<compile_context>
chip_gen: v5e
topology: v5e:2x2
jax: 0.10.0
libtpu: 0.0.40
codegen_flags: <defaults>
</compile_context>

<pallas_src>
import math
from functools import partial

import jax
import jax.numpy as jnp
from jax.experimental import pallas as pl
from jax.experimental.pallas import tpu as pltpu


# ----------------------------------------------------------------------------
# tile helpers / compiler params
# ----------------------------------------------------------------------------
_MM_TN_MAX = 2048                     # safe for v7x's 64 MiB VMEM
try:  # go wider on 128-MiB-VMEM chips (v5e / v6e)
    if getattr(pltpu.get_tpu_info(), "vmem_capacity_bytes", 0) >= 100 * 1024 * 1024:
        _MM_TN_MAX = 4096
except Exception:
    pass


def _pick_tile(dim, max_tile, align=128):
    """Largest tile <= max_tile that divides `dim` and is a multiple of `align`
    (or the full dim if dim <= max_tile)."""
    if dim <= max_tile:
        return dim
    t = (max_tile // align) * align
    while t >= align:
        if dim % t == 0:
            return t
        t -= align
    return dim


def _cp(sem):
    return pltpu.CompilerParams(dimension_semantics=sem,
                                vmem_limit_bytes=48 * 1024 * 1024)


# ----------------------------------------------------------------------------
# Pallas kernels
# ----------------------------------------------------------------------------
def _mm_kernel(x_ref, w_ref, *refs, alpha, has_bias):
    if has_bias:
        b_ref, o_ref = refs
    else:
        (o_ref,) = refs
    r = jnp.dot(x_ref[...].astype(w_ref.dtype), w_ref[...],
                preferred_element_type=jnp.float32)
    if has_bias:
        r = r + b_ref[...]
    if alpha is not None:                       # fused LeakyReLU
        r = jnp.where(r >= 0, r, alpha * r)
    o_ref[...] = r.astype(o_ref.dtype)


def pallas_matmul(x, w, b=None, alpha=None, tn_max=None):
    """out = leaky_alpha(x @ w + b); x:[M,K] f32, w:[K,N] (bf16), b:[N] or None.
    Full-M / full-K blocks (no padding, no k grid axis), N tiled."""
    M, K = x.shape
    K2, N = w.shape
    assert K == K2
    if tn_max is None:
        tn_max = _MM_TN_MAX
    tn = _pick_tile(N, tn_max, 128)
    has_bias = b is not None
    in_specs = [pl.BlockSpec((M, K), lambda j: (0, 0)),
                pl.BlockSpec((K, tn), lambda j: (0, j))]
    args = [x, w]
    if has_bias:
        in_specs.append(pl.BlockSpec((1, tn), lambda j: (0, j)))
        args.append(b.astype(jnp.float32).reshape(1, N))
    return pl.pallas_call(
        partial(_mm_kernel, alpha=alpha, has_bias=has_bias),
        out_shape=jax.ShapeDtypeStruct((M, N), jnp.float32),
        grid=(N // tn,),
        in_specs=in_specs,
        out_specs=pl.BlockSpec((M, tn), lambda j: (0, j)),
        compiler_params=_cp(("parallel",)),
    )(*args)


def _conv3x3_kernel(x2_ref, w_ref, *refs, M2, Wp, alpha, has_bias):
    # x2_ref: [(H+3)*(W+2), Cin] row-flattened padded activation
    # w_ref : [9, Cin, tn]   (tap-major);  out: [H*(W+2), tn]
    if has_bias:
        b_ref, o_ref = refs
    else:
        (o_ref,) = refs
    tn = o_ref.shape[-1]
    acc = jnp.zeros((M2, tn), jnp.float32)
    for t in range(9):
        off = (t // 3) * Wp + (t % 3)           # contiguous row-shifted view
        xs = x2_ref[off:off + M2, :].astype(w_ref.dtype)
        acc = acc + jnp.dot(xs, w_ref[t], preferred_element_type=jnp.float32)
    if has_bias:
        acc = acc + b_ref[...]
    if alpha is not None:
        acc = jnp.where(acc >= 0, acc, alpha * acc)
    o_ref[...] = acc.astype(o_ref.dtype)


def conv3x3(x, w, b=None, alpha=None, tn_max=512):
    """3x3 conv, padding=1, as an in-kernel 9-tap reduction (no HBM im2col).
    x:[B,H,W,Cin] f32, w:[9,Cin,Cout] (bf16), b:[Cout] or None."""
    B, H, W, Cin = x.shape
    Cout = w.shape[-1]
    Wp, Hp = W + 2, H + 3                       # pad W:(1,1), H:(1,2) -> slack rows
    M2 = H * Wp
    tn = _pick_tile(Cout, tn_max, 128)
    has_bias = b is not None
    b2 = None if b is None else b.astype(jnp.float32).reshape(1, Cout)
    outs = []
    for bix in range(B):
        x2 = jnp.pad(x[bix], ((1, 2), (1, 1), (0, 0))).reshape(Hp * Wp, Cin)
        in_specs = [pl.BlockSpec((Hp * Wp, Cin), lambda j: (0, 0)),
                    pl.BlockSpec((9, Cin, tn), lambda j: (0, 0, j))]
        args = [x2, w]
        if has_bias:
            in_specs.append(pl.BlockSpec((1, tn), lambda j: (0, j)))
            args.append(b2)
        o = pl.pallas_call(
            partial(_conv3x3_kernel, M2=M2, Wp=Wp, alpha=alpha, has_bias=has_bias),
            out_shape=jax.ShapeDtypeStruct((M2, Cout), jnp.float32),
            grid=(Cout // tn,),
            in_specs=in_specs,
            out_specs=pl.BlockSpec((M2, tn), lambda j: (0, j)),
            compiler_params=_cp(("parallel",)),
        )(*args)
        outs.append(o.reshape(H, Wp, Cout)[:, :W, :])   # drop slack columns
    return jnp.stack(outs, 0)


def _dwconv7_kernel(x2_ref, w_ref, b_ref, o_ref, *, M2, Wp):
    # x2_ref: [(H+7)*(W+6), C] flattened padded activation; w_ref: [49, C]
    acc = jnp.zeros(o_ref.shape, jnp.float32)
    for t in range(49):
        off = (t // 7) * Wp + (t % 7)
        acc = acc + x2_ref[off:off + M2, :] * w_ref[t:t + 1, :]
    o_ref[...] = (acc + b_ref[...]).astype(o_ref.dtype)


def pallas_dwconv7x7(x, w, b):
    """Depthwise 7x7 conv, 'same' padding. x:[B,H,W,C], w:[49,C], b:[C]."""
    B, H, W, C = x.shape
    Wp, Hp = W + 6, H + 7                       # pad W:(3,3), H:(3,4) -> slack rows
    M2 = H * Wp
    b2 = b.astype(jnp.float32).reshape(1, C)
    outs = []
    for bix in range(B):
        x2 = jnp.pad(x[bix], ((3, 4), (3, 3), (0, 0))).reshape(Hp * Wp, C)
        o = pl.pallas_call(
            partial(_dwconv7_kernel, M2=M2, Wp=Wp),
            out_shape=jax.ShapeDtypeStruct((M2, C), jnp.float32),
            grid=(1,),
            in_specs=[pl.BlockSpec((Hp * Wp, C), lambda i: (0, 0)),
                      pl.BlockSpec((49, C), lambda i: (0, 0)),
                      pl.BlockSpec((1, C), lambda i: (0, 0))],
            out_specs=pl.BlockSpec((M2, C), lambda i: (0, 0)),
            compiler_params=_cp(("arbitrary",)),
        )(x2, w, b2)
        outs.append(o.reshape(H, Wp, C)[:, :W, :])
    return jnp.stack(outs, 0)


def _ln_kernel(x_ref, g_ref, b_ref, o_ref, *, eps):
    x = x_ref[...]
    mu = jnp.mean(x, axis=-1, keepdims=True)
    xc = x - mu
    var = jnp.mean(xc * xc, axis=-1, keepdims=True)
    o_ref[...] = (xc * jax.lax.rsqrt(var + eps) * g_ref[...] + b_ref[...]).astype(o_ref.dtype)


def pallas_layernorm(x, g, b, eps=1e-6):
    """LayerNorm over the last (channel) dim. x:[R,C] (R is tiny here)."""
    R, C = x.shape
    return pl.pallas_call(
        partial(_ln_kernel, eps=eps),
        out_shape=jax.ShapeDtypeStruct((R, C), jnp.float32),
        grid=(1,),
        in_specs=[pl.BlockSpec((R, C), lambda i: (0, 0)),
                  pl.BlockSpec((1, C), lambda i: (0, 0)),
                  pl.BlockSpec((1, C), lambda i: (0, 0))],
        out_specs=pl.BlockSpec((R, C), lambda i: (0, 0)),
        compiler_params=_cp(("arbitrary",)),
    )(x, g.reshape(1, C), b.reshape(1, C))


def _attn_kernel(qkv_ref, x_ref, o_ref, *, C, d, gamma, alpha):
    # qkv_ref: [N, C + 2d], laid out [v | q | k]; x_ref: [N, C] residual input.
    v = qkv_ref[:, :C]
    q = qkv_ref[:, C:C + d]
    k = qkv_ref[:, C + d:C + 2 * d]
    e = jax.lax.dot_general(q, k, (((1,), (1,)), ((), ())),
                            preferred_element_type=jnp.float32)        # [N,N] = q @ k^T
    m = jnp.max(e, axis=-1, keepdims=True)
    p = jnp.exp(e - m)
    p = p * pl.reciprocal(jnp.sum(p, axis=-1, keepdims=True), approx=True)
    out = jnp.dot(p, v, preferred_element_type=jnp.float32)            # [N,C]
    r = gamma * out + x_ref[...]
    if alpha is not None:                      # optionally fuse the following LeakyReLU
        r = jnp.where(r >= 0, r, alpha * r)
    o_ref[...] = r.astype(o_ref.dtype)


def self_attention(x, p, out_alpha=None):
    """SAGAN-style self attention (see TODO at top). x:[B,H,W,C]."""
    B, H, W, C = x.shape
    N = H * W
    d = p["d"]
    outs = []
    for bix in range(B):
        xf = x[bix].reshape(N, C)
        qkv = pallas_matmul(xf, p["w_qkv"], p["b_qkv"])        # one fused [v|q|k] projection
        o = pl.pallas_call(
            partial(_attn_kernel, C=C, d=d, gamma=p["gamma"], alpha=out_alpha),
            out_shape=jax.ShapeDtypeStruct((N, C), jnp.float32),
            grid=(1,),
            in_specs=[pl.BlockSpec((N, C + 2 * d), lambda i: (0, 0)),
                      pl.BlockSpec((N, C), lambda i: (0, 0))],
            out_specs=pl.BlockSpec((N, C), lambda i: (0, 0)),
            compiler_params=_cp(("arbitrary",)),
        )(qkv, xf)
        outs.append(o.reshape(H, W, C))
    return jnp.stack(outs, 0)


def _softmax_kp_kernel(h_ref, g_ref, o_ref, *, scale):
    x = h_ref[...] * scale                                      # temperature folded
    m = jnp.max(x, axis=-1, keepdims=True)
    e = jnp.exp(x - m)
    p = e * pl.reciprocal(jnp.sum(e, axis=-1, keepdims=True), approx=True)
    o_ref[...] = jnp.dot(p, g_ref[...], preferred_element_type=jnp.float32)


def pallas_softmax_kp(heat, coord_grid, scale):
    """Fused row softmax(heat*scale) @ coord_grid.  heat:[R,S], coord_grid:[S,2]."""
    R, S = heat.shape
    return pl.pallas_call(
        partial(_softmax_kp_kernel, scale=scale),
        out_shape=jax.ShapeDtypeStruct((R, 2), jnp.float32),
        grid=(1,),
        in_specs=[pl.BlockSpec((R, S), lambda i: (0, 0)),
                  pl.BlockSpec((S, 2), lambda i: (0, 0))],
        out_specs=pl.BlockSpec((R, 2), lambda i: (0, 0)),
        compiler_params=_cp(("arbitrary",)),
    )(heat, coord_grid)


# ----------------------------------------------------------------------------
# Layers built on the kernels (glue in plain JAX)
# ----------------------------------------------------------------------------
def conv1x1(x, w, b=None, alpha=None):
    B, H, W, C = x.shape
    out = pallas_matmul(x.reshape(B * H * W, C), w, b, alpha=alpha)
    return out.reshape(B, H, W, -1)


def pixel_shuffle(x, r):
    B, H, W, C = x.shape
    cout = C // (r * r)
    x = x.reshape(B, H, W, cout, r, r)
    x = jnp.transpose(x, (0, 1, 4, 2, 5, 3))
    return x.reshape(B, H * r, W * r, cout)


def upsample2x_bilinear(x):
    """nn.Upsample(scale_factor=2, mode='bilinear', align_corners=True), NHWC."""
    def interp(x, axis):
        n_in = x.shape[axis]
        n_out = 2 * n_in
        pos = jnp.arange(n_out, dtype=jnp.float32) * (n_in - 1) / (n_out - 1)
        i0 = jnp.floor(pos).astype(jnp.int32)
        i1 = jnp.minimum(i0 + 1, n_in - 1)
        w1 = pos - i0.astype(jnp.float32)
        w0 = 1.0 - w1
        shape = [1] * x.ndim
        shape[axis] = n_out
        return (jnp.take(x, i0, axis=axis) * w0.reshape(shape)
                + jnp.take(x, i1, axis=axis) * w1.reshape(shape))
    return interp(interp(x, 1), 2)


def convnext_block(x, p):
    """ConvNeXt Block: dwconv7x7 -> LN -> Linear(4C) -> GELU -> Linear(C) -> res.
    (Layer-scale gamma is pre-folded into pw2 weights; DropPath = identity.)"""
    B, H, W, C = x.shape
    inp = x
    x = pallas_dwconv7x7(x, p["dw_w"], p["dw_b"])
    xr = pallas_layernorm(x.reshape(B * H * W, C), p["ln_g"], p["ln_b"], eps=1e-6)
    xr = pallas_matmul(xr, p["pw1_w"], p["pw1_b"])
    xr = jax.nn.gelu(xr, approximate=False)              # exact GELU (erf), as nn.GELU()
    xr = pallas_matmul(xr, p["pw2_w"], p["pw2_b"])
    return inp + xr.reshape(B, H, W, C)


def make_coordinate_grid(H, W):
    xs = 2.0 * (jnp.arange(W, dtype=jnp.float32) / (W - 1)) - 1.0
    ys = 2.0 * (jnp.arange(H, dtype=jnp.float32) / (H - 1)) - 1.0
    xx = jnp.tile(xs[None, :], (H, 1))
    yy = jnp.tile(ys[:, None], (1, W))
    return jnp.stack([xx, yy], axis=-1).reshape(H * W, 2)


def grid_sample_bilinear(x, grid):
    """F.grid_sample(..., mode='bilinear', padding_mode='zeros', align_corners=True).
    x:[B,C,H,W]  grid:[B,Ho,Wo,2] (x,y) in [-1,1]."""
    B, C, H, W = x.shape
    gx, gy = grid[..., 0], grid[..., 1]
    px = (gx + 1.0) * 0.5 * (W - 1)
    py = (gy + 1.0) * 0.5 * (H - 1)
    x0 = jnp.floor(px)
    y0 = jnp.floor(py)

    def tap(xf, yf):
        valid = (xf >= 0) & (xf <= W - 1) & (yf >= 0) & (yf <= H - 1)
        ix = jnp.clip(xf, 0, W - 1).astype(jnp.int32)
        iy = jnp.clip(yf, 0, H - 1).astype(jnp.int32)

        def one(img, ixb, iyb, vb):
            return img[:, iyb, ixb] * vb[None].astype(img.dtype)
        return jax.vmap(one)(x, ix, iy, valid)

    wx1 = (px - x0)[:, None]
    wx0 = 1.0 - wx1
    wy1 = (py - y0)[:, None]
    wy0 = 1.0 - wy1
    out = (tap(x0, y0) * wx0 * wy0 + tap(x0 + 1, y0) * wx1 * wy0
           + tap(x0, y0 + 1) * wx0 * wy1 + tap(x0 + 1, y0 + 1) * wx1 * wy1)
    return out


def warp(x, flo):
    """x:[B,C,H,W] (im2), flo:[B,2,H,W] flow.  (The PyTorch module builds its
    base grid from W for both axes; H==W==8 here, so using H/W properly is
    identical and robust.)"""
    B, C, H, W = x.shape
    xs = jnp.linspace(-1.0, 1.0, W)
    ys = jnp.linspace(-1.0, 1.0, H)
    gx = jnp.tile(xs[None, :], (H, 1))
    gy = jnp.tile(ys[:, None], (1, W))
    base = jnp.stack([gx, gy], axis=-1)[None]            # [1,H,W,2]
    vgrid = base + jnp.transpose(flo, (0, 2, 3, 1))
    out = grid_sample_bilinear(x, vgrid)
    return jnp.clip(out, -1.0, 1.0)


# ----------------------------------------------------------------------------
# Parameters (deterministic synthetic init matching the module's init scheme;
# weights pre-cast to bf16 once, layer-scale folded into pw2)
# ----------------------------------------------------------------------------
def init_params(key):
    keys = iter(jax.random.split(key, 64))

    def nk():
        return next(keys)

    def nrm(shape, std):
        return jax.random.normal(nk(), shape, jnp.float32) * std

    def attn(C):
        d = C // 8
        wv = nrm((C, C), math.sqrt(2.0 / C))
        wq = nrm((C, d), math.sqrt(2.0 / d))
        wk = nrm((C, d), math.sqrt(2.0 / d))
        return dict(
            w_qkv=jnp.concatenate([wv, wq, wk], axis=1).astype(jnp.bfloat16),  # [v|q|k]
            b_qkv=jnp.zeros((C + 2 * d,), jnp.float32),
            d=d, gamma=0.1)

    def conv3_w(cin, cout, std):
        return nrm((9, cin, cout), std).astype(jnp.bfloat16)     # (kh*3+kw, Cin, Cout)

    def block(C):
        ls = 1e-6                                                # layer-scale gamma
        return dict(
            dw_w=nrm((49, C), math.sqrt(2.0 / (49 * C))),
            dw_b=jnp.zeros((C,), jnp.float32),
            ln_g=jnp.ones((C,), jnp.float32), ln_b=jnp.zeros((C,), jnp.float32),
            pw1_w=nrm((C, 4 * C), 1.0 / math.sqrt(C)).astype(jnp.bfloat16),
            pw1_b=jnp.zeros((4 * C,), jnp.float32),
            pw2_w=(nrm((4 * C, C), 1.0 / math.sqrt(4 * C)) * ls).astype(jnp.bfloat16),
            pw2_b=jnp.zeros((C,), jnp.float32))                  # bias * gamma == 0

    p = {}
    # motiongen1
    p["mg1_c0_w"] = nrm((1024, 16384), math.sqrt(2.0 / 16384)).astype(jnp.bfloat16)
    p["mg1_c0_b"] = jnp.zeros((16384,), jnp.float32)
    p["mg1_attn"] = attn(1024)
    p["mg1_c4_w"] = conv3_w(1024, 1024, math.sqrt(2.0 / (9 * 1024)))
    p["mg1_c4_b"] = jnp.zeros((1024,), jnp.float32)
    # motiongen2
    p["mg2_c1_w"] = conv3_w(1024, 512, math.sqrt(2.0 / (9 * 512)))
    p["mg2_c1_b"] = jnp.zeros((512,), jnp.float32)
    p["mg2_attn"] = attn(512)
    p["mg2_c4_w"] = conv3_w(512, 512, math.sqrt(2.0 / (9 * 512)))
    p["mg2_c4_b"] = jnp.zeros((512,), jnp.float32)
    p["rb1"], p["rb2"] = block(512), block(512)
    # motiongen3
    p["mg3_c1_w"] = conv3_w(512, 256, math.sqrt(2.0 / (9 * 256)))
    p["mg3_c1_b"] = jnp.zeros((256,), jnp.float32)
    p["mg3_attn"] = attn(256)
    p["mg3_c4_w"] = nrm((256, 256), math.sqrt(2.0 / 256)).astype(jnp.bfloat16)  # 1x1, no bias
    p["rb3"], p["rb4"] = block(256), block(256)
    # toflow5 (direct Conv2d children re-inited with std 0.05)
    p["tf_c1_w"] = conv3_w(256, 128, 0.05)
    p["tf_c1_b"] = jnp.zeros((128,), jnp.float32)
    p["tf_attn"] = attn(128)
    p["tf_c5_w"] = nrm((128, 64), 0.05).astype(jnp.bfloat16)     # 1x1, no bias
    return p


# ----------------------------------------------------------------------------
# exptoflow forward
# ----------------------------------------------------------------------------
def exptoflow_forward(p, expcode_nchw):
    x = jnp.transpose(expcode_nchw, (0, 2, 3, 1))              # -> NHWC

    # motiongen1: Conv1x1 -> PixelShuffle(4) -> Leaky -> attn -> Conv3x3 -> Leaky
    # (LeakyReLU fused into the 1x1 conv: elementwise, commutes with pixel-shuffle)
    x = conv1x1(x, p["mg1_c0_w"], p["mg1_c0_b"], alpha=0.1)
    x = pixel_shuffle(x, 4)
    x = self_attention(x, p["mg1_attn"])
    x = conv3x3(x, p["mg1_c4_w"], p["mg1_c4_b"], alpha=0.1)

    # motiongen2
    x = upsample2x_bilinear(x)
    x = conv3x3(x, p["mg2_c1_w"], p["mg2_c1_b"], alpha=0.1)
    x = self_attention(x, p["mg2_attn"])
    x = conv3x3(x, p["mg2_c4_w"], p["mg2_c4_b"], alpha=0.1)
    x = convnext_block(x, p["rb1"])
    x = convnext_block(x, p["rb2"])

    # motiongen3
    x = upsample2x_bilinear(x)
    x = conv3x3(x, p["mg3_c1_w"], p["mg3_c1_b"], alpha=0.1)
    x = self_attention(x, p["mg3_attn"])
    x = conv1x1(x, p["mg3_c4_w"], None, alpha=0.1)
    x = convnext_block(x, p["rb3"])
    x = convnext_block(x, p["rb4"])

    # toflow5  (post-attention LeakyReLU fused into the attention epilogue)
    x = upsample2x_bilinear(x)
    x = conv3x3(x, p["tf_c1_w"], p["tf_c1_b"], alpha=0.1)
    x = self_attention(x, p["tf_attn"], out_alpha=0.1)
    flow = conv1x1(x, p["tf_c5_w"], None)                      # [B,H,W,64]

    B, H, W, C = flow.shape
    # spatial softmax with T=0.1 fused with gaussian2kp expectation
    heat = jnp.transpose(flow, (0, 3, 1, 2)).reshape(B * C, H * W)
    coord_grid = make_coordinate_grid(H, W)                    # [H*W, 2]
    kp = pallas_softmax_kp(heat, coord_grid, scale=10.0).reshape(B, C, 2)
    flow_out = jnp.transpose(kp, (0, 2, 1)).reshape(B, 2, 8, 8)
    backflow = warp(flow_out, flow_out) * -1.0
    return flow_out, backflow


if __name__ == "__main__":
    key = jax.random.PRNGKey(0)
    pkey, xkey = jax.random.split(key)
    params = init_params(pkey)
    expcode = jax.random.normal(xkey, (1, 1024, 1, 1), jnp.float32)  # NCHW latent code

    flow, backflow = exptoflow_forward(params, expcode)
    (flow, backflow) = jax.block_until_ready((flow, backflow))

    assert flow.shape == (1, 2, 8, 8), flow.shape
    assert backflow.shape == (1, 2, 8, 8), backflow.shape
    print("KERNEL_OK")
</pallas_src>

<mosaic_0001>
module attributes {stable_mosaic.version = 11 : i64} {
  func.func @_mm_kernel(%arg0: i32, %arg1: memref<1x1024xf32, #tpu.memory_space<vmem>>, %arg2: memref<1024x2048xbf16, #tpu.memory_space<vmem>>, %arg3: memref<1x2048xf32, #tpu.memory_space<vmem>>, %arg4: memref<1x2048xf32, #tpu.memory_space<vmem>>) attributes {dimension_semantics = [#tpu.dimension_semantics<parallel>], iteration_bounds = array<i64: 8>, scalar_prefetch = 0 : i64, scratch_operands = 0 : i64, tpu.core_type = #tpu.core_type<tc>, window_params = [{pipeline_mode = #tpu.pipeline_mode<synchronous>, transform_indices = @transform_0, window_bounds = array<i64: 1, 1024>}, {transform_indices = @transform_1, window_bounds = array<i64: 1024, 2048>}, {transform_indices = @transform_2, window_bounds = array<i64: 1, 2048>}, {transform_indices = @transform_3, window_bounds = array<i64: 1, 2048>}]} {
    %c0 = arith.constant 0 : index
    %c0_0 = arith.constant 0 : index
    %0 = vector.load %arg1[%c0, %c0_0] : memref<1x1024xf32, #tpu.memory_space<vmem>>, vector<1x1024xf32>
    %1 = arith.truncf %0 : vector<1x1024xf32> to vector<1x1024xbf16>
    %c0_1 = arith.constant 0 : index
    %c0_2 = arith.constant 0 : index
    %2 = vector.load %arg2[%c0_1, %c0_2] : memref<1024x2048xbf16, #tpu.memory_space<vmem>>, vector<1024x2048xbf16>
    %cst = arith.constant dense<0.000000e+00> : vector<1x2048xf32>
    %3 = tpu.matmul %1, %2, %cst {dimension_numbers = #tpu.dot_dimension_numbers<[1], [0], [0], [1], [0, 0, 1, 1], [], []>} : vector<1x1024xbf16>, vector<1024x2048xbf16>, vector<1x2048xf32> -> vector<1x2048xf32>
    %c0_3 = arith.constant 0 : index
    %c0_4 = arith.constant 0 : index
    %4 = vector.load %arg3[%c0_3, %c0_4] : memref<1x2048xf32, #tpu.memory_space<vmem>>, vector<1x2048xf32>
    %5 = arith.addf %3, %4 : vector<1x2048xf32>
    %cst_5 = arith.constant 0.000000e+00 : f32
    %6 = vector.broadcast %cst_5 : f32 to vector<1x2048xf32>
    %7 = arith.cmpf oge, %5, %6 : vector<1x2048xf32>
    %cst_6 = arith.constant 1.000000e-01 : f32
    %8 = vector.broadcast %cst_6 : f32 to vector<1x2048xf32>
    %9 = arith.mulf %8, %5 : vector<1x2048xf32>
    %10 = arith.select %7, %5, %9 : vector<1x2048xi1>, vector<1x2048xf32>
    %c0_7 = arith.constant 0 : index
    %c0_8 = arith.constant 0 : index
    %11 = vector.load %arg4[%c0_7, %c0_8] : memref<1x2048xf32, #tpu.memory_space<vmem>>, vector<1x2048xf32>
    tpu.vector_store %arg4[%c0_7, %c0_8], %10 {strides = array<i32>} : memref<1x2048xf32, #tpu.memory_space<vmem>>, vector<1x2048xf32>,
    return
  }
  func.func @transform_0(%arg0: i32) -> (i32, i32) {
    %c0_i32 = arith.constant 0 : i32
    %c0_i32_0 = arith.constant 0 : i32
    %c0_i32_1 = arith.constant 0 : i32
    return %c0_i32, %c0_i32_0 : i32, i32
  }
  func.func @transform_1(%arg0: i32) -> (i32, i32) {
    %c0_i32 = arith.constant 0 : i32
    %c0_i32_0 = arith.constant 0 : i32
    return %c0_i32, %arg0 : i32, i32
  }
  func.func @transform_2(%arg0: i32) -> (i32, i32) {
    %c0_i32 = arith.constant 0 : i32
    %c0_i32_0 = arith.constant 0 : i32
    return %c0_i32, %arg0 : i32, i32
  }
  func.func @transform_3(%arg0: i32) -> (i32, i32) {
    %c0_i32 = arith.constant 0 : i32
    %c0_i32_0 = arith.constant 0 : i32
    return %c0_i32, %arg0 : i32, i32
  }
}

</mosaic_0001>

<llo_original>
// kernel: tpu_custom_call.1
$region0: #{tpu_custom_call.1}
  #allocation0 [shape = 'u32[]', space=smem, size = 0x4, offset = 0x4, fixed_abs, tag = 'smem constant byte address 0x4 - core index']
  #allocation1 [shape = 'u32[72,128]{1,0:T(1,128)}', space=vmem, size = 0x9000, scoped, tag = 'internal scratch']
  %s0 = inlined_call_operand.hbm [shape: f32[1,1024], index: 0, kind: input, shape index: {}]
  %s1 = inlined_call_operand.hbm [shape: bf16[1024,16384], index: 1, kind: input, shape index: {}]
  %s2 = inlined_call_operand.hbm [shape: f32[1,16384], index: 2, kind: input, shape index: {}]
  %s3 = inlined_call_operand.hbm [shape: f32[1,16384], index: 3, kind: output, shape index: {}]
  %s4 = sld [smem:[#allocation0]]
  $region57: #{tpu_custom_call.1} parent=0
    _
  %s6 = ssub.s32 1, %s4
  %s7 = scalar_select 0, %s6, %s4
  $region1: #{tpu_custom_call.1} parent=0
    #allocation2 [shape = 'u8[4096]{0}', space=vmem, size = 0x1000, scoped, tag = 'input window, operand 0, single buffered']
    #allocation3 [shape = 's32[2]{0}', space=sflag, size = 0x8, scoped, tag = 'scoped memory for tpu_custom_call.1']
    #allocation4 [shape = 's32[2]{0}', space=sflag, size = 0x8, scoped, tag = 'scoped memory for tpu_custom_call.1']
    #allocation5 [shape = 'u8[8388608]{0}', space=vmem, size = 0x800000, scoped, tag = 'input window, operand 1']
    #allocation6 [shape = 's32[2]{0}', space=sflag, size = 0x8, scoped, tag = 'scoped memory for tpu_custom_call.1']
    #allocation7 [shape = 'u8[16384]{0}', space=vmem, size = 0x4000, scoped, tag = 'input window, operand 2']
    #allocation8 [shape = 'u8[16384]{0}', space=vmem, size = 0x4000, scoped, tag = 'output window, operand 0']
    %8 = vsyncpa [#allocation3], 0
    %9 = vsyncpa [#allocation6], 0
    %s10 = scalar_lea.sflag [#allocation6], 1
    %11 = vsyncpa %s10, 0
    %12 = vsyncpa [#allocation4], 0
    %s13 = scalar_lea.sflag [#allocation4], 1
    %14 = vsyncpa %s13, 0
    loop: start=0, step=1, limit=10
    $region2: #{tpu_custom_call.1} parent=1 // loop_pre_header
      _
    $region3: #{tpu_custom_call.1} parent=1 // loop_header
      %s16 = sphi 0, %s20
      %p17 = scmp.ge.s32.totalorder %s16, 10
      %s24 = sphi 0, %s24
      %s26 = sphi 0, %s24
      %s27 = sphi 0, %s26
      %s41 = sphi 0, %s27
      %s47 = sphi 0, %s49
      %s50 = sphi 0, %s47
      %s51 = sphi 0, %s50
      %s67 = sphi 0, %s51
      %s73 = sphi 0, %s75
      %s76 = sphi 0, %s73
      %s77 = sphi 0, %s76
      %s93 = sphi 0, %s77
      %s99 = sphi 0, %s101
      %s102 = sphi 0, %s99
      %s103 = sphi 0, %s102
      %s119 = sphi 0, %s103
    $region4: #{tpu_custom_call.1} parent=1 // loop_header_branch
      %19 = sbr.rel (%p17) target = $region8
    $region5: #{tpu_custom_call.1} parent=1 // loop_body
      %s21 = ssub.s32 %s16, 1
      %s22 = ssub.s32 %s16, 2
      %s23 = sadd.s32 %s16, 1
      %s25 = sadd.s32 %s24, 1
      %p28 = scmp.eq.s32.totalorder %s16, 7
      %p29 = scmp.ne.s32.totalorder %s24, %s26
      %p30 = scmp.eq.s32.totalorder %s16, 0
      %p31 = por %p29, %p30
      %p32 = scmp.ne.s32.totalorder %s24, %s26
      %p33 = scmp.eq.s32.totalorder %s21, 7
      %p34 = por %p32, %p33
      %p35 = scmp.ne.s32.totalorder %s26, %s27
      %p36 = scmp.eq.s32.totalorder %s21, 0
      %p37 = por %p35, %p36
      %p38 = scmp.ne.s32.totalorder %s26, %s27
      %p39 = scmp.eq.s32.totalorder %s22, 7
      %p40 = por %p38, %p39
      %p42 = scmp.ne.s32.totalorder %s27, %s41
      %p43 = scmp.eq.s32.totalorder %s22, 0
      %p44 = por %p42, %p43
      %s45 = ssub.s32 %s16, %s23
      %p46 = scmp.eq.s32.totalorder %s45, 0
      %s48 = sadd.s32 %s47, 1
      %s49 = scalar_select %p46, %s47, %s48
      %p52 = pneg %p46
      %p53 = scmp.eq.s32.totalorder %s16, 7
      %p54 = por %p52, %p53
      %p55 = scmp.ne.s32.totalorder %s47, %s50
      %p56 = scmp.eq.s32.totalorder %s16, 0
      %p57 = por %p55, %p56
      %p58 = scmp.ne.s32.totalorder %s47, %s50
      %p59 = scmp.eq.s32.totalorder %s21, 7
      %p60 = por %p58, %p59
      %p61 = scmp.ne.s32.totalorder %s50, %s51
      %p62 = scmp.eq.s32.totalorder %s21, 0
      %p63 = por %p61, %p62
      %p64 = scmp.ne.s32.totalorder %s50, %s51
      %p65 = scmp.eq.s32.totalorder %s22, 7
      %p66 = por %p64, %p65
      %p68 = scmp.ne.s32.totalorder %s51, %s67
      %p69 = scmp.eq.s32.totalorder %s22, 0
      %p70 = por %p68, %p69
      %s71 = ssub.s32 %s16, %s23
      %p72 = scmp.eq.s32.totalorder %s71, 0
      %s74 = sadd.s32 %s73, 1
      %s75 = scalar_select %p72, %s73, %s74
      %p78 = pneg %p72
      %p79 = scmp.eq.s32.totalorder %s16, 7
      %p80 = por %p78, %p79
      %p81 = scmp.ne.s32.totalorder %s73, %s76
      %p82 = scmp.eq.s32.totalorder %s16, 0
      %p83 = por %p81, %p82
      %p84 = scmp.ne.s32.totalorder %s73, %s76
      %p85 = scmp.eq.s32.totalorder %s21, 7
      %p86 = por %p84, %p85
      %p87 = scmp.ne.s32.totalorder %s76, %s77
      %p88 = scmp.eq.s32.totalorder %s21, 0
      %p89 = por %p87, %p88
      %p90 = scmp.ne.s32.totalorder %s76, %s77
      %p91 = scmp.eq.s32.totalorder %s22, 7
      %p92 = por %p90, %p91
      %p94 = scmp.ne.s32.totalorder %s77, %s93
      %p95 = scmp.eq.s32.totalorder %s22, 0
      %p96 = por %p94, %p95
      %s97 = ssub.s32 %s16, %s23
      %p98 = scmp.eq.s32.totalorder %s97, 0
      %s100 = sadd.s32 %s99, 1
      %s101 = scalar_select %p98, %s99, %s100
      %p104 = pneg %p98
      %p105 = scmp.eq.s32.totalorder %s16, 7
      %p106 = por %p104, %p105
      %p107 = scmp.ne.s32.totalorder %s99, %s102
      %p108 = scmp.eq.s32.totalorder %s16, 0
      %p109 = por %p107, %p108
      %p110 = scmp.ne.s32.totalorder %s99, %s102
      %p111 = scmp.eq.s32.totalorder %s21, 7
      %p112 = por %p110, %p111
      %p113 = scmp.ne.s32.totalorder %s102, %s103
      %p114 = scmp.eq.s32.totalorder %s21, 0
      %p115 = por %p113, %p114
      %p116 = scmp.ne.s32.totalorder %s102, %s103
      %p117 = scmp.eq.s32.totalorder %s22, 7
      %p118 = por %p116, %p117
      %p120 = scmp.ne.s32.totalorder %s103, %s119
      %p121 = scmp.eq.s32.totalorder %s22, 0
      %p122 = por %p120, %p121
      %p123 = scmp.le.s32.totalorder 1, %s16
      %p124 = scmp.lt.s32.totalorder %s16, 9
      %p125 = pnand %p123, %p124
      %p126 = pneg %p125
      // Predicated region
      $region9: #{tpu_custom_call.1} parent=5 // pred_check
        _
      $region10: #{tpu_custom_call.1} parent=5 // pred_check_branch
        %128 = sbr.rel (%p125) target = $region12
      $region11: #{tpu_custom_call.1} parent=5 // pred_region
        %s129 = ssub.s32 %s16, 1
        // Predicated region
        $region13: #{tpu_custom_call.1} parent=11 // pred_check
          %p130 = pneg %p37
        $region14: #{tpu_custom_call.1} parent=11 // pred_check_branch
          %132 = sbr.rel (%p130) target = $region16
        $region15: #{tpu_custom_call.1} parent=11 // pred_region
          %134 = vsyncadd [#allocation3], 0
          %s136 = sshll.u32 %s0, 4
          %s137 = int_to_ptr.hbm [resolvable:$true] %s136
          %s138 = sshll.u32 [#allocation2], 4
          %s139 = int_to_ptr.vmem [resolvable:$true] %s138
          %141 = dma.hbm_to_vmem [thread:$0]  %s137, 128, %s139, [#allocation3]
        $region16: #{tpu_custom_call.1} parent=11 // pred_fallthru
          _
      $region12: #{tpu_custom_call.1} parent=5 // pred_fallthru
        _
      %p142 = scmp.lt.s32.totalorder %s16, 8
      // Predicated region
      $region17: #{tpu_custom_call.1} parent=5 // pred_check
        %p143 = pneg %p142
      $region18: #{tpu_custom_call.1} parent=5 // pred_check_branch
        %145 = sbr.rel (%p143) target = $region20
      $region19: #{tpu_custom_call.1} parent=5 // pred_region
        // Predicated region
        $region21: #{tpu_custom_call.1} parent=19 // pred_check
          %p146 = pneg %p57
        $region22: #{tpu_custom_call.1} parent=19 // pred_check_branch
          %148 = sbr.rel (%p146) target = $region24
        $region23: #{tpu_custom_call.1} parent=19 // pred_region
          %s149 = sand.u32 %s16, 1
          %s150 = scalar_lea.sflag [#allocation6], %s149
          %s151 = sand.u32 %s47, 1
          %s152 = smul.addr %s151, 8192
          %s153 = scalar_lea.vmem [#allocation5], %s152
          %s154 = smul.u32 16, %s16
          %156 = vsyncadd %s150, 0
          %s157 = smul.addr %s154, 4
          %s158 = scalar_lea.hbm %s1, %s157
          %s159 = sshll.u32 %s158, 4
          %s160 = int_to_ptr.hbm [resolvable:$true] %s159
          %s161 = sshll.u32 %s153, 4
          %s162 = int_to_ptr.vmem [resolvable:$true] %s161
          %167 = dma.hbm_to_vmem [thread:$0]  %s160, 131072, %s162, %s150, 8192, 1024, 64
        $region24: #{tpu_custom_call.1} parent=19 // pred_fallthru
          _
        // Predicated region
        $region25: #{tpu_custom_call.1} parent=19 // pred_check
          %p168 = pneg %p83
        $region26: #{tpu_custom_call.1} parent=19 // pred_check_branch
          %170 = sbr.rel (%p168) target = $region28
        $region27: #{tpu_custom_call.1} parent=19 // pred_region
          %s171 = sand.u32 %s16, 1
          %s172 = scalar_lea.sflag [#allocation6], %s171
          %s173 = sand.u32 %s73, 1
          %s174 = smul.addr %s173, 16
          %s175 = scalar_lea.vmem [#allocation7], %s174
          %s176 = smul.u32 16, %s16
          %178 = vsyncadd %s172, 0
          %s179 = scalar_lea.hbm %s2, %s176
          %s181 = sshll.u32 %s179, 4
          %s182 = int_to_ptr.hbm [resolvable:$true] %s181
          %s183 = sshll.u32 %s175, 4
          %s184 = int_to_ptr.vmem [resolvable:$true] %s183
          %186 = dma.hbm_to_vmem [thread:$0]  %s182, 256, %s184, %s172
        $region28: #{tpu_custom_call.1} parent=19 // pred_fallthru
          _
      $region20: #{tpu_custom_call.1} parent=5 // pred_fallthru
        _
      %p187 = scmp.le.s32.totalorder 1, %s16
      %p188 = scmp.lt.s32.totalorder %s16, 9
      %p189 = pnand %p187, %p188
      %p190 = pneg %p189
      // Predicated region
      $region29: #{tpu_custom_call.1} parent=5 // pred_check
        _
      $region30: #{tpu_custom_call.1} parent=5 // pred_check_branch
        %192 = sbr.rel (%p189) target = $region32
      $region31: #{tpu_custom_call.1} parent=5 // pred_region
        %s193 = ssub.s32 %s16, 1
        // Predicated region
        $region33: #{tpu_custom_call.1} parent=31 // pred_check
          %p194 = pneg %p37
        $region34: #{tpu_custom_call.1} parent=31 // pred_check_branch
          %196 = sbr.rel (%p194) target = $region36
        $region35: #{tpu_custom_call.1} parent=31 // pred_region
          %198 = dma.done [#allocation3], 128
        $region36: #{tpu_custom_call.1} parent=31 // pred_fallthru
          _
        %s199 = sand.u32 %s21, 1
        %s200 = scalar_lea.sflag [#allocation6], %s199
        %s201 = sand.u32 %s50, 1
        %s202 = smul.addr %s201, 8192
        %s203 = scalar_lea.vmem [#allocation5], %s202
        // Predicated region
        $region37: #{tpu_custom_call.1} parent=31 // pred_check
          %p204 = pneg %p63
        $region38: #{tpu_custom_call.1} parent=31 // pred_check_branch
          %206 = sbr.rel (%p204) target = $region40
        $region39: #{tpu_custom_call.1} parent=31 // pred_region
          %208 = dma.done %s200, 131072
        $region40: #{tpu_custom_call.1} parent=31 // pred_fallthru
          _
        %s209 = sand.u32 %s21, 1
        %s210 = scalar_lea.sflag [#allocation6], %s209
        %s211 = sand.u32 %s76, 1
        %s212 = smul.addr %s211, 16
        %s213 = scalar_lea.vmem [#allocation7], %s212
        // Predicated region
        $region41: #{tpu_custom_call.1} parent=31 // pred_check
          %p214 = pneg %p89
        $region42: #{tpu_custom_call.1} parent=31 // pred_check_branch
          %216 = sbr.rel (%p214) target = $region44
        $region43: #{tpu_custom_call.1} parent=31 // pred_region
          %218 = dma.done %s210, 256
        $region44: #{tpu_custom_call.1} parent=31 // pred_fallthru
          _
        %p219 = pneg %p37
        %p220 = pneg %p34
        %s221 = sand.u32 %s21, 1
        %s222 = scalar_lea.sflag [#allocation6], %s221
        %s223 = sand.u32 %s50, 1
        %s224 = smul.addr %s223, 8192
        %s225 = scalar_lea.vmem [#allocation5], %s224
        %p226 = pneg %p63
        %p227 = pneg %p60
        %s228 = sand.u32 %s21, 1
        %s229 = scalar_lea.sflag [#allocation6], %s228
        %s230 = sand.u32 %s76, 1
        %s231 = smul.addr %s230, 16
        %s232 = scalar_lea.vmem [#allocation7], %s231
        %p233 = pneg %p89
        %p234 = pneg %p86
        %p235 = pneg %p115
        %p236 = pneg %p112
        %s237 = sand.u32 %s102, 1
        %s238 = scalar_lea.sflag [#allocation4], %s237
        %s239 = sand.u32 %s102, 1
        %s240 = smul.addr %s239, 16
        %s241 = scalar_lea.vmem [#allocation8], %s240
        %s242 = smul.u32 16, %s21
        %s243 = smul.u32 16, %s21
        %s244 = smul.u32 16, %s21
        %v245 = vld [vmem:[#allocation2] sm:$0xff]
        %v247 = vperm.slane %v245, 0
        %v248 = vperm.slane %v245, 1
        %v249 = vperm.slane %v245, 2
        %v250 = vperm.slane %v245, 3
        %v251 = vperm.slane %v245, 4
        %v252 = vperm.slane %v245, 5
        %v253 = vperm.slane %v245, 6
        %v254 = vperm.slane %v245, 7
        %v263 = vpack.c.bf16 %v247, %v247
        %v264 = vpack.c.bf16 %v248, %v248
        %v265 = vpack.c.bf16 %v249, %v249
        %v266 = vpack.c.bf16 %v250, %v250
        %v267 = vpack.c.bf16 %v251, %v251
        %v268 = vpack.c.bf16 %v252, %v252
        %v269 = vpack.c.bf16 %v253, %v253
        %v270 = vpack.c.bf16 %v254, %v254
        %v271 = vld [vmem:[%s203] sm:$0xff]
        %v272 = vld [vmem:[%s203 + $0x8] sm:$0xff]
        %v273 = vld [vmem:[%s203 + $0x10] sm:$0xff]
        %v274 = vld [vmem:[%s203 + $0x18] sm:$0xff]
        %v275 = vld [vmem:[%s203 + $0x20] sm:$0xff]
        %v276 = vld [vmem:[%s203 + $0x28] sm:$0xff]
        %v277 = vld [vmem:[%s203 + $0x30] sm:$0xff]
        %v278 = vld [vmem:[%s203 + $0x38] sm:$0xff]
        %v279 = vld [vmem:[%s203 + $0x40] sm:$0xff]
        %v280 = vld [vmem:[%s203 + $0x48] sm:$0xff]
        %v281 = vld [vmem:[%s203 + $0x50] sm:$0xff]
        %v282 = vld [vmem:[%s203 + $0x58] sm:$0xff]
        %v283 = vld [vmem:[%s203 + $0x60] sm:$0xff]
        %v284 = vld [vmem:[%s203 + $0x68] sm:$0xff]
        %v285 = vld [vmem:[%s203 + $0x70] sm:$0xff]
        %v286 = vld [vmem:[%s203 + $0x78] sm:$0xff]
        %v287 = vld [vmem:[%s203 + $0x80] sm:$0xff]
        %v288 = vld [vmem:[%s203 + $0x88] sm:$0xff]
        %v289 = vld [vmem:[%s203 + $0x90] sm:$0xff]
        %v290 = vld [vmem:[%s203 + $0x98] sm:$0xff]
        %v291 = vld [vmem:[%s203 + $0xa0] sm:$0xff]
        %v292 = vld [vmem:[%s203 + $0xa8] sm:$0xff]
        %v293 = vld [vmem:[%s203 + $0xb0] sm:$0xff]
        %v294 = vld [vmem:[%s203 + $0xb8] sm:$0xff]
        %v295 = vld [vmem:[%s203 + $0xc0] sm:$0xff]
        %v296 = vld [vmem:[%s203 + $0xc8] sm:$0xff]
        %v297 = vld [vmem:[%s203 + $0xd0] sm:$0xff]
        %v298 = vld [vmem:[%s203 + $0xd8] sm:$0xff]
        %v299 = vld [vmem:[%s203 + $0xe0] sm:$0xff]
        %v300 = vld [vmem:[%s203 + $0xe8] sm:$0xff]
        %v301 = vld [vmem:[%s203 + $0xf0] sm:$0xff]
        %v302 = vld [vmem:[%s203 + $0xf8] sm:$0xff]
        %v303 = vld [vmem:[%s203 + $0x100] sm:$0xff]
        %v304 = vld [vmem:[%s203 + $0x108] sm:$0xff]
        %v305 = vld [vmem:[%s203 + $0x110] sm:$0xff]
        %v306 = vld [vmem:[%s203 + $0x118] sm:$0xff]
        %v307 = vld [vmem:[%s203 + $0x120] sm:$0xff]
        %v308 = vld [vmem:[%s203 + $0x128] sm:$0xff]
        %v309 = vld [vmem:[%s203 + $0x130] sm:$0xff]
        %v310 = vld [vmem:[%s203 + $0x138] sm:$0xff]
        %v311 = vld [vmem:[%s203 + $0x140] sm:$0xff]
        %v312 = vld [vmem:[%s203 + $0x148] sm:$0xff]
        %v313 = vld [vmem:[%s203 + $0x150] sm:$0xff]
        %v314 = vld [vmem:[%s203 + $0x158] sm:$0xff]
        %v315 = vld [vmem:[%s203 + $0x160] sm:$0xff]
        %v316 = vld [vmem:[%s203 + $0x168] sm:$0xff]
        %v317 = vld [vmem:[%s203 + $0x170] sm:$0xff]
        %v318 = vld [vmem:[%s203 + $0x178] sm:$0xff]
        %v319 = vld [vmem:[%s203 + $0x180] sm:$0xff]
        %v320 = vld [vmem:[%s203 + $0x188] sm:$0xff]
        %v321 = vld [vmem:[%s203 + $0x190] sm:$0xff]
        %v322 = vld [vmem:[%s203 + $0x198] sm:$0xff]
        %v323 = vld [vmem:[%s203 + $0x1a0] sm:$0xff]
        %v324 = vld [vmem:[%s203 + $0x1a8] sm:$0xff]
        %v325 = vld [vmem:[%s203 + $0x1b0] sm:$0xff]
        %v326 = vld [vmem:[%s203 + $0x1b8] sm:$0xff]
        %v327 = vld [vmem:[%s203 + $0x1c0] sm:$0xff]
        %v328 = vld [vmem:[%s203 + $0x1c8] sm:$0xff]
        %v329 = vld [vmem:[%s203 + $0x1d0] sm:$0xff]
        %v330 = vld [vmem:[%s203 + $0x1d8] sm:$0xff]
        %v331 = vld [vmem:[%s203 + $0x1e0] sm:$0xff]
        %v332 = vld [vmem:[%s203 + $0x1e8] sm:$0xff]
        %v333 = vld [vmem:[%s203 + $0x1f0] sm:$0xff]
        %v334 = vld [vmem:[%s203 + $0x1f8] sm:$0xff]
        %v335 = vld [vmem:[%s203 + $0x200] sm:$0xff]
        %v336 = vld [vmem:[%s203 + $0x208] sm:$0xff]
        %v337 = vld [vmem:[%s203 + $0x210] sm:$0xff]
        %v338 = vld [vmem:[%s203 + $0x218] sm:$0xff]
        %v339 = vld [vmem:[%s203 + $0x220] sm:$0xff]
        %v340 = vld [vmem:[%s203 + $0x228] sm:$0xff]
        %v341 = vld [vmem:[%s203 + $0x230] sm:$0xff]
        %v342 = vld [vmem:[%s203 + $0x238] sm:$0xff]
        %v343 = vld [vmem:[%s203 + $0x240] sm:$0xff]
        %v344 = vld [vmem:[%s203 + $0x248] sm:$0xff]
        %v345 = vld [vmem:[%s203 + $0x250] sm:$0xff]
        %v346 = vld [vmem:[%s203 + $0x258] sm:$0xff]
        %v347 = vld [vmem:[%s203 + $0x260] sm:$0xff]
        %v348 = vld [vmem:[%s203 + $0x268] sm:$0xff]
        %v349 = vld [vmem:[%s203 + $0x270] sm:$0xff]
        %v350 = vld [vmem:[%s203 + $0x278] sm:$0xff]
        %v351 = vld [vmem:[%s203 + $0x280] sm:$0xff]
        %v352 = vld [vmem:[%s203 + $0x288] sm:$0xff]
        %v353 = vld [vmem:[%s203 + $0x290] sm:$0xff]
        %v354 = vld [vmem:[%s203 + $0x298] sm:$0xff]
        %v355 = vld [vmem:[%s203 + $0x2a0] sm:$0xff]
        %v356 = vld [vmem:[%s203 + $0x2a8] sm:$0xff]
        %v357 = vld [vmem:[%s203 + $0x2b0] sm:$0xff]
        %v358 = vld [vmem:[%s203 + $0x2b8] sm:$0xff]
        %v359 = vld [vmem:[%s203 + $0x2c0] sm:$0xff]
        %v360 = vld [vmem:[%s203 + $0x2c8] sm:$0xff]
        %v361 = vld [vmem:[%s203 + $0x2d0] sm:$0xff]
        %v362 = vld [vmem:[%s203 + $0x2d8] sm:$0xff]
        %v363 = vld [vmem:[%s203 + $0x2e0] sm:$0xff]
        %v364 = vld [vmem:[%s203 + $0x2e8] sm:$0xff]
        %v365 = vld [vmem:[%s203 + $0x2f0] sm:$0xff]
        %v366 = vld [vmem:[%s203 + $0x2f8] sm:$0xff]
        %v367 = vld [vmem:[%s203 + $0x300] sm:$0xff]
        %v368 = vld [vmem:[%s203 + $0x308] sm:$0xff]
        %v369 = vld [vmem:[%s203 + $0x310] sm:$0xff]
        %v370 = vld [vmem:[%s203 + $0x318] sm:$0xff]
        %v371 = vld [vmem:[%s203 + $0x320] sm:$0xff]
        %v372 = vld [vmem:[%s203 + $0x328] sm:$0xff]
        %v373 = vld [vmem:[%s203 + $0x330] sm:$0xff]
        %v374 = vld [vmem:[%s203 + $0x338] sm:$0xff]
        %v375 = vld [vmem:[%s203 + $0x340] sm:$0xff]
        %v376 = vld [vmem:[%s203 + $0x348] sm:$0xff]
        %v377 = vld [vmem:[%s203 + $0x350] sm:$0xff]
        %v378 = vld [vmem:[%s203 + $0x358] sm:$0xff]
        %v379 = vld [vmem:[%s203 + $0x360] sm:$0xff]
        %v380 = vld [vmem:[%s203 + $0x368] sm:$0xff]
        %v381 = vld [vmem:[%s203 + $0x370] sm:$0xff]
        %v382 = vld [vmem:[%s203 + $0x378] sm:$0xff]
        %v383 = vld [vmem:[%s203 + $0x380] sm:$0xff]
        %v384 = vld [vmem:[%s203 + $0x388] sm:$0xff]
        %v385 = vld [vmem:[%s203 + $0x390] sm:$0xff]
        %v386 = vld [vmem:[%s203 + $0x398] sm:$0xff]
        %v387 = vld [vmem:[%s203 + $0x3a0] sm:$0xff]
        %v388 = vld [vmem:[%s203 + $0x3a8] sm:$0xff]
        %v389 = vld [vmem:[%s203 + $0x3b0] sm:$0xff]
        %v390 = vld [vmem:[%s203 + $0x3b8] sm:$0xff]
        %v391 = vld [vmem:[%s203 + $0x3c0] sm:$0xff]
        %v392 = vld [vmem:[%s203 + $0x3c8] sm:$0xff]
        %v393 = vld [vmem:[%s203 + $0x3d0] sm:$0xff]
        %v394 = vld [vmem:[%s203 + $0x3d8] sm:$0xff]
        %v395 = vld [vmem:[%s203 + $0x3e0] sm:$0xff]
        %v396 = vld [vmem:[%s203 + $0x3e8] sm:$0xff]
        %v397 = vld [vmem:[%s203 + $0x3f0] sm:$0xff]
        %v398 = vld [vmem:[%s203 + $0x3f8] sm:$0xff]
        %v399 = vld [vmem:[%s203 + $0x400] sm:$0xff]
        %v400 = vld [vmem:[%s203 + $0x408] sm:$0xff]
        %v401 = vld [vmem:[%s203 + $0x410] sm:$0xff]
        %v402 = vld [vmem:[%s203 + $0x418] sm:$0xff]
        %v403 = vld [vmem:[%s203 + $0x420] sm:$0xff]
        %v404 = vld [vmem:[%s203 + $0x428] sm:$0xff]
        %v405 = vld [vmem:[%s203 + $0x430] sm:$0xff]
        %v406 = vld [vmem:[%s203 + $0x438] sm:$0xff]
        %v407 = vld [vmem:[%s203 + $0x440] sm:$0xff]
        %v408 = vld [vmem:[%s203 + $0x448] sm:$0xff]
        %v409 = vld [vmem:[%s203 + $0x450] sm:$0xff]
        %v410 = vld [vmem:[%s203 + $0x458] sm:$0xff]
        %v411 = vld [vmem:[%s203 + $0x460] sm:$0xff]
        %v412 = vld [vmem:[%s203 + $0x468] sm:$0xff]
        %v413 = vld [vmem:[%s203 + $0x470] sm:$0xff]
        %v414 = vld [vmem:[%s203 + $0x478] sm:$0xff]
        %v415 = vld [vmem:[%s203 + $0x480] sm:$0xff]
        %v416 = vld [vmem:[%s203 + $0x488] sm:$0xff]
        %v417 = vld [vmem:[%s203 + $0x490] sm:$0xff]
        %v418 = vld [vmem:[%s203 + $0x498] sm:$0xff]
        %v419 = vld [vmem:[%s203 + $0x4a0] sm:$0xff]
        %v420 = vld [vmem:[%s203 + $0x4a8] sm:$0xff]
        %v421 = vld [vmem:[%s203 + $0x4b0] sm:$0xff]
        %v422 = vld [vmem:[%s203 + $0x4b8] sm:$0xff]
        %v423 = vld [vmem:[%s203 + $0x4c0] sm:$0xff]
        %v424 = vld [vmem:[%s203 + $0x4c8] sm:$0xff]
        %v425 = vld [vmem:[%s203 + $0x4d0] sm:$0xff]
        %v426 = vld [vmem:[%s203 + $0x4d8] sm:$0xff]
        %v427 = vld [vmem:[%s203 + $0x4e0] sm:$0xff]
        %v428 = vld [vmem:[%s203 + $0x4e8] sm:$0xff]
        %v429 = vld [vmem:[%s203 + $0x4f0] sm:$0xff]
        %v430 = vld [vmem:[%s203 + $0x4f8] sm:$0xff]
        %v431 = vld [vmem:[%s203 + $0x500] sm:$0xff]
        %v432 = vld [vmem:[%s203 + $0x508] sm:$0xff]
        %v433 = vld [vmem:[%s203 + $0x510] sm:$0xff]
        %v434 = vld [vmem:[%s203 + $0x518] sm:$0xff]
        %v435 = vld [vmem:[%s203 + $0x520] sm:$0xff]
        %v436 = vld [vmem:[%s203 + $0x528] sm:$0xff]
        %v437 = vld [vmem:[%s203 + $0x530] sm:$0xff]
        %v438 = vld [vmem:[%s203 + $0x538] sm:$0xff]
        %v439 = vld [vmem:[%s203 + $0x540] sm:$0xff]
        %v440 = vld [vmem:[%s203 + $0x548] sm:$0xff]
        %v441 = vld [vmem:[%s203 + $0x550] sm:$0xff]
        %v442 = vld [vmem:[%s203 + $0x558] sm:$0xff]
        %v443 = vld [vmem:[%s203 + $0x560] sm:$0xff]
        %v444 = vld [vmem:[%s203 + $0x568] sm:$0xff]
        %v445 = vld [vmem:[%s203 + $0x570] sm:$0xff]
        %v446 = vld [vmem:[%s203 + $0x578] sm:$0xff]
        %v447 = vld [vmem:[%s203 + $0x580] sm:$0xff]
        %v448 = vld [vmem:[%s203 + $0x588] sm:$0xff]
        %v449 = vld [vmem:[%s203 + $0x590] sm:$0xff]
        %v450 = vld [vmem:[%s203 + $0x598] sm:$0xff]
        %v451 = vld [vmem:[%s203 + $0x5a0] sm:$0xff]
        %v452 = vld [vmem:[%s203 + $0x5a8] sm:$0xff]
        %v453 = vld [vmem:[%s203 + $0x5b0] sm:$0xff]
        %v454 = vld [vmem:[%s203 + $0x5b8] sm:$0xff]
        %v455 = vld [vmem:[%s203 + $0x5c0] sm:$0xff]
        %v456 = vld [vmem:[%s203 + $0x5c8] sm:$0xff]
        %v457 = vld [vmem:[%s203 + $0x5d0] sm:$0xff]
        %v458 = vld [vmem:[%s203 + $0x5d8] sm:$0xff]
        %v459 = vld [vmem:[%s203 + $0x5e0] sm:$0xff]
        %v460 = vld [vmem:[%s203 + $0x5e8] sm:$0xff]
        %v461 = vld [vmem:[%s203 + $0x5f0] sm:$0xff]
        %v462 = vld [vmem:[%s203 + $0x5f8] sm:$0xff]
        %v463 = vld [vmem:[%s203 + $0x600] sm:$0xff]
        %v464 = vld [vmem:[%s203 + $0x608] sm:$0xff]
        %v465 = vld [vmem:[%s203 + $0x610] sm:$0xff]
        %v466 = vld [vmem:[%s203 + $0x618] sm:$0xff]
        %v467 = vld [vmem:[%s203 + $0x620] sm:$0xff]
        %v468 = vld [vmem:[%s203 + $0x628] sm:$0xff]
        %v469 = vld [vmem:[%s203 + $0x630] sm:$0xff]
        %v470 = vld [vmem:[%s203 + $0x638] sm:$0xff]
        %v471 = vld [vmem:[%s203 + $0x640] sm:$0xff]
        %v472 = vld [vmem:[%s203 + $0x648] sm:$0xff]
        %v473 = vld [vmem:[%s203 + $0x650] sm:$0xff]
        %v474 = vld [vmem:[%s203 + $0x658] sm:$0xff]
        %v475 = vld [vmem:[%s203 + $0x660] sm:$0xff]
        %v476 = vld [vmem:[%s203 + $0x668] sm:$0xff]
        %v477 = vld [vmem:[%s203 + $0x670] sm:$0xff]
        %v478 = vld [vmem:[%s203 + $0x678] sm:$0xff]
        %v479 = vld [vmem:[%s203 + $0x680] sm:$0xff]
        %v480 = vld [vmem:[%s203 + $0x688] sm:$0xff]
        %v481 = vld [vmem:[%s203 + $0x690] sm:$0xff]
        %v482 = vld [vmem:[%s203 + $0x698] sm:$0xff]
        %v483 = vld [vmem:[%s203 + $0x6a0] sm:$0xff]
        %v484 = vld [vmem:[%s203 + $0x6a8] sm:$0xff]
        %v485 = vld [vmem:[%s203 + $0x6b0] sm:$0xff]
        %v486 = vld [vmem:[%s203 + $0x6b8] sm:$0xff]
        %v487 = vld [vmem:[%s203 + $0x6c0] sm:$0xff]
        %v488 = vld [vmem:[%s203 + $0x6c8] sm:$0xff]
        %v489 = vld [vmem:[%s203 + $0x6d0] sm:$0xff]
        %v490 = vld [vmem:[%s203 + $0x6d8] sm:$0xff]
        %v491 = vld [vmem:[%s203 + $0x6e0] sm:$0xff]
        %v492 = vld [vmem:[%s203 + $0x6e8] sm:$0xff]
        %v493 = vld [vmem:[%s203 + $0x6f0] sm:$0xff]
        %v494 = vld [vmem:[%s203 + $0x6f8] sm:$0xff]
        %v495 = vld [vmem:[%s203 + $0x700] sm:$0xff]
        %v496 = vld [vmem:[%s203 + $0x708] sm:$0xff]
        %v497 = vld [vmem:[%s203 + $0x710] sm:$0xff]
        %v498 = vld [vmem:[%s203 + $0x718] sm:$0xff]
        %v499 = vld [vmem:[%s203 + $0x720] sm:$0xff]
        %v500 = vld [vmem:[%s203 + $0x728] sm:$0xff]
        %v501 = vld [vmem:[%s203 + $0x730] sm:$0xff]
        %v502 = vld [vmem:[%s203 + $0x738] sm:$0xff]
        %v503 = vld [vmem:[%s203 + $0x740] sm:$0xff]
        %v504 = vld [vmem:[%s203 + $0x748] sm:$0xff]
        %v505 = vld [vmem:[%s203 + $0x750] sm:$0xff]
        %v506 = vld [vmem:[%s203 + $0x758] sm:$0xff]
        %v507 = vld [vmem:[%s203 + $0x760] sm:$0xff]
        %v508 = vld [vmem:[%s203 + $0x768] sm:$0xff]
        %v509 = vld [vmem:[%s203 + $0x770] sm:$0xff]
        %v510 = vld [vmem:[%s203 + $0x778] sm:$0xff]
        %v511 = vld [vmem:[%s203 + $0x780] sm:$0xff]
        %v512 = vld [vmem:[%s203 + $0x788] sm:$0xff]
        %v513 = vld [vmem:[%s203 + $0x790] sm:$0xff]
        %v514 = vld [vmem:[%s203 + $0x798] sm:$0xff]
        %v515 = vld [vmem:[%s203 + $0x7a0] sm:$0xff]
        %v516 = vld [vmem:[%s203 + $0x7a8] sm:$0xff]
        %v517 = vld [vmem:[%s203 + $0x7b0] sm:$0xff]
        %v518 = vld [vmem:[%s203 + $0x7b8] sm:$0xff]
        %v519 = vld [vmem:[%s203 + $0x7c0] sm:$0xff]
        %v520 = vld [vmem:[%s203 + $0x7c8] sm:$0xff]
        %v521 = vld [vmem:[%s203 + $0x7d0] sm:$0xff]
        %v522 = vld [vmem:[%s203 + $0x7d8] sm:$0xff]
        %v523 = vld [vmem:[%s203 + $0x7e0] sm:$0xff]
        %v524 = vld [vmem:[%s203 + $0x7e8] sm:$0xff]
        %v525 = vld [vmem:[%s203 + $0x7f0] sm:$0xff]
        %v526 = vld [vmem:[%s203 + $0x7f8] sm:$0xff]
        %v527 = vld [vmem:[%s203 + $0x800] sm:$0xff]
        %v528 = vld [vmem:[%s203 + $0x808] sm:$0xff]
        %v529 = vld [vmem:[%s203 + $0x810] sm:$0xff]
        %v530 = vld [vmem:[%s203 + $0x818] sm:$0xff]
        %v531 = vld [vmem:[%s203 + $0x820] sm:$0xff]
        %v532 = vld [vmem:[%s203 + $0x828] sm:$0xff]
        %v533 = vld [vmem:[%s203 + $0x830] sm:$0xff]
        %v534 = vld [vmem:[%s203 + $0x838] sm:$0xff]
        %v535 = vld [vmem:[%s203 + $0x840] sm:$0xff]
        %v536 = vld [vmem:[%s203 + $0x848] sm:$0xff]
        %v537 = vld [vmem:[%s203 + $0x850] sm:$0xff]
        %v538 = vld [vmem:[%s203 + $0x858] sm:$0xff]
        %v539 = vld [vmem:[%s203 + $0x860] sm:$0xff]
        %v540 = vld [vmem:[%s203 + $0x868] sm:$0xff]
        %v541 = vld [vmem:[%s203 + $0x870] sm:$0xff]
        %v542 = vld [vmem:[%s203 + $0x878] sm:$0xff]
        %v543 = vld [vmem:[%s203 + $0x880] sm:$0xff]
        %v544 = vld [vmem:[%s203 + $0x888] sm:$0xff]
        %v545 = vld [vmem:[%s203 + $0x890] sm:$0xff]
        %v546 = vld [vmem:[%s203 + $0x898] sm:$0xff]
        %v547 = vld [vmem:[%s203 + $0x8a0] sm:$0xff]
        %v548 = vld [vmem:[%s203 + $0x8a8] sm:$0xff]
        %v549 = vld [vmem:[%s203 + $0x8b0] sm:$0xff]
        %v550 = vld [vmem:[%s203 + $0x8b8] sm:$0xff]
        %v551 = vld [vmem:[%s203 + $0x8c0] sm:$0xff]
        %v552 = vld [vmem:[%s203 + $0x8c8] sm:$0xff]
        %v553 = vld [vmem:[%s203 + $0x8d0] sm:$0xff]
        %v554 = vld [vmem:[%s203 + $0x8d8] sm:$0xff]
        %v555 = vld [vmem:[%s203 + $0x8e0] sm:$0xff]
        %v556 = vld [vmem:[%s203 + $0x8e8] sm:$0xff]
        %v557 = vld [vmem:[%s203 + $0x8f0] sm:$0xff]
        %v558 = vld [vmem:[%s203 + $0x8f8] sm:$0xff]
        %v559 = vld [vmem:[%s203 + $0x900] sm:$0xff]
        %v560 = vld [vmem:[%s203 + $0x908] sm:$0xff]
        %v561 = vld [vmem:[%s203 + $0x910] sm:$0xff]
        %v562 = vld [vmem:[%s203 + $0x918] sm:$0xff]
        %v563 = vld [vmem:[%s203 + $0x920] sm:$0xff]
        %v564 = vld [vmem:[%s203 + $0x928] sm:$0xff]
        %v565 = vld [vmem:[%s203 + $0x930] sm:$0xff]
        %v566 = vld [vmem:[%s203 + $0x938] sm:$0xff]
        %v567 = vld [vmem:[%s203 + $0x940] sm:$0xff]
        %v568 = vld [vmem:[%s203 + $0x948] sm:$0xff]
        %v569 = vld [vmem:[%s203 + $0x950] sm:$0xff]
        %v570 = vld [vmem:[%s203 + $0x958] sm:$0xff]
        %v571 = vld [vmem:[%s203 + $0x960] sm:$0xff]
        %v572 = vld [vmem:[%s203 + $0x968] sm:$0xff]
        %v573 = vld [vmem:[%s203 + $0x970] sm:$0xff]
        %v574 = vld [vmem:[%s203 + $0x978] sm:$0xff]
        %v575 = vld [vmem:[%s203 + $0x980] sm:$0xff]
        %v576 = vld [vmem:[%s203 + $0x988] sm:$0xff]
        %v577 = vld [vmem:[%s203 + $0x990] sm:$0xff]
        %v578 = vld [vmem:[%s203 + $0x998] sm:$0xff]
        %v579 = vld [vmem:[%s203 + $0x9a0] sm:$0xff]
        %v580 = vld [vmem:[%s203 + $0x9a8] sm:$0xff]
        %v581 = vld [vmem:[%s203 + $0x9b0] sm:$0xff]
        %v582 = vld [vmem:[%s203 + $0x9b8] sm:$0xff]
        %v583 = vld [vmem:[%s203 + $0x9c0] sm:$0xff]
        %v584 = vld [vmem:[%s203 + $0x9c8] sm:$0xff]
        %v585 = vld [vmem:[%s203 + $0x9d0] sm:$0xff]
        %v586 = vld [vmem:[%s203 + $0x9d8] sm:$0xff]
        %v587 = vld [vmem:[%s203 + $0x9e0] sm:$0xff]
        %v588 = vld [vmem:[%s203 + $0x9e8] sm:$0xff]
        %v589 = vld [vmem:[%s203 + $0x9f0] sm:$0xff]
        %v590 = vld [vmem:[%s203 + $0x9f8] sm:$0xff]
        %v591 = vld [vmem:[%s203 + $0xa00] sm:$0xff]
        %v592 = vld [vmem:[%s203 + $0xa08] sm:$0xff]
        %v593 = vld [vmem:[%s203 + $0xa10] sm:$0xff]
        %v594 = vld [vmem:[%s203 + $0xa18] sm:$0xff]
        %v595 = vld [vmem:[%s203 + $0xa20] sm:$0xff]
        %v596 = vld [vmem:[%s203 + $0xa28] sm:$0xff]
        %v597 = vld [vmem:[%s203 + $0xa30] sm:$0xff]
        %v598 = vld [vmem:[%s203 + $0xa38] sm:$0xff]
        %v599 = vld [vmem:[%s203 + $0xa40] sm:$0xff]
        %v600 = vld [vmem:[%s203 + $0xa48] sm:$0xff]
        %v601 = vld [vmem:[%s203 + $0xa50] sm:$0xff]
        %v602 = vld [vmem:[%s203 + $0xa58] sm:$0xff]
        %v603 = vld [vmem:[%s203 + $0xa60] sm:$0xff]
        %v604 = vld [vmem:[%s203 + $0xa68] sm:$0xff]
        %v605 = vld [vmem:[%s203 + $0xa70] sm:$0xff]
        %v606 = vld [vmem:[%s203 + $0xa78] sm:$0xff]
        %v607 = vld [vmem:[%s203 + $0xa80] sm:$0xff]
        %v608 = vld [vmem:[%s203 + $0xa88] sm:$0xff]
        %v609 = vld [vmem:[%s203 + $0xa90] sm:$0xff]
        %v610 = vld [vmem:[%s203 + $0xa98] sm:$0xff]
        %v611 = vld [vmem:[%s203 + $0xaa0] sm:$0xff]
        %v612 = vld [vmem:[%s203 + $0xaa8] sm:$0xff]
        %v613 = vld [vmem:[%s203 + $0xab0] sm:$0xff]
        %v614 = vld [vmem:[%s203 + $0xab8] sm:$0xff]
        %v615 = vld [vmem:[%s203 + $0xac0] sm:$0xff]
        %v616 = vld [vmem:[%s203 + $0xac8] sm:$0xff]
        %v617 = vld [vmem:[%s203 + $0xad0] sm:$0xff]
        %v618 = vld [vmem:[%s203 + $0xad8] sm:$0xff]
        %v619 = vld [vmem:[%s203 + $0xae0] sm:$0xff]
        %v620 = vld [vmem:[%s203 + $0xae8] sm:$0xff]
        %v621 = vld [vmem:[%s203 + $0xaf0] sm:$0xff]
        %v622 = vld [vmem:[%s203 + $0xaf8] sm:$0xff]
        %v623 = vld [vmem:[%s203 + $0xb00] sm:$0xff]
        %v624 = vld [vmem:[%s203 + $0xb08] sm:$0xff]
        %v625 = vld [vmem:[%s203 + $0xb10] sm:$0xff]
        %v626 = vld [vmem:[%s203 + $0xb18] sm:$0xff]
        %v627 = vld [vmem:[%s203 + $0xb20] sm:$0xff]
        %v628 = vld [vmem:[%s203 + $0xb28] sm:$0xff]
        %v629 = vld [vmem:[%s203 + $0xb30] sm:$0xff]
        %v630 = vld [vmem:[%s203 + $0xb38] sm:$0xff]
        %v631 = vld [vmem:[%s203 + $0xb40] sm:$0xff]
        %v632 = vld [vmem:[%s203 + $0xb48] sm:$0xff]
        %v633 = vld [vmem:[%s203 + $0xb50] sm:$0xff]
        %v634 = vld [vmem:[%s203 + $0xb58] sm:$0xff]
        %v635 = vld [vmem:[%s203 + $0xb60] sm:$0xff]
        %v636 = vld [vmem:[%s203 + $0xb68] sm:$0xff]
        %v637 = vld [vmem:[%s203 + $0xb70] sm:$0xff]
        %v638 = vld [vmem:[%s203 + $0xb78] sm:$0xff]
        %v639 = vld [vmem:[%s203 + $0xb80] sm:$0xff]
        %v640 = vld [vmem:[%s203 + $0xb88] sm:$0xff]
        %v641 = vld [vmem:[%s203 + $0xb90] sm:$0xff]
        %v642 = vld [vmem:[%s203 + $0xb98] sm:$0xff]
        %v643 = vld [vmem:[%s203 + $0xba0] sm:$0xff]
        %v644 = vld [vmem:[%s203 + $0xba8] sm:$0xff]
        %v645 = vld [vmem:[%s203 + $0xbb0] sm:$0xff]
        %v646 = vld [vmem:[%s203 + $0xbb8] sm:$0xff]
        %v647 = vld [vmem:[%s203 + $0xbc0] sm:$0xff]
        %v648 = vld [vmem:[%s203 + $0xbc8] sm:$0xff]
        %v649 = vld [vmem:[%s203 + $0xbd0] sm:$0xff]
        %v650 = vld [vmem:[%s203 + $0xbd8] sm:$0xff]
        %v651 = vld [vmem:[%s203 + $0xbe0] sm:$0xff]
        %v652 = vld [vmem:[%s203 + $0xbe8] sm:$0xff]
        %v653 = vld [vmem:[%s203 + $0xbf0] sm:$0xff]
        %v654 = vld [vmem:[%s203 + $0xbf8] sm:$0xff]
        %v655 = vld [vmem:[%s203 + $0xc00] sm:$0xff]
        %v656 = vld [vmem:[%s203 + $0xc08] sm:$0xff]
        %v657 = vld [vmem:[%s203 + $0xc10] sm:$0xff]
        %v658 = vld [vmem:[%s203 + $0xc18] sm:$0xff]
        %v659 = vld [vmem:[%s203 + $0xc20] sm:$0xff]
        %v660 = vld [vmem:[%s203 + $0xc28] sm:$0xff]
        %v661 = vld [vmem:[%s203 + $0xc30] sm:$0xff]
        %v662 = vld [vmem:[%s203 + $0xc38] sm:$0xff]
        %v663 = vld [vmem:[%s203 + $0xc40] sm:$0xff]
        %v664 = vld [vmem:[%s203 + $0xc48] sm:$0xff]
        %v665 = vld [vmem:[%s203 + $0xc50] sm:$0xff]
        %v666 = vld [vmem:[%s203 + $0xc58] sm:$0xff]
        %v667 = vld [vmem:[%s203 + $0xc60] sm:$0xff]
        %v668 = vld [vmem:[%s203 + $0xc68] sm:$0xff]
        %v669 = vld [vmem:[%s203 + $0xc70] sm:$0xff]
        %v670 = vld [vmem:[%s203 + $0xc78] sm:$0xff]
        %v671 = vld [vmem:[%s203 + $0xc80] sm:$0xff]
        %v672 = vld [vmem:[%s203 + $0xc88] sm:$0xff]
        %v673 = vld [vmem:[%s203 + $0xc90] sm:$0xff]
        %v674 = vld [vmem:[%s203 + $0xc98] sm:$0xff]
        %v675 = vld [vmem:[%s203 + $0xca0] sm:$0xff]
        %v676 = vld [vmem:[%s203 + $0xca8] sm:$0xff]
        %v677 = vld [vmem:[%s203 + $0xcb0] sm:$0xff]
        %v678 = vld [vmem:[%s203 + $0xcb8] sm:$0xff]
        %v679 = vld [vmem:[%s203 + $0xcc0] sm:$0xff]
        %v680 = vld [vmem:[%s203 + $0xcc8] sm:$0xff]
        %v681 = vld [vmem:[%s203 + $0xcd0] sm:$0xff]
        %v682 = vld [vmem:[%s203 + $0xcd8] sm:$0xff]
        %v683 = vld [vmem:[%s203 + $0xce0] sm:$0xff]
        %v684 = vld [vmem:[%s203 + $0xce8] sm:$0xff]
        %v685 = vld [vmem:[%s203 + $0xcf0] sm:$0xff]
        %v686 = vld [vmem:[%s203 + $0xcf8] sm:$0xff]
        %v687 = vld [vmem:[%s203 + $0xd00] sm:$0xff]
        %v688 = vld [vmem:[%s203 + $0xd08] sm:$0xff]
        %v689 = vld [vmem:[%s203 + $0xd10] sm:$0xff]
        %v690 = vld [vmem:[%s203 + $0xd18] sm:$0xff]
        %v691 = vld [vmem:[%s203 + $0xd20] sm:$0xff]
        %v692 = vld [vmem:[%s203 + $0xd28] sm:$0xff]
        %v693 = vld [vmem:[%s203 + $0xd30] sm:$0xff]
        %v694 = vld [vmem:[%s203 + $0xd38] sm:$0xff]
        %v695 = vld [vmem:[%s203 + $0xd40] sm:$0xff]
        %v696 = vld [vmem:[%s203 + $0xd48] sm:$0xff]
        %v697 = vld [vmem:[%s203 + $0xd50] sm:$0xff]
        %v698 = vld [vmem:[%s203 + $0xd58] sm:$0xff]
        %v699 = vld [vmem:[%s203 + $0xd60] sm:$0xff]
        %v700 = vld [vmem:[%s203 + $0xd68] sm:$0xff]
        %v701 = vld [vmem:[%s203 + $0xd70] sm:$0xff]
        %v702 = vld [vmem:[%s203 + $0xd78] sm:$0xff]
        %v703 = vld [vmem:[%s203 + $0xd80] sm:$0xff]
        %v704 = vld [vmem:[%s203 + $0xd88] sm:$0xff]
        %v705 = vld [vmem:[%s203 + $0xd90] sm:$0xff]
        %v706 = vld [vmem:[%s203 + $0xd98] sm:$0xff]
        %v707 = vld [vmem:[%s203 + $0xda0] sm:$0xff]
        %v708 = vld [vmem:[%s203 + $0xda8] sm:$0xff]
        %v709 = vld [vmem:[%s203 + $0xdb0] sm:$0xff]
        %v710 = vld [vmem:[%s203 + $0xdb8] sm:$0xff]
        %v711 = vld [vmem:[%s203 + $0xdc0] sm:$0xff]
        %v712 = vld [vmem:[%s203 + $0xdc8] sm:$0xff]
        %v713 = vld [vmem:[%s203 + $0xdd0] sm:$0xff]
        %v714 = vld [vmem:[%s203 + $0xdd8] sm:$0xff]
        %v715 = vld [vmem:[%s203 + $0xde0] sm:$0xff]
        %v716 = vld [vmem:[%s203 + $0xde8] sm:$0xff]
        %v717 = vld [vmem:[%s203 + $0xdf0] sm:$0xff]
        %v718 = vld [vmem:[%s203 + $0xdf8] sm:$0xff]
        %v719 = vld [vmem:[%s203 + $0xe00] sm:$0xff]
        %v720 = vld [vmem:[%s203 + $0xe08] sm:$0xff]
        %v721 = vld [vmem:[%s203 + $0xe10] sm:$0xff]
        %v722 = vld [vmem:[%s203 + $0xe18] sm:$0xff]
        %v723 = vld [vmem:[%s203 + $0xe20] sm:$0xff]
        %v724 = vld [vmem:[%s203 + $0xe28] sm:$0xff]
        %v725 = vld [vmem:[%s203 + $0xe30] sm:$0xff]
        %v726 = vld [vmem:[%s203 + $0xe38] sm:$0xff]
        %v727 = vld [vmem:[%s203 + $0xe40] sm:$0xff]
        %v728 = vld [vmem:[%s203 + $0xe48] sm:$0xff]
        %v729 = vld [vmem:[%s203 + $0xe50] sm:$0xff]
        %v730 = vld [vmem:[%s203 + $0xe58] sm:$0xff]
        %v731 = vld [vmem:[%s203 + $0xe60] sm:$0xff]
        %v732 = vld [vmem:[%s203 + $0xe68] sm:$0xff]
        %v733 = vld [vmem:[%s203 + $0xe70] sm:$0xff]
        %v734 = vld [vmem:[%s203 + $0xe78] sm:$0xff]
        %v735 = vld [vmem:[%s203 + $0xe80] sm:$0xff]
        %v736 = vld [vmem:[%s203 + $0xe88] sm:$0xff]
        %v737 = vld [vmem:[%s203 + $0xe90] sm:$0xff]
        %v738 = vld [vmem:[%s203 + $0xe98] sm:$0xff]
        %v739 = vld [vmem:[%s203 + $0xea0] sm:$0xff]
        %v740 = vld [vmem:[%s203 + $0xea8] sm:$0xff]
        %v741 = vld [vmem:[%s203 + $0xeb0] sm:$0xff]
        %v742 = vld [vmem:[%s203 + $0xeb8] sm:$0xff]
        %v743 = vld [vmem:[%s203 + $0xec0] sm:$0xff]
        %v744 = vld [vmem:[%s203 + $0xec8] sm:$0xff]
        %v745 = vld [vmem:[%s203 + $0xed0] sm:$0xff]
        %v746 = vld [vmem:[%s203 + $0xed8] sm:$0xff]
        %v747 = vld [vmem:[%s203 + $0xee0] sm:$0xff]
        %v748 = vld [vmem:[%s203 + $0xee8] sm:$0xff]
        %v749 = vld [vmem:[%s203 + $0xef0] sm:$0xff]
        %v750 = vld [vmem:[%s203 + $0xef8] sm:$0xff]
        %v751 = vld [vmem:[%s203 + $0xf00] sm:$0xff]
        %v752 = vld [vmem:[%s203 + $0xf08] sm:$0xff]
        %v753 = vld [vmem:[%s203 + $0xf10] sm:$0xff]
        %v754 = vld [vmem:[%s203 + $0xf18] sm:$0xff]
        %v755 = vld [vmem:[%s203 + $0xf20] sm:$0xff]
        %v756 = vld [vmem:[%s203 + $0xf28] sm:$0xff]
        %v757 = vld [vmem:[%s203 + $0xf30] sm:$0xff]
        %v758 = vld [vmem:[%s203 + $0xf38] sm:$0xff]
        %v759 = vld [vmem:[%s203 + $0xf40] sm:$0xff]
        %v760 = vld [vmem:[%s203 + $0xf48] sm:$0xff]
        %v761 = vld [vmem:[%s203 + $0xf50] sm:$0xff]
        %v762 = vld [vmem:[%s203 + $0xf58] sm:$0xff]
        %v763 = vld [vmem:[%s203 + $0xf60] sm:$0xff]
        %v764 = vld [vmem:[%s203 + $0xf68] sm:$0xff]
        %v765 = vld [vmem:[%s203 + $0xf70] sm:$0xff]
        %v766 = vld [vmem:[%s203 + $0xf78] sm:$0xff]
        %v767 = vld [vmem:[%s203 + $0xf80] sm:$0xff]
        %v768 = vld [vmem:[%s203 + $0xf88] sm:$0xff]
        %v769 = vld [vmem:[%s203 + $0xf90] sm:$0xff]
        %v770 = vld [vmem:[%s203 + $0xf98] sm:$0xff]
        %v771 = vld [vmem:[%s203 + $0xfa0] sm:$0xff]
        %v772 = vld [vmem:[%s203 + $0xfa8] sm:$0xff]
        %v773 = vld [vmem:[%s203 + $0xfb0] sm:$0xff]
        %v774 = vld [vmem:[%s203 + $0xfb8] sm:$0xff]
        %v775 = vld [vmem:[%s203 + $0xfc0] sm:$0xff]
        %v776 = vld [vmem:[%s203 + $0xfc8] sm:$0xff]
        %v777 = vld [vmem:[%s203 + $0xfd0] sm:$0xff]
        %v778 = vld [vmem:[%s203 + $0xfd8] sm:$0xff]
        %v779 = vld [vmem:[%s203 + $0xfe0] sm:$0xff]
        %v780 = vld [vmem:[%s203 + $0xfe8] sm:$0xff]
        %v781 = vld [vmem:[%s203 + $0xff0] sm:$0xff]
        %v782 = vld [vmem:[%s203 + $0xff8] sm:$0xff]
        %v783 = vld [vmem:[%s203 + $0x1000] sm:$0xff]
        %v784 = vld [vmem:[%s203 + $0x1008] sm:$0xff]
        %v785 = vld [vmem:[%s203 + $0x1010] sm:$0xff]
        %v786 = vld [vmem:[%s203 + $0x1018] sm:$0xff]
        %v787 = vld [vmem:[%s203 + $0x1020] sm:$0xff]
        %v788 = vld [vmem:[%s203 + $0x1028] sm:$0xff]
        %v789 = vld [vmem:[%s203 + $0x1030] sm:$0xff]
        %v790 = vld [vmem:[%s203 + $0x1038] sm:$0xff]
        %v791 = vld [vmem:[%s203 + $0x1040] sm:$0xff]
        %v792 = vld [vmem:[%s203 + $0x1048] sm:$0xff]
        %v793 = vld [vmem:[%s203 + $0x1050] sm:$0xff]
        %v794 = vld [vmem:[%s203 + $0x1058] sm:$0xff]
        %v795 = vld [vmem:[%s203 + $0x1060] sm:$0xff]
        %v796 = vld [vmem:[%s203 + $0x1068] sm:$0xff]
        %v797 = vld [vmem:[%s203 + $0x1070] sm:$0xff]
        %v798 = vld [vmem:[%s203 + $0x1078] sm:$0xff]
        %v799 = vld [vmem:[%s203 + $0x1080] sm:$0xff]
        %v800 = vld [vmem:[%s203 + $0x1088] sm:$0xff]
        %v801 = vld [vmem:[%s203 + $0x1090] sm:$0xff]
        %v802 = vld [vmem:[%s203 + $0x1098] sm:$0xff]
        %v803 = vld [vmem:[%s203 + $0x10a0] sm:$0xff]
        %v804 = vld [vmem:[%s203 + $0x10a8] sm:$0xff]
        %v805 = vld [vmem:[%s203 + $0x10b0] sm:$0xff]
        %v806 = vld [vmem:[%s203 + $0x10b8] sm:$0xff]
        %v807 = vld [vmem:[%s203 + $0x10c0] sm:$0xff]
        %v808 = vld [vmem:[%s203 + $0x10c8] sm:$0xff]
        %v809 = vld [vmem:[%s203 + $0x10d0] sm:$0xff]
        %v810 = vld [vmem:[%s203 + $0x10d8] sm:$0xff]
        %v811 = vld [vmem:[%s203 + $0x10e0] sm:$0xff]
        %v812 = vld [vmem:[%s203 + $0x10e8] sm:$0xff]
        %v813 = vld [vmem:[%s203 + $0x10f0] sm:$0xff]
        %v814 = vld [vmem:[%s203 + $0x10f8] sm:$0xff]
        %v815 = vld [vmem:[%s203 + $0x1100] sm:$0xff]
        %v816 = vld [vmem:[%s203 + $0x1108] sm:$0xff]
        %v817 = vld [vmem:[%s203 + $0x1110] sm:$0xff]
        %v818 = vld [vmem:[%s203 + $0x1118] sm:$0xff]
        %v819 = vld [vmem:[%s203 + $0x1120] sm:$0xff]
        %v820 = vld [vmem:[%s203 + $0x1128] sm:$0xff]
        %v821 = vld [vmem:[%s203 + $0x1130] sm:$0xff]
        %v822 = vld [vmem:[%s203 + $0x1138] sm:$0xff]
        %v823 = vld [vmem:[%s203 + $0x1140] sm:$0xff]
        %v824 = vld [vmem:[%s203 + $0x1148] sm:$0xff]
        %v825 = vld [vmem:[%s203 + $0x1150] sm:$0xff]
        %v826 = vld [vmem:[%s203 + $0x1158] sm:$0xff]
        %v827 = vld [vmem:[%s203 + $0x1160] sm:$0xff]
        %v828 = vld [vmem:[%s203 + $0x1168] sm:$0xff]
        %v829 = vld [vmem:[%s203 + $0x1170] sm:$0xff]
        %v830 = vld [vmem:[%s203 + $0x1178] sm:$0xff]
        %v831 = vld [vmem:[%s203 + $0x1180] sm:$0xff]
        %v832 = vld [vmem:[%s203 + $0x1188] sm:$0xff]
        %v833 = vld [vmem:[%s203 + $0x1190] sm:$0xff]
        %v834 = vld [vmem:[%s203 + $0x1198] sm:$0xff]
        %v835 = vld [vmem:[%s203 + $0x11a0] sm:$0xff]
        %v836 = vld [vmem:[%s203 + $0x11a8] sm:$0xff]
        %v837 = vld [vmem:[%s203 + $0x11b0] sm:$0xff]
        %v838 = vld [vmem:[%s203 + $0x11b8] sm:$0xff]
        %v839 = vld [vmem:[%s203 + $0x11c0] sm:$0xff]
        %v840 = vld [vmem:[%s203 + $0x11c8] sm:$0xff]
        %v841 = vld [vmem:[%s203 + $0x11d0] sm:$0xff]
        %v842 = vld [vmem:[%s203 + $0x11d8] sm:$0xff]
        %v843 = vld [vmem:[%s203 + $0x11e0] sm:$0xff]
        %v844 = vld [vmem:[%s203 + $0x11e8] sm:$0xff]
        %v845 = vld [vmem:[%s203 + $0x11f0] sm:$0xff]
        %v846 = vld [vmem:[%s203 + $0x11f8] sm:$0xff]
        %v847 = vld [vmem:[%s203 + $0x1200] sm:$0xff]
        %v848 = vld [vmem:[%s203 + $0x1208] sm:$0xff]
        %v849 = vld [vmem:[%s203 + $0x1210] sm:$0xff]
        %v850 = vld [vmem:[%s203 + $0x1218] sm:$0xff]
        %v851 = vld [vmem:[%s203 + $0x1220] sm:$0xff]
        %v852 = vld [vmem:[%s203 + $0x1228] sm:$0xff]
        %v853 = vld [vmem:[%s203 + $0x1230] sm:$0xff]
        %v854 = vld [vmem:[%s203 + $0x1238] sm:$0xff]
        %v855 = vld [vmem:[%s203 + $0x1240] sm:$0xff]
        %v856 = vld [vmem:[%s203 + $0x1248] sm:$0xff]
        %v857 = vld [vmem:[%s203 + $0x1250] sm:$0xff]
        %v858 = vld [vmem:[%s203 + $0x1258] sm:$0xff]
        %v859 = vld [vmem:[%s203 + $0x1260] sm:$0xff]
        %v860 = vld [vmem:[%s203 + $0x1268] sm:$0xff]
        %v861 = vld [vmem:[%s203 + $0x1270] sm:$0xff]
        %v862 = vld [vmem:[%s203 + $0x1278] sm:$0xff]
        %v863 = vld [vmem:[%s203 + $0x1280] sm:$0xff]
        %v864 = vld [vmem:[%s203 + $0x1288] sm:$0xff]
        %v865 = vld [vmem:[%s203 + $0x1290] sm:$0xff]
        %v866 = vld [vmem:[%s203 + $0x1298] sm:$0xff]
        %v867 = vld [vmem:[%s203 + $0x12a0] sm:$0xff]
        %v868 = vld [vmem:[%s203 + $0x12a8] sm:$0xff]
        %v869 = vld [vmem:[%s203 + $0x12b0] sm:$0xff]
        %v870 = vld [vmem:[%s203 + $0x12b8] sm:$0xff]
        %v871 = vld [vmem:[%s203 + $0x12c0] sm:$0xff]
        %v872 = vld [vmem:[%s203 + $0x12c8] sm:$0xff]
        %v873 = vld [vmem:[%s203 + $0x12d0] sm:$0xff]
        %v874 = vld [vmem:[%s203 + $0x12d8] sm:$0xff]
        %v875 = vld [vmem:[%s203 + $0x12e0] sm:$0xff]
        %v876 = vld [vmem:[%s203 + $0x12e8] sm:$0xff]
        %v877 = vld [vmem:[%s203 + $0x12f0] sm:$0xff]
        %v878 = vld [vmem:[%s203 + $0x12f8] sm:$0xff]
        %v879 = vld [vmem:[%s203 + $0x1300] sm:$0xff]
        %v880 = vld [vmem:[%s203 + $0x1308] sm:$0xff]
        %v881 = vld [vmem:[%s203 + $0x1310] sm:$0xff]
        %v882 = vld [vmem:[%s203 + $0x1318] sm:$0xff]
        %v883 = vld [vmem:[%s203 + $0x1320] sm:$0xff]
        %v884 = vld [vmem:[%s203 + $0x1328] sm:$0xff]
        %v885 = vld [vmem:[%s203 + $0x1330] sm:$0xff]
        %v886 = vld [vmem:[%s203 + $0x1338] sm:$0xff]
        %v887 = vld [vmem:[%s203 + $0x1340] sm:$0xff]
        %v888 = vld [vmem:[%s203 + $0x1348] sm:$0xff]
        %v889 = vld [vmem:[%s203 + $0x1350] sm:$0xff]
        %v890 = vld [vmem:[%s203 + $0x1358] sm:$0xff]
        %v891 = vld [vmem:[%s203 + $0x1360] sm:$0xff]
        %v892 = vld [vmem:[%s203 + $0x1368] sm:$0xff]
        %v893 = vld [vmem:[%s203 + $0x1370] sm:$0xff]
        %v894 = vld [vmem:[%s203 + $0x1378] sm:$0xff]
        %v895 = vld [vmem:[%s203 + $0x1380] sm:$0xff]
        %v896 = vld [vmem:[%s203 + $0x1388] sm:$0xff]
        %v897 = vld [vmem:[%s203 + $0x1390] sm:$0xff]
        %v898 = vld [vmem:[%s203 + $0x1398] sm:$0xff]
        %v899 = vld [vmem:[%s203 + $0x13a0] sm:$0xff]
        %v900 = vld [vmem:[%s203 + $0x13a8] sm:$0xff]
        %v901 = vld [vmem:[%s203 + $0x13b0] sm:$0xff]
        %v902 = vld [vmem:[%s203 + $0x13b8] sm:$0xff]
        %v903 = vld [vmem:[%s203 + $0x13c0] sm:$0xff]
        %v904 = vld [vmem:[%s203 + $0x13c8] sm:$0xff]
        %v905 = vld [vmem:[%s203 + $0x13d0] sm:$0xff]
        %v906 = vld [vmem:[%s203 + $0x13d8] sm:$0xff]
        %v907 = vld [vmem:[%s203 + $0x13e0] sm:$0xff]
        %v908 = vld [vmem:[%s203 + $0x13e8] sm:$0xff]
        %v909 = vld [vmem:[%s203 + $0x13f0] sm:$0xff]
        %v910 = vld [vmem:[%s203 + $0x13f8] sm:$0xff]
        %v911 = vld [vmem:[%s203 + $0x1400] sm:$0xff]
        %v912 = vld [vmem:[%s203 + $0x1408] sm:$0xff]
        %v913 = vld [vmem:[%s203 + $0x1410] sm:$0xff]
        %v914 = vld [vmem:[%s203 + $0x1418] sm:$0xff]
        %v915 = vld [vmem:[%s203 + $0x1420] sm:$0xff]
        %v916 = vld [vmem:[%s203 + $0x1428] sm:$0xff]
        %v917 = vld [vmem:[%s203 + $0x1430] sm:$0xff]
        %v918 = vld [vmem:[%s203 + $0x1438] sm:$0xff]
        %v919 = vld [vmem:[%s203 + $0x1440] sm:$0xff]
        %v920 = vld [vmem:[%s203 + $0x1448] sm:$0xff]
        %v921 = vld [vmem:[%s203 + $0x1450] sm:$0xff]
        %v922 = vld [vmem:[%s203 + $0x1458] sm:$0xff]
        %v923 = vld [vmem:[%s203 + $0x1460] sm:$0xff]
        %v924 = vld [vmem:[%s203 + $0x1468] sm:$0xff]
        %v925 = vld [vmem:[%s203 + $0x1470] sm:$0xff]
        %v926 = vld [vmem:[%s203 + $0x1478] sm:$0xff]
        %v927 = vld [vmem:[%s203 + $0x1480] sm:$0xff]
        %v928 = vld [vmem:[%s203 + $0x1488] sm:$0xff]
        %v929 = vld [vmem:[%s203 + $0x1490] sm:$0xff]
        %v930 = vld [vmem:[%s203 + $0x1498] sm:$0xff]
        %v931 = vld [vmem:[%s203 + $0x14a0] sm:$0xff]
        %v932 = vld [vmem:[%s203 + $0x14a8] sm:$0xff]
        %v933 = vld [vmem:[%s203 + $0x14b0] sm:$0xff]
        %v934 = vld [vmem:[%s203 + $0x14b8] sm:$0xff]
        %v935 = vld [vmem:[%s203 + $0x14c0] sm:$0xff]
        %v936 = vld [vmem:[%s203 + $0x14c8] sm:$0xff]
        %v937 = vld [vmem:[%s203 + $0x14d0] sm:$0xff]
        %v938 = vld [vmem:[%s203 + $0x14d8] sm:$0xff]
        %v939 = vld [vmem:[%s203 + $0x14e0] sm:$0xff]
        %v940 = vld [vmem:[%s203 + $0x14e8] sm:$0xff]
        %v941 = vld [vmem:[%s203 + $0x14f0] sm:$0xff]
        %v942 = vld [vmem:[%s203 + $0x14f8] sm:$0xff]
        %v943 = vld [vmem:[%s203 + $0x1500] sm:$0xff]
        %v944 = vld [vmem:[%s203 + $0x1508] sm:$0xff]
        %v945 = vld [vmem:[%s203 + $0x1510] sm:$0xff]
        %v946 = vld [vmem:[%s203 + $0x1518] sm:$0xff]
        %v947 = vld [vmem:[%s203 + $0x1520] sm:$0xff]
        %v948 = vld [vmem:[%s203 + $0x1528] sm:$0xff]
        %v949 = vld [vmem:[%s203 + $0x1530] sm:$0xff]
        %v950 = vld [vmem:[%s203 + $0x1538] sm:$0xff]
        %v951 = vld [vmem:[%s203 + $0x1540] sm:$0xff]
        %v952 = vld [vmem:[%s203 + $0x1548] sm:$0xff]
        %v953 = vld [vmem:[%s203 + $0x1550] sm:$0xff]
        %v954 = vld [vmem:[%s203 + $0x1558] sm:$0xff]
        %v955 = vld [vmem:[%s203 + $0x1560] sm:$0xff]
        %v956 = vld [vmem:[%s203 + $0x1568] sm:$0xff]
        %v957 = vld [vmem:[%s203 + $0x1570] sm:$0xff]
        %v958 = vld [vmem:[%s203 + $0x1578] sm:$0xff]
        %v959 = vld [vmem:[%s203 + $0x1580] sm:$0xff]
        %v960 = vld [vmem:[%s203 + $0x1588] sm:$0xff]
        %v961 = vld [vmem:[%s203 + $0x1590] sm:$0xff]
        %v962 = vld [vmem:[%s203 + $0x1598] sm:$0xff]
        %v963 = vld [vmem:[%s203 + $0x15a0] sm:$0xff]
        %v964 = vld [vmem:[%s203 + $0x15a8] sm:$0xff]
        %v965 = vld [vmem:[%s203 + $0x15b0] sm:$0xff]
        %v966 = vld [vmem:[%s203 + $0x15b8] sm:$0xff]
        %v967 = vld [vmem:[%s203 + $0x15c0] sm:$0xff]
        %v968 = vld [vmem:[%s203 + $0x15c8] sm:$0xff]
        %v969 = vld [vmem:[%s203 + $0x15d0] sm:$0xff]
        %v970 = vld [vmem:[%s203 + $0x15d8] sm:$0xff]
        %v971 = vld [vmem:[%s203 + $0x15e0] sm:$0xff]
        %v972 = vld [vmem:[%s203 + $0x15e8] sm:$0xff]
        %v973 = vld [vmem:[%s203 + $0x15f0] sm:$0xff]
        %v974 = vld [vmem:[%s203 + $0x15f8] sm:$0xff]
        %v975 = vld [vmem:[%s203 + $0x1600] sm:$0xff]
        %v976 = vld [vmem:[%s203 + $0x1608] sm:$0xff]
        %v977 = vld [vmem:[%s203 + $0x1610] sm:$0xff]
        %v978 = vld [vmem:[%s203 + $0x1618] sm:$0xff]
        %v979 = vld [vmem:[%s203 + $0x1620] sm:$0xff]
        %v980 = vld [vmem:[%s203 + $0x1628] sm:$0xff]
        %v981 = vld [vmem:[%s203 + $0x1630] sm:$0xff]
        %v982 = vld [vmem:[%s203 + $0x1638] sm:$0xff]
        %v983 = vld [vmem:[%s203 + $0x1640] sm:$0xff]
        %v984 = vld [vmem:[%s203 + $0x1648] sm:$0xff]
        %v985 = vld [vmem:[%s203 + $0x1650] sm:$0xff]
        %v986 = vld [vmem:[%s203 + $0x1658] sm:$0xff]
        %v987 = vld [vmem:[%s203 + $0x1660] sm:$0xff]
        %v988 = vld [vmem:[%s203 + $0x1668] sm:$0xff]
        %v989 = vld [vmem:[%s203 + $0x1670] sm:$0xff]
        %v990 = vld [vmem:[%s203 + $0x1678] sm:$0xff]
        %v991 = vld [vmem:[%s203 + $0x1680] sm:$0xff]
        %v992 = vld [vmem:[%s203 + $0x1688] sm:$0xff]
        %v993 = vld [vmem:[%s203 + $0x1690] sm:$0xff]
        %v994 = vld [vmem:[%s203 + $0x1698] sm:$0xff]
        %v995 = vld [vmem:[%s203 + $0x16a0] sm:$0xff]
        %v996 = vld [vmem:[%s203 + $0x16a8] sm:$0xff]
        %v997 = vld [vmem:[%s203 + $0x16b0] sm:$0xff]
        %v998 = vld [vmem:[%s203 + $0x16b8] sm:$0xff]
        %v999 = vld [vmem:[%s203 + $0x16c0] sm:$0xff]
        %v1000 = vld [vmem:[%s203 + $0x16c8] sm:$0xff]
        %v1001 = vld [vmem:[%s203 + $0x16d0] sm:$0xff]
        %v1002 = vld [vmem:[%s203 + $0x16d8] sm:$0xff]
        %v1003 = vld [vmem:[%s203 + $0x16e0] sm:$0xff]
        %v1004 = vld [vmem:[%s203 + $0x16e8] sm:$0xff]
        %v1005 = vld [vmem:[%s203 + $0x16f0] sm:$0xff]
        %v1006 = vld [vmem:[%s203 + $0x16f8] sm:$0xff]
        %v1007 = vld [vmem:[%s203 + $0x1700] sm:$0xff]
        %v1008 = vld [vmem:[%s203 + $0x1708] sm:$0xff]
        %v1009 = vld [vmem:[%s203 + $0x1710] sm:$0xff]
        %v1010 = vld [vmem:[%s203 + $0x1718] sm:$0xff]
        %v1011 = vld [vmem:[%s203 + $0x1720] sm:$0xff]
        %v1012 = vld [vmem:[%s203 + $0x1728] sm:$0xff]
        %v1013 = vld [vmem:[%s203 + $0x1730] sm:$0xff]
        %v1014 = vld [vmem:[%s203 + $0x1738] sm:$0xff]
        %v1015 = vld [vmem:[%s203 + $0x1740] sm:$0xff]
        %v1016 = vld [vmem:[%s203 + $0x1748] sm:$0xff]
        %v1017 = vld [vmem:[%s203 + $0x1750] sm:$0xff]
        %v1018 = vld [vmem:[%s203 + $0x1758] sm:$0xff]
        %v1019 = vld [vmem:[%s203 + $0x1760] sm:$0xff]
        %v1020 = vld [vmem:[%s203 + $0x1768] sm:$0xff]
        %v1021 = vld [vmem:[%s203 + $0x1770] sm:$0xff]
        %v1022 = vld [vmem:[%s203 + $0x1778] sm:$0xff]
        %v1023 = vld [vmem:[%s203 + $0x1780] sm:$0xff]
        %v1024 = vld [vmem:[%s203 + $0x1788] sm:$0xff]
        %v1025 = vld [vmem:[%s203 + $0x1790] sm:$0xff]
        %v1026 = vld [vmem:[%s203 + $0x1798] sm:$0xff]
        %v1027 = vld [vmem:[%s203 + $0x17a0] sm:$0xff]
        %v1028 = vld [vmem:[%s203 + $0x17a8] sm:$0xff]
        %v1029 = vld [vmem:[%s203 + $0x17b0] sm:$0xff]
        %v1030 = vld [vmem:[%s203 + $0x17b8] sm:$0xff]
        %v1031 = vld [vmem:[%s203 + $0x17c0] sm:$0xff]
        %v1032 = vld [vmem:[%s203 + $0x17c8] sm:$0xff]
        %v1033 = vld [vmem:[%s203 + $0x17d0] sm:$0xff]
        %v1034 = vld [vmem:[%s203 + $0x17d8] sm:$0xff]
        %v1035 = vld [vmem:[%s203 + $0x17e0] sm:$0xff]
        %v1036 = vld [vmem:[%s203 + $0x17e8] sm:$0xff]
        %v1037 = vld [vmem:[%s203 + $0x17f0] sm:$0xff]
        %v1038 = vld [vmem:[%s203 + $0x17f8] sm:$0xff]
        %v1039 = vld [vmem:[%s203 + $0x1800] sm:$0xff]
        %v1040 = vld [vmem:[%s203 + $0x1808] sm:$0xff]
        %v1041 = vld [vmem:[%s203 + $0x1810] sm:$0xff]
        %v1042 = vld [vmem:[%s203 + $0x1818] sm:$0xff]
        %v1043 = vld [vmem:[%s203 + $0x1820] sm:$0xff]
        %v1044 = vld [vmem:[%s203 + $0x1828] sm:$0xff]
        %v1045 = vld [vmem:[%s203 + $0x1830] sm:$0xff]
        %v1046 = vld [vmem:[%s203 + $0x1838] sm:$0xff]
        %v1047 = vld [vmem:[%s203 + $0x1840] sm:$0xff]
        %v1048 = vld [vmem:[%s203 + $0x1848] sm:$0xff]
        %v1049 = vld [vmem:[%s203 + $0x1850] sm:$0xff]
        %v1050 = vld [vmem:[%s203 + $0x1858] sm:$0xff]
        %v1051 = vld [vmem:[%s203 + $0x1860] sm:$0xff]
        %v1052 = vld [vmem:[%s203 + $0x1868] sm:$0xff]
        %v1053 = vld [vmem:[%s203 + $0x1870] sm:$0xff]
        %v1054 = vld [vmem:[%s203 + $0x1878] sm:$0xff]
        %v1055 = vld [vmem:[%s203 + $0x1880] sm:$0xff]
        %v1056 = vld [vmem:[%s203 + $0x1888] sm:$0xff]
        %v1057 = vld [vmem:[%s203 + $0x1890] sm:$0xff]
        %v1058 = vld [vmem:[%s203 + $0x1898] sm:$0xff]
        %v1059 = vld [vmem:[%s203 + $0x18a0] sm:$0xff]
        %v1060 = vld [vmem:[%s203 + $0x18a8] sm:$0xff]
        %v1061 = vld [vmem:[%s203 + $0x18b0] sm:$0xff]
        %v1062 = vld [vmem:[%s203 + $0x18b8] sm:$0xff]
        %v1063 = vld [vmem:[%s203 + $0x18c0] sm:$0xff]
        %v1064 = vld [vmem:[%s203 + $0x18c8] sm:$0xff]
        %v1065 = vld [vmem:[%s203 + $0x18d0] sm:$0xff]
        %v1066 = vld [vmem:[%s203 + $0x18d8] sm:$0xff]
        %v1067 = vld [vmem:[%s203 + $0x18e0] sm:$0xff]
        %v1068 = vld [vmem:[%s203 + $0x18e8] sm:$0xff]
        %v1069 = vld [vmem:[%s203 + $0x18f0] sm:$0xff]
        %v1070 = vld [vmem:[%s203 + $0x18f8] sm:$0xff]
        %v1071 = vld [vmem:[%s203 + $0x1900] sm:$0xff]
        %v1072 = vld [vmem:[%s203 + $0x1908] sm:$0xff]
        %v1073 = vld [vmem:[%s203 + $0x1910] sm:$0xff]
        %v1074 = vld [vmem:[%s203 + $0x1918] sm:$0xff]
        %v1075 = vld [vmem:[%s203 + $0x1920] sm:$0xff]
        %v1076 = vld [vmem:[%s203 + $0x1928] sm:$0xff]
        %v1077 = vld [vmem:[%s203 + $0x1930] sm:$0xff]
        %v1078 = vld [vmem:[%s203 + $0x1938] sm:$0xff]
        %v1079 = vld [vmem:[%s203 + $0x1940] sm:$0xff]
        %v1080 = vld [vmem:[%s203 + $0x1948] sm:$0xff]
        %v1081 = vld [vmem:[%s203 + $0x1950] sm:$0xff]
        %v1082 = vld [vmem:[%s203 + $0x1958] sm:$0xff]
        %v1083 = vld [vmem:[%s203 + $0x1960] sm:$0xff]
        %v1084 = vld [vmem:[%s203 + $0x1968] sm:$0xff]
        %v1085 = vld [vmem:[%s203 + $0x1970] sm:$0xff]
        %v1086 = vld [vmem:[%s203 + $0x1978] sm:$0xff]
        %v1087 = vld [vmem:[%s203 + $0x1980] sm:$0xff]
        %v1088 = vld [vmem:[%s203 + $0x1988] sm:$0xff]
        %v1089 = vld [vmem:[%s203 + $0x1990] sm:$0xff]
        %v1090 = vld [vmem:[%s203 + $0x1998] sm:$0xff]
        %v1091 = vld [vmem:[%s203 + $0x19a0] sm:$0xff]
        %v1092 = vld [vmem:[%s203 + $0x19a8] sm:$0xff]
        %v1093 = vld [vmem:[%s203 + $0x19b0] sm:$0xff]
        %v1094 = vld [vmem:[%s203 + $0x19b8] sm:$0xff]
        %v1095 = vld [vmem:[%s203 + $0x19c0] sm:$0xff]
        %v1096 = vld [vmem:[%s203 + $0x19c8] sm:$0xff]
        %v1097 = vld [vmem:[%s203 + $0x19d0] sm:$0xff]
        %v1098 = vld [vmem:[%s203 + $0x19d8] sm:$0xff]
        %v1099 = vld [vmem:[%s203 + $0x19e0] sm:$0xff]
        %v1100 = vld [vmem:[%s203 + $0x19e8] sm:$0xff]
        %v1101 = vld [vmem:[%s203 + $0x19f0] sm:$0xff]
        %v1102 = vld [vmem:[%s203 + $0x19f8] sm:$0xff]
        %v1103 = vld [vmem:[%s203 + $0x1a00] sm:$0xff]
        %v1104 = vld [vmem:[%s203 + $0x1a08] sm:$0xff]
        %v1105 = vld [vmem:[%s203 + $0x1a10] sm:$0xff]
        %v1106 = vld [vmem:[%s203 + $0x1a18] sm:$0xff]
        %v1107 = vld [vmem:[%s203 + $0x1a20] sm:$0xff]
        %v1108 = vld [vmem:[%s203 + $0x1a28] sm:$0xff]
        %v1109 = vld [vmem:[%s203 + $0x1a30] sm:$0xff]
        %v1110 = vld [vmem:[%s203 + $0x1a38] sm:$0xff]
        %v1111 = vld [vmem:[%s203 + $0x1a40] sm:$0xff]
        %v1112 = vld [vmem:[%s203 + $0x1a48] sm:$0xff]
        %v1113 = vld [vmem:[%s203 + $0x1a50] sm:$0xff]
        %v1114 = vld [vmem:[%s203 + $0x1a58] sm:$0xff]
        %v1115 = vld [vmem:[%s203 + $0x1a60] sm:$0xff]
        %v1116 = vld [vmem:[%s203 + $0x1a68] sm:$0xff]
        %v1117 = vld [vmem:[%s203 + $0x1a70] sm:$0xff]
        %v1118 = vld [vmem:[%s203 + $0x1a78] sm:$0xff]
        %v1119 = vld [vmem:[%s203 + $0x1a80] sm:$0xff]
        %v1120 = vld [vmem:[%s203 + $0x1a88] sm:$0xff]
        %v1121 = vld [vmem:[%s203 + $0x1a90] sm:$0xff]
        %v1122 = vld [vmem:[%s203 + $0x1a98] sm:$0xff]
        %v1123 = vld [vmem:[%s203 + $0x1aa0] sm:$0xff]
        %v1124 = vld [vmem:[%s203 + $0x1aa8] sm:$0xff]
        %v1125 = vld [vmem:[%s203 + $0x1ab0] sm:$0xff]
        %v1126 = vld [vmem:[%s203 + $0x1ab8] sm:$0xff]
        %v1127 = vld [vmem:[%s203 + $0x1ac0] sm:$0xff]
        %v1128 = vld [vmem:[%s203 + $0x1ac8] sm:$0xff]
        %v1129 = vld [vmem:[%s203 + $0x1ad0] sm:$0xff]
        %v1130 = vld [vmem:[%s203 + $0x1ad8] sm:$0xff]
        %v1131 = vld [vmem:[%s203 + $0x1ae0] sm:$0xff]
        %v1132 = vld [vmem:[%s203 + $0x1ae8] sm:$0xff]
        %v1133 = vld [vmem:[%s203 + $0x1af0] sm:$0xff]
        %v1134 = vld [vmem:[%s203 + $0x1af8] sm:$0xff]
        %v1135 = vld [vmem:[%s203 + $0x1b00] sm:$0xff]
        %v1136 = vld [vmem:[%s203 + $0x1b08] sm:$0xff]
        %v1137 = vld [vmem:[%s203 + $0x1b10] sm:$0xff]
        %v1138 = vld [vmem:[%s203 + $0x1b18] sm:$0xff]
        %v1139 = vld [vmem:[%s203 + $0x1b20] sm:$0xff]
        %v1140 = vld [vmem:[%s203 + $0x1b28] sm:$0xff]
        %v1141 = vld [vmem:[%s203 + $0x1b30] sm:$0xff]
        %v1142 = vld [vmem:[%s203 + $0x1b38] sm:$0xff]
        %v1143 = vld [vmem:[%s203 + $0x1b40] sm:$0xff]
        %v1144 = vld [vmem:[%s203 + $0x1b48] sm:$0xff]
        %v1145 = vld [vmem:[%s203 + $0x1b50] sm:$0xff]
        %v1146 = vld [vmem:[%s203 + $0x1b58] sm:$0xff]
        %v1147 = vld [vmem:[%s203 + $0x1b60] sm:$0xff]
        %v1148 = vld [vmem:[%s203 + $0x1b68] sm:$0xff]
        %v1149 = vld [vmem:[%s203 + $0x1b70] sm:$0xff]
        %v1150 = vld [vmem:[%s203 + $0x1b78] sm:$0xff]
        %v1151 = vld [vmem:[%s203 + $0x1b80] sm:$0xff]
        %v1152 = vld [vmem:[%s203 + $0x1b88] sm:$0xff]
        %v1153 = vld [vmem:[%s203 + $0x1b90] sm:$0xff]
        %v1154 = vld [vmem:[%s203 + $0x1b98] sm:$0xff]
        %v1155 = vld [vmem:[%s203 + $0x1ba0] sm:$0xff]
        %v1156 = vld [vmem:[%s203 + $0x1ba8] sm:$0xff]
        %v1157 = vld [vmem:[%s203 + $0x1bb0] sm:$0xff]
        %v1158 = vld [vmem:[%s203 + $0x1bb8] sm:$0xff]
        %v1159 = vld [vmem:[%s203 + $0x1bc0] sm:$0xff]
        %v1160 = vld [vmem:[%s203 + $0x1bc8] sm:$0xff]
        %v1161 = vld [vmem:[%s203 + $0x1bd0] sm:$0xff]
        %v1162 = vld [vmem:[%s203 + $0x1bd8] sm:$0xff]
        %v1163 = vld [vmem:[%s203 + $0x1be0] sm:$0xff]
        %v1164 = vld [vmem:[%s203 + $0x1be8] sm:$0xff]
        %v1165 = vld [vmem:[%s203 + $0x1bf0] sm:$0xff]
        %v1166 = vld [vmem:[%s203 + $0x1bf8] sm:$0xff]
        %v1167 = vld [vmem:[%s203 + $0x1c00] sm:$0xff]
        %v1168 = vld [vmem:[%s203 + $0x1c08] sm:$0xff]
        %v1169 = vld [vmem:[%s203 + $0x1c10] sm:$0xff]
        %v1170 = vld [vmem:[%s203 + $0x1c18] sm:$0xff]
        %v1171 = vld [vmem:[%s203 + $0x1c20] sm:$0xff]
        %v1172 = vld [vmem:[%s203 + $0x1c28] sm:$0xff]
        %v1173 = vld [vmem:[%s203 + $0x1c30] sm:$0xff]
        %v1174 = vld [vmem:[%s203 + $0x1c38] sm:$0xff]
        %v1175 = vld [vmem:[%s203 + $0x1c40] sm:$0xff]
        %v1176 = vld [vmem:[%s203 + $0x1c48] sm:$0xff]
        %v1177 = vld [vmem:[%s203 + $0x1c50] sm:$0xff]
        %v1178 = vld [vmem:[%s203 + $0x1c58] sm:$0xff]
        %v1179 = vld [vmem:[%s203 + $0x1c60] sm:$0xff]
        %v1180 = vld [vmem:[%s203 + $0x1c68] sm:$0xff]
        %v1181 = vld [vmem:[%s203 + $0x1c70] sm:$0xff]
        %v1182 = vld [vmem:[%s203 + $0x1c78] sm:$0xff]
        %v1183 = vld [vmem:[%s203 + $0x1c80] sm:$0xff]
        %v1184 = vld [vmem:[%s203 + $0x1c88] sm:$0xff]
        %v1185 = vld [vmem:[%s203 + $0x1c90] sm:$0xff]
        %v1186 = vld [vmem:[%s203 + $0x1c98] sm:$0xff]
        %v1187 = vld [vmem:[%s203 + $0x1ca0] sm:$0xff]
        %v1188 = vld [vmem:[%s203 + $0x1ca8] sm:$0xff]
        %v1189 = vld [vmem:[%s203 + $0x1cb0] sm:$0xff]
        %v1190 = vld [vmem:[%s203 + $0x1cb8] sm:$0xff]
        %v1191 = vld [vmem:[%s203 + $0x1cc0] sm:$0xff]
        %v1192 = vld [vmem:[%s203 + $0x1cc8] sm:$0xff]
        %v1193 = vld [vmem:[%s203 + $0x1cd0] sm:$0xff]
        %v1194 = vld [vmem:[%s203 + $0x1cd8] sm:$0xff]
        %v1195 = vld [vmem:[%s203 + $0x1ce0] sm:$0xff]
        %v1196 = vld [vmem:[%s203 + $0x1ce8] sm:$0xff]
        %v1197 = vld [vmem:[%s203 + $0x1cf0] sm:$0xff]
        %v1198 = vld [vmem:[%s203 + $0x1cf8] sm:$0xff]
        %v1199 = vld [vmem:[%s203 + $0x1d00] sm:$0xff]
        %v1200 = vld [vmem:[%s203 + $0x1d08] sm:$0xff]
        %v1201 = vld [vmem:[%s203 + $0x1d10] sm:$0xff]
        %v1202 = vld [vmem:[%s203 + $0x1d18] sm:$0xff]
        %v1203 = vld [vmem:[%s203 + $0x1d20] sm:$0xff]
        %v1204 = vld [vmem:[%s203 + $0x1d28] sm:$0xff]
        %v1205 = vld [vmem:[%s203 + $0x1d30] sm:$0xff]
        %v1206 = vld [vmem:[%s203 + $0x1d38] sm:$0xff]
        %v1207 = vld [vmem:[%s203 + $0x1d40] sm:$0xff]
        %v1208 = vld [vmem:[%s203 + $0x1d48] sm:$0xff]
        %v1209 = vld [vmem:[%s203 + $0x1d50] sm:$0xff]
        %v1210 = vld [vmem:[%s203 + $0x1d58] sm:$0xff]
        %v1211 = vld [vmem:[%s203 + $0x1d60] sm:$0xff]
        %v1212 = vld [vmem:[%s203 + $0x1d68] sm:$0xff]
        %v1213 = vld [vmem:[%s203 + $0x1d70] sm:$0xff]
        %v1214 = vld [vmem:[%s203 + $0x1d78] sm:$0xff]
        %v1215 = vld [vmem:[%s203 + $0x1d80] sm:$0xff]
        %v1216 = vld [vmem:[%s203 + $0x1d88] sm:$0xff]
        %v1217 = vld [vmem:[%s203 + $0x1d90] sm:$0xff]
        %v1218 = vld [vmem:[%s203 + $0x1d98] sm:$0xff]
        %v1219 = vld [vmem:[%s203 + $0x1da0] sm:$0xff]
        %v1220 = vld [vmem:[%s203 + $0x1da8] sm:$0xff]
        %v1221 = vld [vmem:[%s203 + $0x1db0] sm:$0xff]
        %v1222 = vld [vmem:[%s203 + $0x1db8] sm:$0xff]
        %v1223 = vld [vmem:[%s203 + $0x1dc0] sm:$0xff]
        %v1224 = vld [vmem:[%s203 + $0x1dc8] sm:$0xff]
        %v1225 = vld [vmem:[%s203 + $0x1dd0] sm:$0xff]
        %v1226 = vld [vmem:[%s203 + $0x1dd8] sm:$0xff]
        %v1227 = vld [vmem:[%s203 + $0x1de0] sm:$0xff]
        %v1228 = vld [vmem:[%s203 + $0x1de8] sm:$0xff]
        %v1229 = vld [vmem:[%s203 + $0x1df0] sm:$0xff]
        %v1230 = vld [vmem:[%s203 + $0x1df8] sm:$0xff]
        %v1231 = vld [vmem:[%s203 + $0x1e00] sm:$0xff]
        %v1232 = vld [vmem:[%s203 + $0x1e08] sm:$0xff]
        %v1233 = vld [vmem:[%s203 + $0x1e10] sm:$0xff]
        %v1234 = vld [vmem:[%s203 + $0x1e18] sm:$0xff]
        %v1235 = vld [vmem:[%s203 + $0x1e20] sm:$0xff]
        %v1236 = vld [vmem:[%s203 + $0x1e28] sm:$0xff]
        %v1237 = vld [vmem:[%s203 + $0x1e30] sm:$0xff]
        %v1238 = vld [vmem:[%s203 + $0x1e38] sm:$0xff]
        %v1239 = vld [vmem:[%s203 + $0x1e40] sm:$0xff]
        %v1240 = vld [vmem:[%s203 + $0x1e48] sm:$0xff]
        %v1241 = vld [vmem:[%s203 + $0x1e50] sm:$0xff]
        %v1242 = vld [vmem:[%s203 + $0x1e58] sm:$0xff]
        %v1243 = vld [vmem:[%s203 + $0x1e60] sm:$0xff]
        %v1244 = vld [vmem:[%s203 + $0x1e68] sm:$0xff]
        %v1245 = vld [vmem:[%s203 + $0x1e70] sm:$0xff]
        %v1246 = vld [vmem:[%s203 + $0x1e78] sm:$0xff]
        %v1247 = vld [vmem:[%s203 + $0x1e80] sm:$0xff]
        %v1248 = vld [vmem:[%s203 + $0x1e88] sm:$0xff]
        %v1249 = vld [vmem:[%s203 + $0x1e90] sm:$0xff]
        %v1250 = vld [vmem:[%s203 + $0x1e98] sm:$0xff]
        %v1251 = vld [vmem:[%s203 + $0x1ea0] sm:$0xff]
        %v1252 = vld [vmem:[%s203 + $0x1ea8] sm:$0xff]
        %v1253 = vld [vmem:[%s203 + $0x1eb0] sm:$0xff]
        %v1254 = vld [vmem:[%s203 + $0x1eb8] sm:$0xff]
        %v1255 = vld [vmem:[%s203 + $0x1ec0] sm:$0xff]
        %v1256 = vld [vmem:[%s203 + $0x1ec8] sm:$0xff]
        %v1257 = vld [vmem:[%s203 + $0x1ed0] sm:$0xff]
        %v1258 = vld [vmem:[%s203 + $0x1ed8] sm:$0xff]
        %v1259 = vld [vmem:[%s203 + $0x1ee0] sm:$0xff]
        %v1260 = vld [vmem:[%s203 + $0x1ee8] sm:$0xff]
        %v1261 = vld [vmem:[%s203 + $0x1ef0] sm:$0xff]
        %v1262 = vld [vmem:[%s203 + $0x1ef8] sm:$0xff]
        %v1263 = vld [vmem:[%s203 + $0x1f00] sm:$0xff]
        %v1264 = vld [vmem:[%s203 + $0x1f08] sm:$0xff]
        %v1265 = vld [vmem:[%s203 + $0x1f10] sm:$0xff]
        %v1266 = vld [vmem:[%s203 + $0x1f18] sm:$0xff]
        %v1267 = vld [vmem:[%s203 + $0x1f20] sm:$0xff]
        %v1268 = vld [vmem:[%s203 + $0x1f28] sm:$0xff]
        %v1269 = vld [vmem:[%s203 + $0x1f30] sm:$0xff]
        %v1270 = vld [vmem:[%s203 + $0x1f38] sm:$0xff]
        %v1271 = vld [vmem:[%s203 + $0x1f40] sm:$0xff]
        %v1272 = vld [vmem:[%s203 + $0x1f48] sm:$0xff]
        %v1273 = vld [vmem:[%s203 + $0x1f50] sm:$0xff]
        %v1274 = vld [vmem:[%s203 + $0x1f58] sm:$0xff]
        %v1275 = vld [vmem:[%s203 + $0x1f60] sm:$0xff]
        %v1276 = vld [vmem:[%s203 + $0x1f68] sm:$0xff]
        %v1277 = vld [vmem:[%s203 + $0x1f70] sm:$0xff]
        %v1278 = vld [vmem:[%s203 + $0x1f78] sm:$0xff]
        %v1279 = vld [vmem:[%s203 + $0x1f80] sm:$0xff]
        %v1280 = vld [vmem:[%s203 + $0x1f88] sm:$0xff]
        %v1281 = vld [vmem:[%s203 + $0x1f90] sm:$0xff]
        %v1282 = vld [vmem:[%s203 + $0x1f98] sm:$0xff]
        %v1283 = vld [vmem:[%s203 + $0x1fa0] sm:$0xff]
        %v1284 = vld [vmem:[%s203 + $0x1fa8] sm:$0xff]
        %v1285 = vld [vmem:[%s203 + $0x1fb0] sm:$0xff]
        %v1286 = vld [vmem:[%s203 + $0x1fb8] sm:$0xff]
        %v1287 = vld [vmem:[%s203 + $0x1fc0] sm:$0xff]
        %v1288 = vld [vmem:[%s203 + $0x1fc8] sm:$0xff]
        %v1289 = vld [vmem:[%s203 + $0x1fd0] sm:$0xff]
        %v1290 = vld [vmem:[%s203 + $0x1fd8] sm:$0xff]
        %v1291 = vld [vmem:[%s203 + $0x1fe0] sm:$0xff]
        %v1292 = vld [vmem:[%s203 + $0x1fe8] sm:$0xff]
        %v1293 = vld [vmem:[%s203 + $0x1ff0] sm:$0xff]
        %v1294 = vld [vmem:[%s203 + $0x1ff8] sm:$0xff]
        %v1295 = vld [vmem:[%s213] sm:$0xff]
        %v1296 = vld [vmem:[%s213 + $0x8] sm:$0xff]
        %v2321 = vunpack.c.l.b16 %v271
        %v2322 = vunpack.c.h.b16 %v271
        %v2323 = vunpack.c.l.b16 %v272
        %v2324 = vunpack.c.h.b16 %v272
        %v2325 = vunpack.c.l.b16 %v273
        %v2326 = vunpack.c.h.b16 %v273
        %v2327 = vunpack.c.l.b16 %v274
        %v2328 = vunpack.c.h.b16 %v274
        %v2329 = vunpack.c.l.b16 %v275
        %v2330 = vunpack.c.h.b16 %v275
        %v2331 = vunpack.c.l.b16 %v276
        %v2332 = vunpack.c.h.b16 %v276
        %v2333 = vunpack.c.l.b16 %v277
        %v2334 = vunpack.c.h.b16 %v277
        %v2335 = vunpack.c.l.b16 %v278
        %v2336 = vunpack.c.h.b16 %v278
        %v2337 = vunpack.c.l.b16 %v279
        %v2338 = vunpack.c.h.b16 %v279
        %v2339 = vunpack.c.l.b16 %v280
        %v2340 = vunpack.c.h.b16 %v280
        %v2341 = vunpack.c.l.b16 %v281
        %v2342 = vunpack.c.h.b16 %v281
        %v2343 = vunpack.c.l.b16 %v282
        %v2344 = vunpack.c.h.b16 %v282
        %v2345 = vunpack.c.l.b16 %v283
        %v2346 = vunpack.c.h.b16 %v283
        %v2347 = vunpack.c.l.b16 %v284
        %v2348 = vunpack.c.h.b16 %v284
        %v2349 = vunpack.c.l.b16 %v285
        %v2350 = vunpack.c.h.b16 %v285
        %v2351 = vunpack.c.l.b16 %v286
        %v2352 = vunpack.c.h.b16 %v286
        %v2353 = vunpack.c.l.b16 %v287
        %v2354 = vunpack.c.h.b16 %v287
        %v2355 = vunpack.c.l.b16 %v288
        %v2356 = vunpack.c.h.b16 %v288
        %v2357 = vunpack.c.l.b16 %v289
        %v2358 = vunpack.c.h.b16 %v289
        %v2359 = vunpack.c.l.b16 %v290
        %v2360 = vunpack.c.h.b16 %v290
        %v2361 = vunpack.c.l.b16 %v291
        %v2362 = vunpack.c.h.b16 %v291
        %v2363 = vunpack.c.l.b16 %v292
        %v2364 = vunpack.c.h.b16 %v292
        %v2365 = vunpack.c.l.b16 %v293
        %v2366 = vunpack.c.h.b16 %v293
        %v2367 = vunpack.c.l.b16 %v294
        %v2368 = vunpack.c.h.b16 %v294
        %v2369 = vunpack.c.l.b16 %v295
        %v2370 = vunpack.c.h.b16 %v295
        %v2371 = vunpack.c.l.b16 %v296
        %v2372 = vunpack.c.h.b16 %v296
        %v2373 = vunpack.c.l.b16 %v297
        %v2374 = vunpack.c.h.b16 %v297
        %v2375 = vunpack.c.l.b16 %v298
        %v2376 = vunpack.c.h.b16 %v298
        %v2377 = vunpack.c.l.b16 %v299
        %v2378 = vunpack.c.h.b16 %v299
        %v2379 = vunpack.c.l.b16 %v300
        %v2380 = vunpack.c.h.b16 %v300
        %v2381 = vunpack.c.l.b16 %v301
        %v2382 = vunpack.c.h.b16 %v301
        %v2383 = vunpack.c.l.b16 %v302
        %v2384 = vunpack.c.h.b16 %v302
        %v2385 = vunpack.c.l.b16 %v303
        %v2386 = vunpack.c.h.b16 %v303
        %v2387 = vunpack.c.l.b16 %v304
        %v2388 = vunpack.c.h.b16 %v304
        %v2389 = vunpack.c.l.b16 %v305
        %v2390 = vunpack.c.h.b16 %v305
        %v2391 = vunpack.c.l.b16 %v306
        %v2392 = vunpack.c.h.b16 %v306
        %v2393 = vunpack.c.l.b16 %v307
        %v2394 = vunpack.c.h.b16 %v307
        %v2395 = vunpack.c.l.b16 %v308
        %v2396 = vunpack.c.h.b16 %v308
        %v2397 = vunpack.c.l.b16 %v309
        %v2398 = vunpack.c.h.b16 %v309
        %v2399 = vunpack.c.l.b16 %v310
        %v2400 = vunpack.c.h.b16 %v310
        %v2401 = vunpack.c.l.b16 %v311
        %v2402 = vunpack.c.h.b16 %v311
        %v2403 = vunpack.c.l.b16 %v312
        %v2404 = vunpack.c.h.b16 %v312
        %v2405 = vunpack.c.l.b16 %v313
        %v2406 = vunpack.c.h.b16 %v313
        %v2407 = vunpack.c.l.b16 %v314
        %v2408 = vunpack.c.h.b16 %v314
        %v2409 = vunpack.c.l.b16 %v315
        %v2410 = vunpack.c.h.b16 %v315
        %v2411 = vunpack.c.l.b16 %v316
        %v2412 = vunpack.c.h.b16 %v316
        %v2413 = vunpack.c.l.b16 %v317
        %v2414 = vunpack.c.h.b16 %v317
        %v2415 = vunpack.c.l.b16 %v318
        %v2416 = vunpack.c.h.b16 %v318
        %v2417 = vunpack.c.l.b16 %v319
        %v2418 = vunpack.c.h.b16 %v319
        %v2419 = vunpack.c.l.b16 %v320
        %v2420 = vunpack.c.h.b16 %v320
        %v2421 = vunpack.c.l.b16 %v321
        %v2422 = vunpack.c.h.b16 %v321
        %v2423 = vunpack.c.l.b16 %v322
        %v2424 = vunpack.c.h.b16 %v322
        %v2425 = vunpack.c.l.b16 %v323
        %v2426 = vunpack.c.h.b16 %v323
        %v2427 = vunpack.c.l.b16 %v324
        %v2428 = vunpack.c.h.b16 %v324
        %v2429 = vunpack.c.l.b16 %v325
        %v2430 = vunpack.c.h.b16 %v325
        %v2431 = vunpack.c.l.b16 %v326
        %v2432 = vunpack.c.h.b16 %v326
        %v2433 = vunpack.c.l.b16 %v327
        %v2434 = vunpack.c.h.b16 %v327
        %v2435 = vunpack.c.l.b16 %v328
        %v2436 = vunpack.c.h.b16 %v328
        %v2437 = vunpack.c.l.b16 %v329
        %v2438 = vunpack.c.h.b16 %v329
        %v2439 = vunpack.c.l.b16 %v330
        %v2440 = vunpack.c.h.b16 %v330
        %v2441 = vunpack.c.l.b16 %v331
        %v2442 = vunpack.c.h.b16 %v331
        %v2443 = vunpack.c.l.b16 %v332
        %v2444 = vunpack.c.h.b16 %v332
        %v2445 = vunpack.c.l.b16 %v333
        %v2446 = vunpack.c.h.b16 %v333
        %v2447 = vunpack.c.l.b16 %v334
        %v2448 = vunpack.c.h.b16 %v334
        %v2449 = vunpack.c.l.b16 %v335
        %v2450 = vunpack.c.h.b16 %v335
        %v2451 = vunpack.c.l.b16 %v336
        %v2452 = vunpack.c.h.b16 %v336
        %v2453 = vunpack.c.l.b16 %v337
        %v2454 = vunpack.c.h.b16 %v337
        %v2455 = vunpack.c.l.b16 %v338
        %v2456 = vunpack.c.h.b16 %v338
        %v2457 = vunpack.c.l.b16 %v339
        %v2458 = vunpack.c.h.b16 %v339
        %v2459 = vunpack.c.l.b16 %v340
        %v2460 = vunpack.c.h.b16 %v340
        %v2461 = vunpack.c.l.b16 %v341
        %v2462 = vunpack.c.h.b16 %v341
        %v2463 = vunpack.c.l.b16 %v342
        %v2464 = vunpack.c.h.b16 %v342
        %v2465 = vunpack.c.l.b16 %v343
        %v2466 = vunpack.c.h.b16 %v343
        %v2467 = vunpack.c.l.b16 %v344
        %v2468 = vunpack.c.h.b16 %v344
        %v2469 = vunpack.c.l.b16 %v345
        %v2470 = vunpack.c.h.b16 %v345
        %v2471 = vunpack.c.l.b16 %v346
        %v2472 = vunpack.c.h.b16 %v346
        %v2473 = vunpack.c.l.b16 %v347
        %v2474 = vunpack.c.h.b16 %v347
        %v2475 = vunpack.c.l.b16 %v348
        %v2476 = vunpack.c.h.b16 %v348
        %v2477 = vunpack.c.l.b16 %v349
        %v2478 = vunpack.c.h.b16 %v349
        %v2479 = vunpack.c.l.b16 %v350
        %v2480 = vunpack.c.h.b16 %v350
        %v2481 = vunpack.c.l.b16 %v351
        %v2482 = vunpack.c.h.b16 %v351
        %v2483 = vunpack.c.l.b16 %v352
        %v2484 = vunpack.c.h.b16 %v352
        %v2485 = vunpack.c.l.b16 %v353
        %v2486 = vunpack.c.h.b16 %v353
        %v2487 = vunpack.c.l.b16 %v354
        %v2488 = vunpack.c.h.b16 %v354
        %v2489 = vunpack.c.l.b16 %v355
        %v2490 = vunpack.c.h.b16 %v355
        %v2491 = vunpack.c.l.b16 %v356
        %v2492 = vunpack.c.h.b16 %v356
        %v2493 = vunpack.c.l.b16 %v357
        %v2494 = vunpack.c.h.b16 %v357
        %v2495 = vunpack.c.l.b16 %v358
        %v2496 = vunpack.c.h.b16 %v358
        %v2497 = vunpack.c.l.b16 %v359
        %v2498 = vunpack.c.h.b16 %v359
        %v2499 = vunpack.c.l.b16 %v360
        %v2500 = vunpack.c.h.b16 %v360
        %v2501 = vunpack.c.l.b16 %v361
        %v2502 = vunpack.c.h.b16 %v361
        %v2503 = vunpack.c.l.b16 %v362
        %v2504 = vunpack.c.h.b16 %v362
        %v2505 = vunpack.c.l.b16 %v363
        %v2506 = vunpack.c.h.b16 %v363
        %v2507 = vunpack.c.l.b16 %v364
        %v2508 = vunpack.c.h.b16 %v364
        %v2509 = vunpack.c.l.b16 %v365
        %v2510 = vunpack.c.h.b16 %v365
        %v2511 = vunpack.c.l.b16 %v366
        %v2512 = vunpack.c.h.b16 %v366
        %v2513 = vunpack.c.l.b16 %v367
        %v2514 = vunpack.c.h.b16 %v367
        %v2515 = vunpack.c.l.b16 %v368
        %v2516 = vunpack.c.h.b16 %v368
        %v2517 = vunpack.c.l.b16 %v369
        %v2518 = vunpack.c.h.b16 %v369
        %v2519 = vunpack.c.l.b16 %v370
        %v2520 = vunpack.c.h.b16 %v370
        %v2521 = vunpack.c.l.b16 %v371
        %v2522 = vunpack.c.h.b16 %v371
        %v2523 = vunpack.c.l.b16 %v372
        %v2524 = vunpack.c.h.b16 %v372
        %v2525 = vunpack.c.l.b16 %v373
        %v2526 = vunpack.c.h.b16 %v373
        %v2527 = vunpack.c.l.b16 %v374
        %v2528 = vunpack.c.h.b16 %v374
        %v2529 = vunpack.c.l.b16 %v375
        %v2530 = vunpack.c.h.b16 %v375
        %v2531 = vunpack.c.l.b16 %v376
        %v2532 = vunpack.c.h.b16 %v376
        %v2533 = vunpack.c.l.b16 %v377
        %v2534 = vunpack.c.h.b16 %v377
        %v2535 = vunpack.c.l.b16 %v378
        %v2536 = vunpack.c.h.b16 %v378
        %v2537 = vunpack.c.l.b16 %v379
        %v2538 = vunpack.c.h.b16 %v379
        %v2539 = vunpack.c.l.b16 %v380
        %v2540 = vunpack.c.h.b16 %v380
        %v2541 = vunpack.c.l.b16 %v381
        %v2542 = vunpack.c.h.b16 %v381
        %v2543 = vunpack.c.l.b16 %v382
        %v2544 = vunpack.c.h.b16 %v382
        %v2545 = vunpack.c.l.b16 %v383
        %v2546 = vunpack.c.h.b16 %v383
        %v2547 = vunpack.c.l.b16 %v384
        %v2548 = vunpack.c.h.b16 %v384
        %v2549 = vunpack.c.l.b16 %v385
        %v2550 = vunpack.c.h.b16 %v385
        %v2551 = vunpack.c.l.b16 %v386
        %v2552 = vunpack.c.h.b16 %v386
        %v2553 = vunpack.c.l.b16 %v387
        %v2554 = vunpack.c.h.b16 %v387
        %v2555 = vunpack.c.l.b16 %v388
        %v2556 = vunpack.c.h.b16 %v388
        %v2557 = vunpack.c.l.b16 %v389
        %v2558 = vunpack.c.h.b16 %v389
        %v2559 = vunpack.c.l.b16 %v390
        %v2560 = vunpack.c.h.b16 %v390
        %v2561 = vunpack.c.l.b16 %v391
        %v2562 = vunpack.c.h.b16 %v391
        %v2563 = vunpack.c.l.b16 %v392
        %v2564 = vunpack.c.h.b16 %v392
        %v2565 = vunpack.c.l.b16 %v393
        %v2566 = vunpack.c.h.b16 %v393
        %v2567 = vunpack.c.l.b16 %v394
        %v2568 = vunpack.c.h.b16 %v394
        %v2569 = vunpack.c.l.b16 %v395
        %v2570 = vunpack.c.h.b16 %v395
        %v2571 = vunpack.c.l.b16 %v396
        %v2572 = vunpack.c.h.b16 %v396
        %v2573 = vunpack.c.l.b16 %v397
        %v2574 = vunpack.c.h.b16 %v397
        %v2575 = vunpack.c.l.b16 %v398
        %v2576 = vunpack.c.h.b16 %v398
        %v2577 = vunpack.c.l.b16 %v399
        %v2578 = vunpack.c.h.b16 %v399
        %v2579 = vunpack.c.l.b16 %v400
        %v2580 = vunpack.c.h.b16 %v400
        %v2581 = vunpack.c.l.b16 %v401
        %v2582 = vunpack.c.h.b16 %v401
        %v2583 = vunpack.c.l.b16 %v402
        %v2584 = vunpack.c.h.b16 %v402
        %v2585 = vunpack.c.l.b16 %v403
        %v2586 = vunpack.c.h.b16 %v403
        %v2587 = vunpack.c.l.b16 %v404
        %v2588 = vunpack.c.h.b16 %v404
        %v2589 = vunpack.c.l.b16 %v405
        %v2590 = vunpack.c.h.b16 %v405
        %v2591 = vunpack.c.l.b16 %v406
        %v2592 = vunpack.c.h.b16 %v406
        %v2593 = vunpack.c.l.b16 %v407
        %v2594 = vunpack.c.h.b16 %v407
        %v2595 = vunpack.c.l.b16 %v408
        %v2596 = vunpack.c.h.b16 %v408
        %v2597 = vunpack.c.l.b16 %v409
        %v2598 = vunpack.c.h.b16 %v409
        %v2599 = vunpack.c.l.b16 %v410
        %v2600 = vunpack.c.h.b16 %v410
        %v2601 = vunpack.c.l.b16 %v411
        %v2602 = vunpack.c.h.b16 %v411
        %v2603 = vunpack.c.l.b16 %v412
        %v2604 = vunpack.c.h.b16 %v412
        %v2605 = vunpack.c.l.b16 %v413
        %v2606 = vunpack.c.h.b16 %v413
        %v2607 = vunpack.c.l.b16 %v414
        %v2608 = vunpack.c.h.b16 %v414
        %v2609 = vunpack.c.l.b16 %v415
        %v2610 = vunpack.c.h.b16 %v415
        %v2611 = vunpack.c.l.b16 %v416
        %v2612 = vunpack.c.h.b16 %v416
        %v2613 = vunpack.c.l.b16 %v417
        %v2614 = vunpack.c.h.b16 %v417
        %v2615 = vunpack.c.l.b16 %v418
        %v2616 = vunpack.c.h.b16 %v418
        %v2617 = vunpack.c.l.b16 %v419
        %v2618 = vunpack.c.h.b16 %v419
        %v2619 = vunpack.c.l.b16 %v420
        %v2620 = vunpack.c.h.b16 %v420
        %v2621 = vunpack.c.l.b16 %v421
        %v2622 = vunpack.c.h.b16 %v421
        %v2623 = vunpack.c.l.b16 %v422
        %v2624 = vunpack.c.h.b16 %v422
        %v2625 = vunpack.c.l.b16 %v423
        %v2626 = vunpack.c.h.b16 %v423
        %v2627 = vunpack.c.l.b16 %v424
        %v2628 = vunpack.c.h.b16 %v424
        %v2629 = vunpack.c.l.b16 %v425
        %v2630 = vunpack.c.h.b16 %v425
        %v2631 = vunpack.c.l.b16 %v426
        %v2632 = vunpack.c.h.b16 %v426
        %v2633 = vunpack.c.l.b16 %v427
        %v2634 = vunpack.c.h.b16 %v427
        %v2635 = vunpack.c.l.b16 %v428
        %v2636 = vunpack.c.h.b16 %v428
        %v2637 = vunpack.c.l.b16 %v429
        %v2638 = vunpack.c.h.b16 %v429
        %v2639 = vunpack.c.l.b16 %v430
        %v2640 = vunpack.c.h.b16 %v430
        %v2641 = vunpack.c.l.b16 %v431
        %v2642 = vunpack.c.h.b16 %v431
        %v2643 = vunpack.c.l.b16 %v432
        %v2644 = vunpack.c.h.b16 %v432
        %v2645 = vunpack.c.l.b16 %v433
        %v2646 = vunpack.c.h.b16 %v433
        %v2647 = vunpack.c.l.b16 %v434
        %v2648 = vunpack.c.h.b16 %v434
        %v2649 = vunpack.c.l.b16 %v435
        %v2650 = vunpack.c.h.b16 %v435
        %v2651 = vunpack.c.l.b16 %v436
        %v2652 = vunpack.c.h.b16 %v436
        %v2653 = vunpack.c.l.b16 %v437
        %v2654 = vunpack.c.h.b16 %v437
        %v2655 = vunpack.c.l.b16 %v438
        %v2656 = vunpack.c.h.b16 %v438
        %v2657 = vunpack.c.l.b16 %v439
        %v2658 = vunpack.c.h.b16 %v439
        %v2659 = vunpack.c.l.b16 %v440
        %v2660 = vunpack.c.h.b16 %v440
        %v2661 = vunpack.c.l.b16 %v441
        %v2662 = vunpack.c.h.b16 %v441
        %v2663 = vunpack.c.l.b16 %v442
        %v2664 = vunpack.c.h.b16 %v442
        %v2665 = vunpack.c.l.b16 %v443
        %v2666 = vunpack.c.h.b16 %v443
        %v2667 = vunpack.c.l.b16 %v444
        %v2668 = vunpack.c.h.b16 %v444
        %v2669 = vunpack.c.l.b16 %v445
        %v2670 = vunpack.c.h.b16 %v445
        %v2671 = vunpack.c.l.b16 %v446
        %v2672 = vunpack.c.h.b16 %v446
        %v2673 = vunpack.c.l.b16 %v447
        %v2674 = vunpack.c.h.b16 %v447
        %v2675 = vunpack.c.l.b16 %v448
        %v2676 = vunpack.c.h.b16 %v448
        %v2677 = vunpack.c.l.b16 %v449
        %v2678 = vunpack.c.h.b16 %v449
        %v2679 = vunpack.c.l.b16 %v450
        %v2680 = vunpack.c.h.b16 %v450
        %v2681 = vunpack.c.l.b16 %v451
        %v2682 = vunpack.c.h.b16 %v451
        %v2683 = vunpack.c.l.b16 %v452
        %v2684 = vunpack.c.h.b16 %v452
        %v2685 = vunpack.c.l.b16 %v453
        %v2686 = vunpack.c.h.b16 %v453
        %v2687 = vunpack.c.l.b16 %v454
        %v2688 = vunpack.c.h.b16 %v454
        %v2689 = vunpack.c.l.b16 %v455
        %v2690 = vunpack.c.h.b16 %v455
        %v2691 = vunpack.c.l.b16 %v456
        %v2692 = vunpack.c.h.b16 %v456
        %v2693 = vunpack.c.l.b16 %v457
        %v2694 = vunpack.c.h.b16 %v457
        %v2695 = vunpack.c.l.b16 %v458
        %v2696 = vunpack.c.h.b16 %v458
        %v2697 = vunpack.c.l.b16 %v459
        %v2698 = vunpack.c.h.b16 %v459
        %v2699 = vunpack.c.l.b16 %v460
        %v2700 = vunpack.c.h.b16 %v460
        %v2701 = vunpack.c.l.b16 %v461
        %v2702 = vunpack.c.h.b16 %v461
        %v2703 = vunpack.c.l.b16 %v462
        %v2704 = vunpack.c.h.b16 %v462
        %v2705 = vunpack.c.l.b16 %v463
        %v2706 = vunpack.c.h.b16 %v463
        %v2707 = vunpack.c.l.b16 %v464
        %v2708 = vunpack.c.h.b16 %v464
        %v2709 = vunpack.c.l.b16 %v465
        %v2710 = vunpack.c.h.b16 %v465
        %v2711 = vunpack.c.l.b16 %v466
        %v2712 = vunpack.c.h.b16 %v466
        %v2713 = vunpack.c.l.b16 %v467
        %v2714 = vunpack.c.h.b16 %v467
        %v2715 = vunpack.c.l.b16 %v468
        %v2716 = vunpack.c.h.b16 %v468
        %v2717 = vunpack.c.l.b16 %v469
        %v2718 = vunpack.c.h.b16 %v469
        %v2719 = vunpack.c.l.b16 %v470
        %v2720 = vunpack.c.h.b16 %v470
        %v2721 = vunpack.c.l.b16 %v471
        %v2722 = vunpack.c.h.b16 %v471
        %v2723 = vunpack.c.l.b16 %v472
        %v2724 = vunpack.c.h.b16 %v472
        %v2725 = vunpack.c.l.b16 %v473
        %v2726 = vunpack.c.h.b16 %v473
        %v2727 = vunpack.c.l.b16 %v474
        %v2728 = vunpack.c.h.b16 %v474
        %v2729 = vunpack.c.l.b16 %v475
        %v2730 = vunpack.c.h.b16 %v475
        %v2731 = vunpack.c.l.b16 %v476
        %v2732 = vunpack.c.h.b16 %v476
        %v2733 = vunpack.c.l.b16 %v477
        %v2734 = vunpack.c.h.b16 %v477
        %v2735 = vunpack.c.l.b16 %v478
        %v2736 = vunpack.c.h.b16 %v478
        %v2737 = vunpack.c.l.b16 %v479
        %v2738 = vunpack.c.h.b16 %v479
        %v2739 = vunpack.c.l.b16 %v480
        %v2740 = vunpack.c.h.b16 %v480
        %v2741 = vunpack.c.l.b16 %v481
        %v2742 = vunpack.c.h.b16 %v481
        %v2743 = vunpack.c.l.b16 %v482
        %v2744 = vunpack.c.h.b16 %v482
        %v2745 = vunpack.c.l.b16 %v483
        %v2746 = vunpack.c.h.b16 %v483
        %v2747 = vunpack.c.l.b16 %v484
        %v2748 = vunpack.c.h.b16 %v484
        %v2749 = vunpack.c.l.b16 %v485
        %v2750 = vunpack.c.h.b16 %v485
        %v2751 = vunpack.c.l.b16 %v486
        %v2752 = vunpack.c.h.b16 %v486
        %v2753 = vunpack.c.l.b16 %v487
        %v2754 = vunpack.c.h.b16 %v487
        %v2755 = vunpack.c.l.b16 %v488
        %v2756 = vunpack.c.h.b16 %v488
        %v2757 = vunpack.c.l.b16 %v489
        %v2758 = vunpack.c.h.b16 %v489
        %v2759 = vunpack.c.l.b16 %v490
        %v2760 = vunpack.c.h.b16 %v490
        %v2761 = vunpack.c.l.b16 %v491
        %v2762 = vunpack.c.h.b16 %v491
        %v2763 = vunpack.c.l.b16 %v492
        %v2764 = vunpack.c.h.b16 %v492
        %v2765 = vunpack.c.l.b16 %v493
        %v2766 = vunpack.c.h.b16 %v493
        %v2767 = vunpack.c.l.b16 %v494
        %v2768 = vunpack.c.h.b16 %v494
        %v2769 = vunpack.c.l.b16 %v495
        %v2770 = vunpack.c.h.b16 %v495
        %v2771 = vunpack.c.l.b16 %v496
        %v2772 = vunpack.c.h.b16 %v496
        %v2773 = vunpack.c.l.b16 %v497
        %v2774 = vunpack.c.h.b16 %v497
        %v2775 = vunpack.c.l.b16 %v498
        %v2776 = vunpack.c.h.b16 %v498
        %v2777 = vunpack.c.l.b16 %v499
        %v2778 = vunpack.c.h.b16 %v499
        %v2779 = vunpack.c.l.b16 %v500
        %v2780 = vunpack.c.h.b16 %v500
        %v2781 = vunpack.c.l.b16 %v501
        %v2782 = vunpack.c.h.b16 %v501
        %v2783 = vunpack.c.l.b16 %v502
        %v2784 = vunpack.c.h.b16 %v502
        %v2785 = vunpack.c.l.b16 %v503
        %v2786 = vunpack.c.h.b16 %v503
        %v2787 = vunpack.c.l.b16 %v504
        %v2788 = vunpack.c.h.b16 %v504
        %v2789 = vunpack.c.l.b16 %v505
        %v2790 = vunpack.c.h.b16 %v505
        %v2791 = vunpack.c.l.b16 %v506
        %v2792 = vunpack.c.h.b16 %v506
        %v2793 = vunpack.c.l.b16 %v507
        %v2794 = vunpack.c.h.b16 %v507
        %v2795 = vunpack.c.l.b16 %v508
        %v2796 = vunpack.c.h.b16 %v508
        %v2797 = vunpack.c.l.b16 %v509
        %v2798 = vunpack.c.h.b16 %v509
        %v2799 = vunpack.c.l.b16 %v510
        %v2800 = vunpack.c.h.b16 %v510
        %v2801 = vunpack.c.l.b16 %v511
        %v2802 = vunpack.c.h.b16 %v511
        %v2803 = vunpack.c.l.b16 %v512
        %v2804 = vunpack.c.h.b16 %v512
        %v2805 = vunpack.c.l.b16 %v513
        %v2806 = vunpack.c.h.b16 %v513
        %v2807 = vunpack.c.l.b16 %v514
        %v2808 = vunpack.c.h.b16 %v514
        %v2809 = vunpack.c.l.b16 %v515
        %v2810 = vunpack.c.h.b16 %v515
        %v2811 = vunpack.c.l.b16 %v516
        %v2812 = vunpack.c.h.b16 %v516
        %v2813 = vunpack.c.l.b16 %v517
        %v2814 = vunpack.c.h.b16 %v517
        %v2815 = vunpack.c.l.b16 %v518
        %v2816 = vunpack.c.h.b16 %v518
        %v2817 = vunpack.c.l.b16 %v519
        %v2818 = vunpack.c.h.b16 %v519
        %v2819 = vunpack.c.l.b16 %v520
        %v2820 = vunpack.c.h.b16 %v520
        %v2821 = vunpack.c.l.b16 %v521
        %v2822 = vunpack.c.h.b16 %v521
        %v2823 = vunpack.c.l.b16 %v522
        %v2824 = vunpack.c.h.b16 %v522
        %v2825 = vunpack.c.l.b16 %v523
        %v2826 = vunpack.c.h.b16 %v523
        %v2827 = vunpack.c.l.b16 %v524
        %v2828 = vunpack.c.h.b16 %v524
        %v2829 = vunpack.c.l.b16 %v525
        %v2830 = vunpack.c.h.b16 %v525
        %v2831 = vunpack.c.l.b16 %v526
        %v2832 = vunpack.c.h.b16 %v526
        %v2833 = vunpack.c.l.b16 %v527
        %v2834 = vunpack.c.h.b16 %v527
        %v2835 = vunpack.c.l.b16 %v528
        %v2836 = vunpack.c.h.b16 %v528
        %v2837 = vunpack.c.l.b16 %v529
        %v2838 = vunpack.c.h.b16 %v529
        %v2839 = vunpack.c.l.b16 %v530
        %v2840 = vunpack.c.h.b16 %v530
        %v2841 = vunpack.c.l.b16 %v531
        %v2842 = vunpack.c.h.b16 %v531
        %v2843 = vunpack.c.l.b16 %v532
        %v2844 = vunpack.c.h.b16 %v532
        %v2845 = vunpack.c.l.b16 %v533
        %v2846 = vunpack.c.h.b16 %v533
        %v2847 = vunpack.c.l.b16 %v534
        %v2848 = vunpack.c.h.b16 %v534
        %v2849 = vunpack.c.l.b16 %v535
        %v2850 = vunpack.c.h.b16 %v535
        %v2851 = vunpack.c.l.b16 %v536
        %v2852 = vunpack.c.h.b16 %v536
        %v2853 = vunpack.c.l.b16 %v537
        %v2854 = vunpack.c.h.b16 %v537
        %v2855 = vunpack.c.l.b16 %v538
        %v2856 = vunpack.c.h.b16 %v538
        %v2857 = vunpack.c.l.b16 %v539
        %v2858 = vunpack.c.h.b16 %v539
        %v2859 = vunpack.c.l.b16 %v540
        %v2860 = vunpack.c.h.b16 %v540
        %v2861 = vunpack.c.l.b16 %v541
        %v2862 = vunpack.c.h.b16 %v541
        %v2863 = vunpack.c.l.b16 %v542
        %v2864 = vunpack.c.h.b16 %v542
        %v2865 = vunpack.c.l.b16 %v543
        %v2866 = vunpack.c.h.b16 %v543
        %v2867 = vunpack.c.l.b16 %v544
        %v2868 = vunpack.c.h.b16 %v544
        %v2869 = vunpack.c.l.b16 %v545
        %v2870 = vunpack.c.h.b16 %v545
        %v2871 = vunpack.c.l.b16 %v546
        %v2872 = vunpack.c.h.b16 %v546
        %v2873 = vunpack.c.l.b16 %v547
        %v2874 = vunpack.c.h.b16 %v547
        %v2875 = vunpack.c.l.b16 %v548
        %v2876 = vunpack.c.h.b16 %v548
        %v2877 = vunpack.c.l.b16 %v549
        %v2878 = vunpack.c.h.b16 %v549
        %v2879 = vunpack.c.l.b16 %v550
        %v2880 = vunpack.c.h.b16 %v550
        %v2881 = vunpack.c.l.b16 %v551
        %v2882 = vunpack.c.h.b16 %v551
        %v2883 = vunpack.c.l.b16 %v552
        %v2884 = vunpack.c.h.b16 %v552
        %v2885 = vunpack.c.l.b16 %v553
        %v2886 = vunpack.c.h.b16 %v553
        %v2887 = vunpack.c.l.b16 %v554
        %v2888 = vunpack.c.h.b16 %v554
        %v2889 = vunpack.c.l.b16 %v555
        %v2890 = vunpack.c.h.b16 %v555
        %v2891 = vunpack.c.l.b16 %v556
        %v2892 = vunpack.c.h.b16 %v556
        %v2893 = vunpack.c.l.b16 %v557
        %v2894 = vunpack.c.h.b16 %v557
        %v2895 = vunpack.c.l.b16 %v558
        %v2896 = vunpack.c.h.b16 %v558
        %v2897 = vunpack.c.l.b16 %v559
        %v2898 = vunpack.c.h.b16 %v559
        %v2899 = vunpack.c.l.b16 %v560
        %v2900 = vunpack.c.h.b16 %v560
        %v2901 = vunpack.c.l.b16 %v561
        %v2902 = vunpack.c.h.b16 %v561
        %v2903 = vunpack.c.l.b16 %v562
        %v2904 = vunpack.c.h.b16 %v562
        %v2905 = vunpack.c.l.b16 %v563
        %v2906 = vunpack.c.h.b16 %v563
        %v2907 = vunpack.c.l.b16 %v564
        %v2908 = vunpack.c.h.b16 %v564
        %v2909 = vunpack.c.l.b16 %v565
        %v2910 = vunpack.c.h.b16 %v565
        %v2911 = vunpack.c.l.b16 %v566
        %v2912 = vunpack.c.h.b16 %v566
        %v2913 = vunpack.c.l.b16 %v567
        %v2914 = vunpack.c.h.b16 %v567
        %v2915 = vunpack.c.l.b16 %v568
        %v2916 = vunpack.c.h.b16 %v568
        %v2917 = vunpack.c.l.b16 %v569
        %v2918 = vunpack.c.h.b16 %v569
        %v2919 = vunpack.c.l.b16 %v570
        %v2920 = vunpack.c.h.b16 %v570
        %v2921 = vunpack.c.l.b16 %v571
        %v2922 = vunpack.c.h.b16 %v571
        %v2923 = vunpack.c.l.b16 %v572
        %v2924 = vunpack.c.h.b16 %v572
        %v2925 = vunpack.c.l.b16 %v573
        %v2926 = vunpack.c.h.b16 %v573
        %v2927 = vunpack.c.l.b16 %v574
        %v2928 = vunpack.c.h.b16 %v574
        %v2929 = vunpack.c.l.b16 %v575
        %v2930 = vunpack.c.h.b16 %v575
        %v2931 = vunpack.c.l.b16 %v576
        %v2932 = vunpack.c.h.b16 %v576
        %v2933 = vunpack.c.l.b16 %v577
        %v2934 = vunpack.c.h.b16 %v577
        %v2935 = vunpack.c.l.b16 %v578
        %v2936 = vunpack.c.h.b16 %v578
        %v2937 = vunpack.c.l.b16 %v579
        %v2938 = vunpack.c.h.b16 %v579
        %v2939 = vunpack.c.l.b16 %v580
        %v2940 = vunpack.c.h.b16 %v580
        %v2941 = vunpack.c.l.b16 %v581
        %v2942 = vunpack.c.h.b16 %v581
        %v2943 = vunpack.c.l.b16 %v582
        %v2944 = vunpack.c.h.b16 %v582
        %v2945 = vunpack.c.l.b16 %v583
        %v2946 = vunpack.c.h.b16 %v583
        %v2947 = vunpack.c.l.b16 %v584
        %v2948 = vunpack.c.h.b16 %v584
        %v2949 = vunpack.c.l.b16 %v585
        %v2950 = vunpack.c.h.b16 %v585
        %v2951 = vunpack.c.l.b16 %v586
        %v2952 = vunpack.c.h.b16 %v586
        %v2953 = vunpack.c.l.b16 %v587
        %v2954 = vunpack.c.h.b16 %v587
        %v2955 = vunpack.c.l.b16 %v588
        %v2956 = vunpack.c.h.b16 %v588
        %v2957 = vunpack.c.l.b16 %v589
        %v2958 = vunpack.c.h.b16 %v589
        %v2959 = vunpack.c.l.b16 %v590
        %v2960 = vunpack.c.h.b16 %v590
        %v2961 = vunpack.c.l.b16 %v591
        %v2962 = vunpack.c.h.b16 %v591
        %v2963 = vunpack.c.l.b16 %v592
        %v2964 = vunpack.c.h.b16 %v592
        %v2965 = vunpack.c.l.b16 %v593
        %v2966 = vunpack.c.h.b16 %v593
        %v2967 = vunpack.c.l.b16 %v594
        %v2968 = vunpack.c.h.b16 %v594
        %v2969 = vunpack.c.l.b16 %v595
        %v2970 = vunpack.c.h.b16 %v595
        %v2971 = vunpack.c.l.b16 %v596
        %v2972 = vunpack.c.h.b16 %v596
        %v2973 = vunpack.c.l.b16 %v597
        %v2974 = vunpack.c.h.b16 %v597
        %v2975 = vunpack.c.l.b16 %v598
        %v2976 = vunpack.c.h.b16 %v598
        %v2977 = vunpack.c.l.b16 %v599
        %v2978 = vunpack.c.h.b16 %v599
        %v2979 = vunpack.c.l.b16 %v600
        %v2980 = vunpack.c.h.b16 %v600
        %v2981 = vunpack.c.l.b16 %v601
        %v2982 = vunpack.c.h.b16 %v601
        %v2983 = vunpack.c.l.b16 %v602
        %v2984 = vunpack.c.h.b16 %v602
        %v2985 = vunpack.c.l.b16 %v603
        %v2986 = vunpack.c.h.b16 %v603
        %v2987 = vunpack.c.l.b16 %v604
        %v2988 = vunpack.c.h.b16 %v604
        %v2989 = vunpack.c.l.b16 %v605
        %v2990 = vunpack.c.h.b16 %v605
        %v2991 = vunpack.c.l.b16 %v606
        %v2992 = vunpack.c.h.b16 %v606
        %v2993 = vunpack.c.l.b16 %v607
        %v2994 = vunpack.c.h.b16 %v607
        %v2995 = vunpack.c.l.b16 %v608
        %v2996 = vunpack.c.h.b16 %v608
        %v2997 = vunpack.c.l.b16 %v609
        %v2998 = vunpack.c.h.b16 %v609
        %v2999 = vunpack.c.l.b16 %v610
        %v3000 = vunpack.c.h.b16 %v610
        %v3001 = vunpack.c.l.b16 %v611
        %v3002 = vunpack.c.h.b16 %v611
        %v3003 = vunpack.c.l.b16 %v612
        %v3004 = vunpack.c.h.b16 %v612
        %v3005 = vunpack.c.l.b16 %v613
        %v3006 = vunpack.c.h.b16 %v613
        %v3007 = vunpack.c.l.b16 %v614
        %v3008 = vunpack.c.h.b16 %v614
        %v3009 = vunpack.c.l.b16 %v615
        %v3010 = vunpack.c.h.b16 %v615
        %v3011 = vunpack.c.l.b16 %v616
        %v3012 = vunpack.c.h.b16 %v616
        %v3013 = vunpack.c.l.b16 %v617
        %v3014 = vunpack.c.h.b16 %v617
        %v3015 = vunpack.c.l.b16 %v618
        %v3016 = vunpack.c.h.b16 %v618
        %v3017 = vunpack.c.l.b16 %v619
        %v3018 = vunpack.c.h.b16 %v619
        %v3019 = vunpack.c.l.b16 %v620
        %v3020 = vunpack.c.h.b16 %v620
        %v3021 = vunpack.c.l.b16 %v621
        %v3022 = vunpack.c.h.b16 %v621
        %v3023 = vunpack.c.l.b16 %v622
        %v3024 = vunpack.c.h.b16 %v622
        %v3025 = vunpack.c.l.b16 %v623
        %v3026 = vunpack.c.h.b16 %v623
        %v3027 = vunpack.c.l.b16 %v624
        %v3028 = vunpack.c.h.b16 %v624
        %v3029 = vunpack.c.l.b16 %v625
        %v3030 = vunpack.c.h.b16 %v625
        %v3031 = vunpack.c.l.b16 %v626
        %v3032 = vunpack.c.h.b16 %v626
        %v3033 = vunpack.c.l.b16 %v627
        %v3034 = vunpack.c.h.b16 %v627
        %v3035 = vunpack.c.l.b16 %v628
        %v3036 = vunpack.c.h.b16 %v628
        %v3037 = vunpack.c.l.b16 %v629
        %v3038 = vunpack.c.h.b16 %v629
        %v3039 = vunpack.c.l.b16 %v630
        %v3040 = vunpack.c.h.b16 %v630
        %v3041 = vunpack.c.l.b16 %v631
        %v3042 = vunpack.c.h.b16 %v631
        %v3043 = vunpack.c.l.b16 %v632
        %v3044 = vunpack.c.h.b16 %v632
        %v3045 = vunpack.c.l.b16 %v633
        %v3046 = vunpack.c.h.b16 %v633
        %v3047 = vunpack.c.l.b16 %v634
        %v3048 = vunpack.c.h.b16 %v634
        %v3049 = vunpack.c.l.b16 %v635
        %v3050 = vunpack.c.h.b16 %v635
        %v3051 = vunpack.c.l.b16 %v636
        %v3052 = vunpack.c.h.b16 %v636
        %v3053 = vunpack.c.l.b16 %v637
        %v3054 = vunpack.c.h.b16 %v637
        %v3055 = vunpack.c.l.b16 %v638
        %v3056 = vunpack.c.h.b16 %v638
        %v3057 = vunpack.c.l.b16 %v639
        %v3058 = vunpack.c.h.b16 %v639
        %v3059 = vunpack.c.l.b16 %v640
        %v3060 = vunpack.c.h.b16 %v640
        %v3061 = vunpack.c.l.b16 %v641
        %v3062 = vunpack.c.h.b16 %v641
        %v3063 = vunpack.c.l.b16 %v642
        %v3064 = vunpack.c.h.b16 %v642
        %v3065 = vunpack.c.l.b16 %v643
        %v3066 = vunpack.c.h.b16 %v643
        %v3067 = vunpack.c.l.b16 %v644
        %v3068 = vunpack.c.h.b16 %v644
        %v3069 = vunpack.c.l.b16 %v645
        %v3070 = vunpack.c.h.b16 %v645
        %v3071 = vunpack.c.l.b16 %v646
        %v3072 = vunpack.c.h.b16 %v646
        %v3073 = vunpack.c.l.b16 %v647
        %v3074 = vunpack.c.h.b16 %v647
        %v3075 = vunpack.c.l.b16 %v648
        %v3076 = vunpack.c.h.b16 %v648
        %v3077 = vunpack.c.l.b16 %v649
        %v3078 = vunpack.c.h.b16 %v649
        %v3079 = vunpack.c.l.b16 %v650
        %v3080 = vunpack.c.h.b16 %v650
        %v3081 = vunpack.c.l.b16 %v651
        %v3082 = vunpack.c.h.b16 %v651
        %v3083 = vunpack.c.l.b16 %v652
        %v3084 = vunpack.c.h.b16 %v652
        %v3085 = vunpack.c.l.b16 %v653
        %v3086 = vunpack.c.h.b16 %v653
        %v3087 = vunpack.c.l.b16 %v654
        %v3088 = vunpack.c.h.b16 %v654
        %v3089 = vunpack.c.l.b16 %v655
        %v3090 = vunpack.c.h.b16 %v655
        %v3091 = vunpack.c.l.b16 %v656
        %v3092 = vunpack.c.h.b16 %v656
        %v3093 = vunpack.c.l.b16 %v657
        %v3094 = vunpack.c.h.b16 %v657
        %v3095 = vunpack.c.l.b16 %v658
        %v3096 = vunpack.c.h.b16 %v658
        %v3097 = vunpack.c.l.b16 %v659
        %v3098 = vunpack.c.h.b16 %v659
        %v3099 = vunpack.c.l.b16 %v660
        %v3100 = vunpack.c.h.b16 %v660
        %v3101 = vunpack.c.l.b16 %v661
        %v3102 = vunpack.c.h.b16 %v661
        %v3103 = vunpack.c.l.b16 %v662
        %v3104 = vunpack.c.h.b16 %v662
        %v3105 = vunpack.c.l.b16 %v663
        %v3106 = vunpack.c.h.b16 %v663
        %v3107 = vunpack.c.l.b16 %v664
        %v3108 = vunpack.c.h.b16 %v664
        %v3109 = vunpack.c.l.b16 %v665
        %v3110 = vunpack.c.h.b16 %v665
        %v3111 = vunpack.c.l.b16 %v666
        %v3112 = vunpack.c.h.b16 %v666
        %v3113 = vunpack.c.l.b16 %v667
        %v3114 = vunpack.c.h.b16 %v667
        %v3115 = vunpack.c.l.b16 %v668
        %v3116 = vunpack.c.h.b16 %v668
        %v3117 = vunpack.c.l.b16 %v669
        %v3118 = vunpack.c.h.b16 %v669
        %v3119 = vunpack.c.l.b16 %v670
        %v3120 = vunpack.c.h.b16 %v670
        %v3121 = vunpack.c.l.b16 %v671
        %v3122 = vunpack.c.h.b16 %v671
        %v3123 = vunpack.c.l.b16 %v672
        %v3124 = vunpack.c.h.b16 %v672
        %v3125 = vunpack.c.l.b16 %v673
        %v3126 = vunpack.c.h.b16 %v673
        %v3127 = vunpack.c.l.b16 %v674
        %v3128 = vunpack.c.h.b16 %v674
        %v3129 = vunpack.c.l.b16 %v675
        %v3130 = vunpack.c.h.b16 %v675
        %v3131 = vunpack.c.l.b16 %v676
        %v3132 = vunpack.c.h.b16 %v676
        %v3133 = vunpack.c.l.b16 %v677
        %v3134 = vunpack.c.h.b16 %v677
        %v3135 = vunpack.c.l.b16 %v678
        %v3136 = vunpack.c.h.b16 %v678
        %v3137 = vunpack.c.l.b16 %v679
        %v3138 = vunpack.c.h.b16 %v679
        %v3139 = vunpack.c.l.b16 %v680
        %v3140 = vunpack.c.h.b16 %v680
        %v3141 = vunpack.c.l.b16 %v681
        %v3142 = vunpack.c.h.b16 %v681
        %v3143 = vunpack.c.l.b16 %v682
        %v3144 = vunpack.c.h.b16 %v682
        %v3145 = vunpack.c.l.b16 %v683
        %v3146 = vunpack.c.h.b16 %v683
        %v3147 = vunpack.c.l.b16 %v684
        %v3148 = vunpack.c.h.b16 %v684
        %v3149 = vunpack.c.l.b16 %v685
        %v3150 = vunpack.c.h.b16 %v685
        %v3151 = vunpack.c.l.b16 %v686
        %v3152 = vunpack.c.h.b16 %v686
        %v3153 = vunpack.c.l.b16 %v687
        %v3154 = vunpack.c.h.b16 %v687
        %v3155 = vunpack.c.l.b16 %v688
        %v3156 = vunpack.c.h.b16 %v688
        %v3157 = vunpack.c.l.b16 %v689
        %v3158 = vunpack.c.h.b16 %v689
        %v3159 = vunpack.c.l.b16 %v690
        %v3160 = vunpack.c.h.b16 %v690
        %v3161 = vunpack.c.l.b16 %v691
        %v3162 = vunpack.c.h.b16 %v691
        %v3163 = vunpack.c.l.b16 %v692
        %v3164 = vunpack.c.h.b16 %v692
        %v3165 = vunpack.c.l.b16 %v693
        %v3166 = vunpack.c.h.b16 %v693
        %v3167 = vunpack.c.l.b16 %v694
        %v3168 = vunpack.c.h.b16 %v694
        %v3169 = vunpack.c.l.b16 %v695
        %v3170 = vunpack.c.h.b16 %v695
        %v3171 = vunpack.c.l.b16 %v696
        %v3172 = vunpack.c.h.b16 %v696
        %v3173 = vunpack.c.l.b16 %v697
        %v3174 = vunpack.c.h.b16 %v697
        %v3175 = vunpack.c.l.b16 %v698
        %v3176 = vunpack.c.h.b16 %v698
        %v3177 = vunpack.c.l.b16 %v699
        %v3178 = vunpack.c.h.b16 %v699
        %v3179 = vunpack.c.l.b16 %v700
        %v3180 = vunpack.c.h.b16 %v700
        %v3181 = vunpack.c.l.b16 %v701
        %v3182 = vunpack.c.h.b16 %v701
        %v3183 = vunpack.c.l.b16 %v702
        %v3184 = vunpack.c.h.b16 %v702
        %v3185 = vunpack.c.l.b16 %v703
        %v3186 = vunpack.c.h.b16 %v703
        %v3187 = vunpack.c.l.b16 %v704
        %v3188 = vunpack.c.h.b16 %v704
        %v3189 = vunpack.c.l.b16 %v705
        %v3190 = vunpack.c.h.b16 %v705
        %v3191 = vunpack.c.l.b16 %v706
        %v3192 = vunpack.c.h.b16 %v706
        %v3193 = vunpack.c.l.b16 %v707
        %v3194 = vunpack.c.h.b16 %v707
        %v3195 = vunpack.c.l.b16 %v708
        %v3196 = vunpack.c.h.b16 %v708
        %v3197 = vunpack.c.l.b16 %v709
        %v3198 = vunpack.c.h.b16 %v709
        %v3199 = vunpack.c.l.b16 %v710
        %v3200 = vunpack.c.h.b16 %v710
        %v3201 = vunpack.c.l.b16 %v711
        %v3202 = vunpack.c.h.b16 %v711
        %v3203 = vunpack.c.l.b16 %v712
        %v3204 = vunpack.c.h.b16 %v712
        %v3205 = vunpack.c.l.b16 %v713
        %v3206 = vunpack.c.h.b16 %v713
        %v3207 = vunpack.c.l.b16 %v714
        %v3208 = vunpack.c.h.b16 %v714
        %v3209 = vunpack.c.l.b16 %v715
        %v3210 = vunpack.c.h.b16 %v715
        %v3211 = vunpack.c.l.b16 %v716
        %v3212 = vunpack.c.h.b16 %v716
        %v3213 = vunpack.c.l.b16 %v717
        %v3214 = vunpack.c.h.b16 %v717
        %v3215 = vunpack.c.l.b16 %v718
        %v3216 = vunpack.c.h.b16 %v718
        %v3217 = vunpack.c.l.b16 %v719
        %v3218 = vunpack.c.h.b16 %v719
        %v3219 = vunpack.c.l.b16 %v720
        %v3220 = vunpack.c.h.b16 %v720
        %v3221 = vunpack.c.l.b16 %v721
        %v3222 = vunpack.c.h.b16 %v721
        %v3223 = vunpack.c.l.b16 %v722
        %v3224 = vunpack.c.h.b16 %v722
        %v3225 = vunpack.c.l.b16 %v723
        %v3226 = vunpack.c.h.b16 %v723
        %v3227 = vunpack.c.l.b16 %v724
        %v3228 = vunpack.c.h.b16 %v724
        %v3229 = vunpack.c.l.b16 %v725
        %v3230 = vunpack.c.h.b16 %v725
        %v3231 = vunpack.c.l.b16 %v726
        %v3232 = vunpack.c.h.b16 %v726
        %v3233 = vunpack.c.l.b16 %v727
        %v3234 = vunpack.c.h.b16 %v727
        %v3235 = vunpack.c.l.b16 %v728
        %v3236 = vunpack.c.h.b16 %v728
        %v3237 = vunpack.c.l.b16 %v729
        %v3238 = vunpack.c.h.b16 %v729
        %v3239 = vunpack.c.l.b16 %v730
        %v3240 = vunpack.c.h.b16 %v730
        %v3241 = vunpack.c.l.b16 %v731
        %v3242 = vunpack.c.h.b16 %v731
        %v3243 = vunpack.c.l.b16 %v732
        %v3244 = vunpack.c.h.b16 %v732
        %v3245 = vunpack.c.l.b16 %v733
        %v3246 = vunpack.c.h.b16 %v733
        %v3247 = vunpack.c.l.b16 %v734
        %v3248 = vunpack.c.h.b16 %v734
        %v3249 = vunpack.c.l.b16 %v735
        %v3250 = vunpack.c.h.b16 %v735
        %v3251 = vunpack.c.l.b16 %v736
        %v3252 = vunpack.c.h.b16 %v736
        %v3253 = vunpack.c.l.b16 %v737
        %v3254 = vunpack.c.h.b16 %v737
        %v3255 = vunpack.c.l.b16 %v738
        %v3256 = vunpack.c.h.b16 %v738
        %v3257 = vunpack.c.l.b16 %v739
        %v3258 = vunpack.c.h.b16 %v739
        %v3259 = vunpack.c.l.b16 %v740
        %v3260 = vunpack.c.h.b16 %v740
        %v3261 = vunpack.c.l.b16 %v741
        %v3262 = vunpack.c.h.b16 %v741
        %v3263 = vunpack.c.l.b16 %v742
        %v3264 = vunpack.c.h.b16 %v742
        %v3265 = vunpack.c.l.b16 %v743
        %v3266 = vunpack.c.h.b16 %v743
        %v3267 = vunpack.c.l.b16 %v744
        %v3268 = vunpack.c.h.b16 %v744
        %v3269 = vunpack.c.l.b16 %v745
        %v3270 = vunpack.c.h.b16 %v745
        %v3271 = vunpack.c.l.b16 %v746
        %v3272 = vunpack.c.h.b16 %v746
        %v3273 = vunpack.c.l.b16 %v747
        %v3274 = vunpack.c.h.b16 %v747
        %v3275 = vunpack.c.l.b16 %v748
        %v3276 = vunpack.c.h.b16 %v748
        %v3277 = vunpack.c.l.b16 %v749
        %v3278 = vunpack.c.h.b16 %v749
        %v3279 = vunpack.c.l.b16 %v750
        %v3280 = vunpack.c.h.b16 %v750
        %v3281 = vunpack.c.l.b16 %v751
        %v3282 = vunpack.c.h.b16 %v751
        %v3283 = vunpack.c.l.b16 %v752
        %v3284 = vunpack.c.h.b16 %v752
        %v3285 = vunpack.c.l.b16 %v753
        %v3286 = vunpack.c.h.b16 %v753
        %v3287 = vunpack.c.l.b16 %v754
        %v3288 = vunpack.c.h.b16 %v754
        %v3289 = vunpack.c.l.b16 %v755
        %v3290 = vunpack.c.h.b16 %v755
        %v3291 = vunpack.c.l.b16 %v756
        %v3292 = vunpack.c.h.b16 %v756
        %v3293 = vunpack.c.l.b16 %v757
        %v3294 = vunpack.c.h.b16 %v757
        %v3295 = vunpack.c.l.b16 %v758
        %v3296 = vunpack.c.h.b16 %v758
        %v3297 = vunpack.c.l.b16 %v759
        %v3298 = vunpack.c.h.b16 %v759
        %v3299 = vunpack.c.l.b16 %v760
        %v3300 = vunpack.c.h.b16 %v760
        %v3301 = vunpack.c.l.b16 %v761
        %v3302 = vunpack.c.h.b16 %v761
        %v3303 = vunpack.c.l.b16 %v762
        %v3304 = vunpack.c.h.b16 %v762
        %v3305 = vunpack.c.l.b16 %v763
        %v3306 = vunpack.c.h.b16 %v763
        %v3307 = vunpack.c.l.b16 %v764
        %v3308 = vunpack.c.h.b16 %v764
        %v3309 = vunpack.c.l.b16 %v765
        %v3310 = vunpack.c.h.b16 %v765
        %v3311 = vunpack.c.l.b16 %v766
        %v3312 = vunpack.c.h.b16 %v766
        %v3313 = vunpack.c.l.b16 %v767
        %v3314 = vunpack.c.h.b16 %v767
        %v3315 = vunpack.c.l.b16 %v768
        %v3316 = vunpack.c.h.b16 %v768
        %v3317 = vunpack.c.l.b16 %v769
        %v3318 = vunpack.c.h.b16 %v769
        %v3319 = vunpack.c.l.b16 %v770
        %v3320 = vunpack.c.h.b16 %v770
        %v3321 = vunpack.c.l.b16 %v771
        %v3322 = vunpack.c.h.b16 %v771
        %v3323 = vunpack.c.l.b16 %v772
        %v3324 = vunpack.c.h.b16 %v772
        %v3325 = vunpack.c.l.b16 %v773
        %v3326 = vunpack.c.h.b16 %v773
        %v3327 = vunpack.c.l.b16 %v774
        %v3328 = vunpack.c.h.b16 %v774
        %v3329 = vunpack.c.l.b16 %v775
        %v3330 = vunpack.c.h.b16 %v775
        %v3331 = vunpack.c.l.b16 %v776
        %v3332 = vunpack.c.h.b16 %v776
        %v3333 = vunpack.c.l.b16 %v777
        %v3334 = vunpack.c.h.b16 %v777
        %v3335 = vunpack.c.l.b16 %v778
        %v3336 = vunpack.c.h.b16 %v778
        %v3337 = vunpack.c.l.b16 %v779
        %v3338 = vunpack.c.h.b16 %v779
        %v3339 = vunpack.c.l.b16 %v780
        %v3340 = vunpack.c.h.b16 %v780
        %v3341 = vunpack.c.l.b16 %v781
        %v3342 = vunpack.c.h.b16 %v781
        %v3343 = vunpack.c.l.b16 %v782
        %v3344 = vunpack.c.h.b16 %v782
        %v3345 = vunpack.c.l.b16 %v783
        %v3346 = vunpack.c.h.b16 %v783
        %v3347 = vunpack.c.l.b16 %v784
        %v3348 = vunpack.c.h.b16 %v784
        %v3349 = vunpack.c.l.b16 %v785
        %v3350 = vunpack.c.h.b16 %v785
        %v3351 = vunpack.c.l.b16 %v786
        %v3352 = vunpack.c.h.b16 %v786
        %v3353 = vunpack.c.l.b16 %v787
        %v3354 = vunpack.c.h.b16 %v787
        %v3355 = vunpack.c.l.b16 %v788
        %v3356 = vunpack.c.h.b16 %v788
        %v3357 = vunpack.c.l.b16 %v789
        %v3358 = vunpack.c.h.b16 %v789
        %v3359 = vunpack.c.l.b16 %v790
        %v3360 = vunpack.c.h.b16 %v790
        %v3361 = vunpack.c.l.b16 %v791
        %v3362 = vunpack.c.h.b16 %v791
        %v3363 = vunpack.c.l.b16 %v792
        %v3364 = vunpack.c.h.b16 %v792
        %v3365 = vunpack.c.l.b16 %v793
        %v3366 = vunpack.c.h.b16 %v793
        %v3367 = vunpack.c.l.b16 %v794
        %v3368 = vunpack.c.h.b16 %v794
        %v3369 = vunpack.c.l.b16 %v795
        %v3370 = vunpack.c.h.b16 %v795
        %v3371 = vunpack.c.l.b16 %v796
        %v3372 = vunpack.c.h.b16 %v796
        %v3373 = vunpack.c.l.b16 %v797
        %v3374 = vunpack.c.h.b16 %v797
        %v3375 = vunpack.c.l.b16 %v798
        %v3376 = vunpack.c.h.b16 %v798
        %v3377 = vunpack.c.l.b16 %v799
        %v3378 = vunpack.c.h.b16 %v799
        %v3379 = vunpack.c.l.b16 %v800
        %v3380 = vunpack.c.h.b16 %v800
        %v3381 = vunpack.c.l.b16 %v801
        %v3382 = vunpack.c.h.b16 %v801
        %v3383 = vunpack.c.l.b16 %v802
        %v3384 = vunpack.c.h.b16 %v802
        %v3385 = vunpack.c.l.b16 %v803
        %v3386 = vunpack.c.h.b16 %v803
        %v3387 = vunpack.c.l.b16 %v804
        %v3388 = vunpack.c.h.b16 %v804
        %v3389 = vunpack.c.l.b16 %v805
        %v3390 = vunpack.c.h.b16 %v805
        %v3391 = vunpack.c.l.b16 %v806
        %v3392 = vunpack.c.h.b16 %v806
        %v3393 = vunpack.c.l.b16 %v807
        %v3394 = vunpack.c.h.b16 %v807
        %v3395 = vunpack.c.l.b16 %v808
        %v3396 = vunpack.c.h.b16 %v808
        %v3397 = vunpack.c.l.b16 %v809
        %v3398 = vunpack.c.h.b16 %v809
        %v3399 = vunpack.c.l.b16 %v810
        %v3400 = vunpack.c.h.b16 %v810
        %v3401 = vunpack.c.l.b16 %v811
        %v3402 = vunpack.c.h.b16 %v811
        %v3403 = vunpack.c.l.b16 %v812
        %v3404 = vunpack.c.h.b16 %v812
        %v3405 = vunpack.c.l.b16 %v813
        %v3406 = vunpack.c.h.b16 %v813
        %v3407 = vunpack.c.l.b16 %v814
        %v3408 = vunpack.c.h.b16 %v814
        %v3409 = vunpack.c.l.b16 %v815
        %v3410 = vunpack.c.h.b16 %v815
        %v3411 = vunpack.c.l.b16 %v816
        %v3412 = vunpack.c.h.b16 %v816
        %v3413 = vunpack.c.l.b16 %v817
        %v3414 = vunpack.c.h.b16 %v817
        %v3415 = vunpack.c.l.b16 %v818
        %v3416 = vunpack.c.h.b16 %v818
        %v3417 = vunpack.c.l.b16 %v819
        %v3418 = vunpack.c.h.b16 %v819
        %v3419 = vunpack.c.l.b16 %v820
        %v3420 = vunpack.c.h.b16 %v820
        %v3421 = vunpack.c.l.b16 %v821
        %v3422 = vunpack.c.h.b16 %v821
        %v3423 = vunpack.c.l.b16 %v822
        %v3424 = vunpack.c.h.b16 %v822
        %v3425 = vunpack.c.l.b16 %v823
        %v3426 = vunpack.c.h.b16 %v823
        %v3427 = vunpack.c.l.b16 %v824
        %v3428 = vunpack.c.h.b16 %v824
        %v3429 = vunpack.c.l.b16 %v825
        %v3430 = vunpack.c.h.b16 %v825
        %v3431 = vunpack.c.l.b16 %v826
        %v3432 = vunpack.c.h.b16 %v826
        %v3433 = vunpack.c.l.b16 %v827
        %v3434 = vunpack.c.h.b16 %v827
        %v3435 = vunpack.c.l.b16 %v828
        %v3436 = vunpack.c.h.b16 %v828
        %v3437 = vunpack.c.l.b16 %v829
        %v3438 = vunpack.c.h.b16 %v829
        %v3439 = vunpack.c.l.b16 %v830
        %v3440 = vunpack.c.h.b16 %v830
        %v3441 = vunpack.c.l.b16 %v831
        %v3442 = vunpack.c.h.b16 %v831
        %v3443 = vunpack.c.l.b16 %v832
        %v3444 = vunpack.c.h.b16 %v832
        %v3445 = vunpack.c.l.b16 %v833
        %v3446 = vunpack.c.h.b16 %v833
        %v3447 = vunpack.c.l.b16 %v834
        %v3448 = vunpack.c.h.b16 %v834
        %v3449 = vunpack.c.l.b16 %v835
        %v3450 = vunpack.c.h.b16 %v835
        %v3451 = vunpack.c.l.b16 %v836
        %v3452 = vunpack.c.h.b16 %v836
        %v3453 = vunpack.c.l.b16 %v837
        %v3454 = vunpack.c.h.b16 %v837
        %v3455 = vunpack.c.l.b16 %v838
        %v3456 = vunpack.c.h.b16 %v838
        %v3457 = vunpack.c.l.b16 %v839
        %v3458 = vunpack.c.h.b16 %v839
        %v3459 = vunpack.c.l.b16 %v840
        %v3460 = vunpack.c.h.b16 %v840
        %v3461 = vunpack.c.l.b16 %v841
        %v3462 = vunpack.c.h.b16 %v841
        %v3463 = vunpack.c.l.b16 %v842
        %v3464 = vunpack.c.h.b16 %v842
        %v3465 = vunpack.c.l.b16 %v843
        %v3466 = vunpack.c.h.b16 %v843
        %v3467 = vunpack.c.l.b16 %v844
        %v3468 = vunpack.c.h.b16 %v844
        %v3469 = vunpack.c.l.b16 %v845
        %v3470 = vunpack.c.h.b16 %v845
        %v3471 = vunpack.c.l.b16 %v846
        %v3472 = vunpack.c.h.b16 %v846
        %v3473 = vunpack.c.l.b16 %v847
        %v3474 = vunpack.c.h.b16 %v847
        %v3475 = vunpack.c.l.b16 %v848
        %v3476 = vunpack.c.h.b16 %v848
        %v3477 = vunpack.c.l.b16 %v849
        %v3478 = vunpack.c.h.b16 %v849
        %v3479 = vunpack.c.l.b16 %v850
        %v3480 = vunpack.c.h.b16 %v850
        %v3481 = vunpack.c.l.b16 %v851
        %v3482 = vunpack.c.h.b16 %v851
        %v3483 = vunpack.c.l.b16 %v852
        %v3484 = vunpack.c.h.b16 %v852
        %v3485 = vunpack.c.l.b16 %v853
        %v3486 = vunpack.c.h.b16 %v853
        %v3487 = vunpack.c.l.b16 %v854
        %v3488 = vunpack.c.h.b16 %v854
        %v3489 = vunpack.c.l.b16 %v855
        %v3490 = vunpack.c.h.b16 %v855
        %v3491 = vunpack.c.l.b16 %v856
        %v3492 = vunpack.c.h.b16 %v856
        %v3493 = vunpack.c.l.b16 %v857
        %v3494 = vunpack.c.h.b16 %v857
        %v3495 = vunpack.c.l.b16 %v858
        %v3496 = vunpack.c.h.b16 %v858
        %v3497 = vunpack.c.l.b16 %v859
        %v3498 = vunpack.c.h.b16 %v859
        %v3499 = vunpack.c.l.b16 %v860
        %v3500 = vunpack.c.h.b16 %v860
        %v3501 = vunpack.c.l.b16 %v861
        %v3502 = vunpack.c.h.b16 %v861
        %v3503 = vunpack.c.l.b16 %v862
        %v3504 = vunpack.c.h.b16 %v862
        %v3505 = vunpack.c.l.b16 %v863
        %v3506 = vunpack.c.h.b16 %v863
        %v3507 = vunpack.c.l.b16 %v864
        %v3508 = vunpack.c.h.b16 %v864
        %v3509 = vunpack.c.l.b16 %v865
        %v3510 = vunpack.c.h.b16 %v865
        %v3511 = vunpack.c.l.b16 %v866
        %v3512 = vunpack.c.h.b16 %v866
        %v3513 = vunpack.c.l.b16 %v867
        %v3514 = vunpack.c.h.b16 %v867
        %v3515 = vunpack.c.l.b16 %v868
        %v3516 = vunpack.c.h.b16 %v868
        %v3517 = vunpack.c.l.b16 %v869
        %v3518 = vunpack.c.h.b16 %v869
        %v3519 = vunpack.c.l.b16 %v870
        %v3520 = vunpack.c.h.b16 %v870
        %v3521 = vunpack.c.l.b16 %v871
        %v3522 = vunpack.c.h.b16 %v871
        %v3523 = vunpack.c.l.b16 %v872
        %v3524 = vunpack.c.h.b16 %v872
        %v3525 = vunpack.c.l.b16 %v873
        %v3526 = vunpack.c.h.b16 %v873
        %v3527 = vunpack.c.l.b16 %v874
        %v3528 = vunpack.c.h.b16 %v874
        %v3529 = vunpack.c.l.b16 %v875
        %v3530 = vunpack.c.h.b16 %v875
        %v3531 = vunpack.c.l.b16 %v876
        %v3532 = vunpack.c.h.b16 %v876
        %v3533 = vunpack.c.l.b16 %v877
        %v3534 = vunpack.c.h.b16 %v877
        %v3535 = vunpack.c.l.b16 %v878
        %v3536 = vunpack.c.h.b16 %v878
        %v3537 = vunpack.c.l.b16 %v879
        %v3538 = vunpack.c.h.b16 %v879
        %v3539 = vunpack.c.l.b16 %v880
        %v3540 = vunpack.c.h.b16 %v880
        %v3541 = vunpack.c.l.b16 %v881
        %v3542 = vunpack.c.h.b16 %v881
        %v3543 = vunpack.c.l.b16 %v882
        %v3544 = vunpack.c.h.b16 %v882
        %v3545 = vunpack.c.l.b16 %v883
        %v3546 = vunpack.c.h.b16 %v883
        %v3547 = vunpack.c.l.b16 %v884
        %v3548 = vunpack.c.h.b16 %v884
        %v3549 = vunpack.c.l.b16 %v885
        %v3550 = vunpack.c.h.b16 %v885
        %v3551 = vunpack.c.l.b16 %v886
        %v3552 = vunpack.c.h.b16 %v886
        %v3553 = vunpack.c.l.b16 %v887
        %v3554 = vunpack.c.h.b16 %v887
        %v3555 = vunpack.c.l.b16 %v888
        %v3556 = vunpack.c.h.b16 %v888
        %v3557 = vunpack.c.l.b16 %v889
        %v3558 = vunpack.c.h.b16 %v889
        %v3559 = vunpack.c.l.b16 %v890
        %v3560 = vunpack.c.h.b16 %v890
        %v3561 = vunpack.c.l.b16 %v891
        %v3562 = vunpack.c.h.b16 %v891
        %v3563 = vunpack.c.l.b16 %v892
        %v3564 = vunpack.c.h.b16 %v892
        %v3565 = vunpack.c.l.b16 %v893
        %v3566 = vunpack.c.h.b16 %v893
        %v3567 = vunpack.c.l.b16 %v894
        %v3568 = vunpack.c.h.b16 %v894
        %v3569 = vunpack.c.l.b16 %v895
        %v3570 = vunpack.c.h.b16 %v895
        %v3571 = vunpack.c.l.b16 %v896
        %v3572 = vunpack.c.h.b16 %v896
        %v3573 = vunpack.c.l.b16 %v897
        %v3574 = vunpack.c.h.b16 %v897
        %v3575 = vunpack.c.l.b16 %v898
        %v3576 = vunpack.c.h.b16 %v898
        %v3577 = vunpack.c.l.b16 %v899
        %v3578 = vunpack.c.h.b16 %v899
        %v3579 = vunpack.c.l.b16 %v900
        %v3580 = vunpack.c.h.b16 %v900
        %v3581 = vunpack.c.l.b16 %v901
        %v3582 = vunpack.c.h.b16 %v901
        %v3583 = vunpack.c.l.b16 %v902
        %v3584 = vunpack.c.h.b16 %v902
        %v3585 = vunpack.c.l.b16 %v903
        %v3586 = vunpack.c.h.b16 %v903
        %v3587 = vunpack.c.l.b16 %v904
        %v3588 = vunpack.c.h.b16 %v904
        %v3589 = vunpack.c.l.b16 %v905
        %v3590 = vunpack.c.h.b16 %v905
        %v3591 = vunpack.c.l.b16 %v906
        %v3592 = vunpack.c.h.b16 %v906
        %v3593 = vunpack.c.l.b16 %v907
        %v3594 = vunpack.c.h.b16 %v907
        %v3595 = vunpack.c.l.b16 %v908
        %v3596 = vunpack.c.h.b16 %v908
        %v3597 = vunpack.c.l.b16 %v909
        %v3598 = vunpack.c.h.b16 %v909
        %v3599 = vunpack.c.l.b16 %v910
        %v3600 = vunpack.c.h.b16 %v910
        %v3601 = vunpack.c.l.b16 %v911
        %v3602 = vunpack.c.h.b16 %v911
        %v3603 = vunpack.c.l.b16 %v912
        %v3604 = vunpack.c.h.b16 %v912
        %v3605 = vunpack.c.l.b16 %v913
        %v3606 = vunpack.c.h.b16 %v913
        %v3607 = vunpack.c.l.b16 %v914
        %v3608 = vunpack.c.h.b16 %v914
        %v3609 = vunpack.c.l.b16 %v915
        %v3610 = vunpack.c.h.b16 %v915
        %v3611 = vunpack.c.l.b16 %v916
        %v3612 = vunpack.c.h.b16 %v916
        %v3613 = vunpack.c.l.b16 %v917
        %v3614 = vunpack.c.h.b16 %v917
        %v3615 = vunpack.c.l.b16 %v918
        %v3616 = vunpack.c.h.b16 %v918
        %v3617 = vunpack.c.l.b16 %v919
        %v3618 = vunpack.c.h.b16 %v919
        %v3619 = vunpack.c.l.b16 %v920
        %v3620 = vunpack.c.h.b16 %v920
        %v3621 = vunpack.c.l.b16 %v921
        %v3622 = vunpack.c.h.b16 %v921
        %v3623 = vunpack.c.l.b16 %v922
        %v3624 = vunpack.c.h.b16 %v922
        %v3625 = vunpack.c.l.b16 %v923
        %v3626 = vunpack.c.h.b16 %v923
        %v3627 = vunpack.c.l.b16 %v924
        %v3628 = vunpack.c.h.b16 %v924
        %v3629 = vunpack.c.l.b16 %v925
        %v3630 = vunpack.c.h.b16 %v925
        %v3631 = vunpack.c.l.b16 %v926
        %v3632 = vunpack.c.h.b16 %v926
        %v3633 = vunpack.c.l.b16 %v927
        %v3634 = vunpack.c.h.b16 %v927
        %v3635 = vunpack.c.l.b16 %v928
        %v3636 = vunpack.c.h.b16 %v928
        %v3637 = vunpack.c.l.b16 %v929
        %v3638 = vunpack.c.h.b16 %v929
        %v3639 = vunpack.c.l.b16 %v930
        %v3640 = vunpack.c.h.b16 %v930
        %v3641 = vunpack.c.l.b16 %v931
        %v3642 = vunpack.c.h.b16 %v931
        %v3643 = vunpack.c.l.b16 %v932
        %v3644 = vunpack.c.h.b16 %v932
        %v3645 = vunpack.c.l.b16 %v933
        %v3646 = vunpack.c.h.b16 %v933
        %v3647 = vunpack.c.l.b16 %v934
        %v3648 = vunpack.c.h.b16 %v934
        %v3649 = vunpack.c.l.b16 %v935
        %v3650 = vunpack.c.h.b16 %v935
        %v3651 = vunpack.c.l.b16 %v936
        %v3652 = vunpack.c.h.b16 %v936
        %v3653 = vunpack.c.l.b16 %v937
        %v3654 = vunpack.c.h.b16 %v937
        %v3655 = vunpack.c.l.b16 %v938
        %v3656 = vunpack.c.h.b16 %v938
        %v3657 = vunpack.c.l.b16 %v939
        %v3658 = vunpack.c.h.b16 %v939
        %v3659 = vunpack.c.l.b16 %v940
        %v3660 = vunpack.c.h.b16 %v940
        %v3661 = vunpack.c.l.b16 %v941
        %v3662 = vunpack.c.h.b16 %v941
        %v3663 = vunpack.c.l.b16 %v942
        %v3664 = vunpack.c.h.b16 %v942
        %v3665 = vunpack.c.l.b16 %v943
        %v3666 = vunpack.c.h.b16 %v943
        %v3667 = vunpack.c.l.b16 %v944
        %v3668 = vunpack.c.h.b16 %v944
        %v3669 = vunpack.c.l.b16 %v945
        %v3670 = vunpack.c.h.b16 %v945
        %v3671 = vunpack.c.l.b16 %v946
        %v3672 = vunpack.c.h.b16 %v946
        %v3673 = vunpack.c.l.b16 %v947
        %v3674 = vunpack.c.h.b16 %v947
        %v3675 = vunpack.c.l.b16 %v948
        %v3676 = vunpack.c.h.b16 %v948
        %v3677 = vunpack.c.l.b16 %v949
        %v3678 = vunpack.c.h.b16 %v949
        %v3679 = vunpack.c.l.b16 %v950
        %v3680 = vunpack.c.h.b16 %v950
        %v3681 = vunpack.c.l.b16 %v951
        %v3682 = vunpack.c.h.b16 %v951
        %v3683 = vunpack.c.l.b16 %v952
        %v3684 = vunpack.c.h.b16 %v952
        %v3685 = vunpack.c.l.b16 %v953
        %v3686 = vunpack.c.h.b16 %v953
        %v3687 = vunpack.c.l.b16 %v954
        %v3688 = vunpack.c.h.b16 %v954
        %v3689 = vunpack.c.l.b16 %v955
        %v3690 = vunpack.c.h.b16 %v955
        %v3691 = vunpack.c.l.b16 %v956
        %v3692 = vunpack.c.h.b16 %v956
        %v3693 = vunpack.c.l.b16 %v957
        %v3694 = vunpack.c.h.b16 %v957
        %v3695 = vunpack.c.l.b16 %v958
        %v3696 = vunpack.c.h.b16 %v958
        %v3697 = vunpack.c.l.b16 %v959
        %v3698 = vunpack.c.h.b16 %v959
        %v3699 = vunpack.c.l.b16 %v960
        %v3700 = vunpack.c.h.b16 %v960
        %v3701 = vunpack.c.l.b16 %v961
        %v3702 = vunpack.c.h.b16 %v961
        %v3703 = vunpack.c.l.b16 %v962
        %v3704 = vunpack.c.h.b16 %v962
        %v3705 = vunpack.c.l.b16 %v963
        %v3706 = vunpack.c.h.b16 %v963
        %v3707 = vunpack.c.l.b16 %v964
        %v3708 = vunpack.c.h.b16 %v964
        %v3709 = vunpack.c.l.b16 %v965
        %v3710 = vunpack.c.h.b16 %v965
        %v3711 = vunpack.c.l.b16 %v966
        %v3712 = vunpack.c.h.b16 %v966
        %v3713 = vunpack.c.l.b16 %v967
        %v3714 = vunpack.c.h.b16 %v967
        %v3715 = vunpack.c.l.b16 %v968
        %v3716 = vunpack.c.h.b16 %v968
        %v3717 = vunpack.c.l.b16 %v969
        %v3718 = vunpack.c.h.b16 %v969
        %v3719 = vunpack.c.l.b16 %v970
        %v3720 = vunpack.c.h.b16 %v970
        %v3721 = vunpack.c.l.b16 %v971
        %v3722 = vunpack.c.h.b16 %v971
        %v3723 = vunpack.c.l.b16 %v972
        %v3724 = vunpack.c.h.b16 %v972
        %v3725 = vunpack.c.l.b16 %v973
        %v3726 = vunpack.c.h.b16 %v973
        %v3727 = vunpack.c.l.b16 %v974
        %v3728 = vunpack.c.h.b16 %v974
        %v3729 = vunpack.c.l.b16 %v975
        %v3730 = vunpack.c.h.b16 %v975
        %v3731 = vunpack.c.l.b16 %v976
        %v3732 = vunpack.c.h.b16 %v976
        %v3733 = vunpack.c.l.b16 %v977
        %v3734 = vunpack.c.h.b16 %v977
        %v3735 = vunpack.c.l.b16 %v978
        %v3736 = vunpack.c.h.b16 %v978
        %v3737 = vunpack.c.l.b16 %v979
        %v3738 = vunpack.c.h.b16 %v979
        %v3739 = vunpack.c.l.b16 %v980
        %v3740 = vunpack.c.h.b16 %v980
        %v3741 = vunpack.c.l.b16 %v981
        %v3742 = vunpack.c.h.b16 %v981
        %v3743 = vunpack.c.l.b16 %v982
        %v3744 = vunpack.c.h.b16 %v982
        %v3745 = vunpack.c.l.b16 %v983
        %v3746 = vunpack.c.h.b16 %v983
        %v3747 = vunpack.c.l.b16 %v984
        %v3748 = vunpack.c.h.b16 %v984
        %v3749 = vunpack.c.l.b16 %v985
        %v3750 = vunpack.c.h.b16 %v985
        %v3751 = vunpack.c.l.b16 %v986
        %v3752 = vunpack.c.h.b16 %v986
        %v3753 = vunpack.c.l.b16 %v987
        %v3754 = vunpack.c.h.b16 %v987
        %v3755 = vunpack.c.l.b16 %v988
        %v3756 = vunpack.c.h.b16 %v988
        %v3757 = vunpack.c.l.b16 %v989
        %v3758 = vunpack.c.h.b16 %v989
        %v3759 = vunpack.c.l.b16 %v990
        %v3760 = vunpack.c.h.b16 %v990
        %v3761 = vunpack.c.l.b16 %v991
        %v3762 = vunpack.c.h.b16 %v991
        %v3763 = vunpack.c.l.b16 %v992
        %v3764 = vunpack.c.h.b16 %v992
        %v3765 = vunpack.c.l.b16 %v993
        %v3766 = vunpack.c.h.b16 %v993
        %v3767 = vunpack.c.l.b16 %v994
        %v3768 = vunpack.c.h.b16 %v994
        %v3769 = vunpack.c.l.b16 %v995
        %v3770 = vunpack.c.h.b16 %v995
        %v3771 = vunpack.c.l.b16 %v996
        %v3772 = vunpack.c.h.b16 %v996
        %v3773 = vunpack.c.l.b16 %v997
        %v3774 = vunpack.c.h.b16 %v997
        %v3775 = vunpack.c.l.b16 %v998
        %v3776 = vunpack.c.h.b16 %v998
        %v3777 = vunpack.c.l.b16 %v999
        %v3778 = vunpack.c.h.b16 %v999
        %v3779 = vunpack.c.l.b16 %v1000
        %v3780 = vunpack.c.h.b16 %v1000
        %v3781 = vunpack.c.l.b16 %v1001
        %v3782 = vunpack.c.h.b16 %v1001
        %v3783 = vunpack.c.l.b16 %v1002
        %v3784 = vunpack.c.h.b16 %v1002
        %v3785 = vunpack.c.l.b16 %v1003
        %v3786 = vunpack.c.h.b16 %v1003
        %v3787 = vunpack.c.l.b16 %v1004
        %v3788 = vunpack.c.h.b16 %v1004
        %v3789 = vunpack.c.l.b16 %v1005
        %v3790 = vunpack.c.h.b16 %v1005
        %v3791 = vunpack.c.l.b16 %v1006
        %v3792 = vunpack.c.h.b16 %v1006
        %v3793 = vunpack.c.l.b16 %v1007
        %v3794 = vunpack.c.h.b16 %v1007
        %v3795 = vunpack.c.l.b16 %v1008
        %v3796 = vunpack.c.h.b16 %v1008
        %v3797 = vunpack.c.l.b16 %v1009
        %v3798 = vunpack.c.h.b16 %v1009
        %v3799 = vunpack.c.l.b16 %v1010
        %v3800 = vunpack.c.h.b16 %v1010
        %v3801 = vunpack.c.l.b16 %v1011
        %v3802 = vunpack.c.h.b16 %v1011
        %v3803 = vunpack.c.l.b16 %v1012
        %v3804 = vunpack.c.h.b16 %v1012
        %v3805 = vunpack.c.l.b16 %v1013
        %v3806 = vunpack.c.h.b16 %v1013
        %v3807 = vunpack.c.l.b16 %v1014
        %v3808 = vunpack.c.h.b16 %v1014
        %v3809 = vunpack.c.l.b16 %v1015
        %v3810 = vunpack.c.h.b16 %v1015
        %v3811 = vunpack.c.l.b16 %v1016
        %v3812 = vunpack.c.h.b16 %v1016
        %v3813 = vunpack.c.l.b16 %v1017
        %v3814 = vunpack.c.h.b16 %v1017
        %v3815 = vunpack.c.l.b16 %v1018
        %v3816 = vunpack.c.h.b16 %v1018
        %v3817 = vunpack.c.l.b16 %v1019
        %v3818 = vunpack.c.h.b16 %v1019
        %v3819 = vunpack.c.l.b16 %v1020
        %v3820 = vunpack.c.h.b16 %v1020
        %v3821 = vunpack.c.l.b16 %v1021
        %v3822 = vunpack.c.h.b16 %v1021
        %v3823 = vunpack.c.l.b16 %v1022
        %v3824 = vunpack.c.h.b16 %v1022
        %v3825 = vunpack.c.l.b16 %v1023
        %v3826 = vunpack.c.h.b16 %v1023
        %v3827 = vunpack.c.l.b16 %v1024
        %v3828 = vunpack.c.h.b16 %v1024
        %v3829 = vunpack.c.l.b16 %v1025
        %v3830 = vunpack.c.h.b16 %v1025
        %v3831 = vunpack.c.l.b16 %v1026
        %v3832 = vunpack.c.h.b16 %v1026
        %v3833 = vunpack.c.l.b16 %v1027
        %v3834 = vunpack.c.h.b16 %v1027
        %v3835 = vunpack.c.l.b16 %v1028
        %v3836 = vunpack.c.h.b16 %v1028
        %v3837 = vunpack.c.l.b16 %v1029
        %v3838 = vunpack.c.h.b16 %v1029
        %v3839 = vunpack.c.l.b16 %v1030
        %v3840 = vunpack.c.h.b16 %v1030
        %v3841 = vunpack.c.l.b16 %v1031
        %v3842 = vunpack.c.h.b16 %v1031
        %v3843 = vunpack.c.l.b16 %v1032
        %v3844 = vunpack.c.h.b16 %v1032
        %v3845 = vunpack.c.l.b16 %v1033
        %v3846 = vunpack.c.h.b16 %v1033
        %v3847 = vunpack.c.l.b16 %v1034
        %v3848 = vunpack.c.h.b16 %v1034
        %v3849 = vunpack.c.l.b16 %v1035
        %v3850 = vunpack.c.h.b16 %v1035
        %v3851 = vunpack.c.l.b16 %v1036
        %v3852 = vunpack.c.h.b16 %v1036
        %v3853 = vunpack.c.l.b16 %v1037
        %v3854 = vunpack.c.h.b16 %v1037
        %v3855 = vunpack.c.l.b16 %v1038
        %v3856 = vunpack.c.h.b16 %v1038
        %v3857 = vunpack.c.l.b16 %v1039
        %v3858 = vunpack.c.h.b16 %v1039
        %v3859 = vunpack.c.l.b16 %v1040
        %v3860 = vunpack.c.h.b16 %v1040
        %v3861 = vunpack.c.l.b16 %v1041
        %v3862 = vunpack.c.h.b16 %v1041
        %v3863 = vunpack.c.l.b16 %v1042
        %v3864 = vunpack.c.h.b16 %v1042
        %v3865 = vunpack.c.l.b16 %v1043
        %v3866 = vunpack.c.h.b16 %v1043
        %v3867 = vunpack.c.l.b16 %v1044
        %v3868 = vunpack.c.h.b16 %v1044
        %v3869 = vunpack.c.l.b16 %v1045
        %v3870 = vunpack.c.h.b16 %v1045
        %v3871 = vunpack.c.l.b16 %v1046
        %v3872 = vunpack.c.h.b16 %v1046
        %v3873 = vunpack.c.l.b16 %v1047
        %v3874 = vunpack.c.h.b16 %v1047
        %v3875 = vunpack.c.l.b16 %v1048
        %v3876 = vunpack.c.h.b16 %v1048
        %v3877 = vunpack.c.l.b16 %v1049
        %v3878 = vunpack.c.h.b16 %v1049
        %v3879 = vunpack.c.l.b16 %v1050
        %v3880 = vunpack.c.h.b16 %v1050
        %v3881 = vunpack.c.l.b16 %v1051
        %v3882 = vunpack.c.h.b16 %v1051
        %v3883 = vunpack.c.l.b16 %v1052
        %v3884 = vunpack.c.h.b16 %v1052
        %v3885 = vunpack.c.l.b16 %v1053
        %v3886 = vunpack.c.h.b16 %v1053
        %v3887 = vunpack.c.l.b16 %v1054
        %v3888 = vunpack.c.h.b16 %v1054
        %v3889 = vunpack.c.l.b16 %v1055
        %v3890 = vunpack.c.h.b16 %v1055
        %v3891 = vunpack.c.l.b16 %v1056
        %v3892 = vunpack.c.h.b16 %v1056
        %v3893 = vunpack.c.l.b16 %v1057
        %v3894 = vunpack.c.h.b16 %v1057
        %v3895 = vunpack.c.l.b16 %v1058
        %v3896 = vunpack.c.h.b16 %v1058
        %v3897 = vunpack.c.l.b16 %v1059
        %v3898 = vunpack.c.h.b16 %v1059
        %v3899 = vunpack.c.l.b16 %v1060
        %v3900 = vunpack.c.h.b16 %v1060
        %v3901 = vunpack.c.l.b16 %v1061
        %v3902 = vunpack.c.h.b16 %v1061
        %v3903 = vunpack.c.l.b16 %v1062
        %v3904 = vunpack.c.h.b16 %v1062
        %v3905 = vunpack.c.l.b16 %v1063
        %v3906 = vunpack.c.h.b16 %v1063
        %v3907 = vunpack.c.l.b16 %v1064
        %v3908 = vunpack.c.h.b16 %v1064
        %v3909 = vunpack.c.l.b16 %v1065
        %v3910 = vunpack.c.h.b16 %v1065
        %v3911 = vunpack.c.l.b16 %v1066
        %v3912 = vunpack.c.h.b16 %v1066
        %v3913 = vunpack.c.l.b16 %v1067
        %v3914 = vunpack.c.h.b16 %v1067
        %v3915 = vunpack.c.l.b16 %v1068
        %v3916 = vunpack.c.h.b16 %v1068
        %v3917 = vunpack.c.l.b16 %v1069
        %v3918 = vunpack.c.h.b16 %v1069
        %v3919 = vunpack.c.l.b16 %v1070
        %v3920 = vunpack.c.h.b16 %v1070
        %v3921 = vunpack.c.l.b16 %v1071
        %v3922 = vunpack.c.h.b16 %v1071
        %v3923 = vunpack.c.l.b16 %v1072
        %v3924 = vunpack.c.h.b16 %v1072
        %v3925 = vunpack.c.l.b16 %v1073
        %v3926 = vunpack.c.h.b16 %v1073
        %v3927 = vunpack.c.l.b16 %v1074
        %v3928 = vunpack.c.h.b16 %v1074
        %v3929 = vunpack.c.l.b16 %v1075
        %v3930 = vunpack.c.h.b16 %v1075
        %v3931 = vunpack.c.l.b16 %v1076
        %v3932 = vunpack.c.h.b16 %v1076
        %v3933 = vunpack.c.l.b16 %v1077
        %v3934 = vunpack.c.h.b16 %v1077
        %v3935 = vunpack.c.l.b16 %v1078
        %v3936 = vunpack.c.h.b16 %v1078
        %v3937 = vunpack.c.l.b16 %v1079
        %v3938 = vunpack.c.h.b16 %v1079
        %v3939 = vunpack.c.l.b16 %v1080
        %v3940 = vunpack.c.h.b16 %v1080
        %v3941 = vunpack.c.l.b16 %v1081
        %v3942 = vunpack.c.h.b16 %v1081
        %v3943 = vunpack.c.l.b16 %v1082
        %v3944 = vunpack.c.h.b16 %v1082
        %v3945 = vunpack.c.l.b16 %v1083
        %v3946 = vunpack.c.h.b16 %v1083
        %v3947 = vunpack.c.l.b16 %v1084
        %v3948 = vunpack.c.h.b16 %v1084
        %v3949 = vunpack.c.l.b16 %v1085
        %v3950 = vunpack.c.h.b16 %v1085
        %v3951 = vunpack.c.l.b16 %v1086
        %v3952 = vunpack.c.h.b16 %v1086
        %v3953 = vunpack.c.l.b16 %v1087
        %v3954 = vunpack.c.h.b16 %v1087
        %v3955 = vunpack.c.l.b16 %v1088
        %v3956 = vunpack.c.h.b16 %v1088
        %v3957 = vunpack.c.l.b16 %v1089
        %v3958 = vunpack.c.h.b16 %v1089
        %v3959 = vunpack.c.l.b16 %v1090
        %v3960 = vunpack.c.h.b16 %v1090
        %v3961 = vunpack.c.l.b16 %v1091
        %v3962 = vunpack.c.h.b16 %v1091
        %v3963 = vunpack.c.l.b16 %v1092
        %v3964 = vunpack.c.h.b16 %v1092
        %v3965 = vunpack.c.l.b16 %v1093
        %v3966 = vunpack.c.h.b16 %v1093
        %v3967 = vunpack.c.l.b16 %v1094
        %v3968 = vunpack.c.h.b16 %v1094
        %v3969 = vunpack.c.l.b16 %v1095
        %v3970 = vunpack.c.h.b16 %v1095
        %v3971 = vunpack.c.l.b16 %v1096
        %v3972 = vunpack.c.h.b16 %v1096
        %v3973 = vunpack.c.l.b16 %v1097
        %v3974 = vunpack.c.h.b16 %v1097
        %v3975 = vunpack.c.l.b16 %v1098
        %v3976 = vunpack.c.h.b16 %v1098
        %v3977 = vunpack.c.l.b16 %v1099
        %v3978 = vunpack.c.h.b16 %v1099
        %v3979 = vunpack.c.l.b16 %v1100
        %v3980 = vunpack.c.h.b16 %v1100
        %v3981 = vunpack.c.l.b16 %v1101
        %v3982 = vunpack.c.h.b16 %v1101
        %v3983 = vunpack.c.l.b16 %v1102
        %v3984 = vunpack.c.h.b16 %v1102
        %v3985 = vunpack.c.l.b16 %v1103
        %v3986 = vunpack.c.h.b16 %v1103
        %v3987 = vunpack.c.l.b16 %v1104
        %v3988 = vunpack.c.h.b16 %v1104
        %v3989 = vunpack.c.l.b16 %v1105
        %v3990 = vunpack.c.h.b16 %v1105
        %v3991 = vunpack.c.l.b16 %v1106
        %v3992 = vunpack.c.h.b16 %v1106
        %v3993 = vunpack.c.l.b16 %v1107
        %v3994 = vunpack.c.h.b16 %v1107
        %v3995 = vunpack.c.l.b16 %v1108
        %v3996 = vunpack.c.h.b16 %v1108
        %v3997 = vunpack.c.l.b16 %v1109
        %v3998 = vunpack.c.h.b16 %v1109
        %v3999 = vunpack.c.l.b16 %v1110
        %v4000 = vunpack.c.h.b16 %v1110
        %v4001 = vunpack.c.l.b16 %v1111
        %v4002 = vunpack.c.h.b16 %v1111
        %v4003 = vunpack.c.l.b16 %v1112
        %v4004 = vunpack.c.h.b16 %v1112
        %v4005 = vunpack.c.l.b16 %v1113
        %v4006 = vunpack.c.h.b16 %v1113
        %v4007 = vunpack.c.l.b16 %v1114
        %v4008 = vunpack.c.h.b16 %v1114
        %v4009 = vunpack.c.l.b16 %v1115
        %v4010 = vunpack.c.h.b16 %v1115
        %v4011 = vunpack.c.l.b16 %v1116
        %v4012 = vunpack.c.h.b16 %v1116
        %v4013 = vunpack.c.l.b16 %v1117
        %v4014 = vunpack.c.h.b16 %v1117
        %v4015 = vunpack.c.l.b16 %v1118
        %v4016 = vunpack.c.h.b16 %v1118
        %v4017 = vunpack.c.l.b16 %v1119
        %v4018 = vunpack.c.h.b16 %v1119
        %v4019 = vunpack.c.l.b16 %v1120
        %v4020 = vunpack.c.h.b16 %v1120
        %v4021 = vunpack.c.l.b16 %v1121
        %v4022 = vunpack.c.h.b16 %v1121
        %v4023 = vunpack.c.l.b16 %v1122
        %v4024 = vunpack.c.h.b16 %v1122
        %v4025 = vunpack.c.l.b16 %v1123
        %v4026 = vunpack.c.h.b16 %v1123
        %v4027 = vunpack.c.l.b16 %v1124
        %v4028 = vunpack.c.h.b16 %v1124
        %v4029 = vunpack.c.l.b16 %v1125
        %v4030 = vunpack.c.h.b16 %v1125
        %v4031 = vunpack.c.l.b16 %v1126
        %v4032 = vunpack.c.h.b16 %v1126
        %v4033 = vunpack.c.l.b16 %v1127
        %v4034 = vunpack.c.h.b16 %v1127
        %v4035 = vunpack.c.l.b16 %v1128
        %v4036 = vunpack.c.h.b16 %v1128
        %v4037 = vunpack.c.l.b16 %v1129
        %v4038 = vunpack.c.h.b16 %v1129
        %v4039 = vunpack.c.l.b16 %v1130
        %v4040 = vunpack.c.h.b16 %v1130
        %v4041 = vunpack.c.l.b16 %v1131
        %v4042 = vunpack.c.h.b16 %v1131
        %v4043 = vunpack.c.l.b16 %v1132
        %v4044 = vunpack.c.h.b16 %v1132
        %v4045 = vunpack.c.l.b16 %v1133
        %v4046 = vunpack.c.h.b16 %v1133
        %v4047 = vunpack.c.l.b16 %v1134
        %v4048 = vunpack.c.h.b16 %v1134
        %v4049 = vunpack.c.l.b16 %v1135
        %v4050 = vunpack.c.h.b16 %v1135
        %v4051 = vunpack.c.l.b16 %v1136
        %v4052 = vunpack.c.h.b16 %v1136
        %v4053 = vunpack.c.l.b16 %v1137
        %v4054 = vunpack.c.h.b16 %v1137
        %v4055 = vunpack.c.l.b16 %v1138
        %v4056 = vunpack.c.h.b16 %v1138
        %v4057 = vunpack.c.l.b16 %v1139
        %v4058 = vunpack.c.h.b16 %v1139
        %v4059 = vunpack.c.l.b16 %v1140
        %v4060 = vunpack.c.h.b16 %v1140
        %v4061 = vunpack.c.l.b16 %v1141
        %v4062 = vunpack.c.h.b16 %v1141
        %v4063 = vunpack.c.l.b16 %v1142
        %v4064 = vunpack.c.h.b16 %v1142
        %v4065 = vunpack.c.l.b16 %v1143
        %v4066 = vunpack.c.h.b16 %v1143
        %v4067 = vunpack.c.l.b16 %v1144
        %v4068 = vunpack.c.h.b16 %v1144
        %v4069 = vunpack.c.l.b16 %v1145
        %v4070 = vunpack.c.h.b16 %v1145
        %v4071 = vunpack.c.l.b16 %v1146
        %v4072 = vunpack.c.h.b16 %v1146
        %v4073 = vunpack.c.l.b16 %v1147
        %v4074 = vunpack.c.h.b16 %v1147
        %v4075 = vunpack.c.l.b16 %v1148
        %v4076 = vunpack.c.h.b16 %v1148
        %v4077 = vunpack.c.l.b16 %v1149
        %v4078 = vunpack.c.h.b16 %v1149
        %v4079 = vunpack.c.l.b16 %v1150
        %v4080 = vunpack.c.h.b16 %v1150
        %v4081 = vunpack.c.l.b16 %v1151
        %v4082 = vunpack.c.h.b16 %v1151
        %v4083 = vunpack.c.l.b16 %v1152
        %v4084 = vunpack.c.h.b16 %v1152
        %v4085 = vunpack.c.l.b16 %v1153
        %v4086 = vunpack.c.h.b16 %v1153
        %v4087 = vunpack.c.l.b16 %v1154
        %v4088 = vunpack.c.h.b16 %v1154
        %v4089 = vunpack.c.l.b16 %v1155
        %v4090 = vunpack.c.h.b16 %v1155
        %v4091 = vunpack.c.l.b16 %v1156
        %v4092 = vunpack.c.h.b16 %v1156
        %v4093 = vunpack.c.l.b16 %v1157
        %v4094 = vunpack.c.h.b16 %v1157
        %v4095 = vunpack.c.l.b16 %v1158
        %v4096 = vunpack.c.h.b16 %v1158
        %v4097 = vunpack.c.l.b16 %v1159
        %v4098 = vunpack.c.h.b16 %v1159
        %v4099 = vunpack.c.l.b16 %v1160
        %v4100 = vunpack.c.h.b16 %v1160
        %v4101 = vunpack.c.l.b16 %v1161
        %v4102 = vunpack.c.h.b16 %v1161
        %v4103 = vunpack.c.l.b16 %v1162
        %v4104 = vunpack.c.h.b16 %v1162
        %v4105 = vunpack.c.l.b16 %v1163
        %v4106 = vunpack.c.h.b16 %v1163
        %v4107 = vunpack.c.l.b16 %v1164
        %v4108 = vunpack.c.h.b16 %v1164
        %v4109 = vunpack.c.l.b16 %v1165
        %v4110 = vunpack.c.h.b16 %v1165
        %v4111 = vunpack.c.l.b16 %v1166
        %v4112 = vunpack.c.h.b16 %v1166
        %v4113 = vunpack.c.l.b16 %v1167
        %v4114 = vunpack.c.h.b16 %v1167
        %v4115 = vunpack.c.l.b16 %v1168
        %v4116 = vunpack.c.h.b16 %v1168
        %v4117 = vunpack.c.l.b16 %v1169
        %v4118 = vunpack.c.h.b16 %v1169
        %v4119 = vunpack.c.l.b16 %v1170
        %v4120 = vunpack.c.h.b16 %v1170
        %v4121 = vunpack.c.l.b16 %v1171
        %v4122 = vunpack.c.h.b16 %v1171
        %v4123 = vunpack.c.l.b16 %v1172
        %v4124 = vunpack.c.h.b16 %v1172
        %v4125 = vunpack.c.l.b16 %v1173
        %v4126 = vunpack.c.h.b16 %v1173
        %v4127 = vunpack.c.l.b16 %v1174
        %v4128 = vunpack.c.h.b16 %v1174
        %v4129 = vunpack.c.l.b16 %v1175
        %v4130 = vunpack.c.h.b16 %v1175
        %v4131 = vunpack.c.l.b16 %v1176
        %v4132 = vunpack.c.h.b16 %v1176
        %v4133 = vunpack.c.l.b16 %v1177
        %v4134 = vunpack.c.h.b16 %v1177
        %v4135 = vunpack.c.l.b16 %v1178
        %v4136 = vunpack.c.h.b16 %v1178
        %v4137 = vunpack.c.l.b16 %v1179
        %v4138 = vunpack.c.h.b16 %v1179
        %v4139 = vunpack.c.l.b16 %v1180
        %v4140 = vunpack.c.h.b16 %v1180
        %v4141 = vunpack.c.l.b16 %v1181
        %v4142 = vunpack.c.h.b16 %v1181
        %v4143 = vunpack.c.l.b16 %v1182
        %v4144 = vunpack.c.h.b16 %v1182
        %v4145 = vunpack.c.l.b16 %v1183
        %v4146 = vunpack.c.h.b16 %v1183
        %v4147 = vunpack.c.l.b16 %v1184
        %v4148 = vunpack.c.h.b16 %v1184
        %v4149 = vunpack.c.l.b16 %v1185
        %v4150 = vunpack.c.h.b16 %v1185
        %v4151 = vunpack.c.l.b16 %v1186
        %v4152 = vunpack.c.h.b16 %v1186
        %v4153 = vunpack.c.l.b16 %v1187
        %v4154 = vunpack.c.h.b16 %v1187
        %v4155 = vunpack.c.l.b16 %v1188
        %v4156 = vunpack.c.h.b16 %v1188
        %v4157 = vunpack.c.l.b16 %v1189
        %v4158 = vunpack.c.h.b16 %v1189
        %v4159 = vunpack.c.l.b16 %v1190
        %v4160 = vunpack.c.h.b16 %v1190
        %v4161 = vunpack.c.l.b16 %v1191
        %v4162 = vunpack.c.h.b16 %v1191
        %v4163 = vunpack.c.l.b16 %v1192
        %v4164 = vunpack.c.h.b16 %v1192
        %v4165 = vunpack.c.l.b16 %v1193
        %v4166 = vunpack.c.h.b16 %v1193
        %v4167 = vunpack.c.l.b16 %v1194
        %v4168 = vunpack.c.h.b16 %v1194
        %v4169 = vunpack.c.l.b16 %v1195
        %v4170 = vunpack.c.h.b16 %v1195
        %v4171 = vunpack.c.l.b16 %v1196
        %v4172 = vunpack.c.h.b16 %v1196
        %v4173 = vunpack.c.l.b16 %v1197
        %v4174 = vunpack.c.h.b16 %v1197
        %v4175 = vunpack.c.l.b16 %v1198
        %v4176 = vunpack.c.h.b16 %v1198
        %v4177 = vunpack.c.l.b16 %v1199
        %v4178 = vunpack.c.h.b16 %v1199
        %v4179 = vunpack.c.l.b16 %v1200
        %v4180 = vunpack.c.h.b16 %v1200
        %v4181 = vunpack.c.l.b16 %v1201
        %v4182 = vunpack.c.h.b16 %v1201
        %v4183 = vunpack.c.l.b16 %v1202
        %v4184 = vunpack.c.h.b16 %v1202
        %v4185 = vunpack.c.l.b16 %v1203
        %v4186 = vunpack.c.h.b16 %v1203
        %v4187 = vunpack.c.l.b16 %v1204
        %v4188 = vunpack.c.h.b16 %v1204
        %v4189 = vunpack.c.l.b16 %v1205
        %v4190 = vunpack.c.h.b16 %v1205
        %v4191 = vunpack.c.l.b16 %v1206
        %v4192 = vunpack.c.h.b16 %v1206
        %v4193 = vunpack.c.l.b16 %v1207
        %v4194 = vunpack.c.h.b16 %v1207
        %v4195 = vunpack.c.l.b16 %v1208
        %v4196 = vunpack.c.h.b16 %v1208
        %v4197 = vunpack.c.l.b16 %v1209
        %v4198 = vunpack.c.h.b16 %v1209
        %v4199 = vunpack.c.l.b16 %v1210
        %v4200 = vunpack.c.h.b16 %v1210
        %v4201 = vunpack.c.l.b16 %v1211
        %v4202 = vunpack.c.h.b16 %v1211
        %v4203 = vunpack.c.l.b16 %v1212
        %v4204 = vunpack.c.h.b16 %v1212
        %v4205 = vunpack.c.l.b16 %v1213
        %v4206 = vunpack.c.h.b16 %v1213
        %v4207 = vunpack.c.l.b16 %v1214
        %v4208 = vunpack.c.h.b16 %v1214
        %v4209 = vunpack.c.l.b16 %v1215
        %v4210 = vunpack.c.h.b16 %v1215
        %v4211 = vunpack.c.l.b16 %v1216
        %v4212 = vunpack.c.h.b16 %v1216
        %v4213 = vunpack.c.l.b16 %v1217
        %v4214 = vunpack.c.h.b16 %v1217
        %v4215 = vunpack.c.l.b16 %v1218
        %v4216 = vunpack.c.h.b16 %v1218
        %v4217 = vunpack.c.l.b16 %v1219
        %v4218 = vunpack.c.h.b16 %v1219
        %v4219 = vunpack.c.l.b16 %v1220
        %v4220 = vunpack.c.h.b16 %v1220
        %v4221 = vunpack.c.l.b16 %v1221
        %v4222 = vunpack.c.h.b16 %v1221
        %v4223 = vunpack.c.l.b16 %v1222
        %v4224 = vunpack.c.h.b16 %v1222
        %v4225 = vunpack.c.l.b16 %v1223
        %v4226 = vunpack.c.h.b16 %v1223
        %v4227 = vunpack.c.l.b16 %v1224
        %v4228 = vunpack.c.h.b16 %v1224
        %v4229 = vunpack.c.l.b16 %v1225
        %v4230 = vunpack.c.h.b16 %v1225
        %v4231 = vunpack.c.l.b16 %v1226
        %v4232 = vunpack.c.h.b16 %v1226
        %v4233 = vunpack.c.l.b16 %v1227
        %v4234 = vunpack.c.h.b16 %v1227
        %v4235 = vunpack.c.l.b16 %v1228
        %v4236 = vunpack.c.h.b16 %v1228
        %v4237 = vunpack.c.l.b16 %v1229
        %v4238 = vunpack.c.h.b16 %v1229
        %v4239 = vunpack.c.l.b16 %v1230
        %v4240 = vunpack.c.h.b16 %v1230
        %v4241 = vunpack.c.l.b16 %v1231
        %v4242 = vunpack.c.h.b16 %v1231
        %v4243 = vunpack.c.l.b16 %v1232
        %v4244 = vunpack.c.h.b16 %v1232
        %v4245 = vunpack.c.l.b16 %v1233
        %v4246 = vunpack.c.h.b16 %v1233
        %v4247 = vunpack.c.l.b16 %v1234
        %v4248 = vunpack.c.h.b16 %v1234
        %v4249 = vunpack.c.l.b16 %v1235
        %v4250 = vunpack.c.h.b16 %v1235
        %v4251 = vunpack.c.l.b16 %v1236
        %v4252 = vunpack.c.h.b16 %v1236
        %v4253 = vunpack.c.l.b16 %v1237
        %v4254 = vunpack.c.h.b16 %v1237
        %v4255 = vunpack.c.l.b16 %v1238
        %v4256 = vunpack.c.h.b16 %v1238
        %v4257 = vunpack.c.l.b16 %v1239
        %v4258 = vunpack.c.h.b16 %v1239
        %v4259 = vunpack.c.l.b16 %v1240
        %v4260 = vunpack.c.h.b16 %v1240
        %v4261 = vunpack.c.l.b16 %v1241
        %v4262 = vunpack.c.h.b16 %v1241
        %v4263 = vunpack.c.l.b16 %v1242
        %v4264 = vunpack.c.h.b16 %v1242
        %v4265 = vunpack.c.l.b16 %v1243
        %v4266 = vunpack.c.h.b16 %v1243
        %v4267 = vunpack.c.l.b16 %v1244
        %v4268 = vunpack.c.h.b16 %v1244
        %v4269 = vunpack.c.l.b16 %v1245
        %v4270 = vunpack.c.h.b16 %v1245
        %v4271 = vunpack.c.l.b16 %v1246
        %v4272 = vunpack.c.h.b16 %v1246
        %v4273 = vunpack.c.l.b16 %v1247
        %v4274 = vunpack.c.h.b16 %v1247
        %v4275 = vunpack.c.l.b16 %v1248
        %v4276 = vunpack.c.h.b16 %v1248
        %v4277 = vunpack.c.l.b16 %v1249
        %v4278 = vunpack.c.h.b16 %v1249
        %v4279 = vunpack.c.l.b16 %v1250
        %v4280 = vunpack.c.h.b16 %v1250
        %v4281 = vunpack.c.l.b16 %v1251
        %v4282 = vunpack.c.h.b16 %v1251
        %v4283 = vunpack.c.l.b16 %v1252
        %v4284 = vunpack.c.h.b16 %v1252
        %v4285 = vunpack.c.l.b16 %v1253
        %v4286 = vunpack.c.h.b16 %v1253
        %v4287 = vunpack.c.l.b16 %v1254
        %v4288 = vunpack.c.h.b16 %v1254
        %v4289 = vunpack.c.l.b16 %v1255
        %v4290 = vunpack.c.h.b16 %v1255
        %v4291 = vunpack.c.l.b16 %v1256
        %v4292 = vunpack.c.h.b16 %v1256
        %v4293 = vunpack.c.l.b16 %v1257
        %v4294 = vunpack.c.h.b16 %v1257
        %v4295 = vunpack.c.l.b16 %v1258
        %v4296 = vunpack.c.h.b16 %v1258
        %v4297 = vunpack.c.l.b16 %v1259
        %v4298 = vunpack.c.h.b16 %v1259
        %v4299 = vunpack.c.l.b16 %v1260
        %v4300 = vunpack.c.h.b16 %v1260
        %v4301 = vunpack.c.l.b16 %v1261
        %v4302 = vunpack.c.h.b16 %v1261
        %v4303 = vunpack.c.l.b16 %v1262
        %v4304 = vunpack.c.h.b16 %v1262
        %v4305 = vunpack.c.l.b16 %v1263
        %v4306 = vunpack.c.h.b16 %v1263
        %v4307 = vunpack.c.l.b16 %v1264
        %v4308 = vunpack.c.h.b16 %v1264
        %v4309 = vunpack.c.l.b16 %v1265
        %v4310 = vunpack.c.h.b16 %v1265
        %v4311 = vunpack.c.l.b16 %v1266
        %v4312 = vunpack.c.h.b16 %v1266
        %v4313 = vunpack.c.l.b16 %v1267
        %v4314 = vunpack.c.h.b16 %v1267
        %v4315 = vunpack.c.l.b16 %v1268
        %v4316 = vunpack.c.h.b16 %v1268
        %v4317 = vunpack.c.l.b16 %v1269
        %v4318 = vunpack.c.h.b16 %v1269
        %v4319 = vunpack.c.l.b16 %v1270
        %v4320 = vunpack.c.h.b16 %v1270
        %v4321 = vunpack.c.l.b16 %v1271
        %v4322 = vunpack.c.h.b16 %v1271
        %v4323 = vunpack.c.l.b16 %v1272
        %v4324 = vunpack.c.h.b16 %v1272
        %v4325 = vunpack.c.l.b16 %v1273
        %v4326 = vunpack.c.h.b16 %v1273
        %v4327 = vunpack.c.l.b16 %v1274
        %v4328 = vunpack.c.h.b16 %v1274
        %v4329 = vunpack.c.l.b16 %v1275
        %v4330 = vunpack.c.h.b16 %v1275
        %v4331 = vunpack.c.l.b16 %v1276
        %v4332 = vunpack.c.h.b16 %v1276
        %v4333 = vunpack.c.l.b16 %v1277
        %v4334 = vunpack.c.h.b16 %v1277
        %v4335 = vunpack.c.l.b16 %v1278
        %v4336 = vunpack.c.h.b16 %v1278
        %v4337 = vunpack.c.l.b16 %v1279
        %v4338 = vunpack.c.h.b16 %v1279
        %v4339 = vunpack.c.l.b16 %v1280
        %v4340 = vunpack.c.h.b16 %v1280
        %v4341 = vunpack.c.l.b16 %v1281
        %v4342 = vunpack.c.h.b16 %v1281
        %v4343 = vunpack.c.l.b16 %v1282
        %v4344 = vunpack.c.h.b16 %v1282
        %v4345 = vunpack.c.l.b16 %v1283
        %v4346 = vunpack.c.h.b16 %v1283
        %v4347 = vunpack.c.l.b16 %v1284
        %v4348 = vunpack.c.h.b16 %v1284
        %v4349 = vunpack.c.l.b16 %v1285
        %v4350 = vunpack.c.h.b16 %v1285
        %v4351 = vunpack.c.l.b16 %v1286
        %v4352 = vunpack.c.h.b16 %v1286
        %v4353 = vunpack.c.l.b16 %v1287
        %v4354 = vunpack.c.h.b16 %v1287
        %v4355 = vunpack.c.l.b16 %v1288
        %v4356 = vunpack.c.h.b16 %v1288
        %v4357 = vunpack.c.l.b16 %v1289
        %v4358 = vunpack.c.h.b16 %v1289
        %v4359 = vunpack.c.l.b16 %v1290
        %v4360 = vunpack.c.h.b16 %v1290
        %v4361 = vunpack.c.l.b16 %v1291
        %v4362 = vunpack.c.h.b16 %v1291
        %v4363 = vunpack.c.l.b16 %v1292
        %v4364 = vunpack.c.h.b16 %v1292
        %v4365 = vunpack.c.l.b16 %v1293
        %v4366 = vunpack.c.h.b16 %v1293
        %v4367 = vunpack.c.l.b16 %v1294
        %v4368 = vunpack.c.h.b16 %v1294
        %v4369 = vpack.c.b16 %v2337, %v2321
        %v4370 = vpack.c.b16 %v2338, %v2322
        %v4371 = vpack.c.b16 %v2339, %v2323
        %v4372 = vpack.c.b16 %v2340, %v2324
        %v4373 = vpack.c.b16 %v2341, %v2325
        %v4374 = vpack.c.b16 %v2342, %v2326
        %v4375 = vpack.c.b16 %v2343, %v2327
        %v4376 = vpack.c.b16 %v2344, %v2328
        %v4377 = vpack.c.b16 %v2345, %v2329
        %v4378 = vpack.c.b16 %v2346, %v2330
        %v4379 = vpack.c.b16 %v2347, %v2331
        %v4380 = vpack.c.b16 %v2348, %v2332
        %v4381 = vpack.c.b16 %v2349, %v2333
        %v4382 = vpack.c.b16 %v2350, %v2334
        %v4383 = vpack.c.b16 %v2351, %v2335
        %v4384 = vpack.c.b16 %v2352, %v2336
        %v4385 = vpack.c.b16 %v2369, %v2353
        %v4386 = vpack.c.b16 %v2370, %v2354
        %v4387 = vpack.c.b16 %v2371, %v2355
        %v4388 = vpack.c.b16 %v2372, %v2356
        %v4389 = vpack.c.b16 %v2373, %v2357
        %v4390 = vpack.c.b16 %v2374, %v2358
        %v4391 = vpack.c.b16 %v2375, %v2359
        %v4392 = vpack.c.b16 %v2376, %v2360
        %v4393 = vpack.c.b16 %v2377, %v2361
        %v4394 = vpack.c.b16 %v2378, %v2362
        %v4395 = vpack.c.b16 %v2379, %v2363
        %v4396 = vpack.c.b16 %v2380, %v2364
        %v4397 = vpack.c.b16 %v2381, %v2365
        %v4398 = vpack.c.b16 %v2382, %v2366
        %v4399 = vpack.c.b16 %v2383, %v2367
        %v4400 = vpack.c.b16 %v2384, %v2368
        %v4401 = vpack.c.b16 %v2401, %v2385
        %v4402 = vpack.c.b16 %v2402, %v2386
        %v4403 = vpack.c.b16 %v2403, %v2387
        %v4404 = vpack.c.b16 %v2404, %v2388
        %v4405 = vpack.c.b16 %v2405, %v2389
        %v4406 = vpack.c.b16 %v2406, %v2390
        %v4407 = vpack.c.b16 %v2407, %v2391
        %v4408 = vpack.c.b16 %v2408, %v2392
        %v4409 = vpack.c.b16 %v2409, %v2393
        %v4410 = vpack.c.b16 %v2410, %v2394
        %v4411 = vpack.c.b16 %v2411, %v2395
        %v4412 = vpack.c.b16 %v2412, %v2396
        %v4413 = vpack.c.b16 %v2413, %v2397
        %v4414 = vpack.c.b16 %v2414, %v2398
        %v4415 = vpack.c.b16 %v2415, %v2399
        %v4416 = vpack.c.b16 %v2416, %v2400
        %v4417 = vpack.c.b16 %v2433, %v2417
        %v4418 = vpack.c.b16 %v2434, %v2418
        %v4419 = vpack.c.b16 %v2435, %v2419
        %v4420 = vpack.c.b16 %v2436, %v2420
        %v4421 = vpack.c.b16 %v2437, %v2421
        %v4422 = vpack.c.b16 %v2438, %v2422
        %v4423 = vpack.c.b16 %v2439, %v2423
        %v4424 = vpack.c.b16 %v2440, %v2424
        %v4425 = vpack.c.b16 %v2441, %v2425
        %v4426 = vpack.c.b16 %v2442, %v2426
        %v4427 = vpack.c.b16 %v2443, %v2427
        %v4428 = vpack.c.b16 %v2444, %v2428
        %v4429 = vpack.c.b16 %v2445, %v2429
        %v4430 = vpack.c.b16 %v2446, %v2430
        %v4431 = vpack.c.b16 %v2447, %v2431
        %v4432 = vpack.c.b16 %v2448, %v2432
        %v4433 = vpack.c.b16 %v2465, %v2449
        %v4434 = vpack.c.b16 %v2466, %v2450
        %v4435 = vpack.c.b16 %v2467, %v2451
        %v4436 = vpack.c.b16 %v2468, %v2452
        %v4437 = vpack.c.b16 %v2469, %v2453
        %v4438 = vpack.c.b16 %v2470, %v2454
        %v4439 = vpack.c.b16 %v2471, %v2455
        %v4440 = vpack.c.b16 %v2472, %v2456
        %v4441 = vpack.c.b16 %v2473, %v2457
        %v4442 = vpack.c.b16 %v2474, %v2458
        %v4443 = vpack.c.b16 %v2475, %v2459
        %v4444 = vpack.c.b16 %v2476, %v2460
        %v4445 = vpack.c.b16 %v2477, %v2461
        %v4446 = vpack.c.b16 %v2478, %v2462
        %v4447 = vpack.c.b16 %v2479, %v2463
        %v4448 = vpack.c.b16 %v2480, %v2464
        %v4449 = vpack.c.b16 %v2497, %v2481
        %v4450 = vpack.c.b16 %v2498, %v2482
        %v4451 = vpack.c.b16 %v2499, %v2483
        %v4452 = vpack.c.b16 %v2500, %v2484
        %v4453 = vpack.c.b16 %v2501, %v2485
        %v4454 = vpack.c.b16 %v2502, %v2486
        %v4455 = vpack.c.b16 %v2503, %v2487
        %v4456 = vpack.c.b16 %v2504, %v2488
        %v4457 = vpack.c.b16 %v2505, %v2489
        %v4458 = vpack.c.b16 %v2506, %v2490
        %v4459 = vpack.c.b16 %v2507, %v2491
        %v4460 = vpack.c.b16 %v2508, %v2492
        %v4461 = vpack.c.b16 %v2509, %v2493
        %v4462 = vpack.c.b16 %v2510, %v2494
        %v4463 = vpack.c.b16 %v2511, %v2495
        %v4464 = vpack.c.b16 %v2512, %v2496
        %v4465 = vpack.c.b16 %v2529, %v2513
        %v4466 = vpack.c.b16 %v2530, %v2514
        %v4467 = vpack.c.b16 %v2531, %v2515
        %v4468 = vpack.c.b16 %v2532, %v2516
        %v4469 = vpack.c.b16 %v2533, %v2517
        %v4470 = vpack.c.b16 %v2534, %v2518
        %v4471 = vpack.c.b16 %v2535, %v2519
        %v4472 = vpack.c.b16 %v2536, %v2520
        %v4473 = vpack.c.b16 %v2537, %v2521
        %v4474 = vpack.c.b16 %v2538, %v2522
        %v4475 = vpack.c.b16 %v2539, %v2523
        %v4476 = vpack.c.b16 %v2540, %v2524
        %v4477 = vpack.c.b16 %v2541, %v2525
        %v4478 = vpack.c.b16 %v2542, %v2526
        %v4479 = vpack.c.b16 %v2543, %v2527
        %v4480 = vpack.c.b16 %v2544, %v2528
        %v4481 = vpack.c.b16 %v2561, %v2545
        %v4482 = vpack.c.b16 %v2562, %v2546
        %v4483 = vpack.c.b16 %v2563, %v2547
        %v4484 = vpack.c.b16 %v2564, %v2548
        %v4485 = vpack.c.b16 %v2565, %v2549
        %v4486 = vpack.c.b16 %v2566, %v2550
        %v4487 = vpack.c.b16 %v2567, %v2551
        %v4488 = vpack.c.b16 %v2568, %v2552
        %v4489 = vpack.c.b16 %v2569, %v2553
        %v4490 = vpack.c.b16 %v2570, %v2554
        %v4491 = vpack.c.b16 %v2571, %v2555
        %v4492 = vpack.c.b16 %v2572, %v2556
        %v4493 = vpack.c.b16 %v2573, %v2557
        %v4494 = vpack.c.b16 %v2574, %v2558
        %v4495 = vpack.c.b16 %v2575, %v2559
        %v4496 = vpack.c.b16 %v2576, %v2560
        %v4497 = vpack.c.b16 %v2593, %v2577
        %v4498 = vpack.c.b16 %v2594, %v2578
        %v4499 = vpack.c.b16 %v2595, %v2579
        %v4500 = vpack.c.b16 %v2596, %v2580
        %v4501 = vpack.c.b16 %v2597, %v2581
        %v4502 = vpack.c.b16 %v2598, %v2582
        %v4503 = vpack.c.b16 %v2599, %v2583
        %v4504 = vpack.c.b16 %v2600, %v2584
        %v4505 = vpack.c.b16 %v2601, %v2585
        %v4506 = vpack.c.b16 %v2602, %v2586
        %v4507 = vpack.c.b16 %v2603, %v2587
        %v4508 = vpack.c.b16 %v2604, %v2588
        %v4509 = vpack.c.b16 %v2605, %v2589
        %v4510 = vpack.c.b16 %v2606, %v2590
        %v4511 = vpack.c.b16 %v2607, %v2591
        %v4512 = vpack.c.b16 %v2608, %v2592
        %v4513 = vpack.c.b16 %v2625, %v2609
        %v4514 = vpack.c.b16 %v2626, %v2610
        %v4515 = vpack.c.b16 %v2627, %v2611
        %v4516 = vpack.c.b16 %v2628, %v2612
        %v4517 = vpack.c.b16 %v2629, %v2613
        %v4518 = vpack.c.b16 %v2630, %v2614
        %v4519 = vpack.c.b16 %v2631, %v2615
        %v4520 = vpack.c.b16 %v2632, %v2616
        %v4521 = vpack.c.b16 %v2633, %v2617
        %v4522 = vpack.c.b16 %v2634, %v2618
        %v4523 = vpack.c.b16 %v2635, %v2619
        %v4524 = vpack.c.b16 %v2636, %v2620
        %v4525 = vpack.c.b16 %v2637, %v2621
        %v4526 = vpack.c.b16 %v2638, %v2622
        %v4527 = vpack.c.b16 %v2639, %v2623
        %v4528 = vpack.c.b16 %v2640, %v2624
        %v4529 = vpack.c.b16 %v2657, %v2641
        %v4530 = vpack.c.b16 %v2658, %v2642
        %v4531 = vpack.c.b16 %v2659, %v2643
        %v4532 = vpack.c.b16 %v2660, %v2644
        %v4533 = vpack.c.b16 %v2661, %v2645
        %v4534 = vpack.c.b16 %v2662, %v2646
        %v4535 = vpack.c.b16 %v2663, %v2647
        %v4536 = vpack.c.b16 %v2664, %v2648
        %v4537 = vpack.c.b16 %v2665, %v2649
        %v4538 = vpack.c.b16 %v2666, %v2650
        %v4539 = vpack.c.b16 %v2667, %v2651
        %v4540 = vpack.c.b16 %v2668, %v2652
        %v4541 = vpack.c.b16 %v2669, %v2653
        %v4542 = vpack.c.b16 %v2670, %v2654
        %v4543 = vpack.c.b16 %v2671, %v2655
        %v4544 = vpack.c.b16 %v2672, %v2656
        %v4545 = vpack.c.b16 %v2689, %v2673
        %v4546 = vpack.c.b16 %v2690, %v2674
        %v4547 = vpack.c.b16 %v2691, %v2675
        %v4548 = vpack.c.b16 %v2692, %v2676
        %v4549 = vpack.c.b16 %v2693, %v2677
        %v4550 = vpack.c.b16 %v2694, %v2678
        %v4551 = vpack.c.b16 %v2695, %v2679
        %v4552 = vpack.c.b16 %v2696, %v2680
        %v4553 = vpack.c.b16 %v2697, %v2681
        %v4554 = vpack.c.b16 %v2698, %v2682
        %v4555 = vpack.c.b16 %v2699, %v2683
        %v4556 = vpack.c.b16 %v2700, %v2684
        %v4557 = vpack.c.b16 %v2701, %v2685
        %v4558 = vpack.c.b16 %v2702, %v2686
        %v4559 = vpack.c.b16 %v2703, %v2687
        %v4560 = vpack.c.b16 %v2704, %v2688
        %v4561 = vpack.c.b16 %v2721, %v2705
        %v4562 = vpack.c.b16 %v2722, %v2706
        %v4563 = vpack.c.b16 %v2723, %v2707
        %v4564 = vpack.c.b16 %v2724, %v2708
        %v4565 = vpack.c.b16 %v2725, %v2709
        %v4566 = vpack.c.b16 %v2726, %v2710
        %v4567 = vpack.c.b16 %v2727, %v2711
        %v4568 = vpack.c.b16 %v2728, %v2712
        %v4569 = vpack.c.b16 %v2729, %v2713
        %v4570 = vpack.c.b16 %v2730, %v2714
        %v4571 = vpack.c.b16 %v2731, %v2715
        %v4572 = vpack.c.b16 %v2732, %v2716
        %v4573 = vpack.c.b16 %v2733, %v2717
        %v4574 = vpack.c.b16 %v2734, %v2718
        %v4575 = vpack.c.b16 %v2735, %v2719
        %v4576 = vpack.c.b16 %v2736, %v2720
        %v4577 = vpack.c.b16 %v2753, %v2737
        %v4578 = vpack.c.b16 %v2754, %v2738
        %v4579 = vpack.c.b16 %v2755, %v2739
        %v4580 = vpack.c.b16 %v2756, %v2740
        %v4581 = vpack.c.b16 %v2757, %v2741
        %v4582 = vpack.c.b16 %v2758, %v2742
        %v4583 = vpack.c.b16 %v2759, %v2743
        %v4584 = vpack.c.b16 %v2760, %v2744
        %v4585 = vpack.c.b16 %v2761, %v2745
        %v4586 = vpack.c.b16 %v2762, %v2746
        %v4587 = vpack.c.b16 %v2763, %v2747
        %v4588 = vpack.c.b16 %v2764, %v2748
        %v4589 = vpack.c.b16 %v2765, %v2749
        %v4590 = vpack.c.b16 %v2766, %v2750
        %v4591 = vpack.c.b16 %v2767, %v2751
        %v4592 = vpack.c.b16 %v2768, %v2752
        %v4593 = vpack.c.b16 %v2785, %v2769
        %v4594 = vpack.c.b16 %v2786, %v2770
        %v4595 = vpack.c.b16 %v2787, %v2771
        %v4596 = vpack.c.b16 %v2788, %v2772
        %v4597 = vpack.c.b16 %v2789, %v2773
        %v4598 = vpack.c.b16 %v2790, %v2774
        %v4599 = vpack.c.b16 %v2791, %v2775
        %v4600 = vpack.c.b16 %v2792, %v2776
        %v4601 = vpack.c.b16 %v2793, %v2777
        %v4602 = vpack.c.b16 %v2794, %v2778
        %v4603 = vpack.c.b16 %v2795, %v2779
        %v4604 = vpack.c.b16 %v2796, %v2780
        %v4605 = vpack.c.b16 %v2797, %v2781
        %v4606 = vpack.c.b16 %v2798, %v2782
        %v4607 = vpack.c.b16 %v2799, %v2783
        %v4608 = vpack.c.b16 %v2800, %v2784
        %v4609 = vpack.c.b16 %v2817, %v2801
        %v4610 = vpack.c.b16 %v2818, %v2802
        %v4611 = vpack.c.b16 %v2819, %v2803
        %v4612 = vpack.c.b16 %v2820, %v2804
        %v4613 = vpack.c.b16 %v2821, %v2805
        %v4614 = vpack.c.b16 %v2822, %v2806
        %v4615 = vpack.c.b16 %v2823, %v2807
        %v4616 = vpack.c.b16 %v2824, %v2808
        %v4617 = vpack.c.b16 %v2825, %v2809
        %v4618 = vpack.c.b16 %v2826, %v2810
        %v4619 = vpack.c.b16 %v2827, %v2811
        %v4620 = vpack.c.b16 %v2828, %v2812
        %v4621 = vpack.c.b16 %v2829, %v2813
        %v4622 = vpack.c.b16 %v2830, %v2814
        %v4623 = vpack.c.b16 %v2831, %v2815
        %v4624 = vpack.c.b16 %v2832, %v2816
        %v4625 = vpack.c.b16 %v2849, %v2833
        %v4626 = vpack.c.b16 %v2850, %v2834
        %v4627 = vpack.c.b16 %v2851, %v2835
        %v4628 = vpack.c.b16 %v2852, %v2836
        %v4629 = vpack.c.b16 %v2853, %v2837
        %v4630 = vpack.c.b16 %v2854, %v2838
        %v4631 = vpack.c.b16 %v2855, %v2839
        %v4632 = vpack.c.b16 %v2856, %v2840
        %v4633 = vpack.c.b16 %v2857, %v2841
        %v4634 = vpack.c.b16 %v2858, %v2842
        %v4635 = vpack.c.b16 %v2859, %v2843
        %v4636 = vpack.c.b16 %v2860, %v2844
        %v4637 = vpack.c.b16 %v2861, %v2845
        %v4638 = vpack.c.b16 %v2862, %v2846
        %v4639 = vpack.c.b16 %v2863, %v2847
        %v4640 = vpack.c.b16 %v2864, %v2848
        %v4641 = vpack.c.b16 %v2881, %v2865
        %v4642 = vpack.c.b16 %v2882, %v2866
        %v4643 = vpack.c.b16 %v2883, %v2867
        %v4644 = vpack.c.b16 %v2884, %v2868
        %v4645 = vpack.c.b16 %v2885, %v2869
        %v4646 = vpack.c.b16 %v2886, %v2870
        %v4647 = vpack.c.b16 %v2887, %v2871
        %v4648 = vpack.c.b16 %v2888, %v2872
        %v4649 = vpack.c.b16 %v2889, %v2873
        %v4650 = vpack.c.b16 %v2890, %v2874
        %v4651 = vpack.c.b16 %v2891, %v2875
        %v4652 = vpack.c.b16 %v2892, %v2876
        %v4653 = vpack.c.b16 %v2893, %v2877
        %v4654 = vpack.c.b16 %v2894, %v2878
        %v4655 = vpack.c.b16 %v2895, %v2879
        %v4656 = vpack.c.b16 %v2896, %v2880
        %v4657 = vpack.c.b16 %v2913, %v2897
        %v4658 = vpack.c.b16 %v2914, %v2898
        %v4659 = vpack.c.b16 %v2915, %v2899
        %v4660 = vpack.c.b16 %v2916, %v2900
        %v4661 = vpack.c.b16 %v2917, %v2901
        %v4662 = vpack.c.b16 %v2918, %v2902
        %v4663 = vpack.c.b16 %v2919, %v2903
        %v4664 = vpack.c.b16 %v2920, %v2904
        %v4665 = vpack.c.b16 %v2921, %v2905
        %v4666 = vpack.c.b16 %v2922, %v2906
        %v4667 = vpack.c.b16 %v2923, %v2907
        %v4668 = vpack.c.b16 %v2924, %v2908
        %v4669 = vpack.c.b16 %v2925, %v2909
        %v4670 = vpack.c.b16 %v2926, %v2910
        %v4671 = vpack.c.b16 %v2927, %v2911
        %v4672 = vpack.c.b16 %v2928, %v2912
        %v4673 = vpack.c.b16 %v2945, %v2929
        %v4674 = vpack.c.b16 %v2946, %v2930
        %v4675 = vpack.c.b16 %v2947, %v2931
        %v4676 = vpack.c.b16 %v2948, %v2932
        %v4677 = vpack.c.b16 %v2949, %v2933
        %v4678 = vpack.c.b16 %v2950, %v2934
        %v4679 = vpack.c.b16 %v2951, %v2935
        %v4680 = vpack.c.b16 %v2952, %v2936
        %v4681 = vpack.c.b16 %v2953, %v2937
        %v4682 = vpack.c.b16 %v2954, %v2938
        %v4683 = vpack.c.b16 %v2955, %v2939
        %v4684 = vpack.c.b16 %v2956, %v2940
        %v4685 = vpack.c.b16 %v2957, %v2941
        %v4686 = vpack.c.b16 %v2958, %v2942
        %v4687 = vpack.c.b16 %v2959, %v2943
        %v4688 = vpack.c.b16 %v2960, %v2944
        %v4689 = vpack.c.b16 %v2977, %v2961
        %v4690 = vpack.c.b16 %v2978, %v2962
        %v4691 = vpack.c.b16 %v2979, %v2963
        %v4692 = vpack.c.b16 %v2980, %v2964
        %v4693 = vpack.c.b16 %v2981, %v2965
        %v4694 = vpack.c.b16 %v2982, %v2966
        %v4695 = vpack.c.b16 %v2983, %v2967
        %v4696 = vpack.c.b16 %v2984, %v2968
        %v4697 = vpack.c.b16 %v2985, %v2969
        %v4698 = vpack.c.b16 %v2986, %v2970
        %v4699 = vpack.c.b16 %v2987, %v2971
        %v4700 = vpack.c.b16 %v2988, %v2972
        %v4701 = vpack.c.b16 %v2989, %v2973
        %v4702 = vpack.c.b16 %v2990, %v2974
        %v4703 = vpack.c.b16 %v2991, %v2975
        %v4704 = vpack.c.b16 %v2992, %v2976
        %v4705 = vpack.c.b16 %v3009, %v2993
        %v4706 = vpack.c.b16 %v3010, %v2994
        %v4707 = vpack.c.b16 %v3011, %v2995
        %v4708 = vpack.c.b16 %v3012, %v2996
        %v4709 = vpack.c.b16 %v3013, %v2997
        %v4710 = vpack.c.b16 %v3014, %v2998
        %v4711 = vpack.c.b16 %v3015, %v2999
        %v4712 = vpack.c.b16 %v3016, %v3000
        %v4713 = vpack.c.b16 %v3017, %v3001
        %v4714 = vpack.c.b16 %v3018, %v3002
        %v4715 = vpack.c.b16 %v3019, %v3003
        %v4716 = vpack.c.b16 %v3020, %v3004
        %v4717 = vpack.c.b16 %v3021, %v3005
        %v4718 = vpack.c.b16 %v3022, %v3006
        %v4719 = vpack.c.b16 %v3023, %v3007
        %v4720 = vpack.c.b16 %v3024, %v3008
        %v4721 = vpack.c.b16 %v3041, %v3025
        %v4722 = vpack.c.b16 %v3042, %v3026
        %v4723 = vpack.c.b16 %v3043, %v3027
        %v4724 = vpack.c.b16 %v3044, %v3028
        %v4725 = vpack.c.b16 %v3045, %v3029
        %v4726 = vpack.c.b16 %v3046, %v3030
        %v4727 = vpack.c.b16 %v3047, %v3031
        %v4728 = vpack.c.b16 %v3048, %v3032
        %v4729 = vpack.c.b16 %v3049, %v3033
        %v4730 = vpack.c.b16 %v3050, %v3034
        %v4731 = vpack.c.b16 %v3051, %v3035
        %v4732 = vpack.c.b16 %v3052, %v3036
        %v4733 = vpack.c.b16 %v3053, %v3037
        %v4734 = vpack.c.b16 %v3054, %v3038
        %v4735 = vpack.c.b16 %v3055, %v3039
        %v4736 = vpack.c.b16 %v3056, %v3040
        %v4737 = vpack.c.b16 %v3073, %v3057
        %v4738 = vpack.c.b16 %v3074, %v3058
        %v4739 = vpack.c.b16 %v3075, %v3059
        %v4740 = vpack.c.b16 %v3076, %v3060
        %v4741 = vpack.c.b16 %v3077, %v3061
        %v4742 = vpack.c.b16 %v3078, %v3062
        %v4743 = vpack.c.b16 %v3079, %v3063
        %v4744 = vpack.c.b16 %v3080, %v3064
        %v4745 = vpack.c.b16 %v3081, %v3065
        %v4746 = vpack.c.b16 %v3082, %v3066
        %v4747 = vpack.c.b16 %v3083, %v3067
        %v4748 = vpack.c.b16 %v3084, %v3068
        %v4749 = vpack.c.b16 %v3085, %v3069
        %v4750 = vpack.c.b16 %v3086, %v3070
        %v4751 = vpack.c.b16 %v3087, %v3071
        %v4752 = vpack.c.b16 %v3088, %v3072
        %v4753 = vpack.c.b16 %v3105, %v3089
        %v4754 = vpack.c.b16 %v3106, %v3090
        %v4755 = vpack.c.b16 %v3107, %v3091
        %v4756 = vpack.c.b16 %v3108, %v3092
        %v4757 = vpack.c.b16 %v3109, %v3093
        %v4758 = vpack.c.b16 %v3110, %v3094
        %v4759 = vpack.c.b16 %v3111, %v3095
        %v4760 = vpack.c.b16 %v3112, %v3096
        %v4761 = vpack.c.b16 %v3113, %v3097
        %v4762 = vpack.c.b16 %v3114, %v3098
        %v4763 = vpack.c.b16 %v3115, %v3099
        %v4764 = vpack.c.b16 %v3116, %v3100
        %v4765 = vpack.c.b16 %v3117, %v3101
        %v4766 = vpack.c.b16 %v3118, %v3102
        %v4767 = vpack.c.b16 %v3119, %v3103
        %v4768 = vpack.c.b16 %v3120, %v3104
        %v4769 = vpack.c.b16 %v3137, %v3121
        %v4770 = vpack.c.b16 %v3138, %v3122
        %v4771 = vpack.c.b16 %v3139, %v3123
        %v4772 = vpack.c.b16 %v3140, %v3124
        %v4773 = vpack.c.b16 %v3141, %v3125
        %v4774 = vpack.c.b16 %v3142, %v3126
        %v4775 = vpack.c.b16 %v3143, %v3127
        %v4776 = vpack.c.b16 %v3144, %v3128
        %v4777 = vpack.c.b16 %v3145, %v3129
        %v4778 = vpack.c.b16 %v3146, %v3130
        %v4779 = vpack.c.b16 %v3147, %v3131
        %v4780 = vpack.c.b16 %v3148, %v3132
        %v4781 = vpack.c.b16 %v3149, %v3133
        %v4782 = vpack.c.b16 %v3150, %v3134
        %v4783 = vpack.c.b16 %v3151, %v3135
        %v4784 = vpack.c.b16 %v3152, %v3136
        %v4785 = vpack.c.b16 %v3169, %v3153
        %v4786 = vpack.c.b16 %v3170, %v3154
        %v4787 = vpack.c.b16 %v3171, %v3155
        %v4788 = vpack.c.b16 %v3172, %v3156
        %v4789 = vpack.c.b16 %v3173, %v3157
        %v4790 = vpack.c.b16 %v3174, %v3158
        %v4791 = vpack.c.b16 %v3175, %v3159
        %v4792 = vpack.c.b16 %v3176, %v3160
        %v4793 = vpack.c.b16 %v3177, %v3161
        %v4794 = vpack.c.b16 %v3178, %v3162
        %v4795 = vpack.c.b16 %v3179, %v3163
        %v4796 = vpack.c.b16 %v3180, %v3164
        %v4797 = vpack.c.b16 %v3181, %v3165
        %v4798 = vpack.c.b16 %v3182, %v3166
        %v4799 = vpack.c.b16 %v3183, %v3167
        %v4800 = vpack.c.b16 %v3184, %v3168
        %v4801 = vpack.c.b16 %v3201, %v3185
        %v4802 = vpack.c.b16 %v3202, %v3186
        %v4803 = vpack.c.b16 %v3203, %v3187
        %v4804 = vpack.c.b16 %v3204, %v3188
        %v4805 = vpack.c.b16 %v3205, %v3189
        %v4806 = vpack.c.b16 %v3206, %v3190
        %v4807 = vpack.c.b16 %v3207, %v3191
        %v4808 = vpack.c.b16 %v3208, %v3192
        %v4809 = vpack.c.b16 %v3209, %v3193
        %v4810 = vpack.c.b16 %v3210, %v3194
        %v4811 = vpack.c.b16 %v3211, %v3195
        %v4812 = vpack.c.b16 %v3212, %v3196
        %v4813 = vpack.c.b16 %v3213, %v3197
        %v4814 = vpack.c.b16 %v3214, %v3198
        %v4815 = vpack.c.b16 %v3215, %v3199
        %v4816 = vpack.c.b16 %v3216, %v3200
        %v4817 = vpack.c.b16 %v3233, %v3217
        %v4818 = vpack.c.b16 %v3234, %v3218
        %v4819 = vpack.c.b16 %v3235, %v3219
        %v4820 = vpack.c.b16 %v3236, %v3220
        %v4821 = vpack.c.b16 %v3237, %v3221
        %v4822 = vpack.c.b16 %v3238, %v3222
        %v4823 = vpack.c.b16 %v3239, %v3223
        %v4824 = vpack.c.b16 %v3240, %v3224
        %v4825 = vpack.c.b16 %v3241, %v3225
        %v4826 = vpack.c.b16 %v3242, %v3226
        %v4827 = vpack.c.b16 %v3243, %v3227
        %v4828 = vpack.c.b16 %v3244, %v3228
        %v4829 = vpack.c.b16 %v3245, %v3229
        %v4830 = vpack.c.b16 %v3246, %v3230
        %v4831 = vpack.c.b16 %v3247, %v3231
        %v4832 = vpack.c.b16 %v3248, %v3232
        %v4833 = vpack.c.b16 %v3265, %v3249
        %v4834 = vpack.c.b16 %v3266, %v3250
        %v4835 = vpack.c.b16 %v3267, %v3251
        %v4836 = vpack.c.b16 %v3268, %v3252
        %v4837 = vpack.c.b16 %v3269, %v3253
        %v4838 = vpack.c.b16 %v3270, %v3254
        %v4839 = vpack.c.b16 %v3271, %v3255
        %v4840 = vpack.c.b16 %v3272, %v3256
        %v4841 = vpack.c.b16 %v3273, %v3257
        %v4842 = vpack.c.b16 %v3274, %v3258
        %v4843 = vpack.c.b16 %v3275, %v3259
        %v4844 = vpack.c.b16 %v3276, %v3260
        %v4845 = vpack.c.b16 %v3277, %v3261
        %v4846 = vpack.c.b16 %v3278, %v3262
        %v4847 = vpack.c.b16 %v3279, %v3263
        %v4848 = vpack.c.b16 %v3280, %v3264
        %v4849 = vpack.c.b16 %v3297, %v3281
        %v4850 = vpack.c.b16 %v3298, %v3282
        %v4851 = vpack.c.b16 %v3299, %v3283
        %v4852 = vpack.c.b16 %v3300, %v3284
        %v4853 = vpack.c.b16 %v3301, %v3285
        %v4854 = vpack.c.b16 %v3302, %v3286
        %v4855 = vpack.c.b16 %v3303, %v3287
        %v4856 = vpack.c.b16 %v3304, %v3288
        %v4857 = vpack.c.b16 %v3305, %v3289
        %v4858 = vpack.c.b16 %v3306, %v3290
        %v4859 = vpack.c.b16 %v3307, %v3291
        %v4860 = vpack.c.b16 %v3308, %v3292
        %v4861 = vpack.c.b16 %v3309, %v3293
        %v4862 = vpack.c.b16 %v3310, %v3294
        %v4863 = vpack.c.b16 %v3311, %v3295
        %v4864 = vpack.c.b16 %v3312, %v3296
        %v4865 = vpack.c.b16 %v3329, %v3313
        %v4866 = vpack.c.b16 %v3330, %v3314
        %v4867 = vpack.c.b16 %v3331, %v3315
        %v4868 = vpack.c.b16 %v3332, %v3316
        %v4869 = vpack.c.b16 %v3333, %v3317
        %v4870 = vpack.c.b16 %v3334, %v3318
        %v4871 = vpack.c.b16 %v3335, %v3319
        %v4872 = vpack.c.b16 %v3336, %v3320
        %v4873 = vpack.c.b16 %v3337, %v3321
        %v4874 = vpack.c.b16 %v3338, %v3322
        %v4875 = vpack.c.b16 %v3339, %v3323
        %v4876 = vpack.c.b16 %v3340, %v3324
        %v4877 = vpack.c.b16 %v3341, %v3325
        %v4878 = vpack.c.b16 %v3342, %v3326
        %v4879 = vpack.c.b16 %v3343, %v3327
        %v4880 = vpack.c.b16 %v3344, %v3328
        %v4881 = vpack.c.b16 %v3361, %v3345
        %v4882 = vpack.c.b16 %v3362, %v3346
        %v4883 = vpack.c.b16 %v3363, %v3347
        %v4884 = vpack.c.b16 %v3364, %v3348
        %v4885 = vpack.c.b16 %v3365, %v3349
        %v4886 = vpack.c.b16 %v3366, %v3350
        %v4887 = vpack.c.b16 %v3367, %v3351
        %v4888 = vpack.c.b16 %v3368, %v3352
        %v4889 = vpack.c.b16 %v3369, %v3353
        %v4890 = vpack.c.b16 %v3370, %v3354
        %v4891 = vpack.c.b16 %v3371, %v3355
        %v4892 = vpack.c.b16 %v3372, %v3356
        %v4893 = vpack.c.b16 %v3373, %v3357
        %v4894 = vpack.c.b16 %v3374, %v3358
        %v4895 = vpack.c.b16 %v3375, %v3359
        %v4896 = vpack.c.b16 %v3376, %v3360
        %v4897 = vpack.c.b16 %v3393, %v3377
        %v4898 = vpack.c.b16 %v3394, %v3378
        %v4899 = vpack.c.b16 %v3395, %v3379
        %v4900 = vpack.c.b16 %v3396, %v3380
        %v4901 = vpack.c.b16 %v3397, %v3381
        %v4902 = vpack.c.b16 %v3398, %v3382
        %v4903 = vpack.c.b16 %v3399, %v3383
        %v4904 = vpack.c.b16 %v3400, %v3384
        %v4905 = vpack.c.b16 %v3401, %v3385
        %v4906 = vpack.c.b16 %v3402, %v3386
        %v4907 = vpack.c.b16 %v3403, %v3387
        %v4908 = vpack.c.b16 %v3404, %v3388
        %v4909 = vpack.c.b16 %v3405, %v3389
        %v4910 = vpack.c.b16 %v3406, %v3390
        %v4911 = vpack.c.b16 %v3407, %v3391
        %v4912 = vpack.c.b16 %v3408, %v3392
        %v4913 = vpack.c.b16 %v3425, %v3409
        %v4914 = vpack.c.b16 %v3426, %v3410
        %v4915 = vpack.c.b16 %v3427, %v3411
        %v4916 = vpack.c.b16 %v3428, %v3412
        %v4917 = vpack.c.b16 %v3429, %v3413
        %v4918 = vpack.c.b16 %v3430, %v3414
        %v4919 = vpack.c.b16 %v3431, %v3415
        %v4920 = vpack.c.b16 %v3432, %v3416
        %v4921 = vpack.c.b16 %v3433, %v3417
        %v4922 = vpack.c.b16 %v3434, %v3418
        %v4923 = vpack.c.b16 %v3435, %v3419
        %v4924 = vpack.c.b16 %v3436, %v3420
        %v4925 = vpack.c.b16 %v3437, %v3421
        %v4926 = vpack.c.b16 %v3438, %v3422
        %v4927 = vpack.c.b16 %v3439, %v3423
        %v4928 = vpack.c.b16 %v3440, %v3424
        %v4929 = vpack.c.b16 %v3457, %v3441
        %v4930 = vpack.c.b16 %v3458, %v3442
        %v4931 = vpack.c.b16 %v3459, %v3443
        %v4932 = vpack.c.b16 %v3460, %v3444
        %v4933 = vpack.c.b16 %v3461, %v3445
        %v4934 = vpack.c.b16 %v3462, %v3446
        %v4935 = vpack.c.b16 %v3463, %v3447
        %v4936 = vpack.c.b16 %v3464, %v3448
        %v4937 = vpack.c.b16 %v3465, %v3449
        %v4938 = vpack.c.b16 %v3466, %v3450
        %v4939 = vpack.c.b16 %v3467, %v3451
        %v4940 = vpack.c.b16 %v3468, %v3452
        %v4941 = vpack.c.b16 %v3469, %v3453
        %v4942 = vpack.c.b16 %v3470, %v3454
        %v4943 = vpack.c.b16 %v3471, %v3455
        %v4944 = vpack.c.b16 %v3472, %v3456
        %v4945 = vpack.c.b16 %v3489, %v3473
        %v4946 = vpack.c.b16 %v3490, %v3474
        %v4947 = vpack.c.b16 %v3491, %v3475
        %v4948 = vpack.c.b16 %v3492, %v3476
        %v4949 = vpack.c.b16 %v3493, %v3477
        %v4950 = vpack.c.b16 %v3494, %v3478
        %v4951 = vpack.c.b16 %v3495, %v3479
        %v4952 = vpack.c.b16 %v3496, %v3480
        %v4953 = vpack.c.b16 %v3497, %v3481
        %v4954 = vpack.c.b16 %v3498, %v3482
        %v4955 = vpack.c.b16 %v3499, %v3483
        %v4956 = vpack.c.b16 %v3500, %v3484
        %v4957 = vpack.c.b16 %v3501, %v3485
        %v4958 = vpack.c.b16 %v3502, %v3486
        %v4959 = vpack.c.b16 %v3503, %v3487
        %v4960 = vpack.c.b16 %v3504, %v3488
        %v4961 = vpack.c.b16 %v3521, %v3505
        %v4962 = vpack.c.b16 %v3522, %v3506
        %v4963 = vpack.c.b16 %v3523, %v3507
        %v4964 = vpack.c.b16 %v3524, %v3508
        %v4965 = vpack.c.b16 %v3525, %v3509
        %v4966 = vpack.c.b16 %v3526, %v3510
        %v4967 = vpack.c.b16 %v3527, %v3511
        %v4968 = vpack.c.b16 %v3528, %v3512
        %v4969 = vpack.c.b16 %v3529, %v3513
        %v4970 = vpack.c.b16 %v3530, %v3514
        %v4971 = vpack.c.b16 %v3531, %v3515
        %v4972 = vpack.c.b16 %v3532, %v3516
        %v4973 = vpack.c.b16 %v3533, %v3517
        %v4974 = vpack.c.b16 %v3534, %v3518
        %v4975 = vpack.c.b16 %v3535, %v3519
        %v4976 = vpack.c.b16 %v3536, %v3520
        %v4977 = vpack.c.b16 %v3553, %v3537
        %v4978 = vpack.c.b16 %v3554, %v3538
        %v4979 = vpack.c.b16 %v3555, %v3539
        %v4980 = vpack.c.b16 %v3556, %v3540
        %v4981 = vpack.c.b16 %v3557, %v3541
        %v4982 = vpack.c.b16 %v3558, %v3542
        %v4983 = vpack.c.b16 %v3559, %v3543
        %v4984 = vpack.c.b16 %v3560, %v3544
        %v4985 = vpack.c.b16 %v3561, %v3545
        %v4986 = vpack.c.b16 %v3562, %v3546
        %v4987 = vpack.c.b16 %v3563, %v3547
        %v4988 = vpack.c.b16 %v3564, %v3548
        %v4989 = vpack.c.b16 %v3565, %v3549
        %v4990 = vpack.c.b16 %v3566, %v3550
        %v4991 = vpack.c.b16 %v3567, %v3551
        %v4992 = vpack.c.b16 %v3568, %v3552
        %v4993 = vpack.c.b16 %v3585, %v3569
        %v4994 = vpack.c.b16 %v3586, %v3570
        %v4995 = vpack.c.b16 %v3587, %v3571
        %v4996 = vpack.c.b16 %v3588, %v3572
        %v4997 = vpack.c.b16 %v3589, %v3573
        %v4998 = vpack.c.b16 %v3590, %v3574
        %v4999 = vpack.c.b16 %v3591, %v3575
        %v5000 = vpack.c.b16 %v3592, %v3576
        %v5001 = vpack.c.b16 %v3593, %v3577
        %v5002 = vpack.c.b16 %v3594, %v3578
        %v5003 = vpack.c.b16 %v3595, %v3579
        %v5004 = vpack.c.b16 %v3596, %v3580
        %v5005 = vpack.c.b16 %v3597, %v3581
        %v5006 = vpack.c.b16 %v3598, %v3582
        %v5007 = vpack.c.b16 %v3599, %v3583
        %v5008 = vpack.c.b16 %v3600, %v3584
        %v5009 = vpack.c.b16 %v3617, %v3601
        %v5010 = vpack.c.b16 %v3618, %v3602
        %v5011 = vpack.c.b16 %v3619, %v3603
        %v5012 = vpack.c.b16 %v3620, %v3604
        %v5013 = vpack.c.b16 %v3621, %v3605
        %v5014 = vpack.c.b16 %v3622, %v3606
        %v5015 = vpack.c.b16 %v3623, %v3607
        %v5016 = vpack.c.b16 %v3624, %v3608
        %v5017 = vpack.c.b16 %v3625, %v3609
        %v5018 = vpack.c.b16 %v3626, %v3610
        %v5019 = vpack.c.b16 %v3627, %v3611
        %v5020 = vpack.c.b16 %v3628, %v3612
        %v5021 = vpack.c.b16 %v3629, %v3613
        %v5022 = vpack.c.b16 %v3630, %v3614
        %v5023 = vpack.c.b16 %v3631, %v3615
        %v5024 = vpack.c.b16 %v3632, %v3616
        %v5025 = vpack.c.b16 %v3649, %v3633
        %v5026 = vpack.c.b16 %v3650, %v3634
        %v5027 = vpack.c.b16 %v3651, %v3635
        %v5028 = vpack.c.b16 %v3652, %v3636
        %v5029 = vpack.c.b16 %v3653, %v3637
        %v5030 = vpack.c.b16 %v3654, %v3638
        %v5031 = vpack.c.b16 %v3655, %v3639
        %v5032 = vpack.c.b16 %v3656, %v3640
        %v5033 = vpack.c.b16 %v3657, %v3641
        %v5034 = vpack.c.b16 %v3658, %v3642
        %v5035 = vpack.c.b16 %v3659, %v3643
        %v5036 = vpack.c.b16 %v3660, %v3644
        %v5037 = vpack.c.b16 %v3661, %v3645
        %v5038 = vpack.c.b16 %v3662, %v3646
        %v5039 = vpack.c.b16 %v3663, %v3647
        %v5040 = vpack.c.b16 %v3664, %v3648
        %v5041 = vpack.c.b16 %v3681, %v3665
        %v5042 = vpack.c.b16 %v3682, %v3666
        %v5043 = vpack.c.b16 %v3683, %v3667
        %v5044 = vpack.c.b16 %v3684, %v3668
        %v5045 = vpack.c.b16 %v3685, %v3669
        %v5046 = vpack.c.b16 %v3686, %v3670
        %v5047 = vpack.c.b16 %v3687, %v3671
        %v5048 = vpack.c.b16 %v3688, %v3672
        %v5049 = vpack.c.b16 %v3689, %v3673
        %v5050 = vpack.c.b16 %v3690, %v3674
        %v5051 = vpack.c.b16 %v3691, %v3675
        %v5052 = vpack.c.b16 %v3692, %v3676
        %v5053 = vpack.c.b16 %v3693, %v3677
        %v5054 = vpack.c.b16 %v3694, %v3678
        %v5055 = vpack.c.b16 %v3695, %v3679
        %v5056 = vpack.c.b16 %v3696, %v3680
        %v5057 = vpack.c.b16 %v3713, %v3697
        %v5058 = vpack.c.b16 %v3714, %v3698
        %v5059 = vpack.c.b16 %v3715, %v3699
        %v5060 = vpack.c.b16 %v3716, %v3700
        %v5061 = vpack.c.b16 %v3717, %v3701
        %v5062 = vpack.c.b16 %v3718, %v3702
        %v5063 = vpack.c.b16 %v3719, %v3703
        %v5064 = vpack.c.b16 %v3720, %v3704
        %v5065 = vpack.c.b16 %v3721, %v3705
        %v5066 = vpack.c.b16 %v3722, %v3706
        %v5067 = vpack.c.b16 %v3723, %v3707
        %v5068 = vpack.c.b16 %v3724, %v3708
        %v5069 = vpack.c.b16 %v3725, %v3709
        %v5070 = vpack.c.b16 %v3726, %v3710
        %v5071 = vpack.c.b16 %v3727, %v3711
        %v5072 = vpack.c.b16 %v3728, %v3712
        %v5073 = vpack.c.b16 %v3745, %v3729
        %v5074 = vpack.c.b16 %v3746, %v3730
        %v5075 = vpack.c.b16 %v3747, %v3731
        %v5076 = vpack.c.b16 %v3748, %v3732
        %v5077 = vpack.c.b16 %v3749, %v3733
        %v5078 = vpack.c.b16 %v3750, %v3734
        %v5079 = vpack.c.b16 %v3751, %v3735
        %v5080 = vpack.c.b16 %v3752, %v3736
        %v5081 = vpack.c.b16 %v3753, %v3737
        %v5082 = vpack.c.b16 %v3754, %v3738
        %v5083 = vpack.c.b16 %v3755, %v3739
        %v5084 = vpack.c.b16 %v3756, %v3740
        %v5085 = vpack.c.b16 %v3757, %v3741
        %v5086 = vpack.c.b16 %v3758, %v3742
        %v5087 = vpack.c.b16 %v3759, %v3743
        %v5088 = vpack.c.b16 %v3760, %v3744
        %v5089 = vpack.c.b16 %v3777, %v3761
        %v5090 = vpack.c.b16 %v3778, %v3762
        %v5091 = vpack.c.b16 %v3779, %v3763
        %v5092 = vpack.c.b16 %v3780, %v3764
        %v5093 = vpack.c.b16 %v3781, %v3765
        %v5094 = vpack.c.b16 %v3782, %v3766
        %v5095 = vpack.c.b16 %v3783, %v3767
        %v5096 = vpack.c.b16 %v3784, %v3768
        %v5097 = vpack.c.b16 %v3785, %v3769
        %v5098 = vpack.c.b16 %v3786, %v3770
        %v5099 = vpack.c.b16 %v3787, %v3771
        %v5100 = vpack.c.b16 %v3788, %v3772
        %v5101 = vpack.c.b16 %v3789, %v3773
        %v5102 = vpack.c.b16 %v3790, %v3774
        %v5103 = vpack.c.b16 %v3791, %v3775
        %v5104 = vpack.c.b16 %v3792, %v3776
        %v5105 = vpack.c.b16 %v3809, %v3793
        %v5106 = vpack.c.b16 %v3810, %v3794
        %v5107 = vpack.c.b16 %v3811, %v3795
        %v5108 = vpack.c.b16 %v3812, %v3796
        %v5109 = vpack.c.b16 %v3813, %v3797
        %v5110 = vpack.c.b16 %v3814, %v3798
        %v5111 = vpack.c.b16 %v3815, %v3799
        %v5112 = vpack.c.b16 %v3816, %v3800
        %v5113 = vpack.c.b16 %v3817, %v3801
        %v5114 = vpack.c.b16 %v3818, %v3802
        %v5115 = vpack.c.b16 %v3819, %v3803
        %v5116 = vpack.c.b16 %v3820, %v3804
        %v5117 = vpack.c.b16 %v3821, %v3805
        %v5118 = vpack.c.b16 %v3822, %v3806
        %v5119 = vpack.c.b16 %v3823, %v3807
        %v5120 = vpack.c.b16 %v3824, %v3808
        %v5121 = vpack.c.b16 %v3841, %v3825
        %v5122 = vpack.c.b16 %v3842, %v3826
        %v5123 = vpack.c.b16 %v3843, %v3827
        %v5124 = vpack.c.b16 %v3844, %v3828
        %v5125 = vpack.c.b16 %v3845, %v3829
        %v5126 = vpack.c.b16 %v3846, %v3830
        %v5127 = vpack.c.b16 %v3847, %v3831
        %v5128 = vpack.c.b16 %v3848, %v3832
        %v5129 = vpack.c.b16 %v3849, %v3833
        %v5130 = vpack.c.b16 %v3850, %v3834
        %v5131 = vpack.c.b16 %v3851, %v3835
        %v5132 = vpack.c.b16 %v3852, %v3836
        %v5133 = vpack.c.b16 %v3853, %v3837
        %v5134 = vpack.c.b16 %v3854, %v3838
        %v5135 = vpack.c.b16 %v3855, %v3839
        %v5136 = vpack.c.b16 %v3856, %v3840
        %v5137 = vpack.c.b16 %v3873, %v3857
        %v5138 = vpack.c.b16 %v3874, %v3858
        %v5139 = vpack.c.b16 %v3875, %v3859
        %v5140 = vpack.c.b16 %v3876, %v3860
        %v5141 = vpack.c.b16 %v3877, %v3861
        %v5142 = vpack.c.b16 %v3878, %v3862
        %v5143 = vpack.c.b16 %v3879, %v3863
        %v5144 = vpack.c.b16 %v3880, %v3864
        %v5145 = vpack.c.b16 %v3881, %v3865
        %v5146 = vpack.c.b16 %v3882, %v3866
        %v5147 = vpack.c.b16 %v3883, %v3867
        %v5148 = vpack.c.b16 %v3884, %v3868
        %v5149 = vpack.c.b16 %v3885, %v3869
        %v5150 = vpack.c.b16 %v3886, %v3870
        %v5151 = vpack.c.b16 %v3887, %v3871
        %v5152 = vpack.c.b16 %v3888, %v3872
        %v5153 = vpack.c.b16 %v3905, %v3889
        %v5154 = vpack.c.b16 %v3906, %v3890
        %v5155 = vpack.c.b16 %v3907, %v3891
        %v5156 = vpack.c.b16 %v3908, %v3892
        %v5157 = vpack.c.b16 %v3909, %v3893
        %v5158 = vpack.c.b16 %v3910, %v3894
        %v5159 = vpack.c.b16 %v3911, %v3895
        %v5160 = vpack.c.b16 %v3912, %v3896
        %v5161 = vpack.c.b16 %v3913, %v3897
        %v5162 = vpack.c.b16 %v3914, %v3898
        %v5163 = vpack.c.b16 %v3915, %v3899
        %v5164 = vpack.c.b16 %v3916, %v3900
        %v5165 = vpack.c.b16 %v3917, %v3901
        %v5166 = vpack.c.b16 %v3918, %v3902
        %v5167 = vpack.c.b16 %v3919, %v3903
        %v5168 = vpack.c.b16 %v3920, %v3904
        %v5169 = vpack.c.b16 %v3937, %v3921
        %v5170 = vpack.c.b16 %v3938, %v3922
        %v5171 = vpack.c.b16 %v3939, %v3923
        %v5172 = vpack.c.b16 %v3940, %v3924
        %v5173 = vpack.c.b16 %v3941, %v3925
        %v5174 = vpack.c.b16 %v3942, %v3926
        %v5175 = vpack.c.b16 %v3943, %v3927
        %v5176 = vpack.c.b16 %v3944, %v3928
        %v5177 = vpack.c.b16 %v3945, %v3929
        %v5178 = vpack.c.b16 %v3946, %v3930
        %v5179 = vpack.c.b16 %v3947, %v3931
        %v5180 = vpack.c.b16 %v3948, %v3932
        %v5181 = vpack.c.b16 %v3949, %v3933
        %v5182 = vpack.c.b16 %v3950, %v3934
        %v5183 = vpack.c.b16 %v3951, %v3935
        %v5184 = vpack.c.b16 %v3952, %v3936
        %v5185 = vpack.c.b16 %v3969, %v3953
        %v5186 = vpack.c.b16 %v3970, %v3954
        %v5187 = vpack.c.b16 %v3971, %v3955
        %v5188 = vpack.c.b16 %v3972, %v3956
        %v5189 = vpack.c.b16 %v3973, %v3957
        %v5190 = vpack.c.b16 %v3974, %v3958
        %v5191 = vpack.c.b16 %v3975, %v3959
        %v5192 = vpack.c.b16 %v3976, %v3960
        %v5193 = vpack.c.b16 %v3977, %v3961
        %v5194 = vpack.c.b16 %v3978, %v3962
        %v5195 = vpack.c.b16 %v3979, %v3963
        %v5196 = vpack.c.b16 %v3980, %v3964
        %v5197 = vpack.c.b16 %v3981, %v3965
        %v5198 = vpack.c.b16 %v3982, %v3966
        %v5199 = vpack.c.b16 %v3983, %v3967
        %v5200 = vpack.c.b16 %v3984, %v3968
        %v5201 = vpack.c.b16 %v4001, %v3985
        %v5202 = vpack.c.b16 %v4002, %v3986
        %v5203 = vpack.c.b16 %v4003, %v3987
        %v5204 = vpack.c.b16 %v4004, %v3988
        %v5205 = vpack.c.b16 %v4005, %v3989
        %v5206 = vpack.c.b16 %v4006, %v3990
        %v5207 = vpack.c.b16 %v4007, %v3991
        %v5208 = vpack.c.b16 %v4008, %v3992
        %v5209 = vpack.c.b16 %v4009, %v3993
        %v5210 = vpack.c.b16 %v4010, %v3994
        %v5211 = vpack.c.b16 %v4011, %v3995
        %v5212 = vpack.c.b16 %v4012, %v3996
        %v5213 = vpack.c.b16 %v4013, %v3997
        %v5214 = vpack.c.b16 %v4014, %v3998
        %v5215 = vpack.c.b16 %v4015, %v3999
        %v5216 = vpack.c.b16 %v4016, %v4000
        %v5217 = vpack.c.b16 %v4033, %v4017
        %v5218 = vpack.c.b16 %v4034, %v4018
        %v5219 = vpack.c.b16 %v4035, %v4019
        %v5220 = vpack.c.b16 %v4036, %v4020
        %v5221 = vpack.c.b16 %v4037, %v4021
        %v5222 = vpack.c.b16 %v4038, %v4022
        %v5223 = vpack.c.b16 %v4039, %v4023
        %v5224 = vpack.c.b16 %v4040, %v4024
        %v5225 = vpack.c.b16 %v4041, %v4025
        %v5226 = vpack.c.b16 %v4042, %v4026
        %v5227 = vpack.c.b16 %v4043, %v4027
        %v5228 = vpack.c.b16 %v4044, %v4028
        %v5229 = vpack.c.b16 %v4045, %v4029
        %v5230 = vpack.c.b16 %v4046, %v4030
        %v5231 = vpack.c.b16 %v4047, %v4031
        %v5232 = vpack.c.b16 %v4048, %v4032
        %v5233 = vpack.c.b16 %v4065, %v4049
        %v5234 = vpack.c.b16 %v4066, %v4050
        %v5235 = vpack.c.b16 %v4067, %v4051
        %v5236 = vpack.c.b16 %v4068, %v4052
        %v5237 = vpack.c.b16 %v4069, %v4053
        %v5238 = vpack.c.b16 %v4070, %v4054
        %v5239 = vpack.c.b16 %v4071, %v4055
        %v5240 = vpack.c.b16 %v4072, %v4056
        %v5241 = vpack.c.b16 %v4073, %v4057
        %v5242 = vpack.c.b16 %v4074, %v4058
        %v5243 = vpack.c.b16 %v4075, %v4059
        %v5244 = vpack.c.b16 %v4076, %v4060
        %v5245 = vpack.c.b16 %v4077, %v4061
        %v5246 = vpack.c.b16 %v4078, %v4062
        %v5247 = vpack.c.b16 %v4079, %v4063
        %v5248 = vpack.c.b16 %v4080, %v4064
        %v5249 = vpack.c.b16 %v4097, %v4081
        %v5250 = vpack.c.b16 %v4098, %v4082
        %v5251 = vpack.c.b16 %v4099, %v4083
        %v5252 = vpack.c.b16 %v4100, %v4084
        %v5253 = vpack.c.b16 %v4101, %v4085
        %v5254 = vpack.c.b16 %v4102, %v4086
        %v5255 = vpack.c.b16 %v4103, %v4087
        %v5256 = vpack.c.b16 %v4104, %v4088
        %v5257 = vpack.c.b16 %v4105, %v4089
        %v5258 = vpack.c.b16 %v4106, %v4090
        %v5259 = vpack.c.b16 %v4107, %v4091
        %v5260 = vpack.c.b16 %v4108, %v4092
        %v5261 = vpack.c.b16 %v4109, %v4093
        %v5262 = vpack.c.b16 %v4110, %v4094
        %v5263 = vpack.c.b16 %v4111, %v4095
        %v5264 = vpack.c.b16 %v4112, %v4096
        %v5265 = vpack.c.b16 %v4129, %v4113
        %v5266 = vpack.c.b16 %v4130, %v4114
        %v5267 = vpack.c.b16 %v4131, %v4115
        %v5268 = vpack.c.b16 %v4132, %v4116
        %v5269 = vpack.c.b16 %v4133, %v4117
        %v5270 = vpack.c.b16 %v4134, %v4118
        %v5271 = vpack.c.b16 %v4135, %v4119
        %v5272 = vpack.c.b16 %v4136, %v4120
        %v5273 = vpack.c.b16 %v4137, %v4121
        %v5274 = vpack.c.b16 %v4138, %v4122
        %v5275 = vpack.c.b16 %v4139, %v4123
        %v5276 = vpack.c.b16 %v4140, %v4124
        %v5277 = vpack.c.b16 %v4141, %v4125
        %v5278 = vpack.c.b16 %v4142, %v4126
        %v5279 = vpack.c.b16 %v4143, %v4127
        %v5280 = vpack.c.b16 %v4144, %v4128
        %v5281 = vpack.c.b16 %v4161, %v4145
        %v5282 = vpack.c.b16 %v4162, %v4146
        %v5283 = vpack.c.b16 %v4163, %v4147
        %v5284 = vpack.c.b16 %v4164, %v4148
        %v5285 = vpack.c.b16 %v4165, %v4149
        %v5286 = vpack.c.b16 %v4166, %v4150
        %v5287 = vpack.c.b16 %v4167, %v4151
        %v5288 = vpack.c.b16 %v4168, %v4152
        %v5289 = vpack.c.b16 %v4169, %v4153
        %v5290 = vpack.c.b16 %v4170, %v4154
        %v5291 = vpack.c.b16 %v4171, %v4155
        %v5292 = vpack.c.b16 %v4172, %v4156
        %v5293 = vpack.c.b16 %v4173, %v4157
        %v5294 = vpack.c.b16 %v4174, %v4158
        %v5295 = vpack.c.b16 %v4175, %v4159
        %v5296 = vpack.c.b16 %v4176, %v4160
        %v5297 = vpack.c.b16 %v4193, %v4177
        %v5298 = vpack.c.b16 %v4194, %v4178
        %v5299 = vpack.c.b16 %v4195, %v4179
        %v5300 = vpack.c.b16 %v4196, %v4180
        %v5301 = vpack.c.b16 %v4197, %v4181
        %v5302 = vpack.c.b16 %v4198, %v4182
        %v5303 = vpack.c.b16 %v4199, %v4183
        %v5304 = vpack.c.b16 %v4200, %v4184
        %v5305 = vpack.c.b16 %v4201, %v4185
        %v5306 = vpack.c.b16 %v4202, %v4186
        %v5307 = vpack.c.b16 %v4203, %v4187
        %v5308 = vpack.c.b16 %v4204, %v4188
        %v5309 = vpack.c.b16 %v4205, %v4189
        %v5310 = vpack.c.b16 %v4206, %v4190
        %v5311 = vpack.c.b16 %v4207, %v4191
        %v5312 = vpack.c.b16 %v4208, %v4192
        %v5313 = vpack.c.b16 %v4225, %v4209
        %v5314 = vpack.c.b16 %v4226, %v4210
        %v5315 = vpack.c.b16 %v4227, %v4211
        %v5316 = vpack.c.b16 %v4228, %v4212
        %v5317 = vpack.c.b16 %v4229, %v4213
        %v5318 = vpack.c.b16 %v4230, %v4214
        %v5319 = vpack.c.b16 %v4231, %v4215
        %v5320 = vpack.c.b16 %v4232, %v4216
        %v5321 = vpack.c.b16 %v4233, %v4217
        %v5322 = vpack.c.b16 %v4234, %v4218
        %v5323 = vpack.c.b16 %v4235, %v4219
        %v5324 = vpack.c.b16 %v4236, %v4220
        %v5325 = vpack.c.b16 %v4237, %v4221
        %v5326 = vpack.c.b16 %v4238, %v4222
        %v5327 = vpack.c.b16 %v4239, %v4223
        %v5328 = vpack.c.b16 %v4240, %v4224
        %v5329 = vpack.c.b16 %v4257, %v4241
        %v5330 = vpack.c.b16 %v4258, %v4242
        %v5331 = vpack.c.b16 %v4259, %v4243
        %v5332 = vpack.c.b16 %v4260, %v4244
        %v5333 = vpack.c.b16 %v4261, %v4245
        %v5334 = vpack.c.b16 %v4262, %v4246
        %v5335 = vpack.c.b16 %v4263, %v4247
        %v5336 = vpack.c.b16 %v4264, %v4248
        %v5337 = vpack.c.b16 %v4265, %v4249
        %v5338 = vpack.c.b16 %v4266, %v4250
        %v5339 = vpack.c.b16 %v4267, %v4251
        %v5340 = vpack.c.b16 %v4268, %v4252
        %v5341 = vpack.c.b16 %v4269, %v4253
        %v5342 = vpack.c.b16 %v4270, %v4254
        %v5343 = vpack.c.b16 %v4271, %v4255
        %v5344 = vpack.c.b16 %v4272, %v4256
        %v5345 = vpack.c.b16 %v4289, %v4273
        %v5346 = vpack.c.b16 %v4290, %v4274
        %v5347 = vpack.c.b16 %v4291, %v4275
        %v5348 = vpack.c.b16 %v4292, %v4276
        %v5349 = vpack.c.b16 %v4293, %v4277
        %v5350 = vpack.c.b16 %v4294, %v4278
        %v5351 = vpack.c.b16 %v4295, %v4279
        %v5352 = vpack.c.b16 %v4296, %v4280
        %v5353 = vpack.c.b16 %v4297, %v4281
        %v5354 = vpack.c.b16 %v4298, %v4282
        %v5355 = vpack.c.b16 %v4299, %v4283
        %v5356 = vpack.c.b16 %v4300, %v4284
        %v5357 = vpack.c.b16 %v4301, %v4285
        %v5358 = vpack.c.b16 %v4302, %v4286
        %v5359 = vpack.c.b16 %v4303, %v4287
        %v5360 = vpack.c.b16 %v4304, %v4288
        %v5361 = vpack.c.b16 %v4321, %v4305
        %v5362 = vpack.c.b16 %v4322, %v4306
        %v5363 = vpack.c.b16 %v4323, %v4307
        %v5364 = vpack.c.b16 %v4324, %v4308
        %v5365 = vpack.c.b16 %v4325, %v4309
        %v5366 = vpack.c.b16 %v4326, %v4310
        %v5367 = vpack.c.b16 %v4327, %v4311
        %v5368 = vpack.c.b16 %v4328, %v4312
        %v5369 = vpack.c.b16 %v4329, %v4313
        %v5370 = vpack.c.b16 %v4330, %v4314
        %v5371 = vpack.c.b16 %v4331, %v4315
        %v5372 = vpack.c.b16 %v4332, %v4316
        %v5373 = vpack.c.b16 %v4333, %v4317
        %v5374 = vpack.c.b16 %v4334, %v4318
        %v5375 = vpack.c.b16 %v4335, %v4319
        %v5376 = vpack.c.b16 %v4336, %v4320
        %v5377 = vpack.c.b16 %v4353, %v4337
        %v5378 = vpack.c.b16 %v4354, %v4338
        %v5379 = vpack.c.b16 %v4355, %v4339
        %v5380 = vpack.c.b16 %v4356, %v4340
        %v5381 = vpack.c.b16 %v4357, %v4341
        %v5382 = vpack.c.b16 %v4358, %v4342
        %v5383 = vpack.c.b16 %v4359, %v4343
        %v5384 = vpack.c.b16 %v4360, %v4344
        %v5385 = vpack.c.b16 %v4361, %v4345
        %v5386 = vpack.c.b16 %v4362, %v4346
        %v5387 = vpack.c.b16 %v4363, %v4347
        %v5388 = vpack.c.b16 %v4364, %v4348
        %v5389 = vpack.c.b16 %v4365, %v4349
        %v5390 = vpack.c.b16 %v4366, %v4350
        %v5391 = vpack.c.b16 %v4367, %v4351
        %v5392 = vpack.c.b16 %v4368, %v4352
        %v6419 = vperm.slane %v1295, 0
        %v6420 = vperm.slane %v1295, 1
        %v6421 = vperm.slane %v1295, 2
        %v6422 = vperm.slane %v1295, 3
        %v6423 = vperm.slane %v1295, 4
        %v6424 = vperm.slane %v1295, 5
        %v6425 = vperm.slane %v1295, 6
        %v6426 = vperm.slane %v1295, 7
        %v6427 = vperm.slane %v1296, 0
        %v6428 = vperm.slane %v1296, 1
        %v6429 = vperm.slane %v1296, 2
        %v6430 = vperm.slane %v1296, 3
        %v6431 = vperm.slane %v1296, 4
        %v6432 = vperm.slane %v1296, 5
        %v6433 = vperm.slane %v1296, 6
        %v6434 = vperm.slane %v1296, 7
        %6451 = vmatpush.bf16.msra.mxu0 %v4481
        %6452 = vmatpush.bf16.msra.mxu0 %v4465
        %6453 = vmatpush.bf16.msra.mxu0 %v4449
        %6454 = vmatpush.bf16.msra.mxu0 %v4433
        %6455 = vmatpush.bf16.msra.mxu0 %v4417
        %6456 = vmatpush.bf16.msra.mxu0 %v4401
        %6457 = vmatpush.bf16.msra.mxu0 %v4385
        %6458 = vmatpush.bf16.msra.mxu0 %v4369
        %6459 = vmatmul.bf16.gmra.mxu0 %v263
        %v6460 = vpop.f32.mrf.mxu0
        %v6461 = vadd.f32 %v6419, %v6460
        %v6462 = vpop.f32.mrf.mxu0
        %6463 = vdwg.mxu0
        %6464 = vmatpush.bf16.msra.mxu0 %v4609
        %6465 = vmatpush.bf16.msra.mxu0 %v4593
        %6466 = vmatpush.bf16.msra.mxu0 %v4577
        %6467 = vmatpush.bf16.msra.mxu0 %v4561
        %6468 = vmatpush.bf16.msra.mxu0 %v4545
        %6469 = vmatpush.bf16.msra.mxu0 %v4529
        %6470 = vmatpush.bf16.msra.mxu0 %v4513
        %6471 = vmatpush.bf16.msra.mxu0 %v4497
        %6472 = vmatmul.bf16.gmra.mxu0 %v264
        %v6473 = vpop.f32.mrf.mxu0
        %v6474 = vadd.f32 %v6461, %v6473
        %v6475 = vpop.f32.mrf.mxu0
        %6476 = vdwg.mxu0
        %6477 = vmatpush.bf16.msra.mxu0 %v4737
        %6478 = vmatpush.bf16.msra.mxu0 %v4721
        %6479 = vmatpush.bf16.msra.mxu0 %v4705
        %6480 = vmatpush.bf16.msra.mxu0 %v4689
        %6481 = vmatpush.bf16.msra.mxu0 %v4673
        %6482 = vmatpush.bf16.msra.mxu0 %v4657
        %6483 = vmatpush.bf16.msra.mxu0 %v4641
        %6484 = vmatpush.bf16.msra.mxu0 %v4625
        %6485 = vmatmul.bf16.gmra.mxu0 %v265
        %v6486 = vpop.f32.mrf.mxu0
        %v6487 = vadd.f32 %v6474, %v6486
        %v6488 = vpop.f32.mrf.mxu0
        %6489 = vdwg.mxu0
        %6490 = vmatpush.bf16.msra.mxu0 %v4865
        %6491 = vmatpush.bf16.msra.mxu0 %v4849
        %6492 = vmatpush.bf16.msra.mxu0 %v4833
        %6493 = vmatpush.bf16.msra.mxu0 %v4817
        %6494 = vmatpush.bf16.msra.mxu0 %v4801
        %6495 = vmatpush.bf16.msra.mxu0 %v4785
        %6496 = vmatpush.bf16.msra.mxu0 %v4769
        %6497 = vmatpush.bf16.msra.mxu0 %v4753
        %6498 = vmatmul.bf16.gmra.mxu0 %v266
        %v6499 = vpop.f32.mrf.mxu0
        %v6500 = vadd.f32 %v6487, %v6499
        %v6501 = vpop.f32.mrf.mxu0
        %6502 = vdwg.mxu0
        %6503 = vmatpush.bf16.msra.mxu0 %v4993
        %6504 = vmatpush.bf16.msra.mxu0 %v4977
        %6505 = vmatpush.bf16.msra.mxu0 %v4961
        %6506 = vmatpush.bf16.msra.mxu0 %v4945
        %6507 = vmatpush.bf16.msra.mxu0 %v4929
        %6508 = vmatpush.bf16.msra.mxu0 %v4913
        %6509 = vmatpush.bf16.msra.mxu0 %v4897
        %6510 = vmatpush.bf16.msra.mxu0 %v4881
        %6511 = vmatmul.bf16.gmra.mxu0 %v267
        %v6512 = vpop.f32.mrf.mxu0
        %v6513 = vadd.f32 %v6500, %v6512
        %v6514 = vpop.f32.mrf.mxu0
        %6515 = vdwg.mxu0
        %6516 = vmatpush.bf16.msra.mxu0 %v5121
        %6517 = vmatpush.bf16.msra.mxu0 %v5105
        %6518 = vmatpush.bf16.msra.mxu0 %v5089
        %6519 = vmatpush.bf16.msra.mxu0 %v5073
        %6520 = vmatpush.bf16.msra.mxu0 %v5057
        %6521 = vmatpush.bf16.msra.mxu0 %v5041
        %6522 = vmatpush.bf16.msra.mxu0 %v5025
        %6523 = vmatpush.bf16.msra.mxu0 %v5009
        %6524 = vmatmul.bf16.gmra.mxu0 %v268
        %v6525 = vpop.f32.mrf.mxu0
        %v6526 = vadd.f32 %v6513, %v6525
        %v6527 = vpop.f32.mrf.mxu0
        %6528 = vdwg.mxu0
        %6529 = vmatpush.bf16.msra.mxu0 %v5249
        %6530 = vmatpush.bf16.msra.mxu0 %v5233
        %6531 = vmatpush.bf16.msra.mxu0 %v5217
        %6532 = vmatpush.bf16.msra.mxu0 %v5201
        %6533 = vmatpush.bf16.msra.mxu0 %v5185
        %6534 = vmatpush.bf16.msra.mxu0 %v5169
        %6535 = vmatpush.bf16.msra.mxu0 %v5153
        %6536 = vmatpush.bf16.msra.mxu0 %v5137
        %6537 = vmatmul.bf16.gmra.mxu0 %v269
        %v6538 = vpop.f32.mrf.mxu0
        %v6539 = vadd.f32 %v6526, %v6538
        %v6540 = vpop.f32.mrf.mxu0
        %6541 = vdwg.mxu0
        %6542 = vmatpush.bf16.msra.mxu0 %v5377
        %6543 = vmatpush.bf16.msra.mxu0 %v5361
        %6544 = vmatpush.bf16.msra.mxu0 %v5345
        %6545 = vmatpush.bf16.msra.mxu0 %v5329
        %6546 = vmatpush.bf16.msra.mxu0 %v5313
        %6547 = vmatpush.bf16.msra.mxu0 %v5297
        %6548 = vmatpush.bf16.msra.mxu0 %v5281
        %6549 = vmatpush.bf16.msra.mxu0 %v5265
        %6550 = vmatmul.bf16.gmra.mxu0 %v270
        %v6551 = vpop.f32.mrf.mxu0
        %v6552 = vadd.f32 %v6539, %v6551
        %v6553 = vpop.f32.mrf.mxu0
        %6554 = vdwg.mxu0
        %6555 = vmatpush.bf16.msra.mxu0 %v4482
        %6556 = vmatpush.bf16.msra.mxu0 %v4466
        %6557 = vmatpush.bf16.msra.mxu0 %v4450
        %6558 = vmatpush.bf16.msra.mxu0 %v4434
        %6559 = vmatpush.bf16.msra.mxu0 %v4418
        %6560 = vmatpush.bf16.msra.mxu0 %v4402
        %6561 = vmatpush.bf16.msra.mxu0 %v4386
        %6562 = vmatpush.bf16.msra.mxu0 %v4370
        %6563 = vmatmul.bf16.gmra.mxu0 %v263
        %v6564 = vpop.f32.mrf.mxu0
        %v6565 = vadd.f32 %v6420, %v6564
        %v6566 = vpop.f32.mrf.mxu0
        %6567 = vdwg.mxu0
        %6568 = vmatpush.bf16.msra.mxu0 %v4610
        %6569 = vmatpush.bf16.msra.mxu0 %v4594
        %6570 = vmatpush.bf16.msra.mxu0 %v4578
        %6571 = vmatpush.bf16.msra.mxu0 %v4562
        %6572 = vmatpush.bf16.msra.mxu0 %v4546
        %6573 = vmatpush.bf16.msra.mxu0 %v4530
        %6574 = vmatpush.bf16.msra.mxu0 %v4514
        %6575 = vmatpush.bf16.msra.mxu0 %v4498
        %6576 = vmatmul.bf16.gmra.mxu0 %v264
        %v6577 = vpop.f32.mrf.mxu0
        %v6578 = vadd.f32 %v6565, %v6577
        %v6579 = vpop.f32.mrf.mxu0
        %6580 = vdwg.mxu0
        %6581 = vmatpush.bf16.msra.mxu0 %v4738
        %6582 = vmatpush.bf16.msra.mxu0 %v4722
        %6583 = vmatpush.bf16.msra.mxu0 %v4706
        %6584 = vmatpush.bf16.msra.mxu0 %v4690
        %6585 = vmatpush.bf16.msra.mxu0 %v4674
        %6586 = vmatpush.bf16.msra.mxu0 %v4658
        %6587 = vmatpush.bf16.msra.mxu0 %v4642
        %6588 = vmatpush.bf16.msra.mxu0 %v4626
        %6589 = vmatmul.bf16.gmra.mxu0 %v265
        %v6590 = vpop.f32.mrf.mxu0
        %v6591 = vadd.f32 %v6578, %v6590
        %v6592 = vpop.f32.mrf.mxu0
        %6593 = vdwg.mxu0
        %6594 = vmatpush.bf16.msra.mxu0 %v4866
        %6595 = vmatpush.bf16.msra.mxu0 %v4850
        %6596 = vmatpush.bf16.msra.mxu0 %v4834
        %6597 = vmatpush.bf16.msra.mxu0 %v4818
        %6598 = vmatpush.bf16.msra.mxu0 %v4802
        %6599 = vmatpush.bf16.msra.mxu0 %v4786
        %6600 = vmatpush.bf16.msra.mxu0 %v4770
        %6601 = vmatpush.bf16.msra.mxu0 %v4754
        %6602 = vmatmul.bf16.gmra.mxu0 %v266
        %v6603 = vpop.f32.mrf.mxu0
        %v6604 = vadd.f32 %v6591, %v6603
        %v6605 = vpop.f32.mrf.mxu0
        %6606 = vdwg.mxu0
        %6607 = vmatpush.bf16.msra.mxu0 %v4994
        %6608 = vmatpush.bf16.msra.mxu0 %v4978
        %6609 = vmatpush.bf16.msra.mxu0 %v4962
        %6610 = vmatpush.bf16.msra.mxu0 %v4946
        %6611 = vmatpush.bf16.msra.mxu0 %v4930
        %6612 = vmatpush.bf16.msra.mxu0 %v4914
        %6613 = vmatpush.bf16.msra.mxu0 %v4898
        %6614 = vmatpush.bf16.msra.mxu0 %v4882
        %6615 = vmatmul.bf16.gmra.mxu0 %v267
        %v6616 = vpop.f32.mrf.mxu0
        %v6617 = vadd.f32 %v6604, %v6616
        %v6618 = vpop.f32.mrf.mxu0
        %6619 = vdwg.mxu0
        %6620 = vmatpush.bf16.msra.mxu0 %v5122
        %6621 = vmatpush.bf16.msra.mxu0 %v5106
        %6622 = vmatpush.bf16.msra.mxu0 %v5090
        %6623 = vmatpush.bf16.msra.mxu0 %v5074
        %6624 = vmatpush.bf16.msra.mxu0 %v5058
        %6625 = vmatpush.bf16.msra.mxu0 %v5042
        %6626 = vmatpush.bf16.msra.mxu0 %v5026
        %6627 = vmatpush.bf16.msra.mxu0 %v5010
        %6628 = vmatmul.bf16.gmra.mxu0 %v268
        %v6629 = vpop.f32.mrf.mxu0
        %v6630 = vadd.f32 %v6617, %v6629
        %v6631 = vpop.f32.mrf.mxu0
        %6632 = vdwg.mxu0
        %6633 = vmatpush.bf16.msra.mxu0 %v5250
        %6634 = vmatpush.bf16.msra.mxu0 %v5234
        %6635 = vmatpush.bf16.msra.mxu0 %v5218
        %6636 = vmatpush.bf16.msra.mxu0 %v5202
        %6637 = vmatpush.bf16.msra.mxu0 %v5186
        %6638 = vmatpush.bf16.msra.mxu0 %v5170
        %6639 = vmatpush.bf16.msra.mxu0 %v5154
        %6640 = vmatpush.bf16.msra.mxu0 %v5138
        %6641 = vmatmul.bf16.gmra.mxu0 %v269
        %v6642 = vpop.f32.mrf.mxu0
        %v6643 = vadd.f32 %v6630, %v6642
        %v6644 = vpop.f32.mrf.mxu0
        %6645 = vdwg.mxu0
        %6646 = vmatpush.bf16.msra.mxu0 %v5378
        %6647 = vmatpush.bf16.msra.mxu0 %v5362
        %6648 = vmatpush.bf16.msra.mxu0 %v5346
        %6649 = vmatpush.bf16.msra.mxu0 %v5330
        %6650 = vmatpush.bf16.msra.mxu0 %v5314
        %6651 = vmatpush.bf16.msra.mxu0 %v5298
        %6652 = vmatpush.bf16.msra.mxu0 %v5282
        %6653 = vmatpush.bf16.msra.mxu0 %v5266
        %6654 = vmatmul.bf16.gmra.mxu0 %v270
        %v6655 = vpop.f32.mrf.mxu0
        %v6656 = vadd.f32 %v6643, %v6655
        %v6657 = vpop.f32.mrf.mxu0
        %6658 = vdwg.mxu0
        %6659 = vmatpush.bf16.msra.mxu0 %v4483
        %6660 = vmatpush.bf16.msra.mxu0 %v4467
        %6661 = vmatpush.bf16.msra.mxu0 %v4451
        %6662 = vmatpush.bf16.msra.mxu0 %v4435
        %6663 = vmatpush.bf16.msra.mxu0 %v4419
        %6664 = vmatpush.bf16.msra.mxu0 %v4403
        %6665 = vmatpush.bf16.msra.mxu0 %v4387
        %6666 = vmatpush.bf16.msra.mxu0 %v4371
        %6667 = vmatmul.bf16.gmra.mxu0 %v263
        %v6668 = vpop.f32.mrf.mxu0
        %v6669 = vadd.f32 %v6421, %v6668
        %v6670 = vpop.f32.mrf.mxu0
        %6671 = vdwg.mxu0
        %6672 = vmatpush.bf16.msra.mxu0 %v4611
        %6673 = vmatpush.bf16.msra.mxu0 %v4595
        %6674 = vmatpush.bf16.msra.mxu0 %v4579
        %6675 = vmatpush.bf16.msra.mxu0 %v4563
        %6676 = vmatpush.bf16.msra.mxu0 %v4547
        %6677 = vmatpush.bf16.msra.mxu0 %v4531
        %6678 = vmatpush.bf16.msra.mxu0 %v4515
        %6679 = vmatpush.bf16.msra.mxu0 %v4499
        %6680 = vmatmul.bf16.gmra.mxu0 %v264
        %v6681 = vpop.f32.mrf.mxu0
        %v6682 = vadd.f32 %v6669, %v6681
        %v6683 = vpop.f32.mrf.mxu0
        %6684 = vdwg.mxu0
        %6685 = vmatpush.bf16.msra.mxu0 %v4739
        %6686 = vmatpush.bf16.msra.mxu0 %v4723
        %6687 = vmatpush.bf16.msra.mxu0 %v4707
        %6688 = vmatpush.bf16.msra.mxu0 %v4691
        %6689 = vmatpush.bf16.msra.mxu0 %v4675
        %6690 = vmatpush.bf16.msra.mxu0 %v4659
        %6691 = vmatpush.bf16.msra.mxu0 %v4643
        %6692 = vmatpush.bf16.msra.mxu0 %v4627
        %6693 = vmatmul.bf16.gmra.mxu0 %v265
        %v6694 = vpop.f32.mrf.mxu0
        %v6695 = vadd.f32 %v6682, %v6694
        %v6696 = vpop.f32.mrf.mxu0
        %6697 = vdwg.mxu0
        %6698 = vmatpush.bf16.msra.mxu0 %v4867
        %6699 = vmatpush.bf16.msra.mxu0 %v4851
        %6700 = vmatpush.bf16.msra.mxu0 %v4835
        %6701 = vmatpush.bf16.msra.mxu0 %v4819
        %6702 = vmatpush.bf16.msra.mxu0 %v4803
        %6703 = vmatpush.bf16.msra.mxu0 %v4787
        %6704 = vmatpush.bf16.msra.mxu0 %v4771
        %6705 = vmatpush.bf16.msra.mxu0 %v4755
        %6706 = vmatmul.bf16.gmra.mxu0 %v266
        %v6707 = vpop.f32.mrf.mxu0
        %v6708 = vadd.f32 %v6695, %v6707
        %v6709 = vpop.f32.mrf.mxu0
        %6710 = vdwg.mxu0
        %6711 = vmatpush.bf16.msra.mxu0 %v4995
        %6712 = vmatpush.bf16.msra.mxu0 %v4979
        %6713 = vmatpush.bf16.msra.mxu0 %v4963
        %6714 = vmatpush.bf16.msra.mxu0 %v4947
        %6715 = vmatpush.bf16.msra.mxu0 %v4931
        %6716 = vmatpush.bf16.msra.mxu0 %v4915
        %6717 = vmatpush.bf16.msra.mxu0 %v4899
        %6718 = vmatpush.bf16.msra.mxu0 %v4883
        %6719 = vmatmul.bf16.gmra.mxu0 %v267
        %v6720 = vpop.f32.mrf.mxu0
        %v6721 = vadd.f32 %v6708, %v6720
        %v6722 = vpop.f32.mrf.mxu0
        %6723 = vdwg.mxu0
        %6724 = vmatpush.bf16.msra.mxu0 %v5123
        %6725 = vmatpush.bf16.msra.mxu0 %v5107
        %6726 = vmatpush.bf16.msra.mxu0 %v5091
        %6727 = vmatpush.bf16.msra.mxu0 %v5075
        %6728 = vmatpush.bf16.msra.mxu0 %v5059
        %6729 = vmatpush.bf16.msra.mxu0 %v5043
        %6730 = vmatpush.bf16.msra.mxu0 %v5027
        %6731 = vmatpush.bf16.msra.mxu0 %v5011
        %6732 = vmatmul.bf16.gmra.mxu0 %v268
        %v6733 = vpop.f32.mrf.mxu0
        %v6734 = vadd.f32 %v6721, %v6733
        %v6735 = vpop.f32.mrf.mxu0
        %6736 = vdwg.mxu0
        %6737 = vmatpush.bf16.msra.mxu0 %v5251
        %6738 = vmatpush.bf16.msra.mxu0 %v5235
        %6739 = vmatpush.bf16.msra.mxu0 %v5219
        %6740 = vmatpush.bf16.msra.mxu0 %v5203
        %6741 = vmatpush.bf16.msra.mxu0 %v5187
        %6742 = vmatpush.bf16.msra.mxu0 %v5171
        %6743 = vmatpush.bf16.msra.mxu0 %v5155
        %6744 = vmatpush.bf16.msra.mxu0 %v5139
        %6745 = vmatmul.bf16.gmra.mxu0 %v269
        %v6746 = vpop.f32.mrf.mxu0
        %v6747 = vadd.f32 %v6734, %v6746
        %v6748 = vpop.f32.mrf.mxu0
        %6749 = vdwg.mxu0
        %6750 = vmatpush.bf16.msra.mxu0 %v5379
        %6751 = vmatpush.bf16.msra.mxu0 %v5363
        %6752 = vmatpush.bf16.msra.mxu0 %v5347
        %6753 = vmatpush.bf16.msra.mxu0 %v5331
        %6754 = vmatpush.bf16.msra.mxu0 %v5315
        %6755 = vmatpush.bf16.msra.mxu0 %v5299
        %6756 = vmatpush.bf16.msra.mxu0 %v5283
        %6757 = vmatpush.bf16.msra.mxu0 %v5267
        %6758 = vmatmul.bf16.gmra.mxu0 %v270
        %v6759 = vpop.f32.mrf.mxu0
        %v6760 = vadd.f32 %v6747, %v6759
        %v6761 = vpop.f32.mrf.mxu0
        %6762 = vdwg.mxu0
        %6763 = vmatpush.bf16.msra.mxu0 %v4484
        %6764 = vmatpush.bf16.msra.mxu0 %v4468
        %6765 = vmatpush.bf16.msra.mxu0 %v4452
        %6766 = vmatpush.bf16.msra.mxu0 %v4436
        %6767 = vmatpush.bf16.msra.mxu0 %v4420
        %6768 = vmatpush.bf16.msra.mxu0 %v4404
        %6769 = vmatpush.bf16.msra.mxu0 %v4388
        %6770 = vmatpush.bf16.msra.mxu0 %v4372
        %6771 = vmatmul.bf16.gmra.mxu0 %v263
        %v6772 = vpop.f32.mrf.mxu0
        %v6773 = vadd.f32 %v6422, %v6772
        %v6774 = vpop.f32.mrf.mxu0
        %6775 = vdwg.mxu0
        %6776 = vmatpush.bf16.msra.mxu0 %v4612
        %6777 = vmatpush.bf16.msra.mxu0 %v4596
        %6778 = vmatpush.bf16.msra.mxu0 %v4580
        %6779 = vmatpush.bf16.msra.mxu0 %v4564
        %6780 = vmatpush.bf16.msra.mxu0 %v4548
        %6781 = vmatpush.bf16.msra.mxu0 %v4532
        %6782 = vmatpush.bf16.msra.mxu0 %v4516
        %6783 = vmatpush.bf16.msra.mxu0 %v4500
        %6784 = vmatmul.bf16.gmra.mxu0 %v264
        %v6785 = vpop.f32.mrf.mxu0
        %v6786 = vadd.f32 %v6773, %v6785
        %v6787 = vpop.f32.mrf.mxu0
        %6788 = vdwg.mxu0
        %6789 = vmatpush.bf16.msra.mxu0 %v4740
        %6790 = vmatpush.bf16.msra.mxu0 %v4724
        %6791 = vmatpush.bf16.msra.mxu0 %v4708
        %6792 = vmatpush.bf16.msra.mxu0 %v4692
        %6793 = vmatpush.bf16.msra.mxu0 %v4676
        %6794 = vmatpush.bf16.msra.mxu0 %v4660
        %6795 = vmatpush.bf16.msra.mxu0 %v4644
        %6796 = vmatpush.bf16.msra.mxu0 %v4628
        %6797 = vmatmul.bf16.gmra.mxu0 %v265
        %v6798 = vpop.f32.mrf.mxu0
        %v6799 = vadd.f32 %v6786, %v6798
        %v6800 = vpop.f32.mrf.mxu0
        %6801 = vdwg.mxu0
        %6802 = vmatpush.bf16.msra.mxu0 %v4868
        %6803 = vmatpush.bf16.msra.mxu0 %v4852
        %6804 = vmatpush.bf16.msra.mxu0 %v4836
        %6805 = vmatpush.bf16.msra.mxu0 %v4820
        %6806 = vmatpush.bf16.msra.mxu0 %v4804
        %6807 = vmatpush.bf16.msra.mxu0 %v4788
        %6808 = vmatpush.bf16.msra.mxu0 %v4772
        %6809 = vmatpush.bf16.msra.mxu0 %v4756
        %6810 = vmatmul.bf16.gmra.mxu0 %v266
        %v6811 = vpop.f32.mrf.mxu0
        %v6812 = vadd.f32 %v6799, %v6811
        %v6813 = vpop.f32.mrf.mxu0
        %6814 = vdwg.mxu0
        %6815 = vmatpush.bf16.msra.mxu0 %v4996
        %6816 = vmatpush.bf16.msra.mxu0 %v4980
        %6817 = vmatpush.bf16.msra.mxu0 %v4964
        %6818 = vmatpush.bf16.msra.mxu0 %v4948
        %6819 = vmatpush.bf16.msra.mxu0 %v4932
        %6820 = vmatpush.bf16.msra.mxu0 %v4916
        %6821 = vmatpush.bf16.msra.mxu0 %v4900
        %6822 = vmatpush.bf16.msra.mxu0 %v4884
        %6823 = vmatmul.bf16.gmra.mxu0 %v267
        %v6824 = vpop.f32.mrf.mxu0
        %v6825 = vadd.f32 %v6812, %v6824
        %v6826 = vpop.f32.mrf.mxu0
        %6827 = vdwg.mxu0
        %6828 = vmatpush.bf16.msra.mxu0 %v5124
        %6829 = vmatpush.bf16.msra.mxu0 %v5108
        %6830 = vmatpush.bf16.msra.mxu0 %v5092
        %6831 = vmatpush.bf16.msra.mxu0 %v5076
        %6832 = vmatpush.bf16.msra.mxu0 %v5060
        %6833 = vmatpush.bf16.msra.mxu0 %v5044
        %6834 = vmatpush.bf16.msra.mxu0 %v5028
        %6835 = vmatpush.bf16.msra.mxu0 %v5012
        %6836 = vmatmul.bf16.gmra.mxu0 %v268
        %v6837 = vpop.f32.mrf.mxu0
        %v6838 = vadd.f32 %v6825, %v6837
        %v6839 = vpop.f32.mrf.mxu0
        %6840 = vdwg.mxu0
        %6841 = vmatpush.bf16.msra.mxu0 %v5252
        %6842 = vmatpush.bf16.msra.mxu0 %v5236
        %6843 = vmatpush.bf16.msra.mxu0 %v5220
        %6844 = vmatpush.bf16.msra.mxu0 %v5204
        %6845 = vmatpush.bf16.msra.mxu0 %v5188
        %6846 = vmatpush.bf16.msra.mxu0 %v5172
        %6847 = vmatpush.bf16.msra.mxu0 %v5156
        %6848 = vmatpush.bf16.msra.mxu0 %v5140
        %6849 = vmatmul.bf16.gmra.mxu0 %v269
        %v6850 = vpop.f32.mrf.mxu0
        %v6851 = vadd.f32 %v6838, %v6850
        %v6852 = vpop.f32.mrf.mxu0
        %6853 = vdwg.mxu0
        %6854 = vmatpush.bf16.msra.mxu0 %v5380
        %6855 = vmatpush.bf16.msra.mxu0 %v5364
        %6856 = vmatpush.bf16.msra.mxu0 %v5348
        %6857 = vmatpush.bf16.msra.mxu0 %v5332
        %6858 = vmatpush.bf16.msra.mxu0 %v5316
        %6859 = vmatpush.bf16.msra.mxu0 %v5300
        %6860 = vmatpush.bf16.msra.mxu0 %v5284
        %6861 = vmatpush.bf16.msra.mxu0 %v5268
        %6862 = vmatmul.bf16.gmra.mxu0 %v270
        %v6863 = vpop.f32.mrf.mxu0
        %v6864 = vadd.f32 %v6851, %v6863
        %v6865 = vpop.f32.mrf.mxu0
        %6866 = vdwg.mxu0
        %6867 = vmatpush.bf16.msra.mxu0 %v4485
        %6868 = vmatpush.bf16.msra.mxu0 %v4469
        %6869 = vmatpush.bf16.msra.mxu0 %v4453
        %6870 = vmatpush.bf16.msra.mxu0 %v4437
        %6871 = vmatpush.bf16.msra.mxu0 %v4421
        %6872 = vmatpush.bf16.msra.mxu0 %v4405
        %6873 = vmatpush.bf16.msra.mxu0 %v4389
        %6874 = vmatpush.bf16.msra.mxu0 %v4373
        %6875 = vmatmul.bf16.gmra.mxu0 %v263
        %v6876 = vpop.f32.mrf.mxu0
        %v6877 = vadd.f32 %v6423, %v6876
        %v6878 = vpop.f32.mrf.mxu0
        %6879 = vdwg.mxu0
        %6880 = vmatpush.bf16.msra.mxu0 %v4613
        %6881 = vmatpush.bf16.msra.mxu0 %v4597
        %6882 = vmatpush.bf16.msra.mxu0 %v4581
        %6883 = vmatpush.bf16.msra.mxu0 %v4565
        %6884 = vmatpush.bf16.msra.mxu0 %v4549
        %6885 = vmatpush.bf16.msra.mxu0 %v4533
        %6886 = vmatpush.bf16.msra.mxu0 %v4517
        %6887 = vmatpush.bf16.msra.mxu0 %v4501
        %6888 = vmatmul.bf16.gmra.mxu0 %v264
        %v6889 = vpop.f32.mrf.mxu0
        %v6890 = vadd.f32 %v6877, %v6889
        %v6891 = vpop.f32.mrf.mxu0
        %6892 = vdwg.mxu0
        %6893 = vmatpush.bf16.msra.mxu0 %v4741
        %6894 = vmatpush.bf16.msra.mxu0 %v4725
        %6895 = vmatpush.bf16.msra.mxu0 %v4709
        %6896 = vmatpush.bf16.msra.mxu0 %v4693
        %6897 = vmatpush.bf16.msra.mxu0 %v4677
        %6898 = vmatpush.bf16.msra.mxu0 %v4661
        %6899 = vmatpush.bf16.msra.mxu0 %v4645
        %6900 = vmatpush.bf16.msra.mxu0 %v4629
        %6901 = vmatmul.bf16.gmra.mxu0 %v265
        %v6902 = vpop.f32.mrf.mxu0
        %v6903 = vadd.f32 %v6890, %v6902
        %v6904 = vpop.f32.mrf.mxu0
        %6905 = vdwg.mxu0
        %6906 = vmatpush.bf16.msra.mxu0 %v4869
        %6907 = vmatpush.bf16.msra.mxu0 %v4853
        %6908 = vmatpush.bf16.msra.mxu0 %v4837
        %6909 = vmatpush.bf16.msra.mxu0 %v4821
        %6910 = vmatpush.bf16.msra.mxu0 %v4805
        %6911 = vmatpush.bf16.msra.mxu0 %v4789
        %6912 = vmatpush.bf16.msra.mxu0 %v4773
        %6913 = vmatpush.bf16.msra.mxu0 %v4757
        %6914 = vmatmul.bf16.gmra.mxu0 %v266
        %v6915 = vpop.f32.mrf.mxu0
        %v6916 = vadd.f32 %v6903, %v6915
        %v6917 = vpop.f32.mrf.mxu0
        %6918 = vdwg.mxu0
        %6919 = vmatpush.bf16.msra.mxu0 %v4997
        %6920 = vmatpush.bf16.msra.mxu0 %v4981
        %6921 = vmatpush.bf16.msra.mxu0 %v4965
        %6922 = vmatpush.bf16.msra.mxu0 %v4949
        %6923 = vmatpush.bf16.msra.mxu0 %v4933
        %6924 = vmatpush.bf16.msra.mxu0 %v4917
        %6925 = vmatpush.bf16.msra.mxu0 %v4901
        %6926 = vmatpush.bf16.msra.mxu0 %v4885
        %6927 = vmatmul.bf16.gmra.mxu0 %v267
        %v6928 = vpop.f32.mrf.mxu0
        %v6929 = vadd.f32 %v6916, %v6928
        %v6930 = vpop.f32.mrf.mxu0
        %6931 = vdwg.mxu0
        %6932 = vmatpush.bf16.msra.mxu0 %v5125
        %6933 = vmatpush.bf16.msra.mxu0 %v5109
        %6934 = vmatpush.bf16.msra.mxu0 %v5093
        %6935 = vmatpush.bf16.msra.mxu0 %v5077
        %6936 = vmatpush.bf16.msra.mxu0 %v5061
        %6937 = vmatpush.bf16.msra.mxu0 %v5045
        %6938 = vmatpush.bf16.msra.mxu0 %v5029
        %6939 = vmatpush.bf16.msra.mxu0 %v5013
        %6940 = vmatmul.bf16.gmra.mxu0 %v268
        %v6941 = vpop.f32.mrf.mxu0
        %v6942 = vadd.f32 %v6929, %v6941
        %v6943 = vpop.f32.mrf.mxu0
        %6944 = vdwg.mxu0
        %6945 = vmatpush.bf16.msra.mxu0 %v5253
        %6946 = vmatpush.bf16.msra.mxu0 %v5237
        %6947 = vmatpush.bf16.msra.mxu0 %v5221
        %6948 = vmatpush.bf16.msra.mxu0 %v5205
        %6949 = vmatpush.bf16.msra.mxu0 %v5189
        %6950 = vmatpush.bf16.msra.mxu0 %v5173
        %6951 = vmatpush.bf16.msra.mxu0 %v5157
        %6952 = vmatpush.bf16.msra.mxu0 %v5141
        %6953 = vmatmul.bf16.gmra.mxu0 %v269
        %v6954 = vpop.f32.mrf.mxu0
        %v6955 = vadd.f32 %v6942, %v6954
        %v6956 = vpop.f32.mrf.mxu0
        %6957 = vdwg.mxu0
        %6958 = vmatpush.bf16.msra.mxu0 %v5381
        %6959 = vmatpush.bf16.msra.mxu0 %v5365
        %6960 = vmatpush.bf16.msra.mxu0 %v5349
        %6961 = vmatpush.bf16.msra.mxu0 %v5333
        %6962 = vmatpush.bf16.msra.mxu0 %v5317
        %6963 = vmatpush.bf16.msra.mxu0 %v5301
        %6964 = vmatpush.bf16.msra.mxu0 %v5285
        %6965 = vmatpush.bf16.msra.mxu0 %v5269
        %6966 = vmatmul.bf16.gmra.mxu0 %v270
        %v6967 = vpop.f32.mrf.mxu0
        %v6968 = vadd.f32 %v6955, %v6967
        %v6969 = vpop.f32.mrf.mxu0
        %6970 = vdwg.mxu0
        %6971 = vmatpush.bf16.msra.mxu0 %v4486
        %6972 = vmatpush.bf16.msra.mxu0 %v4470
        %6973 = vmatpush.bf16.msra.mxu0 %v4454
        %6974 = vmatpush.bf16.msra.mxu0 %v4438
        %6975 = vmatpush.bf16.msra.mxu0 %v4422
        %6976 = vmatpush.bf16.msra.mxu0 %v4406
        %6977 = vmatpush.bf16.msra.mxu0 %v4390
        %6978 = vmatpush.bf16.msra.mxu0 %v4374
        %6979 = vmatmul.bf16.gmra.mxu0 %v263
        %v6980 = vpop.f32.mrf.mxu0
        %v6981 = vadd.f32 %v6424, %v6980
        %v6982 = vpop.f32.mrf.mxu0
        %6983 = vdwg.mxu0
        %6984 = vmatpush.bf16.msra.mxu0 %v4614
        %6985 = vmatpush.bf16.msra.mxu0 %v4598
        %6986 = vmatpush.bf16.msra.mxu0 %v4582
        %6987 = vmatpush.bf16.msra.mxu0 %v4566
        %6988 = vmatpush.bf16.msra.mxu0 %v4550
        %6989 = vmatpush.bf16.msra.mxu0 %v4534
        %6990 = vmatpush.bf16.msra.mxu0 %v4518
        %6991 = vmatpush.bf16.msra.mxu0 %v4502
        %6992 = vmatmul.bf16.gmra.mxu0 %v264
        %v6993 = vpop.f32.mrf.mxu0
        %v6994 = vadd.f32 %v6981, %v6993
        %v6995 = vpop.f32.mrf.mxu0
        %6996 = vdwg.mxu0
        %6997 = vmatpush.bf16.msra.mxu0 %v4742
        %6998 = vmatpush.bf16.msra.mxu0 %v4726
        %6999 = vmatpush.bf16.msra.mxu0 %v4710
        %7000 = vmatpush.bf16.msra.mxu0 %v4694
        %7001 = vmatpush.bf16.msra.mxu0 %v4678
        %7002 = vmatpush.bf16.msra.mxu0 %v4662
        %7003 = vmatpush.bf16.msra.mxu0 %v4646
        %7004 = vmatpush.bf16.msra.mxu0 %v4630
        %7005 = vmatmul.bf16.gmra.mxu0 %v265
        %v7006 = vpop.f32.mrf.mxu0
        %v7007 = vadd.f32 %v6994, %v7006
        %v7008 = vpop.f32.mrf.mxu0
        %7009 = vdwg.mxu0
        %7010 = vmatpush.bf16.msra.mxu0 %v4870
        %7011 = vmatpush.bf16.msra.mxu0 %v4854
        %7012 = vmatpush.bf16.msra.mxu0 %v4838
        %7013 = vmatpush.bf16.msra.mxu0 %v4822
        %7014 = vmatpush.bf16.msra.mxu0 %v4806
        %7015 = vmatpush.bf16.msra.mxu0 %v4790
        %7016 = vmatpush.bf16.msra.mxu0 %v4774
        %7017 = vmatpush.bf16.msra.mxu0 %v4758
        %7018 = vmatmul.bf16.gmra.mxu0 %v266
        %v7019 = vpop.f32.mrf.mxu0
        %v7020 = vadd.f32 %v7007, %v7019
        %v7021 = vpop.f32.mrf.mxu0
        %7022 = vdwg.mxu0
        %7023 = vmatpush.bf16.msra.mxu0 %v4998
        %7024 = vmatpush.bf16.msra.mxu0 %v4982
        %7025 = vmatpush.bf16.msra.mxu0 %v4966
        %7026 = vmatpush.bf16.msra.mxu0 %v4950
        %7027 = vmatpush.bf16.msra.mxu0 %v4934
        %7028 = vmatpush.bf16.msra.mxu0 %v4918
        %7029 = vmatpush.bf16.msra.mxu0 %v4902
        %7030 = vmatpush.bf16.msra.mxu0 %v4886
        %7031 = vmatmul.bf16.gmra.mxu0 %v267
        %v7032 = vpop.f32.mrf.mxu0
        %v7033 = vadd.f32 %v7020, %v7032
        %v7034 = vpop.f32.mrf.mxu0
        %7035 = vdwg.mxu0
        %7036 = vmatpush.bf16.msra.mxu0 %v5126
        %7037 = vmatpush.bf16.msra.mxu0 %v5110
        %7038 = vmatpush.bf16.msra.mxu0 %v5094
        %7039 = vmatpush.bf16.msra.mxu0 %v5078
        %7040 = vmatpush.bf16.msra.mxu0 %v5062
        %7041 = vmatpush.bf16.msra.mxu0 %v5046
        %7042 = vmatpush.bf16.msra.mxu0 %v5030
        %7043 = vmatpush.bf16.msra.mxu0 %v5014
        %7044 = vmatmul.bf16.gmra.mxu0 %v268
        %v7045 = vpop.f32.mrf.mxu0
        %v7046 = vadd.f32 %v7033, %v7045
        %v7047 = vpop.f32.mrf.mxu0
        %7048 = vdwg.mxu0
        %7049 = vmatpush.bf16.msra.mxu0 %v5254
        %7050 = vmatpush.bf16.msra.mxu0 %v5238
        %7051 = vmatpush.bf16.msra.mxu0 %v5222
        %7052 = vmatpush.bf16.msra.mxu0 %v5206
        %7053 = vmatpush.bf16.msra.mxu0 %v5190
        %7054 = vmatpush.bf16.msra.mxu0 %v5174
        %7055 = vmatpush.bf16.msra.mxu0 %v5158
        %7056 = vmatpush.bf16.msra.mxu0 %v5142
        %7057 = vmatmul.bf16.gmra.mxu0 %v269
        %v7058 = vpop.f32.mrf.mxu0
        %v7059 = vadd.f32 %v7046, %v7058
        %v7060 = vpop.f32.mrf.mxu0
        %7061 = vdwg.mxu0
        %7062 = vmatpush.bf16.msra.mxu0 %v5382
        %7063 = vmatpush.bf16.msra.mxu0 %v5366
        %7064 = vmatpush.bf16.msra.mxu0 %v5350
        %7065 = vmatpush.bf16.msra.mxu0 %v5334
        %7066 = vmatpush.bf16.msra.mxu0 %v5318
        %7067 = vmatpush.bf16.msra.mxu0 %v5302
        %7068 = vmatpush.bf16.msra.mxu0 %v5286
        %7069 = vmatpush.bf16.msra.mxu0 %v5270
        %7070 = vmatmul.bf16.gmra.mxu0 %v270
        %v7071 = vpop.f32.mrf.mxu0
        %v7072 = vadd.f32 %v7059, %v7071
        %v7073 = vpop.f32.mrf.mxu0
        %7074 = vdwg.mxu0
        %7075 = vmatpush.bf16.msra.mxu0 %v4487
        %7076 = vmatpush.bf16.msra.mxu0 %v4471
        %7077 = vmatpush.bf16.msra.mxu0 %v4455
        %7078 = vmatpush.bf16.msra.mxu0 %v4439
        %7079 = vmatpush.bf16.msra.mxu0 %v4423
        %7080 = vmatpush.bf16.msra.mxu0 %v4407
        %7081 = vmatpush.bf16.msra.mxu0 %v4391
        %7082 = vmatpush.bf16.msra.mxu0 %v4375
        %7083 = vmatmul.bf16.gmra.mxu0 %v263
        %v7084 = vpop.f32.mrf.mxu0
        %v7085 = vadd.f32 %v6425, %v7084
        %v7086 = vpop.f32.mrf.mxu0
        %7087 = vdwg.mxu0
        %7088 = vmatpush.bf16.msra.mxu0 %v4615
        %7089 = vmatpush.bf16.msra.mxu0 %v4599
        %7090 = vmatpush.bf16.msra.mxu0 %v4583
        %7091 = vmatpush.bf16.msra.mxu0 %v4567
        %7092 = vmatpush.bf16.msra.mxu0 %v4551
        %7093 = vmatpush.bf16.msra.mxu0 %v4535
        %7094 = vmatpush.bf16.msra.mxu0 %v4519
        %7095 = vmatpush.bf16.msra.mxu0 %v4503
        %7096 = vmatmul.bf16.gmra.mxu0 %v264
        %v7097 = vpop.f32.mrf.mxu0
        %v7098 = vadd.f32 %v7085, %v7097
        %v7099 = vpop.f32.mrf.mxu0
        %7100 = vdwg.mxu0
        %7101 = vmatpush.bf16.msra.mxu0 %v4743
        %7102 = vmatpush.bf16.msra.mxu0 %v4727
        %7103 = vmatpush.bf16.msra.mxu0 %v4711
        %7104 = vmatpush.bf16.msra.mxu0 %v4695
        %7105 = vmatpush.bf16.msra.mxu0 %v4679
        %7106 = vmatpush.bf16.msra.mxu0 %v4663
        %7107 = vmatpush.bf16.msra.mxu0 %v4647
        %7108 = vmatpush.bf16.msra.mxu0 %v4631
        %7109 = vmatmul.bf16.gmra.mxu0 %v265
        %v7110 = vpop.f32.mrf.mxu0
        %v7111 = vadd.f32 %v7098, %v7110
        %v7112 = vpop.f32.mrf.mxu0
        %7113 = vdwg.mxu0
        %7114 = vmatpush.bf16.msra.mxu0 %v4871
        %7115 = vmatpush.bf16.msra.mxu0 %v4855
        %7116 = vmatpush.bf16.msra.mxu0 %v4839
        %7117 = vmatpush.bf16.msra.mxu0 %v4823
        %7118 = vmatpush.bf16.msra.mxu0 %v4807
        %7119 = vmatpush.bf16.msra.mxu0 %v4791
        %7120 = vmatpush.bf16.msra.mxu0 %v4775
        %7121 = vmatpush.bf16.msra.mxu0 %v4759
        %7122 = vmatmul.bf16.gmra.mxu0 %v266
        %v7123 = vpop.f32.mrf.mxu0
        %v7124 = vadd.f32 %v7111, %v7123
        %v7125 = vpop.f32.mrf.mxu0
        %7126 = vdwg.mxu0
        %7127 = vmatpush.bf16.msra.mxu0 %v4999
        %7128 = vmatpush.bf16.msra.mxu0 %v4983
        %7129 = vmatpush.bf16.msra.mxu0 %v4967
        %7130 = vmatpush.bf16.msra.mxu0 %v4951
        %7131 = vmatpush.bf16.msra.mxu0 %v4935
        %7132 = vmatpush.bf16.msra.mxu0 %v4919
        %7133 = vmatpush.bf16.msra.mxu0 %v4903
        %7134 = vmatpush.bf16.msra.mxu0 %v4887
        %7135 = vmatmul.bf16.gmra.mxu0 %v267
        %v7136 = vpop.f32.mrf.mxu0
        %v7137 = vadd.f32 %v7124, %v7136
        %v7138 = vpop.f32.mrf.mxu0
        %7139 = vdwg.mxu0
        %7140 = vmatpush.bf16.msra.mxu0 %v5127
        %7141 = vmatpush.bf16.msra.mxu0 %v5111
        %7142 = vmatpush.bf16.msra.mxu0 %v5095
        %7143 = vmatpush.bf16.msra.mxu0 %v5079
        %7144 = vmatpush.bf16.msra.mxu0 %v5063
        %7145 = vmatpush.bf16.msra.mxu0 %v5047
        %7146 = vmatpush.bf16.msra.mxu0 %v5031
        %7147 = vmatpush.bf16.msra.mxu0 %v5015
        %7148 = vmatmul.bf16.gmra.mxu0 %v268
        %v7149 = vpop.f32.mrf.mxu0
        %v7150 = vadd.f32 %v7137, %v7149
        %v7151 = vpop.f32.mrf.mxu0
        %7152 = vdwg.mxu0
        %7153 = vmatpush.bf16.msra.mxu0 %v5255
        %7154 = vmatpush.bf16.msra.mxu0 %v5239
        %7155 = vmatpush.bf16.msra.mxu0 %v5223
        %7156 = vmatpush.bf16.msra.mxu0 %v5207
        %7157 = vmatpush.bf16.msra.mxu0 %v5191
        %7158 = vmatpush.bf16.msra.mxu0 %v5175
        %7159 = vmatpush.bf16.msra.mxu0 %v5159
        %7160 = vmatpush.bf16.msra.mxu0 %v5143
        %7161 = vmatmul.bf16.gmra.mxu0 %v269
        %v7162 = vpop.f32.mrf.mxu0
        %v7163 = vadd.f32 %v7150, %v7162
        %v7164 = vpop.f32.mrf.mxu0
        %7165 = vdwg.mxu0
        %7166 = vmatpush.bf16.msra.mxu0 %v5383
        %7167 = vmatpush.bf16.msra.mxu0 %v5367
        %7168 = vmatpush.bf16.msra.mxu0 %v5351
        %7169 = vmatpush.bf16.msra.mxu0 %v5335
        %7170 = vmatpush.bf16.msra.mxu0 %v5319
        %7171 = vmatpush.bf16.msra.mxu0 %v5303
        %7172 = vmatpush.bf16.msra.mxu0 %v5287
        %7173 = vmatpush.bf16.msra.mxu0 %v5271
        %7174 = vmatmul.bf16.gmra.mxu0 %v270
        %v7175 = vpop.f32.mrf.mxu0
        %v7176 = vadd.f32 %v7163, %v7175
        %v7177 = vpop.f32.mrf.mxu0
        %7178 = vdwg.mxu0
        %7179 = vmatpush.bf16.msra.mxu0 %v4488
        %7180 = vmatpush.bf16.msra.mxu0 %v4472
        %7181 = vmatpush.bf16.msra.mxu0 %v4456
        %7182 = vmatpush.bf16.msra.mxu0 %v4440
        %7183 = vmatpush.bf16.msra.mxu0 %v4424
        %7184 = vmatpush.bf16.msra.mxu0 %v4408
        %7185 = vmatpush.bf16.msra.mxu0 %v4392
        %7186 = vmatpush.bf16.msra.mxu0 %v4376
        %7187 = vmatmul.bf16.gmra.mxu0 %v263
        %v7188 = vpop.f32.mrf.mxu0
        %v7189 = vadd.f32 %v6426, %v7188
        %v7190 = vpop.f32.mrf.mxu0
        %7191 = vdwg.mxu0
        %7192 = vmatpush.bf16.msra.mxu0 %v4616
        %7193 = vmatpush.bf16.msra.mxu0 %v4600
        %7194 = vmatpush.bf16.msra.mxu0 %v4584
        %7195 = vmatpush.bf16.msra.mxu0 %v4568
        %7196 = vmatpush.bf16.msra.mxu0 %v4552
        %7197 = vmatpush.bf16.msra.mxu0 %v4536
        %7198 = vmatpush.bf16.msra.mxu0 %v4520
        %7199 = vmatpush.bf16.msra.mxu0 %v4504
        %7200 = vmatmul.bf16.gmra.mxu0 %v264
        %v7201 = vpop.f32.mrf.mxu0
        %v7202 = vadd.f32 %v7189, %v7201
        %v7203 = vpop.f32.mrf.mxu0
        %7204 = vdwg.mxu0
        %7205 = vmatpush.bf16.msra.mxu0 %v4744
        %7206 = vmatpush.bf16.msra.mxu0 %v4728
        %7207 = vmatpush.bf16.msra.mxu0 %v4712
        %7208 = vmatpush.bf16.msra.mxu0 %v4696
        %7209 = vmatpush.bf16.msra.mxu0 %v4680
        %7210 = vmatpush.bf16.msra.mxu0 %v4664
        %7211 = vmatpush.bf16.msra.mxu0 %v4648
        %7212 = vmatpush.bf16.msra.mxu0 %v4632
        %7213 = vmatmul.bf16.gmra.mxu0 %v265
        %v7214 = vpop.f32.mrf.mxu0
        %v7215 = vadd.f32 %v7202, %v7214
        %v7216 = vpop.f32.mrf.mxu0
        %7217 = vdwg.mxu0
        %7218 = vmatpush.bf16.msra.mxu0 %v4872
        %7219 = vmatpush.bf16.msra.mxu0 %v4856
        %7220 = vmatpush.bf16.msra.mxu0 %v4840
        %7221 = vmatpush.bf16.msra.mxu0 %v4824
        %7222 = vmatpush.bf16.msra.mxu0 %v4808
        %7223 = vmatpush.bf16.msra.mxu0 %v4792
        %7224 = vmatpush.bf16.msra.mxu0 %v4776
        %7225 = vmatpush.bf16.msra.mxu0 %v4760
        %7226 = vmatmul.bf16.gmra.mxu0 %v266
        %v7227 = vpop.f32.mrf.mxu0
        %v7228 = vadd.f32 %v7215, %v7227
        %v7229 = vpop.f32.mrf.mxu0
        %7230 = vdwg.mxu0
        %7231 = vmatpush.bf16.msra.mxu0 %v5000
        %7232 = vmatpush.bf16.msra.mxu0 %v4984
        %7233 = vmatpush.bf16.msra.mxu0 %v4968
        %7234 = vmatpush.bf16.msra.mxu0 %v4952
        %7235 = vmatpush.bf16.msra.mxu0 %v4936
        %7236 = vmatpush.bf16.msra.mxu0 %v4920
        %7237 = vmatpush.bf16.msra.mxu0 %v4904
        %7238 = vmatpush.bf16.msra.mxu0 %v4888
        %7239 = vmatmul.bf16.gmra.mxu0 %v267
        %v7240 = vpop.f32.mrf.mxu0
        %v7241 = vadd.f32 %v7228, %v7240
        %v7242 = vpop.f32.mrf.mxu0
        %7243 = vdwg.mxu0
        %7244 = vmatpush.bf16.msra.mxu0 %v5128
        %7245 = vmatpush.bf16.msra.mxu0 %v5112
        %7246 = vmatpush.bf16.msra.mxu0 %v5096
        %7247 = vmatpush.bf16.msra.mxu0 %v5080
        %7248 = vmatpush.bf16.msra.mxu0 %v5064
        %7249 = vmatpush.bf16.msra.mxu0 %v5048
        %7250 = vmatpush.bf16.msra.mxu0 %v5032
        %7251 = vmatpush.bf16.msra.mxu0 %v5016
        %7252 = vmatmul.bf16.gmra.mxu0 %v268
        %v7253 = vpop.f32.mrf.mxu0
        %v7254 = vadd.f32 %v7241, %v7253
        %v7255 = vpop.f32.mrf.mxu0
        %7256 = vdwg.mxu0
        %7257 = vmatpush.bf16.msra.mxu0 %v5256
        %7258 = vmatpush.bf16.msra.mxu0 %v5240
        %7259 = vmatpush.bf16.msra.mxu0 %v5224
        %7260 = vmatpush.bf16.msra.mxu0 %v5208
        %7261 = vmatpush.bf16.msra.mxu0 %v5192
        %7262 = vmatpush.bf16.msra.mxu0 %v5176
        %7263 = vmatpush.bf16.msra.mxu0 %v5160
        %7264 = vmatpush.bf16.msra.mxu0 %v5144
        %7265 = vmatmul.bf16.gmra.mxu0 %v269
        %v7266 = vpop.f32.mrf.mxu0
        %v7267 = vadd.f32 %v7254, %v7266
        %v7268 = vpop.f32.mrf.mxu0
        %7269 = vdwg.mxu0
        %7270 = vmatpush.bf16.msra.mxu0 %v5384
        %7271 = vmatpush.bf16.msra.mxu0 %v5368
        %7272 = vmatpush.bf16.msra.mxu0 %v5352
        %7273 = vmatpush.bf16.msra.mxu0 %v5336
        %7274 = vmatpush.bf16.msra.mxu0 %v5320
        %7275 = vmatpush.bf16.msra.mxu0 %v5304
        %7276 = vmatpush.bf16.msra.mxu0 %v5288
        %7277 = vmatpush.bf16.msra.mxu0 %v5272
        %7278 = vmatmul.bf16.gmra.mxu0 %v270
        %v7279 = vpop.f32.mrf.mxu0
        %v7280 = vadd.f32 %v7267, %v7279
        %v7281 = vpop.f32.mrf.mxu0
        %7282 = vdwg.mxu0
        %7283 = vmatpush.bf16.msra.mxu0 %v4489
        %7284 = vmatpush.bf16.msra.mxu0 %v4473
        %7285 = vmatpush.bf16.msra.mxu0 %v4457
        %7286 = vmatpush.bf16.msra.mxu0 %v4441
        %7287 = vmatpush.bf16.msra.mxu0 %v4425
        %7288 = vmatpush.bf16.msra.mxu0 %v4409
        %7289 = vmatpush.bf16.msra.mxu0 %v4393
        %7290 = vmatpush.bf16.msra.mxu0 %v4377
        %7291 = vmatmul.bf16.gmra.mxu0 %v263
        %v7292 = vpop.f32.mrf.mxu0
        %v7293 = vadd.f32 %v6427, %v7292
        %v7294 = vpop.f32.mrf.mxu0
        %7295 = vdwg.mxu0
        %7296 = vmatpush.bf16.msra.mxu0 %v4617
        %7297 = vmatpush.bf16.msra.mxu0 %v4601
        %7298 = vmatpush.bf16.msra.mxu0 %v4585
        %7299 = vmatpush.bf16.msra.mxu0 %v4569
        %7300 = vmatpush.bf16.msra.mxu0 %v4553
        %7301 = vmatpush.bf16.msra.mxu0 %v4537
        %7302 = vmatpush.bf16.msra.mxu0 %v4521
        %7303 = vmatpush.bf16.msra.mxu0 %v4505
        %7304 = vmatmul.bf16.gmra.mxu0 %v264
        %v7305 = vpop.f32.mrf.mxu0
        %v7306 = vadd.f32 %v7293, %v7305
        %v7307 = vpop.f32.mrf.mxu0
        %7308 = vdwg.mxu0
        %7309 = vmatpush.bf16.msra.mxu0 %v4745
        %7310 = vmatpush.bf16.msra.mxu0 %v4729
        %7311 = vmatpush.bf16.msra.mxu0 %v4713
        %7312 = vmatpush.bf16.msra.mxu0 %v4697
        %7313 = vmatpush.bf16.msra.mxu0 %v4681
        %7314 = vmatpush.bf16.msra.mxu0 %v4665
        %7315 = vmatpush.bf16.msra.mxu0 %v4649
        %7316 = vmatpush.bf16.msra.mxu0 %v4633
        %7317 = vmatmul.bf16.gmra.mxu0 %v265
        %v7318 = vpop.f32.mrf.mxu0
        %v7319 = vadd.f32 %v7306, %v7318
        %v7320 = vpop.f32.mrf.mxu0
        %7321 = vdwg.mxu0
        %7322 = vmatpush.bf16.msra.mxu0 %v4873
        %7323 = vmatpush.bf16.msra.mxu0 %v4857
        %7324 = vmatpush.bf16.msra.mxu0 %v4841
        %7325 = vmatpush.bf16.msra.mxu0 %v4825
        %7326 = vmatpush.bf16.msra.mxu0 %v4809
        %7327 = vmatpush.bf16.msra.mxu0 %v4793
        %7328 = vmatpush.bf16.msra.mxu0 %v4777
        %7329 = vmatpush.bf16.msra.mxu0 %v4761
        %7330 = vmatmul.bf16.gmra.mxu0 %v266
        %v7331 = vpop.f32.mrf.mxu0
        %v7332 = vadd.f32 %v7319, %v7331
        %v7333 = vpop.f32.mrf.mxu0
        %7334 = vdwg.mxu0
        %7335 = vmatpush.bf16.msra.mxu0 %v5001
        %7336 = vmatpush.bf16.msra.mxu0 %v4985
        %7337 = vmatpush.bf16.msra.mxu0 %v4969
        %7338 = vmatpush.bf16.msra.mxu0 %v4953
        %7339 = vmatpush.bf16.msra.mxu0 %v4937
        %7340 = vmatpush.bf16.msra.mxu0 %v4921
        %7341 = vmatpush.bf16.msra.mxu0 %v4905
        %7342 = vmatpush.bf16.msra.mxu0 %v4889
        %7343 = vmatmul.bf16.gmra.mxu0 %v267
        %v7344 = vpop.f32.mrf.mxu0
        %v7345 = vadd.f32 %v7332, %v7344
        %v7346 = vpop.f32.mrf.mxu0
        %7347 = vdwg.mxu0
        %7348 = vmatpush.bf16.msra.mxu0 %v5129
        %7349 = vmatpush.bf16.msra.mxu0 %v5113
        %7350 = vmatpush.bf16.msra.mxu0 %v5097
        %7351 = vmatpush.bf16.msra.mxu0 %v5081
        %7352 = vmatpush.bf16.msra.mxu0 %v5065
        %7353 = vmatpush.bf16.msra.mxu0 %v5049
        %7354 = vmatpush.bf16.msra.mxu0 %v5033
        %7355 = vmatpush.bf16.msra.mxu0 %v5017
        %7356 = vmatmul.bf16.gmra.mxu0 %v268
        %v7357 = vpop.f32.mrf.mxu0
        %v7358 = vadd.f32 %v7345, %v7357
        %v7359 = vpop.f32.mrf.mxu0
        %7360 = vdwg.mxu0
        %7361 = vmatpush.bf16.msra.mxu0 %v5257
        %7362 = vmatpush.bf16.msra.mxu0 %v5241
        %7363 = vmatpush.bf16.msra.mxu0 %v5225
        %7364 = vmatpush.bf16.msra.mxu0 %v5209
        %7365 = vmatpush.bf16.msra.mxu0 %v5193
        %7366 = vmatpush.bf16.msra.mxu0 %v5177
        %7367 = vmatpush.bf16.msra.mxu0 %v5161
        %7368 = vmatpush.bf16.msra.mxu0 %v5145
        %7369 = vmatmul.bf16.gmra.mxu0 %v269
        %v7370 = vpop.f32.mrf.mxu0
        %v7371 = vadd.f32 %v7358, %v7370
        %v7372 = vpop.f32.mrf.mxu0
        %7373 = vdwg.mxu0
        %7374 = vmatpush.bf16.msra.mxu0 %v5385
        %7375 = vmatpush.bf16.msra.mxu0 %v5369
        %7376 = vmatpush.bf16.msra.mxu0 %v5353
        %7377 = vmatpush.bf16.msra.mxu0 %v5337
        %7378 = vmatpush.bf16.msra.mxu0 %v5321
        %7379 = vmatpush.bf16.msra.mxu0 %v5305
        %7380 = vmatpush.bf16.msra.mxu0 %v5289
        %7381 = vmatpush.bf16.msra.mxu0 %v5273
        %7382 = vmatmul.bf16.gmra.mxu0 %v270
        %v7383 = vpop.f32.mrf.mxu0
        %v7384 = vadd.f32 %v7371, %v7383
        %v7385 = vpop.f32.mrf.mxu0
        %7386 = vdwg.mxu0
        %7387 = vmatpush.bf16.msra.mxu0 %v4490
        %7388 = vmatpush.bf16.msra.mxu0 %v4474
        %7389 = vmatpush.bf16.msra.mxu0 %v4458
        %7390 = vmatpush.bf16.msra.mxu0 %v4442
        %7391 = vmatpush.bf16.msra.mxu0 %v4426
        %7392 = vmatpush.bf16.msra.mxu0 %v4410
        %7393 = vmatpush.bf16.msra.mxu0 %v4394
        %7394 = vmatpush.bf16.msra.mxu0 %v4378
        %7395 = vmatmul.bf16.gmra.mxu0 %v263
        %v7396 = vpop.f32.mrf.mxu0
        %v7397 = vadd.f32 %v6428, %v7396
        %v7398 = vpop.f32.mrf.mxu0
        %7399 = vdwg.mxu0
        %7400 = vmatpush.bf16.msra.mxu0 %v4618
        %7401 = vmatpush.bf16.msra.mxu0 %v4602
        %7402 = vmatpush.bf16.msra.mxu0 %v4586
        %7403 = vmatpush.bf16.msra.mxu0 %v4570
        %7404 = vmatpush.bf16.msra.mxu0 %v4554
        %7405 = vmatpush.bf16.msra.mxu0 %v4538
        %7406 = vmatpush.bf16.msra.mxu0 %v4522
        %7407 = vmatpush.bf16.msra.mxu0 %v4506
        %7408 = vmatmul.bf16.gmra.mxu0 %v264
        %v7409 = vpop.f32.mrf.mxu0
        %v7410 = vadd.f32 %v7397, %v7409
        %v7411 = vpop.f32.mrf.mxu0
        %7412 = vdwg.mxu0
        %7413 = vmatpush.bf16.msra.mxu0 %v4746
        %7414 = vmatpush.bf16.msra.mxu0 %v4730
        %7415 = vmatpush.bf16.msra.mxu0 %v4714
        %7416 = vmatpush.bf16.msra.mxu0 %v4698
        %7417 = vmatpush.bf16.msra.mxu0 %v4682
        %7418 = vmatpush.bf16.msra.mxu0 %v4666
        %7419 = vmatpush.bf16.msra.mxu0 %v4650
        %7420 = vmatpush.bf16.msra.mxu0 %v4634
        %7421 = vmatmul.bf16.gmra.mxu0 %v265
        %v7422 = vpop.f32.mrf.mxu0
        %v7423 = vadd.f32 %v7410, %v7422
        %v7424 = vpop.f32.mrf.mxu0
        %7425 = vdwg.mxu0
        %7426 = vmatpush.bf16.msra.mxu0 %v4874
        %7427 = vmatpush.bf16.msra.mxu0 %v4858
        %7428 = vmatpush.bf16.msra.mxu0 %v4842
        %7429 = vmatpush.bf16.msra.mxu0 %v4826
        %7430 = vmatpush.bf16.msra.mxu0 %v4810
        %7431 = vmatpush.bf16.msra.mxu0 %v4794
        %7432 = vmatpush.bf16.msra.mxu0 %v4778
        %7433 = vmatpush.bf16.msra.mxu0 %v4762
        %7434 = vmatmul.bf16.gmra.mxu0 %v266
        %v7435 = vpop.f32.mrf.mxu0
        %v7436 = vadd.f32 %v7423, %v7435
        %v7437 = vpop.f32.mrf.mxu0
        %7438 = vdwg.mxu0
        %7439 = vmatpush.bf16.msra.mxu0 %v5002
        %7440 = vmatpush.bf16.msra.mxu0 %v4986
        %7441 = vmatpush.bf16.msra.mxu0 %v4970
        %7442 = vmatpush.bf16.msra.mxu0 %v4954
        %7443 = vmatpush.bf16.msra.mxu0 %v4938
        %7444 = vmatpush.bf16.msra.mxu0 %v4922
        %7445 = vmatpush.bf16.msra.mxu0 %v4906
        %7446 = vmatpush.bf16.msra.mxu0 %v4890
        %7447 = vmatmul.bf16.gmra.mxu0 %v267
        %v7448 = vpop.f32.mrf.mxu0
        %v7449 = vadd.f32 %v7436, %v7448
        %v7450 = vpop.f32.mrf.mxu0
        %7451 = vdwg.mxu0
        %7452 = vmatpush.bf16.msra.mxu0 %v5130
        %7453 = vmatpush.bf16.msra.mxu0 %v5114
        %7454 = vmatpush.bf16.msra.mxu0 %v5098
        %7455 = vmatpush.bf16.msra.mxu0 %v5082
        %7456 = vmatpush.bf16.msra.mxu0 %v5066
        %7457 = vmatpush.bf16.msra.mxu0 %v5050
        %7458 = vmatpush.bf16.msra.mxu0 %v5034
        %7459 = vmatpush.bf16.msra.mxu0 %v5018
        %7460 = vmatmul.bf16.gmra.mxu0 %v268
        %v7461 = vpop.f32.mrf.mxu0
        %v7462 = vadd.f32 %v7449, %v7461
        %v7463 = vpop.f32.mrf.mxu0
        %7464 = vdwg.mxu0
        %7465 = vmatpush.bf16.msra.mxu0 %v5258
        %7466 = vmatpush.bf16.msra.mxu0 %v5242
        %7467 = vmatpush.bf16.msra.mxu0 %v5226
        %7468 = vmatpush.bf16.msra.mxu0 %v5210
        %7469 = vmatpush.bf16.msra.mxu0 %v5194
        %7470 = vmatpush.bf16.msra.mxu0 %v5178
        %7471 = vmatpush.bf16.msra.mxu0 %v5162
        %7472 = vmatpush.bf16.msra.mxu0 %v5146
        %7473 = vmatmul.bf16.gmra.mxu0 %v269
        %v7474 = vpop.f32.mrf.mxu0
        %v7475 = vadd.f32 %v7462, %v7474
        %v7476 = vpop.f32.mrf.mxu0
        %7477 = vdwg.mxu0
        %7478 = vmatpush.bf16.msra.mxu0 %v5386
        %7479 = vmatpush.bf16.msra.mxu0 %v5370
        %7480 = vmatpush.bf16.msra.mxu0 %v5354
        %7481 = vmatpush.bf16.msra.mxu0 %v5338
        %7482 = vmatpush.bf16.msra.mxu0 %v5322
        %7483 = vmatpush.bf16.msra.mxu0 %v5306
        %7484 = vmatpush.bf16.msra.mxu0 %v5290
        %7485 = vmatpush.bf16.msra.mxu0 %v5274
        %7486 = vmatmul.bf16.gmra.mxu0 %v270
        %v7487 = vpop.f32.mrf.mxu0
        %v7488 = vadd.f32 %v7475, %v7487
        %v7489 = vpop.f32.mrf.mxu0
        %7490 = vdwg.mxu0
        %7491 = vmatpush.bf16.msra.mxu0 %v4491
        %7492 = vmatpush.bf16.msra.mxu0 %v4475
        %7493 = vmatpush.bf16.msra.mxu0 %v4459
        %7494 = vmatpush.bf16.msra.mxu0 %v4443
        %7495 = vmatpush.bf16.msra.mxu0 %v4427
        %7496 = vmatpush.bf16.msra.mxu0 %v4411
        %7497 = vmatpush.bf16.msra.mxu0 %v4395
        %7498 = vmatpush.bf16.msra.mxu0 %v4379
        %7499 = vmatmul.bf16.gmra.mxu0 %v263
        %v7500 = vpop.f32.mrf.mxu0
        %v7501 = vadd.f32 %v6429, %v7500
        %v7502 = vpop.f32.mrf.mxu0
        %7503 = vdwg.mxu0
        %7504 = vmatpush.bf16.msra.mxu0 %v4619
        %7505 = vmatpush.bf16.msra.mxu0 %v4603
        %7506 = vmatpush.bf16.msra.mxu0 %v4587
        %7507 = vmatpush.bf16.msra.mxu0 %v4571
        %7508 = vmatpush.bf16.msra.mxu0 %v4555
        %7509 = vmatpush.bf16.msra.mxu0 %v4539
        %7510 = vmatpush.bf16.msra.mxu0 %v4523
        %7511 = vmatpush.bf16.msra.mxu0 %v4507
        %7512 = vmatmul.bf16.gmra.mxu0 %v264
        %v7513 = vpop.f32.mrf.mxu0
        %v7514 = vadd.f32 %v7501, %v7513
        %v7515 = vpop.f32.mrf.mxu0
        %7516 = vdwg.mxu0
        %7517 = vmatpush.bf16.msra.mxu0 %v4747
        %7518 = vmatpush.bf16.msra.mxu0 %v4731
        %7519 = vmatpush.bf16.msra.mxu0 %v4715
        %7520 = vmatpush.bf16.msra.mxu0 %v4699
        %7521 = vmatpush.bf16.msra.mxu0 %v4683
        %7522 = vmatpush.bf16.msra.mxu0 %v4667
        %7523 = vmatpush.bf16.msra.mxu0 %v4651
        %7524 = vmatpush.bf16.msra.mxu0 %v4635
        %7525 = vmatmul.bf16.gmra.mxu0 %v265
        %v7526 = vpop.f32.mrf.mxu0
        %v7527 = vadd.f32 %v7514, %v7526
        %v7528 = vpop.f32.mrf.mxu0
        %7529 = vdwg.mxu0
        %7530 = vmatpush.bf16.msra.mxu0 %v4875
        %7531 = vmatpush.bf16.msra.mxu0 %v4859
        %7532 = vmatpush.bf16.msra.mxu0 %v4843
        %7533 = vmatpush.bf16.msra.mxu0 %v4827
        %7534 = vmatpush.bf16.msra.mxu0 %v4811
        %7535 = vmatpush.bf16.msra.mxu0 %v4795
        %7536 = vmatpush.bf16.msra.mxu0 %v4779
        %7537 = vmatpush.bf16.msra.mxu0 %v4763
        %7538 = vmatmul.bf16.gmra.mxu0 %v266
        %v7539 = vpop.f32.mrf.mxu0
        %v7540 = vadd.f32 %v7527, %v7539
        %v7541 = vpop.f32.mrf.mxu0
        %7542 = vdwg.mxu0
        %7543 = vmatpush.bf16.msra.mxu0 %v5003
        %7544 = vmatpush.bf16.msra.mxu0 %v4987
        %7545 = vmatpush.bf16.msra.mxu0 %v4971
        %7546 = vmatpush.bf16.msra.mxu0 %v4955
        %7547 = vmatpush.bf16.msra.mxu0 %v4939
        %7548 = vmatpush.bf16.msra.mxu0 %v4923
        %7549 = vmatpush.bf16.msra.mxu0 %v4907
        %7550 = vmatpush.bf16.msra.mxu0 %v4891
        %7551 = vmatmul.bf16.gmra.mxu0 %v267
        %v7552 = vpop.f32.mrf.mxu0
        %v7553 = vadd.f32 %v7540, %v7552
        %v7554 = vpop.f32.mrf.mxu0
        %7555 = vdwg.mxu0
        %7556 = vmatpush.bf16.msra.mxu0 %v5131
        %7557 = vmatpush.bf16.msra.mxu0 %v5115
        %7558 = vmatpush.bf16.msra.mxu0 %v5099
        %7559 = vmatpush.bf16.msra.mxu0 %v5083
        %7560 = vmatpush.bf16.msra.mxu0 %v5067
        %7561 = vmatpush.bf16.msra.mxu0 %v5051
        %7562 = vmatpush.bf16.msra.mxu0 %v5035
        %7563 = vmatpush.bf16.msra.mxu0 %v5019
        %7564 = vmatmul.bf16.gmra.mxu0 %v268
        %v7565 = vpop.f32.mrf.mxu0
        %v7566 = vadd.f32 %v7553, %v7565
        %v7567 = vpop.f32.mrf.mxu0
        %7568 = vdwg.mxu0
        %7569 = vmatpush.bf16.msra.mxu0 %v5259
        %7570 = vmatpush.bf16.msra.mxu0 %v5243
        %7571 = vmatpush.bf16.msra.mxu0 %v5227
        %7572 = vmatpush.bf16.msra.mxu0 %v5211
        %7573 = vmatpush.bf16.msra.mxu0 %v5195
        %7574 = vmatpush.bf16.msra.mxu0 %v5179
        %7575 = vmatpush.bf16.msra.mxu0 %v5163
        %7576 = vmatpush.bf16.msra.mxu0 %v5147
        %7577 = vmatmul.bf16.gmra.mxu0 %v269
        %v7578 = vpop.f32.mrf.mxu0
        %v7579 = vadd.f32 %v7566, %v7578
        %v7580 = vpop.f32.mrf.mxu0
        %7581 = vdwg.mxu0
        %7582 = vmatpush.bf16.msra.mxu0 %v5387
        %7583 = vmatpush.bf16.msra.mxu0 %v5371
        %7584 = vmatpush.bf16.msra.mxu0 %v5355
        %7585 = vmatpush.bf16.msra.mxu0 %v5339
        %7586 = vmatpush.bf16.msra.mxu0 %v5323
        %7587 = vmatpush.bf16.msra.mxu0 %v5307
        %7588 = vmatpush.bf16.msra.mxu0 %v5291
        %7589 = vmatpush.bf16.msra.mxu0 %v5275
        %7590 = vmatmul.bf16.gmra.mxu0 %v270
        %v7591 = vpop.f32.mrf.mxu0
        %v7592 = vadd.f32 %v7579, %v7591
        %v7593 = vpop.f32.mrf.mxu0
        %7594 = vdwg.mxu0
        %7595 = vmatpush.bf16.msra.mxu0 %v4492
        %7596 = vmatpush.bf16.msra.mxu0 %v4476
        %7597 = vmatpush.bf16.msra.mxu0 %v4460
        %7598 = vmatpush.bf16.msra.mxu0 %v4444
        %7599 = vmatpush.bf16.msra.mxu0 %v4428
        %7600 = vmatpush.bf16.msra.mxu0 %v4412
        %7601 = vmatpush.bf16.msra.mxu0 %v4396
        %7602 = vmatpush.bf16.msra.mxu0 %v4380
        %7603 = vmatmul.bf16.gmra.mxu0 %v263
        %v7604 = vpop.f32.mrf.mxu0
        %v7605 = vadd.f32 %v6430, %v7604
        %v7606 = vpop.f32.mrf.mxu0
        %7607 = vdwg.mxu0
        %7608 = vmatpush.bf16.msra.mxu0 %v4620
        %7609 = vmatpush.bf16.msra.mxu0 %v4604
        %7610 = vmatpush.bf16.msra.mxu0 %v4588
        %7611 = vmatpush.bf16.msra.mxu0 %v4572
        %7612 = vmatpush.bf16.msra.mxu0 %v4556
        %7613 = vmatpush.bf16.msra.mxu0 %v4540
        %7614 = vmatpush.bf16.msra.mxu0 %v4524
        %7615 = vmatpush.bf16.msra.mxu0 %v4508
        %7616 = vmatmul.bf16.gmra.mxu0 %v264
        %v7617 = vpop.f32.mrf.mxu0
        %v7618 = vadd.f32 %v7605, %v7617
        %v7619 = vpop.f32.mrf.mxu0
        %7620 = vdwg.mxu0
        %7621 = vmatpush.bf16.msra.mxu0 %v4748
        %7622 = vmatpush.bf16.msra.mxu0 %v4732
        %7623 = vmatpush.bf16.msra.mxu0 %v4716
        %7624 = vmatpush.bf16.msra.mxu0 %v4700
        %7625 = vmatpush.bf16.msra.mxu0 %v4684
        %7626 = vmatpush.bf16.msra.mxu0 %v4668
        %7627 = vmatpush.bf16.msra.mxu0 %v4652
        %7628 = vmatpush.bf16.msra.mxu0 %v4636
        %7629 = vmatmul.bf16.gmra.mxu0 %v265
        %v7630 = vpop.f32.mrf.mxu0
        %v7631 = vadd.f32 %v7618, %v7630
        %v7632 = vpop.f32.mrf.mxu0
        %7633 = vdwg.mxu0
        %7634 = vmatpush.bf16.msra.mxu0 %v4876
        %7635 = vmatpush.bf16.msra.mxu0 %v4860
        %7636 = vmatpush.bf16.msra.mxu0 %v4844
        %7637 = vmatpush.bf16.msra.mxu0 %v4828
        %7638 = vmatpush.bf16.msra.mxu0 %v4812
        %7639 = vmatpush.bf16.msra.mxu0 %v4796
        %7640 = vmatpush.bf16.msra.mxu0 %v4780
        %7641 = vmatpush.bf16.msra.mxu0 %v4764
        %7642 = vmatmul.bf16.gmra.mxu0 %v266
        %v7643 = vpop.f32.mrf.mxu0
        %v7644 = vadd.f32 %v7631, %v7643
        %v7645 = vpop.f32.mrf.mxu0
        %7646 = vdwg.mxu0
        %7647 = vmatpush.bf16.msra.mxu0 %v5004
        %7648 = vmatpush.bf16.msra.mxu0 %v4988
        %7649 = vmatpush.bf16.msra.mxu0 %v4972
        %7650 = vmatpush.bf16.msra.mxu0 %v4956
        %7651 = vmatpush.bf16.msra.mxu0 %v4940
        %7652 = vmatpush.bf16.msra.mxu0 %v4924
        %7653 = vmatpush.bf16.msra.mxu0 %v4908
        %7654 = vmatpush.bf16.msra.mxu0 %v4892
        %7655 = vmatmul.bf16.gmra.mxu0 %v267
        %v7656 = vpop.f32.mrf.mxu0
        %v7657 = vadd.f32 %v7644, %v7656
        %v7658 = vpop.f32.mrf.mxu0
        %7659 = vdwg.mxu0
        %7660 = vmatpush.bf16.msra.mxu0 %v5132
        %7661 = vmatpush.bf16.msra.mxu0 %v5116
        %7662 = vmatpush.bf16.msra.mxu0 %v5100
        %7663 = vmatpush.bf16.msra.mxu0 %v5084
        %7664 = vmatpush.bf16.msra.mxu0 %v5068
        %7665 = vmatpush.bf16.msra.mxu0 %v5052
        %7666 = vmatpush.bf16.msra.mxu0 %v5036
        %7667 = vmatpush.bf16.msra.mxu0 %v5020
        %7668 = vmatmul.bf16.gmra.mxu0 %v268
        %v7669 = vpop.f32.mrf.mxu0
        %v7670 = vadd.f32 %v7657, %v7669
        %v7671 = vpop.f32.mrf.mxu0
        %7672 = vdwg.mxu0
        %7673 = vmatpush.bf16.msra.mxu0 %v5260
        %7674 = vmatpush.bf16.msra.mxu0 %v5244
        %7675 = vmatpush.bf16.msra.mxu0 %v5228
        %7676 = vmatpush.bf16.msra.mxu0 %v5212
        %7677 = vmatpush.bf16.msra.mxu0 %v5196
        %7678 = vmatpush.bf16.msra.mxu0 %v5180
        %7679 = vmatpush.bf16.msra.mxu0 %v5164
        %7680 = vmatpush.bf16.msra.mxu0 %v5148
        %7681 = vmatmul.bf16.gmra.mxu0 %v269
        %v7682 = vpop.f32.mrf.mxu0
        %v7683 = vadd.f32 %v7670, %v7682
        %v7684 = vpop.f32.mrf.mxu0
        %7685 = vdwg.mxu0
        %7686 = vmatpush.bf16.msra.mxu0 %v5388
        %7687 = vmatpush.bf16.msra.mxu0 %v5372
        %7688 = vmatpush.bf16.msra.mxu0 %v5356
        %7689 = vmatpush.bf16.msra.mxu0 %v5340
        %7690 = vmatpush.bf16.msra.mxu0 %v5324
        %7691 = vmatpush.bf16.msra.mxu0 %v5308
        %7692 = vmatpush.bf16.msra.mxu0 %v5292
        %7693 = vmatpush.bf16.msra.mxu0 %v5276
        %7694 = vmatmul.bf16.gmra.mxu0 %v270
        %v7695 = vpop.f32.mrf.mxu0
        %v7696 = vadd.f32 %v7683, %v7695
        %v7697 = vpop.f32.mrf.mxu0
        %7698 = vdwg.mxu0
        %7699 = vmatpush.bf16.msra.mxu0 %v4493
        %7700 = vmatpush.bf16.msra.mxu0 %v4477
        %7701 = vmatpush.bf16.msra.mxu0 %v4461
        %7702 = vmatpush.bf16.msra.mxu0 %v4445
        %7703 = vmatpush.bf16.msra.mxu0 %v4429
        %7704 = vmatpush.bf16.msra.mxu0 %v4413
        %7705 = vmatpush.bf16.msra.mxu0 %v4397
        %7706 = vmatpush.bf16.msra.mxu0 %v4381
        %7707 = vmatmul.bf16.gmra.mxu0 %v263
        %v7708 = vpop.f32.mrf.mxu0
        %v7709 = vadd.f32 %v6431, %v7708
        %v7710 = vpop.f32.mrf.mxu0
        %7711 = vdwg.mxu0
        %7712 = vmatpush.bf16.msra.mxu0 %v4621
        %7713 = vmatpush.bf16.msra.mxu0 %v4605
        %7714 = vmatpush.bf16.msra.mxu0 %v4589
        %7715 = vmatpush.bf16.msra.mxu0 %v4573
        %7716 = vmatpush.bf16.msra.mxu0 %v4557
        %7717 = vmatpush.bf16.msra.mxu0 %v4541
        %7718 = vmatpush.bf16.msra.mxu0 %v4525
        %7719 = vmatpush.bf16.msra.mxu0 %v4509
        %7720 = vmatmul.bf16.gmra.mxu0 %v264
        %v7721 = vpop.f32.mrf.mxu0
        %v7722 = vadd.f32 %v7709, %v7721
        %v7723 = vpop.f32.mrf.mxu0
        %7724 = vdwg.mxu0
        %7725 = vmatpush.bf16.msra.mxu0 %v4749
        %7726 = vmatpush.bf16.msra.mxu0 %v4733
        %7727 = vmatpush.bf16.msra.mxu0 %v4717
        %7728 = vmatpush.bf16.msra.mxu0 %v4701
        %7729 = vmatpush.bf16.msra.mxu0 %v4685
        %7730 = vmatpush.bf16.msra.mxu0 %v4669
        %7731 = vmatpush.bf16.msra.mxu0 %v4653
        %7732 = vmatpush.bf16.msra.mxu0 %v4637
        %7733 = vmatmul.bf16.gmra.mxu0 %v265
        %v7734 = vpop.f32.mrf.mxu0
        %v7735 = vadd.f32 %v7722, %v7734
        %v7736 = vpop.f32.mrf.mxu0
        %7737 = vdwg.mxu0
        %7738 = vmatpush.bf16.msra.mxu0 %v4877
        %7739 = vmatpush.bf16.msra.mxu0 %v4861
        %7740 = vmatpush.bf16.msra.mxu0 %v4845
        %7741 = vmatpush.bf16.msra.mxu0 %v4829
        %7742 = vmatpush.bf16.msra.mxu0 %v4813
        %7743 = vmatpush.bf16.msra.mxu0 %v4797
        %7744 = vmatpush.bf16.msra.mxu0 %v4781
        %7745 = vmatpush.bf16.msra.mxu0 %v4765
        %7746 = vmatmul.bf16.gmra.mxu0 %v266
        %v7747 = vpop.f32.mrf.mxu0
        %v7748 = vadd.f32 %v7735, %v7747
        %v7749 = vpop.f32.mrf.mxu0
        %7750 = vdwg.mxu0
        %7751 = vmatpush.bf16.msra.mxu0 %v5005
        %7752 = vmatpush.bf16.msra.mxu0 %v4989
        %7753 = vmatpush.bf16.msra.mxu0 %v4973
        %7754 = vmatpush.bf16.msra.mxu0 %v4957
        %7755 = vmatpush.bf16.msra.mxu0 %v4941
        %7756 = vmatpush.bf16.msra.mxu0 %v4925
        %7757 = vmatpush.bf16.msra.mxu0 %v4909
        %7758 = vmatpush.bf16.msra.mxu0 %v4893
        %7759 = vmatmul.bf16.gmra.mxu0 %v267
        %v7760 = vpop.f32.mrf.mxu0
        %v7761 = vadd.f32 %v7748, %v7760
        %v7762 = vpop.f32.mrf.mxu0
        %7763 = vdwg.mxu0
        %7764 = vmatpush.bf16.msra.mxu0 %v5133
        %7765 = vmatpush.bf16.msra.mxu0 %v5117
        %7766 = vmatpush.bf16.msra.mxu0 %v5101
        %7767 = vmatpush.bf16.msra.mxu0 %v5085
        %7768 = vmatpush.bf16.msra.mxu0 %v5069
        %7769 = vmatpush.bf16.msra.mxu0 %v5053
        %7770 = vmatpush.bf16.msra.mxu0 %v5037
        %7771 = vmatpush.bf16.msra.mxu0 %v5021
        %7772 = vmatmul.bf16.gmra.mxu0 %v268
        %v7773 = vpop.f32.mrf.mxu0
        %v7774 = vadd.f32 %v7761, %v7773
        %v7775 = vpop.f32.mrf.mxu0
        %7776 = vdwg.mxu0
        %7777 = vmatpush.bf16.msra.mxu0 %v5261
        %7778 = vmatpush.bf16.msra.mxu0 %v5245
        %7779 = vmatpush.bf16.msra.mxu0 %v5229
        %7780 = vmatpush.bf16.msra.mxu0 %v5213
        %7781 = vmatpush.bf16.msra.mxu0 %v5197
        %7782 = vmatpush.bf16.msra.mxu0 %v5181
        %7783 = vmatpush.bf16.msra.mxu0 %v5165
        %7784 = vmatpush.bf16.msra.mxu0 %v5149
        %7785 = vmatmul.bf16.gmra.mxu0 %v269
        %v7786 = vpop.f32.mrf.mxu0
        %v7787 = vadd.f32 %v7774, %v7786
        %v7788 = vpop.f32.mrf.mxu0
        %7789 = vdwg.mxu0
        %7790 = vmatpush.bf16.msra.mxu0 %v5389
        %7791 = vmatpush.bf16.msra.mxu0 %v5373
        %7792 = vmatpush.bf16.msra.mxu0 %v5357
        %7793 = vmatpush.bf16.msra.mxu0 %v5341
        %7794 = vmatpush.bf16.msra.mxu0 %v5325
        %7795 = vmatpush.bf16.msra.mxu0 %v5309
        %7796 = vmatpush.bf16.msra.mxu0 %v5293
        %7797 = vmatpush.bf16.msra.mxu0 %v5277
        %7798 = vmatmul.bf16.gmra.mxu0 %v270
        %v7799 = vpop.f32.mrf.mxu0
        %v7800 = vadd.f32 %v7787, %v7799
        %v7801 = vpop.f32.mrf.mxu0
        %7802 = vdwg.mxu0
        %7803 = vmatpush.bf16.msra.mxu0 %v4494
        %7804 = vmatpush.bf16.msra.mxu0 %v4478
        %7805 = vmatpush.bf16.msra.mxu0 %v4462
        %7806 = vmatpush.bf16.msra.mxu0 %v4446
        %7807 = vmatpush.bf16.msra.mxu0 %v4430
        %7808 = vmatpush.bf16.msra.mxu0 %v4414
        %7809 = vmatpush.bf16.msra.mxu0 %v4398
        %7810 = vmatpush.bf16.msra.mxu0 %v4382
        %7811 = vmatmul.bf16.gmra.mxu0 %v263
        %v7812 = vpop.f32.mrf.mxu0
        %v7813 = vadd.f32 %v6432, %v7812
        %v7814 = vpop.f32.mrf.mxu0
        %7815 = vdwg.mxu0
        %7816 = vmatpush.bf16.msra.mxu0 %v4622
        %7817 = vmatpush.bf16.msra.mxu0 %v4606
        %7818 = vmatpush.bf16.msra.mxu0 %v4590
        %7819 = vmatpush.bf16.msra.mxu0 %v4574
        %7820 = vmatpush.bf16.msra.mxu0 %v4558
        %7821 = vmatpush.bf16.msra.mxu0 %v4542
        %7822 = vmatpush.bf16.msra.mxu0 %v4526
        %7823 = vmatpush.bf16.msra.mxu0 %v4510
        %7824 = vmatmul.bf16.gmra.mxu0 %v264
        %v7825 = vpop.f32.mrf.mxu0
        %v7826 = vadd.f32 %v7813, %v7825
        %v7827 = vpop.f32.mrf.mxu0
        %7828 = vdwg.mxu0
        %7829 = vmatpush.bf16.msra.mxu0 %v4750
        %7830 = vmatpush.bf16.msra.mxu0 %v4734
        %7831 = vmatpush.bf16.msra.mxu0 %v4718
        %7832 = vmatpush.bf16.msra.mxu0 %v4702
        %7833 = vmatpush.bf16.msra.mxu0 %v4686
        %7834 = vmatpush.bf16.msra.mxu0 %v4670
        %7835 = vmatpush.bf16.msra.mxu0 %v4654
        %7836 = vmatpush.bf16.msra.mxu0 %v4638
        %7837 = vmatmul.bf16.gmra.mxu0 %v265
        %v7838 = vpop.f32.mrf.mxu0
        %v7839 = vadd.f32 %v7826, %v7838
        %v7840 = vpop.f32.mrf.mxu0
        %7841 = vdwg.mxu0
        %7842 = vmatpush.bf16.msra.mxu0 %v4878
        %7843 = vmatpush.bf16.msra.mxu0 %v4862
        %7844 = vmatpush.bf16.msra.mxu0 %v4846
        %7845 = vmatpush.bf16.msra.mxu0 %v4830
        %7846 = vmatpush.bf16.msra.mxu0 %v4814
        %7847 = vmatpush.bf16.msra.mxu0 %v4798
        %7848 = vmatpush.bf16.msra.mxu0 %v4782
        %7849 = vmatpush.bf16.msra.mxu0 %v4766
        %7850 = vmatmul.bf16.gmra.mxu0 %v266
        %v7851 = vpop.f32.mrf.mxu0
        %v7852 = vadd.f32 %v7839, %v7851
        %v7853 = vpop.f32.mrf.mxu0
        %7854 = vdwg.mxu0
        %7855 = vmatpush.bf16.msra.mxu0 %v5006
        %7856 = vmatpush.bf16.msra.mxu0 %v4990
        %7857 = vmatpush.bf16.msra.mxu0 %v4974
        %7858 = vmatpush.bf16.msra.mxu0 %v4958
        %7859 = vmatpush.bf16.msra.mxu0 %v4942
        %7860 = vmatpush.bf16.msra.mxu0 %v4926
        %7861 = vmatpush.bf16.msra.mxu0 %v4910
        %7862 = vmatpush.bf16.msra.mxu0 %v4894
        %7863 = vmatmul.bf16.gmra.mxu0 %v267
        %v7864 = vpop.f32.mrf.mxu0
        %v7865 = vadd.f32 %v7852, %v7864
        %v7866 = vpop.f32.mrf.mxu0
        %7867 = vdwg.mxu0
        %7868 = vmatpush.bf16.msra.mxu0 %v5134
        %7869 = vmatpush.bf16.msra.mxu0 %v5118
        %7870 = vmatpush.bf16.msra.mxu0 %v5102
        %7871 = vmatpush.bf16.msra.mxu0 %v5086
        %7872 = vmatpush.bf16.msra.mxu0 %v5070
        %7873 = vmatpush.bf16.msra.mxu0 %v5054
        %7874 = vmatpush.bf16.msra.mxu0 %v5038
        %7875 = vmatpush.bf16.msra.mxu0 %v5022
        %7876 = vmatmul.bf16.gmra.mxu0 %v268
        %v7877 = vpop.f32.mrf.mxu0
        %v7878 = vadd.f32 %v7865, %v7877
        %v7879 = vpop.f32.mrf.mxu0
        %7880 = vdwg.mxu0
        %7881 = vmatpush.bf16.msra.mxu0 %v5262
        %7882 = vmatpush.bf16.msra.mxu0 %v5246
        %7883 = vmatpush.bf16.msra.mxu0 %v5230
        %7884 = vmatpush.bf16.msra.mxu0 %v5214
        %7885 = vmatpush.bf16.msra.mxu0 %v5198
        %7886 = vmatpush.bf16.msra.mxu0 %v5182
        %7887 = vmatpush.bf16.msra.mxu0 %v5166
        %7888 = vmatpush.bf16.msra.mxu0 %v5150
        %7889 = vmatmul.bf16.gmra.mxu0 %v269
        %v7890 = vpop.f32.mrf.mxu0
        %v7891 = vadd.f32 %v7878, %v7890
        %v7892 = vpop.f32.mrf.mxu0
        %7893 = vdwg.mxu0
        %7894 = vmatpush.bf16.msra.mxu0 %v5390
        %7895 = vmatpush.bf16.msra.mxu0 %v5374
        %7896 = vmatpush.bf16.msra.mxu0 %v5358
        %7897 = vmatpush.bf16.msra.mxu0 %v5342
        %7898 = vmatpush.bf16.msra.mxu0 %v5326
        %7899 = vmatpush.bf16.msra.mxu0 %v5310
        %7900 = vmatpush.bf16.msra.mxu0 %v5294
        %7901 = vmatpush.bf16.msra.mxu0 %v5278
        %7902 = vmatmul.bf16.gmra.mxu0 %v270
        %v7903 = vpop.f32.mrf.mxu0
        %v7904 = vadd.f32 %v7891, %v7903
        %v7905 = vpop.f32.mrf.mxu0
        %7906 = vdwg.mxu0
        %7907 = vmatpush.bf16.msra.mxu0 %v4495
        %7908 = vmatpush.bf16.msra.mxu0 %v4479
        %7909 = vmatpush.bf16.msra.mxu0 %v4463
        %7910 = vmatpush.bf16.msra.mxu0 %v4447
        %7911 = vmatpush.bf16.msra.mxu0 %v4431
        %7912 = vmatpush.bf16.msra.mxu0 %v4415
        %7913 = vmatpush.bf16.msra.mxu0 %v4399
        %7914 = vmatpush.bf16.msra.mxu0 %v4383
        %7915 = vmatmul.bf16.gmra.mxu0 %v263
        %v7916 = vpop.f32.mrf.mxu0
        %v7917 = vadd.f32 %v6433, %v7916
        %v7918 = vpop.f32.mrf.mxu0
        %7919 = vdwg.mxu0
        %7920 = vmatpush.bf16.msra.mxu0 %v4623
        %7921 = vmatpush.bf16.msra.mxu0 %v4607
        %7922 = vmatpush.bf16.msra.mxu0 %v4591
        %7923 = vmatpush.bf16.msra.mxu0 %v4575
        %7924 = vmatpush.bf16.msra.mxu0 %v4559
        %7925 = vmatpush.bf16.msra.mxu0 %v4543
        %7926 = vmatpush.bf16.msra.mxu0 %v4527
        %7927 = vmatpush.bf16.msra.mxu0 %v4511
        %7928 = vmatmul.bf16.gmra.mxu0 %v264
        %v7929 = vpop.f32.mrf.mxu0
        %v7930 = vadd.f32 %v7917, %v7929
        %v7931 = vpop.f32.mrf.mxu0
        %7932 = vdwg.mxu0
        %7933 = vmatpush.bf16.msra.mxu0 %v4751
        %7934 = vmatpush.bf16.msra.mxu0 %v4735
        %7935 = vmatpush.bf16.msra.mxu0 %v4719
        %7936 = vmatpush.bf16.msra.mxu0 %v4703
        %7937 = vmatpush.bf16.msra.mxu0 %v4687
        %7938 = vmatpush.bf16.msra.mxu0 %v4671
        %7939 = vmatpush.bf16.msra.mxu0 %v4655
        %7940 = vmatpush.bf16.msra.mxu0 %v4639
        %7941 = vmatmul.bf16.gmra.mxu0 %v265
        %v7942 = vpop.f32.mrf.mxu0
        %v7943 = vadd.f32 %v7930, %v7942
        %v7944 = vpop.f32.mrf.mxu0
        %7945 = vdwg.mxu0
        %7946 = vmatpush.bf16.msra.mxu0 %v4879
        %7947 = vmatpush.bf16.msra.mxu0 %v4863
        %7948 = vmatpush.bf16.msra.mxu0 %v4847
        %7949 = vmatpush.bf16.msra.mxu0 %v4831
        %7950 = vmatpush.bf16.msra.mxu0 %v4815
        %7951 = vmatpush.bf16.msra.mxu0 %v4799
        %7952 = vmatpush.bf16.msra.mxu0 %v4783
        %7953 = vmatpush.bf16.msra.mxu0 %v4767
        %7954 = vmatmul.bf16.gmra.mxu0 %v266
        %v7955 = vpop.f32.mrf.mxu0
        %v7956 = vadd.f32 %v7943, %v7955
        %v7957 = vpop.f32.mrf.mxu0
        %7958 = vdwg.mxu0
        %7959 = vmatpush.bf16.msra.mxu0 %v5007
        %7960 = vmatpush.bf16.msra.mxu0 %v4991
        %7961 = vmatpush.bf16.msra.mxu0 %v4975
        %7962 = vmatpush.bf16.msra.mxu0 %v4959
        %7963 = vmatpush.bf16.msra.mxu0 %v4943
        %7964 = vmatpush.bf16.msra.mxu0 %v4927
        %7965 = vmatpush.bf16.msra.mxu0 %v4911
        %7966 = vmatpush.bf16.msra.mxu0 %v4895
        %7967 = vmatmul.bf16.gmra.mxu0 %v267
        %v7968 = vpop.f32.mrf.mxu0
        %v7969 = vadd.f32 %v7956, %v7968
        %v7970 = vpop.f32.mrf.mxu0
        %7971 = vdwg.mxu0
        %7972 = vmatpush.bf16.msra.mxu0 %v5135
        %7973 = vmatpush.bf16.msra.mxu0 %v5119
        %7974 = vmatpush.bf16.msra.mxu0 %v5103
        %7975 = vmatpush.bf16.msra.mxu0 %v5087
        %7976 = vmatpush.bf16.msra.mxu0 %v5071
        %7977 = vmatpush.bf16.msra.mxu0 %v5055
        %7978 = vmatpush.bf16.msra.mxu0 %v5039
        %7979 = vmatpush.bf16.msra.mxu0 %v5023
        %7980 = vmatmul.bf16.gmra.mxu0 %v268
        %v7981 = vpop.f32.mrf.mxu0
        %v7982 = vadd.f32 %v7969, %v7981
        %v7983 = vpop.f32.mrf.mxu0
        %7984 = vdwg.mxu0
        %7985 = vmatpush.bf16.msra.mxu0 %v5263
        %7986 = vmatpush.bf16.msra.mxu0 %v5247
        %7987 = vmatpush.bf16.msra.mxu0 %v5231
        %7988 = vmatpush.bf16.msra.mxu0 %v5215
        %7989 = vmatpush.bf16.msra.mxu0 %v5199
        %7990 = vmatpush.bf16.msra.mxu0 %v5183
        %7991 = vmatpush.bf16.msra.mxu0 %v5167
        %7992 = vmatpush.bf16.msra.mxu0 %v5151
        %7993 = vmatmul.bf16.gmra.mxu0 %v269
        %v7994 = vpop.f32.mrf.mxu0
        %v7995 = vadd.f32 %v7982, %v7994
        %v7996 = vpop.f32.mrf.mxu0
        %7997 = vdwg.mxu0
        %7998 = vmatpush.bf16.msra.mxu0 %v5391
        %7999 = vmatpush.bf16.msra.mxu0 %v5375
        %8000 = vmatpush.bf16.msra.mxu0 %v5359
        %8001 = vmatpush.bf16.msra.mxu0 %v5343
        %8002 = vmatpush.bf16.msra.mxu0 %v5327
        %8003 = vmatpush.bf16.msra.mxu0 %v5311
        %8004 = vmatpush.bf16.msra.mxu0 %v5295
        %8005 = vmatpush.bf16.msra.mxu0 %v5279
        %8006 = vmatmul.bf16.gmra.mxu0 %v270
        %v8007 = vpop.f32.mrf.mxu0
        %v8008 = vadd.f32 %v7995, %v8007
        %v8009 = vpop.f32.mrf.mxu0
        %8010 = vdwg.mxu0
        %8011 = vmatpush.bf16.msra.mxu0 %v4496
        %8012 = vmatpush.bf16.msra.mxu0 %v4480
        %8013 = vmatpush.bf16.msra.mxu0 %v4464
        %8014 = vmatpush.bf16.msra.mxu0 %v4448
        %8015 = vmatpush.bf16.msra.mxu0 %v4432
        %8016 = vmatpush.bf16.msra.mxu0 %v4416
        %8017 = vmatpush.bf16.msra.mxu0 %v4400
        %8018 = vmatpush.bf16.msra.mxu0 %v4384
        %8019 = vmatmul.bf16.gmra.mxu0 %v263
        %v8020 = vpop.f32.mrf.mxu0
        %v8021 = vadd.f32 %v6434, %v8020
        %v8022 = vpop.f32.mrf.mxu0
        %8023 = vdwg.mxu0
        %8024 = vmatpush.bf16.msra.mxu0 %v4624
        %8025 = vmatpush.bf16.msra.mxu0 %v4608
        %8026 = vmatpush.bf16.msra.mxu0 %v4592
        %8027 = vmatpush.bf16.msra.mxu0 %v4576
        %8028 = vmatpush.bf16.msra.mxu0 %v4560
        %8029 = vmatpush.bf16.msra.mxu0 %v4544
        %8030 = vmatpush.bf16.msra.mxu0 %v4528
        %8031 = vmatpush.bf16.msra.mxu0 %v4512
        %8032 = vmatmul.bf16.gmra.mxu0 %v264
        %v8033 = vpop.f32.mrf.mxu0
        %v8034 = vadd.f32 %v8021, %v8033
        %v8035 = vpop.f32.mrf.mxu0
        %8036 = vdwg.mxu0
        %8037 = vmatpush.bf16.msra.mxu0 %v4752
        %8038 = vmatpush.bf16.msra.mxu0 %v4736
        %8039 = vmatpush.bf16.msra.mxu0 %v4720
        %8040 = vmatpush.bf16.msra.mxu0 %v4704
        %8041 = vmatpush.bf16.msra.mxu0 %v4688
        %8042 = vmatpush.bf16.msra.mxu0 %v4672
        %8043 = vmatpush.bf16.msra.mxu0 %v4656
        %8044 = vmatpush.bf16.msra.mxu0 %v4640
        %8045 = vmatmul.bf16.gmra.mxu0 %v265
        %v8046 = vpop.f32.mrf.mxu0
        %v8047 = vadd.f32 %v8034, %v8046
        %v8048 = vpop.f32.mrf.mxu0
        %8049 = vdwg.mxu0
        %8050 = vmatpush.bf16.msra.mxu0 %v4880
        %8051 = vmatpush.bf16.msra.mxu0 %v4864
        %8052 = vmatpush.bf16.msra.mxu0 %v4848
        %8053 = vmatpush.bf16.msra.mxu0 %v4832
        %8054 = vmatpush.bf16.msra.mxu0 %v4816
        %8055 = vmatpush.bf16.msra.mxu0 %v4800
        %8056 = vmatpush.bf16.msra.mxu0 %v4784
        %8057 = vmatpush.bf16.msra.mxu0 %v4768
        %8058 = vmatmul.bf16.gmra.mxu0 %v266
        %v8059 = vpop.f32.mrf.mxu0
        %v8060 = vadd.f32 %v8047, %v8059
        %v8061 = vpop.f32.mrf.mxu0
        %8062 = vdwg.mxu0
        %8063 = vmatpush.bf16.msra.mxu0 %v5008
        %8064 = vmatpush.bf16.msra.mxu0 %v4992
        %8065 = vmatpush.bf16.msra.mxu0 %v4976
        %8066 = vmatpush.bf16.msra.mxu0 %v4960
        %8067 = vmatpush.bf16.msra.mxu0 %v4944
        %8068 = vmatpush.bf16.msra.mxu0 %v4928
        %8069 = vmatpush.bf16.msra.mxu0 %v4912
        %8070 = vmatpush.bf16.msra.mxu0 %v4896
        %8071 = vmatmul.bf16.gmra.mxu0 %v267
        %v8072 = vpop.f32.mrf.mxu0
        %v8073 = vadd.f32 %v8060, %v8072
        %v8074 = vpop.f32.mrf.mxu0
        %8075 = vdwg.mxu0
        %8076 = vmatpush.bf16.msra.mxu0 %v5136
        %8077 = vmatpush.bf16.msra.mxu0 %v5120
        %8078 = vmatpush.bf16.msra.mxu0 %v5104
        %8079 = vmatpush.bf16.msra.mxu0 %v5088
        %8080 = vmatpush.bf16.msra.mxu0 %v5072
        %8081 = vmatpush.bf16.msra.mxu0 %v5056
        %8082 = vmatpush.bf16.msra.mxu0 %v5040
        %8083 = vmatpush.bf16.msra.mxu0 %v5024
        %8084 = vmatmul.bf16.gmra.mxu0 %v268
        %v8085 = vpop.f32.mrf.mxu0
        %v8086 = vadd.f32 %v8073, %v8085
        %v8087 = vpop.f32.mrf.mxu0
        %8088 = vdwg.mxu0
        %8089 = vmatpush.bf16.msra.mxu0 %v5264
        %8090 = vmatpush.bf16.msra.mxu0 %v5248
        %8091 = vmatpush.bf16.msra.mxu0 %v5232
        %8092 = vmatpush.bf16.msra.mxu0 %v5216
        %8093 = vmatpush.bf16.msra.mxu0 %v5200
        %8094 = vmatpush.bf16.msra.mxu0 %v5184
        %8095 = vmatpush.bf16.msra.mxu0 %v5168
        %8096 = vmatpush.bf16.msra.mxu0 %v5152
        %8097 = vmatmul.bf16.gmra.mxu0 %v269
        %v8098 = vpop.f32.mrf.mxu0
        %v8099 = vadd.f32 %v8086, %v8098
        %v8100 = vpop.f32.mrf.mxu0
        %8101 = vdwg.mxu0
        %8102 = vmatpush.bf16.msra.mxu0 %v5392
        %8103 = vmatpush.bf16.msra.mxu0 %v5376
        %8104 = vmatpush.bf16.msra.mxu0 %v5360
        %8105 = vmatpush.bf16.msra.mxu0 %v5344
        %8106 = vmatpush.bf16.msra.mxu0 %v5328
        %8107 = vmatpush.bf16.msra.mxu0 %v5312
        %8108 = vmatpush.bf16.msra.mxu0 %v5296
        %8109 = vmatpush.bf16.msra.mxu0 %v5280
        %8110 = vmatmul.bf16.gmra.mxu0 %v270
        %v8111 = vpop.f32.mrf.mxu0
        %v8112 = vadd.f32 %v8099, %v8111
        %v8113 = vpop.f32.mrf.mxu0
        %8114 = vdwg.mxu0
        %vm8115 = vcmp.ge.f32.partialorder %v6552, 0.0
        %vm8116 = vcmp.ge.f32.partialorder %v6656, 0.0
        %vm8117 = vcmp.ge.f32.partialorder %v6760, 0.0
        %vm8118 = vcmp.ge.f32.partialorder %v6864, 0.0
        %vm8119 = vcmp.ge.f32.partialorder %v6968, 0.0
        %vm8120 = vcmp.ge.f32.partialorder %v7072, 0.0
        %vm8121 = vcmp.ge.f32.partialorder %v7176, 0.0
        %vm8122 = vcmp.ge.f32.partialorder %v7280, 0.0
        %vm8123 = vcmp.ge.f32.partialorder %v7384, 0.0
        %vm8124 = vcmp.ge.f32.partialorder %v7488, 0.0
        %vm8125 = vcmp.ge.f32.partialorder %v7592, 0.0
        %vm8126 = vcmp.ge.f32.partialorder %v7696, 0.0
        %vm8127 = vcmp.ge.f32.partialorder %v7800, 0.0
        %vm8128 = vcmp.ge.f32.partialorder %v7904, 0.0
        %vm8129 = vcmp.ge.f32.partialorder %v8008, 0.0
        %vm8130 = vcmp.ge.f32.partialorder %v8112, 0.0
        %v8131 = vmul.f32 %v6552, 0.1
        %v8132 = vmul.f32 %v6656, 0.1
        %v8133 = vmul.f32 %v6760, 0.1
        %v8134 = vmul.f32 %v6864, 0.1
        %v8135 = vmul.f32 %v6968, 0.1
        %v8136 = vmul.f32 %v7072, 0.1
        %v8137 = vmul.f32 %v7176, 0.1
        %v8138 = vmul.f32 %v7280, 0.1
        %v8139 = vmul.f32 %v7384, 0.1
        %v8140 = vmul.f32 %v7488, 0.1
        %v8141 = vmul.f32 %v7592, 0.1
        %v8142 = vmul.f32 %v7696, 0.1
        %v8143 = vmul.f32 %v7800, 0.1
        %v8144 = vmul.f32 %v7904, 0.1
        %v8145 = vmul.f32 %v8008, 0.1
        %v8146 = vmul.f32 %v8112, 0.1
        %v8147 = vsel %vm8115, %v6552, %v8131
        %v8148 = vsel %vm8116, %v6656, %v8132
        %v8149 = vsel %vm8117, %v6760, %v8133
        %v8150 = vsel %vm8118, %v6864, %v8134
        %v8151 = vsel %vm8119, %v6968, %v8135
        %v8152 = vsel %vm8120, %v7072, %v8136
        %v8153 = vsel %vm8121, %v7176, %v8137
        %v8154 = vsel %vm8122, %v7280, %v8138
        %v8155 = vsel %vm8123, %v7384, %v8139
        %v8156 = vsel %vm8124, %v7488, %v8140
        %v8157 = vsel %vm8125, %v7592, %v8141
        %v8158 = vsel %vm8126, %v7696, %v8142
        %v8159 = vsel %vm8127, %v7800, %v8143
        %v8160 = vsel %vm8128, %v7904, %v8144
        %v8161 = vsel %vm8129, %v8008, %v8145
        %v8162 = vsel %vm8130, %v8112, %v8146
        %v8179 = vrot.slane %v8148, 7
        %v8180 = vrot.slane %v8149, 6
        %v8181 = vrot.slane %v8150, 5
        %v8182 = vrot.slane %v8151, 4
        %v8183 = vrot.slane %v8152, 3
        %v8184 = vrot.slane %v8153, 2
        %v8185 = vrot.slane %v8154, 1
        %v8186 = vrot.slane %v8156, 7
        %v8187 = vrot.slane %v8157, 6
        %v8188 = vrot.slane %v8158, 5
        %v8189 = vrot.slane %v8159, 4
        %v8190 = vrot.slane %v8160, 3
        %v8191 = vrot.slane %v8161, 2
        %v8192 = vrot.slane %v8162, 1
        %vm8193 = vcmask 1040384
        %v8194 = vsel %vm8193, %v8147, %v8179
        %vm8195 = vcmask 1042434
        %v8196 = vsel %vm8195, %v8180, %v8181
        %vm8197 = vcmask 1041408
        %v8198 = vsel %vm8197, %v8194, %v8196
        %vm8199 = vcmask 1044484
        %v8200 = vsel %vm8199, %v8182, %v8183
        %vm8201 = vcmask 1046534
        %v8202 = vsel %vm8201, %v8184, %v8185
        %vm8203 = vcmask 1045508
        %v8204 = vsel %vm8203, %v8200, %v8202
        %vm8205 = vcmask 1043456
        %v8206 = vsel %vm8205, %v8198, %v8204
        %v8207 = vsel %vm8193, %v8155, %v8186
        %v8208 = vsel %vm8195, %v8187, %v8188
        %v8209 = vsel %vm8197, %v8207, %v8208
        %v8210 = vsel %vm8199, %v8189, %v8190
        %v8211 = vsel %vm8201, %v8191, %v8192
        %v8212 = vsel %vm8203, %v8210, %v8211
        %v8213 = vsel %vm8205, %v8209, %v8212
        %8216 = vst [vmem:[%s241] sm:$0xff] %v8206
        %8217 = vst [vmem:[%s241 + $0x8] sm:$0xff] %v8213
        %s8218 = sand.u32 %s102, 1
        %s8219 = scalar_lea.sflag [#allocation4], %s8218
        %s8220 = sand.u32 %s102, 1
        %s8221 = smul.addr %s8220, 16
        %s8222 = scalar_lea.vmem [#allocation8], %s8221
        // Predicated region
        $region45: #{tpu_custom_call.1} parent=31 // pred_check
          %p8223 = pneg %p112
        $region46: #{tpu_custom_call.1} parent=31 // pred_check_branch
          %8225 = sbr.rel (%p8223) target = $region48
        $region47: #{tpu_custom_call.1} parent=31 // pred_region
          %s8226 = smul.u32 16, %s21
          %8228 = vsyncadd %s8219, 0
          %s8229 = scalar_lea.hbm %s3, %s8226
          %s8231 = sshll.u32 %s8222, 4
          %s8232 = int_to_ptr.vmem [resolvable:$true] %s8231
          %s8233 = sshll.u32 %s8229, 4
          %s8234 = int_to_ptr.hbm [resolvable:$true] %s8233
          %8236 = dma.vmem_to_hbm [thread:$0]  %s8232, 256, %s8234, %s8219
        $region48: #{tpu_custom_call.1} parent=31 // pred_fallthru
          _
      $region32: #{tpu_custom_call.1} parent=5 // pred_fallthru
        _
      %p8237 = scmp.le.s32.totalorder 2, %s16
      // Predicated region
      $region49: #{tpu_custom_call.1} parent=5 // pred_check
        %p8238 = pneg %p8237
      $region50: #{tpu_custom_call.1} parent=5 // pred_check_branch
        %8240 = sbr.rel (%p8238) target = $region52
      $region51: #{tpu_custom_call.1} parent=5 // pred_region
        %s8241 = ssub.s32 %s16, 2
        // Predicated region
        $region53: #{tpu_custom_call.1} parent=51 // pred_check
          %p8242 = pneg %p118
        $region54: #{tpu_custom_call.1} parent=51 // pred_check_branch
          %8244 = sbr.rel (%p8242) target = $region56
        $region55: #{tpu_custom_call.1} parent=51 // pred_region
          %s8245 = sand.u32 %s103, 1
          %s8246 = scalar_lea.sflag [#allocation4], %s8245
          %s8247 = sand.u32 %s103, 1
          %s8248 = smul.addr %s8247, 16
          %s8249 = scalar_lea.vmem [#allocation8], %s8248
          %8251 = dma.done %s8246, 256
        $region56: #{tpu_custom_call.1} parent=51 // pred_fallthru
          _
      $region52: #{tpu_custom_call.1} parent=5 // pred_fallthru
        _
    $region6: #{tpu_custom_call.1} parent=1 // loop_footer
      %s20 = sadd.s32 1, %s16
    $region7: #{tpu_custom_call.1} parent=1 // loop_footer_branch
      %15 = sbr.rel target = $region3
    $region8: #{tpu_custom_call.1} parent=1 // loop_exit
      _
    %8252 = vsyncpa [#allocation3], 1
    %s8253 = scalar_lea.sflag [#allocation3], 1
    %8254 = vsyncpa %s8253, 1
    %8255 = vsyncpa [#allocation6], 1
    %s8256 = scalar_lea.sflag [#allocation6], 1
    %8257 = vsyncpa %s8256, 1
    %8258 = vsyncpa [#allocation4], 1
    %s8259 = scalar_lea.sflag [#allocation4], 1
    %8260 = vsyncpa %s8259, 1

</llo_original>
